<compile_context>
chip_gen: v7x
topology: tpu7x:2x2x1
jax: 0.10.0
libtpu: 0.0.40
codegen_flags: <defaults>
</compile_context>

<pallas_src>
import functools

import jax
import jax.numpy as jnp
from jax.experimental import pallas as pl
from jax.experimental.pallas import tpu as pltpu


K_PAD = 3200            # fc1 contraction dim 64*7*7=3136 zero-padded to a 128 multiple
FC1_TK = 640            # fc1 K-tile (divides K_PAD, multiple of 128)
VMEM_LIMIT = 32 * 1024 * 1024


# ----------------------------------------------------------------------------
# Pallas kernels
# ----------------------------------------------------------------------------
def _conv_block_kernel(p_ref, w_ref, b_ref, o_ref, y_ref, *, n_pool):
    """Conv (patches @ W) + bias + LeakyReLU(0.2) + AvgPool2d(2,2) for ONE image.

    p_ref : [4*n_pool, K]    bf16  im2col patches, rows ordered (di, dj, i, j)
    w_ref : [K, Cout]        bf16
    b_ref : [1, Cout]        f32
    o_ref : [n_pool, Cout]   bf16  pooled output, rows ordered (i, j)
    y_ref : [4*n_pool, Cout] f32   VMEM scratch (pre-pool activation)
    """
    y = jnp.dot(p_ref[...], w_ref[...], preferred_element_type=jnp.float32)
    y = y + b_ref[...]
    y_ref[...] = jnp.where(y >= 0.0, y, 0.2 * y)           # LeakyReLU(0.2) in f32
    # 2x2 average pool == mean of the four (di, dj) row groups: pure VPU adds,
    # no pool matrix, no strided/relayout reshapes.
    pooled = 0.25 * (y_ref[pl.ds(0 * n_pool, n_pool), :]
                     + y_ref[pl.ds(1 * n_pool, n_pool), :]
                     + y_ref[pl.ds(2 * n_pool, n_pool), :]
                     + y_ref[pl.ds(3 * n_pool, n_pool), :])
    o_ref[...] = pooled.astype(o_ref.dtype)


def _fc_head_kernel(x_ref, w1_ref, b1_ref, w2_ref, b2_ref, o_ref, acc_ref):
    """fc1 (K-tiled reduction) + LeakyReLU(0.2) + fc2 + Sigmoid."""
    k = pl.program_id(1)

    @pl.when(k == 0)
    def _():
        acc_ref[...] = jnp.zeros_like(acc_ref)

    acc_ref[...] += jnp.dot(x_ref[...], w1_ref[...],
                            preferred_element_type=jnp.float32)

    @pl.when(k == pl.num_programs(1) - 1)
    def _():
        h = acc_ref[...] + b1_ref[...]
        h = jnp.where(h >= 0.0, h, 0.2 * h)                # LeakyReLU(0.2) in f32
        z = jnp.dot(h.astype(jnp.bfloat16), w2_ref[...],
                    preferred_element_type=jnp.float32) + b2_ref[...]
        ez = jnp.exp(-jnp.abs(z))                          # stable sigmoid
        o_ref[...] = jnp.where(z >= 0.0, 1.0 / (1.0 + ez), ez / (1.0 + ez))


# ----------------------------------------------------------------------------
# pallas_call wrappers
# ----------------------------------------------------------------------------
def conv_lrelu_avgpool(patches, wmat, bias, *, h, w, cout):
    """patches: [B, H*W, K] bf16 (rows (di,dj,i,j)) -> [B, (H/2)*(W/2), Cout] bf16."""
    batch, hw, feat = patches.shape
    assert hw == h * w
    n_pool = (h // 2) * (w // 2)
    kernel = functools.partial(_conv_block_kernel, n_pool=n_pool)
    flops = 2 * batch * hw * feat * cout
    bytes_accessed = (patches.size * 2 + wmat.size * 2 + bias.size * 4
                      + batch * n_pool * cout * 2)
    return pl.pallas_call(
        kernel,
        out_shape=jax.ShapeDtypeStruct((batch, n_pool, cout), jnp.bfloat16),
        grid=(batch,),
        in_specs=[pl.BlockSpec((None, hw, feat), lambda b: (b, 0, 0)),
                  pl.BlockSpec((feat, cout), lambda b: (0, 0)),
                  pl.BlockSpec((1, cout), lambda b: (0, 0))],
        out_specs=pl.BlockSpec((None, n_pool, cout), lambda b: (b, 0, 0)),
        scratch_shapes=[pltpu.VMEM((hw, cout), jnp.float32)],
        compiler_params=pltpu.CompilerParams(
            dimension_semantics=("parallel",),
            vmem_limit_bytes=VMEM_LIMIT),
        cost_estimate=pl.CostEstimate(flops=flops, transcendentals=0,
                                      bytes_accessed=bytes_accessed),
    )(patches, wmat, bias)


def fc_head(xf, w1, b1, w2, b2):
    """xf: [B, K_PAD] bf16 -> [B, 1] f32."""
    batch, kp = xf.shape
    assert kp % FC1_TK == 0
    bm = batch if batch <= 128 else 128
    nb = pl.cdiv(batch, bm)
    nk = kp // FC1_TK
    hidden = w1.shape[1]
    flops = 2 * batch * (kp * hidden + hidden)
    bytes_accessed = (xf.size * 2 + w1.size * 2 + b1.size * 4
                      + w2.size * 2 + b2.size * 4 + batch * 4)
    return pl.pallas_call(
        _fc_head_kernel,
        out_shape=jax.ShapeDtypeStruct((batch, 1), jnp.float32),
        grid=(nb, nk),
        in_specs=[pl.BlockSpec((bm, FC1_TK), lambda i, k: (i, k)),
                  pl.BlockSpec((FC1_TK, hidden), lambda i, k: (k, 0)),
                  pl.BlockSpec((1, hidden), lambda i, k: (0, 0)),
                  pl.BlockSpec((hidden, 1), lambda i, k: (0, 0)),
                  pl.BlockSpec((1, 1), lambda i, k: (0, 0))],
        out_specs=pl.BlockSpec((bm, 1), lambda i, k: (i, 0)),
        scratch_shapes=[pltpu.VMEM((bm, hidden), jnp.float32)],
        compiler_params=pltpu.CompilerParams(
            dimension_semantics=("parallel", "arbitrary"),
            vmem_limit_bytes=VMEM_LIMIT),
        cost_estimate=pl.CostEstimate(flops=flops, transcendentals=batch,
                                      bytes_accessed=bytes_accessed),
    )(xf, w1, b1, w2, b2)


# ----------------------------------------------------------------------------
# Plain-JAX glue: im2col (pool-friendly row order) and parameter setup
# ----------------------------------------------------------------------------
def im2col_pool_order(x_nhwc, k, pad):
    """Extract k x k stride-1 patches and order the rows (b, di, dj, i, j) with
    h = 2*i + di, w = 2*j + dj, so the 2x2 average pool in the kernel is the
    mean of 4 contiguous row slabs.  Feature index = (ki*k + kj)*C + ci."""
    b, h, w, c = x_nhwc.shape
    xp = jnp.pad(x_nhwc, ((0, 0), (pad, pad), (pad, pad), (0, 0)))
    cols = [xp[:, ki:ki + h, kj:kj + w, :] for ki in range(k) for kj in range(k)]
    patches = jnp.concatenate(cols, axis=-1)               # [B, H, W, k*k*C]
    ho, wo = h // 2, w // 2
    patches = patches.reshape(b, ho, 2, wo, 2, k * k * c)  # (b, i, di, j, dj, f)
    patches = jnp.transpose(patches, (0, 2, 4, 1, 3, 5))   # (b, di, dj, i, j, f)
    return patches.reshape(b, h * w, k * k * c)


def init_params(key):
    ks = jax.random.split(key, 8)
    # PyTorch layouts: conv weight [Cout, Cin, K, K], linear weight [out, in]
    w1_pt = 0.05 * jax.random.normal(ks[0], (32, 1, 5, 5), jnp.float32)
    b1_pt = 0.05 * jax.random.normal(ks[1], (32,), jnp.float32)
    w2_pt = 0.05 * jax.random.normal(ks[2], (64, 32, 5, 5), jnp.float32)
    b2_pt = 0.05 * jax.random.normal(ks[3], (64,), jnp.float32)
    fw1_pt = 0.02 * jax.random.normal(ks[4], (1024, 64 * 7 * 7), jnp.float32)
    fb1_pt = 0.02 * jax.random.normal(ks[5], (1024,), jnp.float32)
    fw2_pt = 0.02 * jax.random.normal(ks[6], (1, 1024), jnp.float32)
    fb2_pt = 0.02 * jax.random.normal(ks[7], (1,), jnp.float32)

    # fc1 weight: transpose to [3136, 1024] (rows in PyTorch CHW flatten order
    # (c, i, j)), permute rows to our HWC flatten order (i, j, c), then zero-pad
    # the contraction dim 3136 -> K_PAD so K tiles are 128-aligned.
    fw1 = jnp.transpose(fw1_pt)                                    # [3136, 1024]
    fw1 = fw1.reshape(64, 7, 7, 1024).transpose(1, 2, 0, 3).reshape(3136, 1024)
    fw1 = jnp.pad(fw1, ((0, K_PAD - 3136), (0, 0))).astype(jnp.bfloat16)

    return {
        # conv weights as im2col matmul matrices [(ki,kj,ci) -> co], bf16 for MXU
        "w1": jnp.transpose(w1_pt, (2, 3, 1, 0)).reshape(25 * 1, 32).astype(jnp.bfloat16),
        "b1": b1_pt.reshape(1, 32),                                # f32
        "w2": jnp.transpose(w2_pt, (2, 3, 1, 0)).reshape(25 * 32, 64).astype(jnp.bfloat16),
        "b2": b2_pt.reshape(1, 64),                                # f32
        "fw1": fw1,                                                # [K_PAD, 1024] bf16
        "fb1": fb1_pt.reshape(1, 1024),                            # f32
        "fw2": jnp.transpose(fw2_pt).astype(jnp.bfloat16),         # [1024, 1] bf16
        "fb2": fb2_pt.reshape(1, 1),                               # f32
    }


def discrimination_net_forward(x_nchw, params):
    batch = x_nchw.shape[0]
    # ---- conv1: Conv2d(1,32,5,p=2) -> LeakyReLU(0.2) -> AvgPool2d(2) ----
    x = jnp.transpose(x_nchw, (0, 2, 3, 1)).astype(jnp.bfloat16)       # NHWC [B,28,28,1]
    p1 = im2col_pool_order(x, 5, 2)                                    # [B,784,25]
    h1 = conv_lrelu_avgpool(p1, params["w1"], params["b1"],
                            h=28, w=28, cout=32)                       # [B,196,32]
    # ---- conv2: Conv2d(32,64,5,p=2) -> LeakyReLU(0.2) -> AvgPool2d(2) ----
    p2 = im2col_pool_order(h1.reshape(batch, 14, 14, 32), 5, 2)        # [B,196,800]
    h2 = conv_lrelu_avgpool(p2, params["w2"], params["b2"],
                            h=14, w=14, cout=64)                       # [B,49,64]
    # ---- flatten (HWC order; NCHW permutation already folded into fw1) ----
    h2f = h2.reshape(batch, 49 * 64)
    h2f = jnp.pad(h2f, ((0, 0), (0, K_PAD - 49 * 64)))                 # [B, K_PAD] bf16
    # ---- fc: Linear(3136,1024) -> LeakyReLU(0.2) -> Linear(1024,1) -> Sigmoid ----
    return fc_head(h2f, params["fw1"], params["fb1"], params["fw2"], params["fb2"])


# ----------------------------------------------------------------------------
if __name__ == "__main__":
    BATCH = 2
    key = jax.random.PRNGKey(0)
    k_x, k_p = jax.random.split(key)
    x = jax.random.normal(k_x, (BATCH, 1, 28, 28), dtype=jnp.float32)
    params = init_params(k_p)

    fwd = jax.jit(functools.partial(discrimination_net_forward, params=params))
    out = jax.block_until_ready(fwd(x))

    assert out.shape == (BATCH, 1), out.shape
    assert bool(jnp.all(jnp.isfinite(out)))
    assert bool(jnp.all((out >= 0.0) & (out <= 1.0)))   # sigmoid range
    print("KERNEL_OK")
</pallas_src>

<mosaic_0001>
module attributes {stable_mosaic.version = 11 : i64} {
  func.func @_conv_block_kernel(%arg0: i32, %arg1: memref<1x784x25xbf16, #tpu.memory_space<vmem>>, %arg2: memref<25x32xbf16, #tpu.memory_space<vmem>>, %arg3: memref<1x32xf32, #tpu.memory_space<vmem>>, %arg4: memref<1x196x32xbf16, #tpu.memory_space<vmem>>, %arg5: memref<784x32xf32, #tpu.memory_space<vmem>>) attributes {dimension_semantics = [#tpu.dimension_semantics<parallel>], iteration_bounds = array<i64: 2>, scalar_prefetch = 0 : i64, scratch_operands = 1 : i64, tpu.core_type = #tpu.core_type<tc>, window_params = [{transform_indices = @transform_0, window_bounds = array<i64: 1, 784, 25>}, {pipeline_mode = #tpu.pipeline_mode<synchronous>, transform_indices = @transform_1, window_bounds = array<i64: 25, 32>}, {pipeline_mode = #tpu.pipeline_mode<synchronous>, transform_indices = @transform_2, window_bounds = array<i64: 1, 32>}, {transform_indices = @transform_3, window_bounds = array<i64: 1, 196, 32>}]} {
    %c0 = arith.constant 0 : index
    %c0_0 = arith.constant 0 : index
    %c0_1 = arith.constant 0 : index
    %0 = vector.load %arg1[%c0, %c0_0, %c0_1] : memref<1x784x25xbf16, #tpu.memory_space<vmem>>, vector<1x784x25xbf16>
    %1 = vector.shape_cast %0 : vector<1x784x25xbf16> to vector<784x25xbf16>
    %c0_2 = arith.constant 0 : index
    %c0_3 = arith.constant 0 : index
    %2 = vector.load %arg2[%c0_2, %c0_3] : memref<25x32xbf16, #tpu.memory_space<vmem>>, vector<25x32xbf16>
    %cst = arith.constant dense<0.000000e+00> : vector<784x32xf32>
    %3 = tpu.matmul %1, %2, %cst {dimension_numbers = #tpu.dot_dimension_numbers<[1], [0], [0], [1], [0, 0, 1, 1], [], []>} : vector<784x25xbf16>, vector<25x32xbf16>, vector<784x32xf32> -> vector<784x32xf32>
    %c0_4 = arith.constant 0 : index
    %c0_5 = arith.constant 0 : index
    %4 = vector.load %arg3[%c0_4, %c0_5] : memref<1x32xf32, #tpu.memory_space<vmem>>, vector<1x32xf32>
    %5 = vector.broadcast %4 : vector<1x32xf32> to vector<784x32xf32>
    %6 = arith.addf %3, %5 : vector<784x32xf32>
    %cst_6 = arith.constant 0.000000e+00 : f32
    %7 = vector.broadcast %cst_6 : f32 to vector<784x32xf32>
    %8 = arith.cmpf oge, %6, %7 : vector<784x32xf32>
    %cst_7 = arith.constant 2.000000e-01 : f32
    %9 = vector.broadcast %cst_7 : f32 to vector<784x32xf32>
    %10 = arith.mulf %9, %6 : vector<784x32xf32>
    %11 = arith.select %8, %6, %10 : vector<784x32xi1>, vector<784x32xf32>
    %c0_8 = arith.constant 0 : index
    %c0_9 = arith.constant 0 : index
    %12 = vector.load %arg5[%c0_8, %c0_9] : memref<784x32xf32, #tpu.memory_space<vmem>>, vector<784x32xf32>
    tpu.vector_store %arg5[%c0_8, %c0_9], %11 {strides = array<i32>} : memref<784x32xf32, #tpu.memory_space<vmem>>, vector<784x32xf32>,
    %c0_10 = arith.constant 0 : index
    %c0_11 = arith.constant 0 : index
    %13 = vector.load %arg5[%c0_10, %c0_11] : memref<784x32xf32, #tpu.memory_space<vmem>>, vector<196x32xf32>
    %c196 = arith.constant 196 : index
    %c0_12 = arith.constant 0 : index
    %14 = vector.load %arg5[%c196, %c0_12] : memref<784x32xf32, #tpu.memory_space<vmem>>, vector<196x32xf32>
    %15 = arith.addf %13, %14 : vector<196x32xf32>
    %c392 = arith.constant 392 : index
    %c0_13 = arith.constant 0 : index
    %16 = vector.load %arg5[%c392, %c0_13] : memref<784x32xf32, #tpu.memory_space<vmem>>, vector<196x32xf32>
    %17 = arith.addf %15, %16 : vector<196x32xf32>
    %c588 = arith.constant 588 : index
    %c0_14 = arith.constant 0 : index
    %18 = vector.load %arg5[%c588, %c0_14] : memref<784x32xf32, #tpu.memory_space<vmem>>, vector<196x32xf32>
    %19 = arith.addf %17, %18 : vector<196x32xf32>
    %cst_15 = arith.constant 2.500000e-01 : f32
    %20 = vector.broadcast %cst_15 : f32 to vector<196x32xf32>
    %21 = arith.mulf %20, %19 : vector<196x32xf32>
    %22 = arith.truncf %21 : vector<196x32xf32> to vector<196x32xbf16>
    %c0_16 = arith.constant 0 : index
    %c0_17 = arith.constant 0 : index
    %c0_18 = arith.constant 0 : index
    %23 = vector.load %arg4[%c0_16, %c0_17, %c0_18] : memref<1x196x32xbf16, #tpu.memory_space<vmem>>, vector<1x196x32xbf16>
    %24 = vector.shape_cast %23 : vector<1x196x32xbf16> to vector<196x32xbf16>
    %25 = vector.shape_cast %22 : vector<196x32xbf16> to vector<1x196x32xbf16>
    tpu.vector_store %arg4[%c0_16, %c0_17, %c0_18], %25 {strides = array<i32>} : memref<1x196x32xbf16, #tpu.memory_space<vmem>>, vector<1x196x32xbf16>,
    return
  }
  func.func @transform_0(%arg0: i32) -> (i32, i32, i32) {
    %c0_i32 = arith.constant 0 : i32
    %c0_i32_0 = arith.constant 0 : i32
    %c0_i32_1 = arith.constant 0 : i32
    return %arg0, %c0_i32, %c0_i32_0 : i32, i32, i32
  }
  func.func @transform_1(%arg0: i32) -> (i32, i32) {
    %c0_i32 = arith.constant 0 : i32
    %c0_i32_0 = arith.constant 0 : i32
    %c0_i32_1 = arith.constant 0 : i32
    return %c0_i32, %c0_i32_0 : i32, i32
  }
  func.func @transform_2(%arg0: i32) -> (i32, i32) {
    %c0_i32 = arith.constant 0 : i32
    %c0_i32_0 = arith.constant 0 : i32
    %c0_i32_1 = arith.constant 0 : i32
    return %c0_i32, %c0_i32_0 : i32, i32
  }
  func.func @transform_3(%arg0: i32) -> (i32, i32, i32) {
    %c0_i32 = arith.constant 0 : i32
    %c0_i32_0 = arith.constant 0 : i32
    %c0_i32_1 = arith.constant 0 : i32
    return %arg0, %c0_i32, %c0_i32_0 : i32, i32, i32
  }
}

module attributes {stable_mosaic.version = 11 : i64} {
  func.func @_conv_block_kernel(%arg0: i32, %arg1: memref<1x196x800xbf16, #tpu.memory_space<vmem>>, %arg2: memref<800x64xbf16, #tpu.memory_space<vmem>>, %arg3: memref<1x64xf32, #tpu.memory_space<vmem>>, %arg4: memref<1x49x64xbf16, #tpu.memory_space<vmem>>, %arg5: memref<196x64xf32, #tpu.memory_space<vmem>>) attributes {dimension_semantics = [#tpu.dimension_semantics<parallel>], iteration_bounds = array<i64: 2>, scalar_prefetch = 0 : i64, scratch_operands = 1 : i64, tpu.core_type = #tpu.core_type<tc>, window_params = [{transform_indices = @transform_0, window_bounds = array<i64: 1, 196, 800>}, {pipeline_mode = #tpu.pipeline_mode<synchronous>, transform_indices = @transform_1, window_bounds = array<i64: 800, 64>}, {pipeline_mode = #tpu.pipeline_mode<synchronous>, transform_indices = @transform_2, window_bounds = array<i64: 1, 64>}, {transform_indices = @transform_3, window_bounds = array<i64: 1, 49, 64>}]} {
    %c0 = arith.constant 0 : index
    %c0_0 = arith.constant 0 : index
    %c0_1 = arith.constant 0 : index
    %0 = vector.load %arg1[%c0, %c0_0, %c0_1] : memref<1x196x800xbf16, #tpu.memory_space<vmem>>, vector<1x196x800xbf16>
    %1 = vector.shape_cast %0 : vector<1x196x800xbf16> to vector<196x800xbf16>
    %c0_2 = arith.constant 0 : index
    %c0_3 = arith.constant 0 : index
    %2 = vector.load %arg2[%c0_2, %c0_3] : memref<800x64xbf16, #tpu.memory_space<vmem>>, vector<800x64xbf16>
    %cst = arith.constant dense<0.000000e+00> : vector<196x64xf32>
    %3 = tpu.matmul %1, %2, %cst {dimension_numbers = #tpu.dot_dimension_numbers<[1], [0], [0], [1], [0, 0, 1, 1], [], []>} : vector<196x800xbf16>, vector<800x64xbf16>, vector<196x64xf32> -> vector<196x64xf32>
    %c0_4 = arith.constant 0 : index
    %c0_5 = arith.constant 0 : index
    %4 = vector.load %arg3[%c0_4, %c0_5] : memref<1x64xf32, #tpu.memory_space<vmem>>, vector<1x64xf32>
    %5 = vector.broadcast %4 : vector<1x64xf32> to vector<196x64xf32>
    %6 = arith.addf %3, %5 : vector<196x64xf32>
    %cst_6 = arith.constant 0.000000e+00 : f32
    %7 = vector.broadcast %cst_6 : f32 to vector<196x64xf32>
    %8 = arith.cmpf oge, %6, %7 : vector<196x64xf32>
    %cst_7 = arith.constant 2.000000e-01 : f32
    %9 = vector.broadcast %cst_7 : f32 to vector<196x64xf32>
    %10 = arith.mulf %9, %6 : vector<196x64xf32>
    %11 = arith.select %8, %6, %10 : vector<196x64xi1>, vector<196x64xf32>
    %c0_8 = arith.constant 0 : index
    %c0_9 = arith.constant 0 : index
    %12 = vector.load %arg5[%c0_8, %c0_9] : memref<196x64xf32, #tpu.memory_space<vmem>>, vector<196x64xf32>
    tpu.vector_store %arg5[%c0_8, %c0_9], %11 {strides = array<i32>} : memref<196x64xf32, #tpu.memory_space<vmem>>, vector<196x64xf32>,
    %c0_10 = arith.constant 0 : index
    %c0_11 = arith.constant 0 : index
    %13 = vector.load %arg5[%c0_10, %c0_11] : memref<196x64xf32, #tpu.memory_space<vmem>>, vector<49x64xf32>
    %c49 = arith.constant 49 : index
    %c0_12 = arith.constant 0 : index
    %14 = vector.load %arg5[%c49, %c0_12] : memref<196x64xf32, #tpu.memory_space<vmem>>, vector<49x64xf32>
    %15 = arith.addf %13, %14 : vector<49x64xf32>
    %c98 = arith.constant 98 : index
    %c0_13 = arith.constant 0 : index
    %16 = vector.load %arg5[%c98, %c0_13] : memref<196x64xf32, #tpu.memory_space<vmem>>, vector<49x64xf32>
    %17 = arith.addf %15, %16 : vector<49x64xf32>
    %c147 = arith.constant 147 : index
    %c0_14 = arith.constant 0 : index
    %18 = vector.load %arg5[%c147, %c0_14] : memref<196x64xf32, #tpu.memory_space<vmem>>, vector<49x64xf32>
    %19 = arith.addf %17, %18 : vector<49x64xf32>
    %cst_15 = arith.constant 2.500000e-01 : f32
    %20 = vector.broadcast %cst_15 : f32 to vector<49x64xf32>
    %21 = arith.mulf %20, %19 : vector<49x64xf32>
    %22 = arith.truncf %21 : vector<49x64xf32> to vector<49x64xbf16>
    %c0_16 = arith.constant 0 : index
    %c0_17 = arith.constant 0 : index
    %c0_18 = arith.constant 0 : index
    %23 = vector.load %arg4[%c0_16, %c0_17, %c0_18] : memref<1x49x64xbf16, #tpu.memory_space<vmem>>, vector<1x49x64xbf16>
    %24 = vector.shape_cast %23 : vector<1x49x64xbf16> to vector<49x64xbf16>
    %25 = vector.shape_cast %22 : vector<49x64xbf16> to vector<1x49x64xbf16>
    tpu.vector_store %arg4[%c0_16, %c0_17, %c0_18], %25 {strides = array<i32>} : memref<1x49x64xbf16, #tpu.memory_space<vmem>>, vector<1x49x64xbf16>,
    return
  }
  func.func @transform_0(%arg0: i32) -> (i32, i32, i32) {
    %c0_i32 = arith.constant 0 : i32
    %c0_i32_0 = arith.constant 0 : i32
    %c0_i32_1 = arith.constant 0 : i32
    return %arg0, %c0_i32, %c0_i32_0 : i32, i32, i32
  }
  func.func @transform_1(%arg0: i32) -> (i32, i32) {
    %c0_i32 = arith.constant 0 : i32
    %c0_i32_0 = arith.constant 0 : i32
    %c0_i32_1 = arith.constant 0 : i32
    return %c0_i32, %c0_i32_0 : i32, i32
  }
  func.func @transform_2(%arg0: i32) -> (i32, i32) {
    %c0_i32 = arith.constant 0 : i32
    %c0_i32_0 = arith.constant 0 : i32
    %c0_i32_1 = arith.constant 0 : i32
    return %c0_i32, %c0_i32_0 : i32, i32
  }
  func.func @transform_3(%arg0: i32) -> (i32, i32, i32) {
    %c0_i32 = arith.constant 0 : i32
    %c0_i32_0 = arith.constant 0 : i32
    %c0_i32_1 = arith.constant 0 : i32
    return %arg0, %c0_i32, %c0_i32_0 : i32, i32, i32
  }
}

module attributes {stable_mosaic.version = 11 : i64} {
  func.func @_fc_head_kernel(%arg0: i32, %arg1: i32, %arg2: memref<2x640xbf16, #tpu.memory_space<vmem>>, %arg3: memref<640x1024xbf16, #tpu.memory_space<vmem>>, %arg4: memref<1x1024xf32, #tpu.memory_space<vmem>>, %arg5: memref<1024x1xbf16, #tpu.memory_space<vmem>>, %arg6: memref<1x1xf32, #tpu.memory_space<vmem>>, %arg7: memref<2x1xf32, #tpu.memory_space<vmem>>, %arg8: memref<2x1024xf32, #tpu.memory_space<vmem>>) attributes {dimension_semantics = [#tpu.dimension_semantics<parallel>, #tpu.dimension_semantics<arbitrary>], iteration_bounds = array<i64: 1, 5>, scalar_prefetch = 0 : i64, scratch_operands = 1 : i64, tpu.core_type = #tpu.core_type<tc>, window_params = [{transform_indices = @transform_0, window_bounds = array<i64: 2, 640>}, {transform_indices = @transform_1, window_bounds = array<i64: 640, 1024>}, {pipeline_mode = #tpu.pipeline_mode<synchronous>, transform_indices = @transform_2, window_bounds = array<i64: 1, 1024>}, {pipeline_mode = #tpu.pipeline_mode<synchronous>, transform_indices = @transform_3, window_bounds = array<i64: 1024, 1>}, {pipeline_mode = #tpu.pipeline_mode<synchronous>, transform_indices = @transform_4, window_bounds = array<i64: 1, 1>}, {transform_indices = @transform_5, window_bounds = array<i64: 2, 1>}]} {
    %c0_i32 = arith.constant 0 : i32
    %0 = arith.cmpi eq, %arg1, %c0_i32 : i32
    %1 = arith.extui %0 : i1 to i32
    %c0_i32_0 = arith.constant 0 : i32
    %2 = arith.cmpi ne, %1, %c0_i32_0 : i32
    scf.if %2 {
      %cst_9 = arith.constant 0.000000e+00 : f32
      %12 = vector.broadcast %cst_9 : f32 to vector<2x1024xf32>
      %c0_10 = arith.constant 0 : index
      %c0_11 = arith.constant 0 : index
      %13 = vector.load %arg8[%c0_10, %c0_11] : memref<2x1024xf32, #tpu.memory_space<vmem>>, vector<2x1024xf32>
      tpu.vector_store %arg8[%c0_10, %c0_11], %12 {strides = array<i32>} : memref<2x1024xf32, #tpu.memory_space<vmem>>, vector<2x1024xf32>,
    } else {
    }
    %c0 = arith.constant 0 : index
    %c0_1 = arith.constant 0 : index
    %3 = vector.load %arg8[%c0, %c0_1] : memref<2x1024xf32, #tpu.memory_space<vmem>>, vector<2x1024xf32>
    %c0_2 = arith.constant 0 : index
    %c0_3 = arith.constant 0 : index
    %4 = vector.load %arg2[%c0_2, %c0_3] : memref<2x640xbf16, #tpu.memory_space<vmem>>, vector<2x640xbf16>
    %c0_4 = arith.constant 0 : index
    %c0_5 = arith.constant 0 : index
    %5 = vector.load %arg3[%c0_4, %c0_5] : memref<640x1024xbf16, #tpu.memory_space<vmem>>, vector<640x1024xbf16>
    %cst = arith.constant dense<0.000000e+00> : vector<2x1024xf32>
    %6 = tpu.matmul %4, %5, %cst {dimension_numbers = #tpu.dot_dimension_numbers<[1], [0], [0], [1], [0, 0, 1, 1], [], []>} : vector<2x640xbf16>, vector<640x1024xbf16>, vector<2x1024xf32> -> vector<2x1024xf32>
    %7 = arith.addf %3, %6 : vector<2x1024xf32>
    %c0_6 = arith.constant 0 : index
    %c0_7 = arith.constant 0 : index
    %8 = vector.load %arg8[%c0_6, %c0_7] : memref<2x1024xf32, #tpu.memory_space<vmem>>, vector<2x1024xf32>
    tpu.vector_store %arg8[%c0_6, %c0_7], %7 {strides = array<i32>} : memref<2x1024xf32, #tpu.memory_space<vmem>>, vector<2x1024xf32>,
    %c4_i32 = arith.constant 4 : i32
    %9 = arith.cmpi eq, %arg1, %c4_i32 : i32
    %10 = arith.extui %9 : i1 to i32
    %c0_i32_8 = arith.constant 0 : i32
    %11 = arith.cmpi ne, %10, %c0_i32_8 : i32
    scf.if %11 {
      %c0_9 = arith.constant 0 : index
      %c0_10 = arith.constant 0 : index
      %12 = vector.load %arg8[%c0_9, %c0_10] : memref<2x1024xf32, #tpu.memory_space<vmem>>, vector<2x1024xf32>
      %c0_11 = arith.constant 0 : index
      %c0_12 = arith.constant 0 : index
      %13 = vector.load %arg4[%c0_11, %c0_12] : memref<1x1024xf32, #tpu.memory_space<vmem>>, vector<1x1024xf32>
      %14 = vector.broadcast %13 : vector<1x1024xf32> to vector<2x1024xf32>
      %15 = arith.addf %12, %14 : vector<2x1024xf32>
      %cst_13 = arith.constant 0.000000e+00 : f32
      %16 = vector.broadcast %cst_13 : f32 to vector<2x1024xf32>
      %17 = arith.cmpf oge, %15, %16 : vector<2x1024xf32>
      %cst_14 = arith.constant 2.000000e-01 : f32
      %18 = vector.broadcast %cst_14 : f32 to vector<2x1024xf32>
      %19 = arith.mulf %18, %15 : vector<2x1024xf32>
      %20 = arith.select %17, %15, %19 : vector<2x1024xi1>, vector<2x1024xf32>
      %21 = arith.truncf %20 : vector<2x1024xf32> to vector<2x1024xbf16>
      %c0_15 = arith.constant 0 : index
      %c0_16 = arith.constant 0 : index
      %22 = vector.load %arg5[%c0_15, %c0_16] : memref<1024x1xbf16, #tpu.memory_space<vmem>>, vector<1024x1xbf16>
      %cst_17 = arith.constant dense<0.000000e+00> : vector<2x1xf32>
      %23 = tpu.matmul %21, %22, %cst_17 {dimension_numbers = #tpu.dot_dimension_numbers<[1], [0], [0], [1], [0, 0, 1, 1], [], []>} : vector<2x1024xbf16>, vector<1024x1xbf16>, vector<2x1xf32> -> vector<2x1xf32>
      %c0_18 = arith.constant 0 : index
      %c0_19 = arith.constant 0 : index
      %24 = vector.load %arg6[%c0_18, %c0_19] : memref<1x1xf32, #tpu.memory_space<vmem>>, vector<1x1xf32>
      %25 = vector.broadcast %24 : vector<1x1xf32> to vector<2x1xf32>
      %26 = arith.addf %23, %25 : vector<2x1xf32>
      %27 = math.absf %26 : vector<2x1xf32>
      %cst_20 = arith.constant 0.000000e+00 : f32
      %28 = vector.broadcast %cst_20 : f32 to vector<2x1xf32>
      %29 = arith.subf %28, %27 : vector<2x1xf32>
      %30 = math.exp %29 : vector<2x1xf32>
      %cst_21 = arith.constant 0.000000e+00 : f32
      %31 = vector.broadcast %cst_21 : f32 to vector<2x1xf32>
      %32 = arith.cmpf oge, %26, %31 : vector<2x1xf32>
      %cst_22 = arith.constant 1.000000e+00 : f32
      %33 = vector.broadcast %cst_22 : f32 to vector<2x1xf32>
      %34 = arith.addf %33, %30 : vector<2x1xf32>
      %cst_23 = arith.constant 1.000000e+00 : f32
      %35 = vector.broadcast %cst_23 : f32 to vector<2x1xf32>
      %36 = arith.divf %35, %34 : vector<2x1xf32>
      %cst_24 = arith.constant 1.000000e+00 : f32
      %37 = vector.broadcast %cst_24 : f32 to vector<2x1xf32>
      %38 = arith.addf %37, %30 : vector<2x1xf32>
      %39 = arith.divf %30, %38 : vector<2x1xf32>
      %40 = arith.select %32, %36, %39 : vector<2x1xi1>, vector<2x1xf32>
      %c0_25 = arith.constant 0 : index
      %c0_26 = arith.constant 0 : index
      %41 = vector.load %arg7[%c0_25, %c0_26] : memref<2x1xf32, #tpu.memory_space<vmem>>, vector<2x1xf32>
      tpu.vector_store %arg7[%c0_25, %c0_26], %40 {strides = array<i32>} : memref<2x1xf32, #tpu.memory_space<vmem>>, vector<2x1xf32>,
    } else {
    }
    return
  }
  func.func @transform_0(%arg0: i32, %arg1: i32) -> (i32, i32) {
    %c0_i32 = arith.constant 0 : i32
    return %arg0, %arg1 : i32, i32
  }
  func.func @transform_1(%arg0: i32, %arg1: i32) -> (i32, i32) {
    %c0_i32 = arith.constant 0 : i32
    %c0_i32_0 = arith.constant 0 : i32
    return %arg1, %c0_i32 : i32, i32
  }
  func.func @transform_2(%arg0: i32, %arg1: i32) -> (i32, i32) {
    %c0_i32 = arith.constant 0 : i32
    %c0_i32_0 = arith.constant 0 : i32
    %c0_i32_1 = arith.constant 0 : i32
    return %c0_i32, %c0_i32_0 : i32, i32
  }
  func.func @transform_3(%arg0: i32, %arg1: i32) -> (i32, i32) {
    %c0_i32 = arith.constant 0 : i32
    %c0_i32_0 = arith.constant 0 : i32
    %c0_i32_1 = arith.constant 0 : i32
    return %c0_i32, %c0_i32_0 : i32, i32
  }
  func.func @transform_4(%arg0: i32, %arg1: i32) -> (i32, i32) {
    %c0_i32 = arith.constant 0 : i32
    %c0_i32_0 = arith.constant 0 : i32
    %c0_i32_1 = arith.constant 0 : i32
    return %c0_i32, %c0_i32_0 : i32, i32
  }
  func.func @transform_5(%arg0: i32, %arg1: i32) -> (i32, i32) {
    %c0_i32 = arith.constant 0 : i32
    %c0_i32_0 = arith.constant 0 : i32
    return %arg0, %c0_i32 : i32, i32
  }
}

</mosaic_0001>

<llo_original>
// kernel: discrimination_net_forward.3
$region0: #{discrimination_net_forward.3}
  #allocation0 [shape = 'u32[]', space=smem, size = 0x4, offset = 0x4, fixed_abs, tag = 'smem constant byte address 0x4 - core index']
  #allocation1 [shape = 'u32[144,128]{1,0:T(1,128)}', space=vmem, size = 0x12000, scoped, tag = 'internal scratch']
  #allocation2 [shape = 'f32[784,32]{1,0:T(8,128)}', space=vmem, size = 0x62000, scoped, tag = 'scratch operand']
  %s0 = inlined_call_operand.vmem [shape: bf16[2,784,25], index: 0, kind: input, shape index: {}]
  %s1 = inlined_call_operand.vmem [shape: bf16[25,32], index: 1, kind: input, shape index: {}]
  %s2 = inlined_call_operand.vmem [shape: f32[1,32], index: 2, kind: input, shape index: {}]
  %s3 = inlined_call_operand.vmem [shape: bf16[2,196,32], index: 3, kind: output, shape index: {}]
  %s4 = sld [smem:[#allocation0]]
  $region45: #{discrimination_net_forward.3} parent=0
    _
  %s6 = ssub.s32 1, %s4
  %s7 = scalar_select 0, %s6, %s4
  loop: start=0, step=1, limit=4
  $region2: #{discrimination_net_forward.3} parent=0 // loop_pre_header
    _
  $region3: #{discrimination_net_forward.3} parent=0 // loop_header
    %s9 = sphi 0, %s13
    %p10 = scmp.ge.s32.totalorder %s9, 4
    %s19 = sphi 0, %s21
    %s22 = sphi 0, %s19
    %s23 = sphi 0, %s22
    %s39 = sphi 0, %s23
    %s43 = sphi 0, %s43
    %s45 = sphi 0, %s43
    %s46 = sphi 0, %s45
    %s60 = sphi 0, %s46
    %s64 = sphi 0, %s64
    %s66 = sphi 0, %s64
    %s67 = sphi 0, %s66
    %s81 = sphi 0, %s67
    %s87 = sphi 0, %s89
    %s90 = sphi 0, %s87
    %s91 = sphi 0, %s90
    %s107 = sphi 0, %s91
  $region4: #{discrimination_net_forward.3} parent=0 // loop_header_branch
    %12 = sbr.rel (%p10) target = $region8
  $region5: #{discrimination_net_forward.3} parent=0 // loop_body
    %s14 = ssub.s32 %s9, 1
    %s15 = ssub.s32 %s9, 2
    %s16 = sadd.s32 %s9, 1
    %s17 = ssub.s32 %s9, %s16
    %p18 = scmp.eq.s32.totalorder %s17, 0
    %s20 = sadd.s32 %s19, 1
    %s21 = scalar_select %p18, %s19, %s20
    %p24 = pneg %p18
    %p25 = scmp.eq.s32.totalorder %s9, 1
    %p26 = por %p24, %p25
    %p27 = scmp.ne.s32.totalorder %s19, %s22
    %p28 = scmp.eq.s32.totalorder %s9, 0
    %p29 = por %p27, %p28
    %p30 = scmp.ne.s32.totalorder %s19, %s22
    %p31 = scmp.eq.s32.totalorder %s14, 1
    %p32 = por %p30, %p31
    %p33 = scmp.ne.s32.totalorder %s22, %s23
    %p34 = scmp.eq.s32.totalorder %s14, 0
    %p35 = por %p33, %p34
    %p36 = scmp.ne.s32.totalorder %s22, %s23
    %p37 = scmp.eq.s32.totalorder %s15, 1
    %p38 = por %p36, %p37
    %p40 = scmp.ne.s32.totalorder %s23, %s39
    %p41 = scmp.eq.s32.totalorder %s15, 0
    %p42 = por %p40, %p41
    %s44 = sadd.s32 %s43, 1
    %p47 = scmp.eq.s32.totalorder %s9, 1
    %p48 = scmp.ne.s32.totalorder %s43, %s45
    %p49 = scmp.eq.s32.totalorder %s9, 0
    %p50 = por %p48, %p49
    %p51 = scmp.ne.s32.totalorder %s43, %s45
    %p52 = scmp.eq.s32.totalorder %s14, 1
    %p53 = por %p51, %p52
    %p54 = scmp.ne.s32.totalorder %s45, %s46
    %p55 = scmp.eq.s32.totalorder %s14, 0
    %p56 = por %p54, %p55
    %p57 = scmp.ne.s32.totalorder %s45, %s46
    %p58 = scmp.eq.s32.totalorder %s15, 1
    %p59 = por %p57, %p58
    %p61 = scmp.ne.s32.totalorder %s46, %s60
    %p62 = scmp.eq.s32.totalorder %s15, 0
    %p63 = por %p61, %p62
    %s65 = sadd.s32 %s64, 1
    %p68 = scmp.eq.s32.totalorder %s9, 1
    %p69 = scmp.ne.s32.totalorder %s64, %s66
    %p70 = scmp.eq.s32.totalorder %s9, 0
    %p71 = por %p69, %p70
    %p72 = scmp.ne.s32.totalorder %s64, %s66
    %p73 = scmp.eq.s32.totalorder %s14, 1
    %p74 = por %p72, %p73
    %p75 = scmp.ne.s32.totalorder %s66, %s67
    %p76 = scmp.eq.s32.totalorder %s14, 0
    %p77 = por %p75, %p76
    %p78 = scmp.ne.s32.totalorder %s66, %s67
    %p79 = scmp.eq.s32.totalorder %s15, 1
    %p80 = por %p78, %p79
    %p82 = scmp.ne.s32.totalorder %s67, %s81
    %p83 = scmp.eq.s32.totalorder %s15, 0
    %p84 = por %p82, %p83
    %s85 = ssub.s32 %s9, %s16
    %p86 = scmp.eq.s32.totalorder %s85, 0
    %s88 = sadd.s32 %s87, 1
    %s89 = scalar_select %p86, %s87, %s88
    %p92 = pneg %p86
    %p93 = scmp.eq.s32.totalorder %s9, 1
    %p94 = por %p92, %p93
    %p95 = scmp.ne.s32.totalorder %s87, %s90
    %p96 = scmp.eq.s32.totalorder %s9, 0
    %p97 = por %p95, %p96
    %p98 = scmp.ne.s32.totalorder %s87, %s90
    %p99 = scmp.eq.s32.totalorder %s14, 1
    %p100 = por %p98, %p99
    %p101 = scmp.ne.s32.totalorder %s90, %s91
    %p102 = scmp.eq.s32.totalorder %s14, 0
    %p103 = por %p101, %p102
    %p104 = scmp.ne.s32.totalorder %s90, %s91
    %p105 = scmp.eq.s32.totalorder %s15, 1
    %p106 = por %p104, %p105
    %p108 = scmp.ne.s32.totalorder %s91, %s107
    %p109 = scmp.eq.s32.totalorder %s15, 0
    %p110 = por %p108, %p109
    %p111 = scmp.le.s32.totalorder 1, %s9
    %p112 = scmp.lt.s32.totalorder %s9, 3
    %p113 = pnand %p111, %p112
    %p114 = pneg %p113
    // Predicated region
    $region9: #{discrimination_net_forward.3} parent=5 // pred_check
      _
    $region10: #{discrimination_net_forward.3} parent=5 // pred_check_branch
      %116 = sbr.rel (%p113) target = $region12
    $region11: #{discrimination_net_forward.3} parent=5 // pred_region
      %s117 = ssub.s32 %s9, 1
      // Predicated region
      $region13: #{discrimination_net_forward.3} parent=11 // pred_check
        %p118 = pneg %p56
      $region14: #{discrimination_net_forward.3} parent=11 // pred_check_branch
        %120 = sbr.rel (%p118) target = $region16
      $region15: #{discrimination_net_forward.3} parent=11 // pred_region
        _
      $region16: #{discrimination_net_forward.3} parent=11 // pred_fallthru
        _
      // Predicated region
      $region17: #{discrimination_net_forward.3} parent=11 // pred_check
        %p121 = pneg %p77
      $region18: #{discrimination_net_forward.3} parent=11 // pred_check_branch
        %123 = sbr.rel (%p121) target = $region20
      $region19: #{discrimination_net_forward.3} parent=11 // pred_region
        _
      $region20: #{discrimination_net_forward.3} parent=11 // pred_fallthru
        _
    $region12: #{discrimination_net_forward.3} parent=5 // pred_fallthru
      _
    %p124 = scmp.lt.s32.totalorder %s9, 2
    // Predicated region
    $region21: #{discrimination_net_forward.3} parent=5 // pred_check
      %p125 = pneg %p124
    $region22: #{discrimination_net_forward.3} parent=5 // pred_check_branch
      %127 = sbr.rel (%p125) target = $region24
    $region23: #{discrimination_net_forward.3} parent=5 // pred_region
      // Predicated region
      $region25: #{discrimination_net_forward.3} parent=23 // pred_check
        %p128 = pneg %p29
      $region26: #{discrimination_net_forward.3} parent=23 // pred_check_branch
        %130 = sbr.rel (%p128) target = $region28
      $region27: #{discrimination_net_forward.3} parent=23 // pred_region
        %p131 = scmp.lt.s32.totalorder %s9, 1
        %s132 = scalar_select %p131, %s9, 1
        %s133 = smul.addr %s132, 98
        %s134 = smul.addr %s133, 4
        %s135 = scalar_lea.vmem %s0, %s134
      $region28: #{discrimination_net_forward.3} parent=23 // pred_fallthru
        _
    $region24: #{discrimination_net_forward.3} parent=5 // pred_fallthru
      _
    %p136 = scmp.le.s32.totalorder 1, %s9
    %p137 = scmp.lt.s32.totalorder %s9, 3
    %p138 = pnand %p136, %p137
    %p139 = pneg %p138
    // Predicated region
    $region29: #{discrimination_net_forward.3} parent=5 // pred_check
      _
    $region30: #{discrimination_net_forward.3} parent=5 // pred_check_branch
      %141 = sbr.rel (%p138) target = $region32
    $region31: #{discrimination_net_forward.3} parent=5 // pred_region
      %s142 = ssub.s32 %s9, 1
      %p143 = scmp.lt.s32.totalorder %s14, 1
      %s144 = scalar_select %p143, %s14, 1
      %s145 = smul.addr %s144, 98
      %s146 = smul.addr %s145, 4
      %s147 = scalar_lea.vmem %s0, %s146
      %p148 = pneg %p35
      %p149 = pneg %p32
      %p150 = pneg %p56
      %p151 = pneg %p53
      %p152 = pneg %p77
      %p153 = pneg %p74
      %p154 = pneg %p103
      %p155 = pneg %p100
      %p156 = scmp.lt.s32.totalorder %s14, 1
      %s157 = scalar_select %p156, %s14, 1
      %s158 = smul.addr %s157, 25
      %s159 = smul.addr %s158, 4
      %s160 = scalar_lea.vmem %s3, %s159
      %p161 = scmp.lt.s32.totalorder %s14, 1
      %s162 = scalar_select %p161, %s14, 1
      %s163 = smul.addr %s162, 98
      %s164 = smul.addr %s163, 4
      %s165 = scalar_lea.vmem %s0, %s164
      %p166 = scmp.lt.s32.totalorder %s14, 1
      %s167 = scalar_select %p166, %s14, 1
      %s168 = smul.addr %s167, 25
      %s169 = smul.addr %s168, 4
      %s170 = scalar_lea.vmem %s3, %s169
      %v172 = vld [vmem:[%s165] sm:$0xf]
      %v173 = vld [vmem:[%s165 + $0x4] sm:$0xf]
      %v174 = vld [vmem:[%s165 + $0x8] sm:$0xf]
      %v175 = vld [vmem:[%s165 + $0xc] sm:$0xf]
      %v176 = vld [vmem:[%s165 + $0x10] sm:$0xf]
      %v177 = vld [vmem:[%s165 + $0x14] sm:$0xf]
      %v178 = vld [vmem:[%s165 + $0x18] sm:$0xf]
      %v179 = vld [vmem:[%s165 + $0x1c] sm:$0xf]
      %v180 = vld [vmem:[%s165 + $0x20] sm:$0xf]
      %v181 = vld [vmem:[%s165 + $0x24] sm:$0xf]
      %v182 = vld [vmem:[%s165 + $0x28] sm:$0xf]
      %v183 = vld [vmem:[%s165 + $0x2c] sm:$0xf]
      %v184 = vld [vmem:[%s165 + $0x30] sm:$0xf]
      %v185 = vld [vmem:[%s165 + $0x34] sm:$0xf]
      %v186 = vld [vmem:[%s165 + $0x38] sm:$0xf]
      %v187 = vld [vmem:[%s165 + $0x3c] sm:$0xf]
      %v188 = vld [vmem:[%s165 + $0x40] sm:$0xf]
      %v189 = vld [vmem:[%s165 + $0x44] sm:$0xf]
      %v190 = vld [vmem:[%s165 + $0x48] sm:$0xf]
      %v191 = vld [vmem:[%s165 + $0x4c] sm:$0xf]
      %v192 = vld [vmem:[%s165 + $0x50] sm:$0xf]
      %v193 = vld [vmem:[%s165 + $0x54] sm:$0xf]
      %v194 = vld [vmem:[%s165 + $0x58] sm:$0xf]
      %v195 = vld [vmem:[%s165 + $0x5c] sm:$0xf]
      %v196 = vld [vmem:[%s165 + $0x60] sm:$0xf]
      %v197 = vld [vmem:[%s165 + $0x64] sm:$0xf]
      %v198 = vld [vmem:[%s165 + $0x68] sm:$0xf]
      %v199 = vld [vmem:[%s165 + $0x6c] sm:$0xf]
      %v200 = vld [vmem:[%s165 + $0x70] sm:$0xf]
      %v201 = vld [vmem:[%s165 + $0x74] sm:$0xf]
      %v202 = vld [vmem:[%s165 + $0x78] sm:$0xf]
      %v203 = vld [vmem:[%s165 + $0x7c] sm:$0xf]
      %v204 = vld [vmem:[%s165 + $0x80] sm:$0xf]
      %v205 = vld [vmem:[%s165 + $0x84] sm:$0xf]
      %v206 = vld [vmem:[%s165 + $0x88] sm:$0xf]
      %v207 = vld [vmem:[%s165 + $0x8c] sm:$0xf]
      %v208 = vld [vmem:[%s165 + $0x90] sm:$0xf]
      %v209 = vld [vmem:[%s165 + $0x94] sm:$0xf]
      %v210 = vld [vmem:[%s165 + $0x98] sm:$0xf]
      %v211 = vld [vmem:[%s165 + $0x9c] sm:$0xf]
      %v212 = vld [vmem:[%s165 + $0xa0] sm:$0xf]
      %v213 = vld [vmem:[%s165 + $0xa4] sm:$0xf]
      %v214 = vld [vmem:[%s165 + $0xa8] sm:$0xf]
      %v215 = vld [vmem:[%s165 + $0xac] sm:$0xf]
      %v216 = vld [vmem:[%s165 + $0xb0] sm:$0xf]
      %v217 = vld [vmem:[%s165 + $0xb4] sm:$0xf]
      %v218 = vld [vmem:[%s165 + $0xb8] sm:$0xf]
      %v219 = vld [vmem:[%s165 + $0xbc] sm:$0xf]
      %v220 = vld [vmem:[%s165 + $0xc0] sm:$0xf]
      %v221 = vld [vmem:[%s165 + $0xc4] sm:$0xf]
      %v222 = vld [vmem:[%s165 + $0xc8] sm:$0xf]
      %v223 = vld [vmem:[%s165 + $0xcc] sm:$0xf]
      %v224 = vld [vmem:[%s165 + $0xd0] sm:$0xf]
      %v225 = vld [vmem:[%s165 + $0xd4] sm:$0xf]
      %v226 = vld [vmem:[%s165 + $0xd8] sm:$0xf]
      %v227 = vld [vmem:[%s165 + $0xdc] sm:$0xf]
      %v228 = vld [vmem:[%s165 + $0xe0] sm:$0xf]
      %v229 = vld [vmem:[%s165 + $0xe4] sm:$0xf]
      %v230 = vld [vmem:[%s165 + $0xe8] sm:$0xf]
      %v231 = vld [vmem:[%s165 + $0xec] sm:$0xf]
      %v232 = vld [vmem:[%s165 + $0xf0] sm:$0xf]
      %v233 = vld [vmem:[%s165 + $0xf4] sm:$0xf]
      %v234 = vld [vmem:[%s165 + $0xf8] sm:$0xf]
      %v235 = vld [vmem:[%s165 + $0xfc] sm:$0xf]
      %v236 = vld [vmem:[%s165 + $0x100] sm:$0xf]
      %v237 = vld [vmem:[%s165 + $0x104] sm:$0xf]
      %v238 = vld [vmem:[%s165 + $0x108] sm:$0xf]
      %v239 = vld [vmem:[%s165 + $0x10c] sm:$0xf]
      %v240 = vld [vmem:[%s165 + $0x110] sm:$0xf]
      %v241 = vld [vmem:[%s165 + $0x114] sm:$0xf]
      %v242 = vld [vmem:[%s165 + $0x118] sm:$0xf]
      %v243 = vld [vmem:[%s165 + $0x11c] sm:$0xf]
      %v244 = vld [vmem:[%s165 + $0x120] sm:$0xf]
      %v245 = vld [vmem:[%s165 + $0x124] sm:$0xf]
      %v246 = vld [vmem:[%s165 + $0x128] sm:$0xf]
      %v247 = vld [vmem:[%s165 + $0x12c] sm:$0xf]
      %v248 = vld [vmem:[%s165 + $0x130] sm:$0xf]
      %v249 = vld [vmem:[%s165 + $0x134] sm:$0xf]
      %v250 = vld [vmem:[%s165 + $0x138] sm:$0xf]
      %v251 = vld [vmem:[%s165 + $0x13c] sm:$0xf]
      %v252 = vld [vmem:[%s165 + $0x140] sm:$0xf]
      %v253 = vld [vmem:[%s165 + $0x144] sm:$0xf]
      %v254 = vld [vmem:[%s165 + $0x148] sm:$0xf]
      %v255 = vld [vmem:[%s165 + $0x14c] sm:$0xf]
      %v256 = vld [vmem:[%s165 + $0x150] sm:$0xf]
      %v257 = vld [vmem:[%s165 + $0x154] sm:$0xf]
      %v258 = vld [vmem:[%s165 + $0x158] sm:$0xf]
      %v259 = vld [vmem:[%s165 + $0x15c] sm:$0xf]
      %v260 = vld [vmem:[%s165 + $0x160] sm:$0xf]
      %v261 = vld [vmem:[%s165 + $0x164] sm:$0xf]
      %v262 = vld [vmem:[%s165 + $0x168] sm:$0xf]
      %v263 = vld [vmem:[%s165 + $0x16c] sm:$0xf]
      %v264 = vld [vmem:[%s165 + $0x170] sm:$0xf]
      %v265 = vld [vmem:[%s165 + $0x174] sm:$0xf]
      %v266 = vld [vmem:[%s165 + $0x178] sm:$0xf]
      %v267 = vld [vmem:[%s165 + $0x17c] sm:$0xf]
      %v268 = vld [vmem:[%s165 + $0x180] sm:$0xf]
      %v269 = vld [vmem:[%s165 + $0x184] sm:$0xf]
      %v270 = vld [vmem:[%s1] sm:$0xf]
      %v271 = vld [vmem:[%s1 + $0x4] sm:$0xf]
      %v272 = vld [vmem:[%s1 + $0x8] sm:$0xf]
      %v273 = vld [vmem:[%s1 + $0xc] sm:$0x1]
      %v274 = vld [vmem:[%s2] sm:$0x1]
      %v276 = vlaneseq
      %v277 = vshrl.u32 %v276, 7
      %v278 = vsub.s32 0, %v277
      %v279 = vrot.slane %v274, %v278
      %v379 = vunpack.c.l.b16 %v172
      %v380 = vunpack.c.l.b16 %v173
      %v381 = vunpack.c.l.b16 %v174
      %v382 = vunpack.c.l.b16 %v175
      %v383 = vunpack.c.l.b16 %v176
      %v384 = vunpack.c.l.b16 %v177
      %v385 = vunpack.c.l.b16 %v178
      %v386 = vunpack.c.l.b16 %v179
      %v387 = vunpack.c.l.b16 %v180
      %v388 = vunpack.c.l.b16 %v181
      %v389 = vunpack.c.l.b16 %v182
      %v390 = vunpack.c.l.b16 %v183
      %v391 = vunpack.c.l.b16 %v184
      %v392 = vunpack.c.l.b16 %v185
      %v393 = vunpack.c.l.b16 %v186
      %v394 = vunpack.c.l.b16 %v187
      %v395 = vunpack.c.l.b16 %v188
      %v396 = vunpack.c.l.b16 %v189
      %v397 = vunpack.c.l.b16 %v190
      %v398 = vunpack.c.l.b16 %v191
      %v399 = vunpack.c.l.b16 %v192
      %v400 = vunpack.c.l.b16 %v193
      %v401 = vunpack.c.l.b16 %v194
      %v402 = vunpack.c.l.b16 %v195
      %v403 = vunpack.c.l.b16 %v196
      %v404 = vunpack.c.l.b16 %v197
      %v405 = vunpack.c.l.b16 %v198
      %v406 = vunpack.c.l.b16 %v199
      %v407 = vunpack.c.l.b16 %v200
      %v408 = vunpack.c.l.b16 %v201
      %v409 = vunpack.c.l.b16 %v202
      %v410 = vunpack.c.l.b16 %v203
      %v411 = vunpack.c.l.b16 %v204
      %v412 = vunpack.c.l.b16 %v205
      %v413 = vunpack.c.l.b16 %v206
      %v414 = vunpack.c.l.b16 %v207
      %v415 = vunpack.c.l.b16 %v208
      %v416 = vunpack.c.l.b16 %v209
      %v417 = vunpack.c.l.b16 %v210
      %v418 = vunpack.c.l.b16 %v211
      %v419 = vunpack.c.l.b16 %v212
      %v420 = vunpack.c.l.b16 %v213
      %v421 = vunpack.c.l.b16 %v214
      %v422 = vunpack.c.l.b16 %v215
      %v423 = vunpack.c.l.b16 %v216
      %v424 = vunpack.c.l.b16 %v217
      %v425 = vunpack.c.l.b16 %v218
      %v426 = vunpack.c.l.b16 %v219
      %v427 = vunpack.c.l.b16 %v220
      %v428 = vunpack.c.l.b16 %v221
      %v429 = vunpack.c.l.b16 %v222
      %v430 = vunpack.c.l.b16 %v223
      %v431 = vunpack.c.l.b16 %v224
      %v432 = vunpack.c.l.b16 %v225
      %v433 = vunpack.c.l.b16 %v226
      %v434 = vunpack.c.l.b16 %v227
      %v435 = vunpack.c.l.b16 %v228
      %v436 = vunpack.c.l.b16 %v229
      %v437 = vunpack.c.l.b16 %v230
      %v438 = vunpack.c.l.b16 %v231
      %v439 = vunpack.c.l.b16 %v232
      %v440 = vunpack.c.l.b16 %v233
      %v441 = vunpack.c.l.b16 %v234
      %v442 = vunpack.c.l.b16 %v235
      %v443 = vunpack.c.l.b16 %v236
      %v444 = vunpack.c.l.b16 %v237
      %v445 = vunpack.c.l.b16 %v238
      %v446 = vunpack.c.l.b16 %v239
      %v447 = vunpack.c.l.b16 %v240
      %v448 = vunpack.c.l.b16 %v241
      %v449 = vunpack.c.l.b16 %v242
      %v450 = vunpack.c.l.b16 %v243
      %v451 = vunpack.c.l.b16 %v244
      %v452 = vunpack.c.l.b16 %v245
      %v453 = vunpack.c.l.b16 %v246
      %v454 = vunpack.c.l.b16 %v247
      %v455 = vunpack.c.l.b16 %v248
      %v456 = vunpack.c.l.b16 %v249
      %v457 = vunpack.c.l.b16 %v250
      %v458 = vunpack.c.l.b16 %v251
      %v459 = vunpack.c.l.b16 %v252
      %v460 = vunpack.c.l.b16 %v253
      %v461 = vunpack.c.l.b16 %v254
      %v462 = vunpack.c.l.b16 %v255
      %v463 = vunpack.c.l.b16 %v256
      %v464 = vunpack.c.l.b16 %v257
      %v465 = vunpack.c.l.b16 %v258
      %v466 = vunpack.c.l.b16 %v259
      %v467 = vunpack.c.l.b16 %v260
      %v468 = vunpack.c.l.b16 %v261
      %v469 = vunpack.c.l.b16 %v262
      %v470 = vunpack.c.l.b16 %v263
      %v471 = vunpack.c.l.b16 %v264
      %v472 = vunpack.c.l.b16 %v265
      %v473 = vunpack.c.l.b16 %v266
      %v474 = vunpack.c.l.b16 %v267
      %v475 = vunpack.c.l.b16 %v268
      %v476 = vunpack.c.l.b16 %v269
      %v477 = vpack.c.b16 %v380, %v379
      %v478 = vpack.c.b16 %v382, %v381
      %v479 = vpack.c.b16 %v384, %v383
      %v480 = vpack.c.b16 %v386, %v385
      %v481 = vpack.c.b16 %v388, %v387
      %v482 = vpack.c.b16 %v390, %v389
      %v483 = vpack.c.b16 %v392, %v391
      %v484 = vpack.c.b16 %v394, %v393
      %v485 = vpack.c.b16 %v396, %v395
      %v486 = vpack.c.b16 %v398, %v397
      %v487 = vpack.c.b16 %v400, %v399
      %v488 = vpack.c.b16 %v402, %v401
      %v489 = vpack.c.b16 %v404, %v403
      %v490 = vpack.c.b16 %v406, %v405
      %v491 = vpack.c.b16 %v408, %v407
      %v492 = vpack.c.b16 %v410, %v409
      %v493 = vpack.c.b16 %v412, %v411
      %v494 = vpack.c.b16 %v414, %v413
      %v495 = vpack.c.b16 %v416, %v415
      %v496 = vpack.c.b16 %v418, %v417
      %v497 = vpack.c.b16 %v420, %v419
      %v498 = vpack.c.b16 %v422, %v421
      %v499 = vpack.c.b16 %v424, %v423
      %v500 = vpack.c.b16 %v426, %v425
      %v501 = vpack.c.b16 %v428, %v427
      %v502 = vpack.c.b16 %v430, %v429
      %v503 = vpack.c.b16 %v432, %v431
      %v504 = vpack.c.b16 %v434, %v433
      %v505 = vpack.c.b16 %v436, %v435
      %v506 = vpack.c.b16 %v438, %v437
      %v507 = vpack.c.b16 %v440, %v439
      %v508 = vpack.c.b16 %v442, %v441
      %v509 = vpack.c.b16 %v444, %v443
      %v510 = vpack.c.b16 %v446, %v445
      %v511 = vpack.c.b16 %v448, %v447
      %v512 = vpack.c.b16 %v450, %v449
      %v513 = vpack.c.b16 %v452, %v451
      %v514 = vpack.c.b16 %v454, %v453
      %v515 = vpack.c.b16 %v456, %v455
      %v516 = vpack.c.b16 %v458, %v457
      %v517 = vpack.c.b16 %v460, %v459
      %v518 = vpack.c.b16 %v462, %v461
      %v519 = vpack.c.b16 %v464, %v463
      %v520 = vpack.c.b16 %v466, %v465
      %v521 = vpack.c.b16 %v468, %v467
      %v522 = vpack.c.b16 %v470, %v469
      %v523 = vpack.c.b16 %v472, %v471
      %v524 = vpack.c.b16 %v474, %v473
      %v525 = vpack.c.b16 %v476, %v475
      %v530 = vunpack.c.l.b16 %v270
      %v531 = vunpack.c.l.b16 %v271
      %v532 = vunpack.c.l.b16 %v272
      %v533 = vunpack.c.l.b16 %v273
      %v534 = vpack.c.b16 %v531, %v530
      %v535 = vpack.c.b16 %v533, %v532
      %vm537 = vcmask 203776
      %v539 = vsel %vm537, %v477, 0
      %v542 = vsel %vm537, %v478, 0
      %v545 = vsel %vm537, %v479, 0
      %v548 = vsel %vm537, %v480, 0
      %v551 = vsel %vm537, %v481, 0
      %v554 = vsel %vm537, %v482, 0
      %v557 = vsel %vm537, %v483, 0
      %v560 = vsel %vm537, %v484, 0
      %v563 = vsel %vm537, %v485, 0
      %v566 = vsel %vm537, %v486, 0
      %v569 = vsel %vm537, %v487, 0
      %v572 = vsel %vm537, %v488, 0
      %v575 = vsel %vm537, %v489, 0
      %v578 = vsel %vm537, %v490, 0
      %v581 = vsel %vm537, %v491, 0
      %v584 = vsel %vm537, %v492, 0
      %v587 = vsel %vm537, %v493, 0
      %v590 = vsel %vm537, %v494, 0
      %v593 = vsel %vm537, %v495, 0
      %v596 = vsel %vm537, %v496, 0
      %v599 = vsel %vm537, %v497, 0
      %v602 = vsel %vm537, %v498, 0
      %v605 = vsel %vm537, %v499, 0
      %v608 = vsel %vm537, %v500, 0
      %v611 = vsel %vm537, %v501, 0
      %v614 = vsel %vm537, %v502, 0
      %v617 = vsel %vm537, %v503, 0
      %v620 = vsel %vm537, %v504, 0
      %v623 = vsel %vm537, %v505, 0
      %v626 = vsel %vm537, %v506, 0
      %v629 = vsel %vm537, %v507, 0
      %v632 = vsel %vm537, %v508, 0
      %v635 = vsel %vm537, %v509, 0
      %v638 = vsel %vm537, %v510, 0
      %v641 = vsel %vm537, %v511, 0
      %v644 = vsel %vm537, %v512, 0
      %v647 = vsel %vm537, %v513, 0
      %v650 = vsel %vm537, %v514, 0
      %v653 = vsel %vm537, %v515, 0
      %v656 = vsel %vm537, %v516, 0
      %v659 = vsel %vm537, %v517, 0
      %v662 = vsel %vm537, %v518, 0
      %v665 = vsel %vm537, %v519, 0
      %v668 = vsel %vm537, %v520, 0
      %v671 = vsel %vm537, %v521, 0
      %v674 = vsel %vm537, %v522, 0
      %v677 = vsel %vm537, %v523, 0
      %v680 = vsel %vm537, %v524, 0
      %v683 = vsel %vm537, %v525, 0
      %vm685 = vcmask 1043456
      %vm686 = vcmask 1044480
      %v687 = vsel %vm685, 4294967295, 65535
      %v688 = vsel %vm686, %v687, 0
      %v690 = vand.u32 %v535, %v688
      %692 = vmatprep.subr.bf16.mxu0 0
      %693 = vmatpush1.bf16.msra.mxu0 %v534
      %694 = vmatprep.subr.bf16.mxu0 0
      %695 = vmatpush1.bf16.msra.mxu0 %v690
      %696 = vmatprep.subr.bf16.mxu0 0
      %697 = vmatpush1.bf16.msra.mxu0 0
      %698 = vmatprep.subr.bf16.mxu0 0
      %699 = vmatpush1.bf16.msra.mxu0 0
      %700 = vmatprep.subr.bf16.mxu0 0
      %701 = vmatpush1.bf16.msra.mxu0 0
      %702 = vmatprep.subr.bf16.mxu0 0
      %703 = vmatpush1.bf16.msra.mxu0 0
      %704 = vmatprep.subr.bf16.mxu0 0
      %705 = vmatpush1.bf16.msra.mxu0 0
      %706 = vmatprep.subr.bf16.mxu0 0
      %707 = vmatpush1.bf16.msra.mxu0 0
      %708 = vmatprep.subr.bf16.mxu0 0
      %709 = vmatpush1.bf16.msra.mxu0 0
      %710 = vmatprep.subr.bf16.mxu0 0
      %711 = vmatpush1.bf16.msra.mxu0 0
      %712 = vmatprep.subr.bf16.mxu0 0
      %713 = vmatpush1.bf16.msra.mxu0 0
      %714 = vmatprep.subr.bf16.mxu0 0
      %715 = vmatpush1.bf16.msra.mxu0 0
      %716 = vmatprep.subr.bf16.mxu0 0
      %717 = vmatpush1.bf16.msra.mxu0 0
      %718 = vmatprep.subr.bf16.mxu0 0
      %719 = vmatpush1.bf16.msra.mxu0 0
      %720 = vmatprep.subr.bf16.mxu0 0
      %721 = vmatpush1.bf16.msra.mxu0 0
      %722 = vmatprep.subr.bf16.mxu0 0
      %723 = vmatpush1.bf16.msra.mxu0 0
      %724 = vmatprep.mubr.bf16.mxu0 0
      %725 = vmatmul.mubr.bf16.gmra.mrb[0].mxu0 %v539
      %v726 = vpop.f32.mrb[0].mxu0
      %v727 = vadd.f32 %v279, %v726
      %v728 = vpop.f32.mrb[0].mxu0
      %v729 = vpop.f32.mrb[0].mxu0
      %v730 = vadd.f32 %v279, %v729
      %v731 = vpop.f32.mrb[0].mxu0
      %732 = vmatprep.mubr.bf16.mxu0 0
      %733 = vmatmul.mubr.bf16.gmra.mrb[0].mxu0 %v542
      %v734 = vpop.f32.mrb[0].mxu0
      %v735 = vadd.f32 %v279, %v734
      %v736 = vpop.f32.mrb[0].mxu0
      %v737 = vpop.f32.mrb[0].mxu0
      %v738 = vadd.f32 %v279, %v737
      %v739 = vpop.f32.mrb[0].mxu0
      %740 = vmatprep.mubr.bf16.mxu0 0
      %741 = vmatmul.mubr.bf16.gmra.mrb[0].mxu0 %v545
      %v742 = vpop.f32.mrb[0].mxu0
      %v743 = vadd.f32 %v279, %v742
      %v744 = vpop.f32.mrb[0].mxu0
      %v745 = vpop.f32.mrb[0].mxu0
      %v746 = vadd.f32 %v279, %v745
      %v747 = vpop.f32.mrb[0].mxu0
      %748 = vmatprep.mubr.bf16.mxu0 0
      %749 = vmatmul.mubr.bf16.gmra.mrb[0].mxu0 %v548
      %v750 = vpop.f32.mrb[0].mxu0
      %v751 = vadd.f32 %v279, %v750
      %v752 = vpop.f32.mrb[0].mxu0
      %v753 = vpop.f32.mrb[0].mxu0
      %v754 = vadd.f32 %v279, %v753
      %v755 = vpop.f32.mrb[0].mxu0
      %756 = vmatprep.mubr.bf16.mxu0 0
      %757 = vmatmul.mubr.bf16.gmra.mrb[0].mxu0 %v551
      %v758 = vpop.f32.mrb[0].mxu0
      %v759 = vadd.f32 %v279, %v758
      %v760 = vpop.f32.mrb[0].mxu0
      %v761 = vpop.f32.mrb[0].mxu0
      %v762 = vadd.f32 %v279, %v761
      %v763 = vpop.f32.mrb[0].mxu0
      %764 = vmatprep.mubr.bf16.mxu0 0
      %765 = vmatmul.mubr.bf16.gmra.mrb[0].mxu0 %v554
      %v766 = vpop.f32.mrb[0].mxu0
      %v767 = vadd.f32 %v279, %v766
      %v768 = vpop.f32.mrb[0].mxu0
      %v769 = vpop.f32.mrb[0].mxu0
      %v770 = vadd.f32 %v279, %v769
      %v771 = vpop.f32.mrb[0].mxu0
      %772 = vmatprep.mubr.bf16.mxu0 0
      %773 = vmatmul.mubr.bf16.gmra.mrb[0].mxu0 %v557
      %v774 = vpop.f32.mrb[0].mxu0
      %v775 = vadd.f32 %v279, %v774
      %v776 = vpop.f32.mrb[0].mxu0
      %v777 = vpop.f32.mrb[0].mxu0
      %v778 = vadd.f32 %v279, %v777
      %v779 = vpop.f32.mrb[0].mxu0
      %780 = vmatprep.mubr.bf16.mxu0 0
      %781 = vmatmul.mubr.bf16.gmra.mrb[0].mxu0 %v560
      %v782 = vpop.f32.mrb[0].mxu0
      %v783 = vadd.f32 %v279, %v782
      %v784 = vpop.f32.mrb[0].mxu0
      %v785 = vpop.f32.mrb[0].mxu0
      %v786 = vadd.f32 %v279, %v785
      %v787 = vpop.f32.mrb[0].mxu0
      %788 = vmatprep.mubr.bf16.mxu0 0
      %789 = vmatmul.mubr.bf16.gmra.mrb[0].mxu0 %v563
      %v790 = vpop.f32.mrb[0].mxu0
      %v791 = vadd.f32 %v279, %v790
      %v792 = vpop.f32.mrb[0].mxu0
      %v793 = vpop.f32.mrb[0].mxu0
      %v794 = vadd.f32 %v279, %v793
      %v795 = vpop.f32.mrb[0].mxu0
      %796 = vmatprep.mubr.bf16.mxu0 0
      %797 = vmatmul.mubr.bf16.gmra.mrb[0].mxu0 %v566
      %v798 = vpop.f32.mrb[0].mxu0
      %v799 = vadd.f32 %v279, %v798
      %v800 = vpop.f32.mrb[0].mxu0
      %v801 = vpop.f32.mrb[0].mxu0
      %v802 = vadd.f32 %v279, %v801
      %v803 = vpop.f32.mrb[0].mxu0
      %804 = vmatprep.mubr.bf16.mxu0 0
      %805 = vmatmul.mubr.bf16.gmra.mrb[0].mxu0 %v569
      %v806 = vpop.f32.mrb[0].mxu0
      %v807 = vadd.f32 %v279, %v806
      %v808 = vpop.f32.mrb[0].mxu0
      %v809 = vpop.f32.mrb[0].mxu0
      %v810 = vadd.f32 %v279, %v809
      %v811 = vpop.f32.mrb[0].mxu0
      %812 = vmatprep.mubr.bf16.mxu0 0
      %813 = vmatmul.mubr.bf16.gmra.mrb[0].mxu0 %v572
      %v814 = vpop.f32.mrb[0].mxu0
      %v815 = vadd.f32 %v279, %v814
      %v816 = vpop.f32.mrb[0].mxu0
      %v817 = vpop.f32.mrb[0].mxu0
      %v818 = vadd.f32 %v279, %v817
      %v819 = vpop.f32.mrb[0].mxu0
      %820 = vmatprep.mubr.bf16.mxu0 0
      %821 = vmatmul.mubr.bf16.gmra.mrb[0].mxu0 %v575
      %v822 = vpop.f32.mrb[0].mxu0
      %v823 = vadd.f32 %v279, %v822
      %v824 = vpop.f32.mrb[0].mxu0
      %v825 = vpop.f32.mrb[0].mxu0
      %v826 = vadd.f32 %v279, %v825
      %v827 = vpop.f32.mrb[0].mxu0
      %828 = vmatprep.mubr.bf16.mxu0 0
      %829 = vmatmul.mubr.bf16.gmra.mrb[0].mxu0 %v578
      %v830 = vpop.f32.mrb[0].mxu0
      %v831 = vadd.f32 %v279, %v830
      %v832 = vpop.f32.mrb[0].mxu0
      %v833 = vpop.f32.mrb[0].mxu0
      %v834 = vadd.f32 %v279, %v833
      %v835 = vpop.f32.mrb[0].mxu0
      %836 = vmatprep.mubr.bf16.mxu0 0
      %837 = vmatmul.mubr.bf16.gmra.mrb[0].mxu0 %v581
      %v838 = vpop.f32.mrb[0].mxu0
      %v839 = vadd.f32 %v279, %v838
      %v840 = vpop.f32.mrb[0].mxu0
      %v841 = vpop.f32.mrb[0].mxu0
      %v842 = vadd.f32 %v279, %v841
      %v843 = vpop.f32.mrb[0].mxu0
      %844 = vmatprep.mubr.bf16.mxu0 0
      %845 = vmatmul.mubr.bf16.gmra.mrb[0].mxu0 %v584
      %v846 = vpop.f32.mrb[0].mxu0
      %v847 = vadd.f32 %v279, %v846
      %v848 = vpop.f32.mrb[0].mxu0
      %v849 = vpop.f32.mrb[0].mxu0
      %v850 = vadd.f32 %v279, %v849
      %v851 = vpop.f32.mrb[0].mxu0
      %852 = vmatprep.mubr.bf16.mxu0 0
      %853 = vmatmul.mubr.bf16.gmra.mrb[0].mxu0 %v587
      %v854 = vpop.f32.mrb[0].mxu0
      %v855 = vadd.f32 %v279, %v854
      %v856 = vpop.f32.mrb[0].mxu0
      %v857 = vpop.f32.mrb[0].mxu0
      %v858 = vadd.f32 %v279, %v857
      %v859 = vpop.f32.mrb[0].mxu0
      %860 = vmatprep.mubr.bf16.mxu0 0
      %861 = vmatmul.mubr.bf16.gmra.mrb[0].mxu0 %v590
      %v862 = vpop.f32.mrb[0].mxu0
      %v863 = vadd.f32 %v279, %v862
      %v864 = vpop.f32.mrb[0].mxu0
      %v865 = vpop.f32.mrb[0].mxu0
      %v866 = vadd.f32 %v279, %v865
      %v867 = vpop.f32.mrb[0].mxu0
      %868 = vmatprep.mubr.bf16.mxu0 0
      %869 = vmatmul.mubr.bf16.gmra.mrb[0].mxu0 %v593
      %v870 = vpop.f32.mrb[0].mxu0
      %v871 = vadd.f32 %v279, %v870
      %v872 = vpop.f32.mrb[0].mxu0
      %v873 = vpop.f32.mrb[0].mxu0
      %v874 = vadd.f32 %v279, %v873
      %v875 = vpop.f32.mrb[0].mxu0
      %876 = vmatprep.mubr.bf16.mxu0 0
      %877 = vmatmul.mubr.bf16.gmra.mrb[0].mxu0 %v596
      %v878 = vpop.f32.mrb[0].mxu0
      %v879 = vadd.f32 %v279, %v878
      %v880 = vpop.f32.mrb[0].mxu0
      %v881 = vpop.f32.mrb[0].mxu0
      %v882 = vadd.f32 %v279, %v881
      %v883 = vpop.f32.mrb[0].mxu0
      %884 = vmatprep.mubr.bf16.mxu0 0
      %885 = vmatmul.mubr.bf16.gmra.mrb[0].mxu0 %v599
      %v886 = vpop.f32.mrb[0].mxu0
      %v887 = vadd.f32 %v279, %v886
      %v888 = vpop.f32.mrb[0].mxu0
      %v889 = vpop.f32.mrb[0].mxu0
      %v890 = vadd.f32 %v279, %v889
      %v891 = vpop.f32.mrb[0].mxu0
      %892 = vmatprep.mubr.bf16.mxu0 0
      %893 = vmatmul.mubr.bf16.gmra.mrb[0].mxu0 %v602
      %v894 = vpop.f32.mrb[0].mxu0
      %v895 = vadd.f32 %v279, %v894
      %v896 = vpop.f32.mrb[0].mxu0
      %v897 = vpop.f32.mrb[0].mxu0
      %v898 = vadd.f32 %v279, %v897
      %v899 = vpop.f32.mrb[0].mxu0
      %900 = vmatprep.mubr.bf16.mxu0 0
      %901 = vmatmul.mubr.bf16.gmra.mrb[0].mxu0 %v605
      %v902 = vpop.f32.mrb[0].mxu0
      %v903 = vadd.f32 %v279, %v902
      %v904 = vpop.f32.mrb[0].mxu0
      %v905 = vpop.f32.mrb[0].mxu0
      %v906 = vadd.f32 %v279, %v905
      %v907 = vpop.f32.mrb[0].mxu0
      %908 = vmatprep.mubr.bf16.mxu0 0
      %909 = vmatmul.mubr.bf16.gmra.mrb[0].mxu0 %v608
      %v910 = vpop.f32.mrb[0].mxu0
      %v911 = vadd.f32 %v279, %v910
      %v912 = vpop.f32.mrb[0].mxu0
      %v913 = vpop.f32.mrb[0].mxu0
      %v914 = vadd.f32 %v279, %v913
      %v915 = vpop.f32.mrb[0].mxu0
      %916 = vmatprep.mubr.bf16.mxu0 0
      %917 = vmatmul.mubr.bf16.gmra.mrb[0].mxu0 %v611
      %v918 = vpop.f32.mrb[0].mxu0
      %v919 = vadd.f32 %v279, %v918
      %v920 = vpop.f32.mrb[0].mxu0
      %v921 = vpop.f32.mrb[0].mxu0
      %v922 = vadd.f32 %v279, %v921
      %v923 = vpop.f32.mrb[0].mxu0
      %924 = vmatprep.mubr.bf16.mxu0 0
      %925 = vmatmul.mubr.bf16.gmra.mrb[0].mxu0 %v614
      %v926 = vpop.f32.mrb[0].mxu0
      %v927 = vadd.f32 %v279, %v926
      %v928 = vpop.f32.mrb[0].mxu0
      %v929 = vpop.f32.mrb[0].mxu0
      %v930 = vadd.f32 %v279, %v929
      %v931 = vpop.f32.mrb[0].mxu0
      %932 = vmatprep.mubr.bf16.mxu0 0
      %933 = vmatmul.mubr.bf16.gmra.mrb[0].mxu0 %v617
      %v934 = vpop.f32.mrb[0].mxu0
      %v935 = vadd.f32 %v279, %v934
      %v936 = vpop.f32.mrb[0].mxu0
      %v937 = vpop.f32.mrb[0].mxu0
      %v938 = vadd.f32 %v279, %v937
      %v939 = vpop.f32.mrb[0].mxu0
      %940 = vmatprep.mubr.bf16.mxu0 0
      %941 = vmatmul.mubr.bf16.gmra.mrb[0].mxu0 %v620
      %v942 = vpop.f32.mrb[0].mxu0
      %v943 = vadd.f32 %v279, %v942
      %v944 = vpop.f32.mrb[0].mxu0
      %v945 = vpop.f32.mrb[0].mxu0
      %v946 = vadd.f32 %v279, %v945
      %v947 = vpop.f32.mrb[0].mxu0
      %948 = vmatprep.mubr.bf16.mxu0 0
      %949 = vmatmul.mubr.bf16.gmra.mrb[0].mxu0 %v623
      %v950 = vpop.f32.mrb[0].mxu0
      %v951 = vadd.f32 %v279, %v950
      %v952 = vpop.f32.mrb[0].mxu0
      %v953 = vpop.f32.mrb[0].mxu0
      %v954 = vadd.f32 %v279, %v953
      %v955 = vpop.f32.mrb[0].mxu0
      %956 = vmatprep.mubr.bf16.mxu0 0
      %957 = vmatmul.mubr.bf16.gmra.mrb[0].mxu0 %v626
      %v958 = vpop.f32.mrb[0].mxu0
      %v959 = vadd.f32 %v279, %v958
      %v960 = vpop.f32.mrb[0].mxu0
      %v961 = vpop.f32.mrb[0].mxu0
      %v962 = vadd.f32 %v279, %v961
      %v963 = vpop.f32.mrb[0].mxu0
      %964 = vmatprep.mubr.bf16.mxu0 0
      %965 = vmatmul.mubr.bf16.gmra.mrb[0].mxu0 %v629
      %v966 = vpop.f32.mrb[0].mxu0
      %v967 = vadd.f32 %v279, %v966
      %v968 = vpop.f32.mrb[0].mxu0
      %v969 = vpop.f32.mrb[0].mxu0
      %v970 = vadd.f32 %v279, %v969
      %v971 = vpop.f32.mrb[0].mxu0
      %972 = vmatprep.mubr.bf16.mxu0 0
      %973 = vmatmul.mubr.bf16.gmra.mrb[0].mxu0 %v632
      %v974 = vpop.f32.mrb[0].mxu0
      %v975 = vadd.f32 %v279, %v974
      %v976 = vpop.f32.mrb[0].mxu0
      %v977 = vpop.f32.mrb[0].mxu0
      %v978 = vadd.f32 %v279, %v977
      %v979 = vpop.f32.mrb[0].mxu0
      %980 = vmatprep.mubr.bf16.mxu0 0
      %981 = vmatmul.mubr.bf16.gmra.mrb[0].mxu0 %v635
      %v982 = vpop.f32.mrb[0].mxu0
      %v983 = vadd.f32 %v279, %v982
      %v984 = vpop.f32.mrb[0].mxu0
      %v985 = vpop.f32.mrb[0].mxu0
      %v986 = vadd.f32 %v279, %v985
      %v987 = vpop.f32.mrb[0].mxu0
      %988 = vmatprep.mubr.bf16.mxu0 0
      %989 = vmatmul.mubr.bf16.gmra.mrb[0].mxu0 %v638
      %v990 = vpop.f32.mrb[0].mxu0
      %v991 = vadd.f32 %v279, %v990
      %v992 = vpop.f32.mrb[0].mxu0
      %v993 = vpop.f32.mrb[0].mxu0
      %v994 = vadd.f32 %v279, %v993
      %v995 = vpop.f32.mrb[0].mxu0
      %996 = vmatprep.mubr.bf16.mxu0 0
      %997 = vmatmul.mubr.bf16.gmra.mrb[0].mxu0 %v641
      %v998 = vpop.f32.mrb[0].mxu0
      %v999 = vadd.f32 %v279, %v998
      %v1000 = vpop.f32.mrb[0].mxu0
      %v1001 = vpop.f32.mrb[0].mxu0
      %v1002 = vadd.f32 %v279, %v1001
      %v1003 = vpop.f32.mrb[0].mxu0
      %1004 = vmatprep.mubr.bf16.mxu0 0
      %1005 = vmatmul.mubr.bf16.gmra.mrb[0].mxu0 %v644
      %v1006 = vpop.f32.mrb[0].mxu0
      %v1007 = vadd.f32 %v279, %v1006
      %v1008 = vpop.f32.mrb[0].mxu0
      %v1009 = vpop.f32.mrb[0].mxu0
      %v1010 = vadd.f32 %v279, %v1009
      %v1011 = vpop.f32.mrb[0].mxu0
      %1012 = vmatprep.mubr.bf16.mxu0 0
      %1013 = vmatmul.mubr.bf16.gmra.mrb[0].mxu0 %v647
      %v1014 = vpop.f32.mrb[0].mxu0
      %v1015 = vadd.f32 %v279, %v1014
      %v1016 = vpop.f32.mrb[0].mxu0
      %v1017 = vpop.f32.mrb[0].mxu0
      %v1018 = vadd.f32 %v279, %v1017
      %v1019 = vpop.f32.mrb[0].mxu0
      %1020 = vmatprep.mubr.bf16.mxu0 0
      %1021 = vmatmul.mubr.bf16.gmra.mrb[0].mxu0 %v650
      %v1022 = vpop.f32.mrb[0].mxu0
      %v1023 = vadd.f32 %v279, %v1022
      %v1024 = vpop.f32.mrb[0].mxu0
      %v1025 = vpop.f32.mrb[0].mxu0
      %v1026 = vadd.f32 %v279, %v1025
      %v1027 = vpop.f32.mrb[0].mxu0
      %1028 = vmatprep.mubr.bf16.mxu0 0
      %1029 = vmatmul.mubr.bf16.gmra.mrb[0].mxu0 %v653
      %v1030 = vpop.f32.mrb[0].mxu0
      %v1031 = vadd.f32 %v279, %v1030
      %v1032 = vpop.f32.mrb[0].mxu0
      %v1033 = vpop.f32.mrb[0].mxu0
      %v1034 = vadd.f32 %v279, %v1033
      %v1035 = vpop.f32.mrb[0].mxu0
      %1036 = vmatprep.mubr.bf16.mxu0 0
      %1037 = vmatmul.mubr.bf16.gmra.mrb[0].mxu0 %v656
      %v1038 = vpop.f32.mrb[0].mxu0
      %v1039 = vadd.f32 %v279, %v1038
      %v1040 = vpop.f32.mrb[0].mxu0
      %v1041 = vpop.f32.mrb[0].mxu0
      %v1042 = vadd.f32 %v279, %v1041
      %v1043 = vpop.f32.mrb[0].mxu0
      %1044 = vmatprep.mubr.bf16.mxu0 0
      %1045 = vmatmul.mubr.bf16.gmra.mrb[0].mxu0 %v659
      %v1046 = vpop.f32.mrb[0].mxu0
      %v1047 = vadd.f32 %v279, %v1046
      %v1048 = vpop.f32.mrb[0].mxu0
      %v1049 = vpop.f32.mrb[0].mxu0
      %v1050 = vadd.f32 %v279, %v1049
      %v1051 = vpop.f32.mrb[0].mxu0
      %1052 = vmatprep.mubr.bf16.mxu0 0
      %1053 = vmatmul.mubr.bf16.gmra.mrb[0].mxu0 %v662
      %v1054 = vpop.f32.mrb[0].mxu0
      %v1055 = vadd.f32 %v279, %v1054
      %v1056 = vpop.f32.mrb[0].mxu0
      %v1057 = vpop.f32.mrb[0].mxu0
      %v1058 = vadd.f32 %v279, %v1057
      %v1059 = vpop.f32.mrb[0].mxu0
      %1060 = vmatprep.mubr.bf16.mxu0 0
      %1061 = vmatmul.mubr.bf16.gmra.mrb[0].mxu0 %v665
      %v1062 = vpop.f32.mrb[0].mxu0
      %v1063 = vadd.f32 %v279, %v1062
      %v1064 = vpop.f32.mrb[0].mxu0
      %v1065 = vpop.f32.mrb[0].mxu0
      %v1066 = vadd.f32 %v279, %v1065
      %v1067 = vpop.f32.mrb[0].mxu0
      %1068 = vmatprep.mubr.bf16.mxu0 0
      %1069 = vmatmul.mubr.bf16.gmra.mrb[0].mxu0 %v668
      %v1070 = vpop.f32.mrb[0].mxu0
      %v1071 = vadd.f32 %v279, %v1070
      %v1072 = vpop.f32.mrb[0].mxu0
      %v1073 = vpop.f32.mrb[0].mxu0
      %v1074 = vadd.f32 %v279, %v1073
      %v1075 = vpop.f32.mrb[0].mxu0
      %1076 = vmatprep.mubr.bf16.mxu0 0
      %1077 = vmatmul.mubr.bf16.gmra.mrb[0].mxu0 %v671
      %v1078 = vpop.f32.mrb[0].mxu0
      %v1079 = vadd.f32 %v279, %v1078
      %v1080 = vpop.f32.mrb[0].mxu0
      %v1081 = vpop.f32.mrb[0].mxu0
      %v1082 = vadd.f32 %v279, %v1081
      %v1083 = vpop.f32.mrb[0].mxu0
      %1084 = vmatprep.mubr.bf16.mxu0 0
      %1085 = vmatmul.mubr.bf16.gmra.mrb[0].mxu0 %v674
      %v1086 = vpop.f32.mrb[0].mxu0
      %v1087 = vadd.f32 %v279, %v1086
      %v1088 = vpop.f32.mrb[0].mxu0
      %v1089 = vpop.f32.mrb[0].mxu0
      %v1090 = vadd.f32 %v279, %v1089
      %v1091 = vpop.f32.mrb[0].mxu0
      %1092 = vmatprep.mubr.bf16.mxu0 0
      %1093 = vmatmul.mubr.bf16.gmra.mrb[0].mxu0 %v677
      %v1094 = vpop.f32.mrb[0].mxu0
      %v1095 = vadd.f32 %v279, %v1094
      %v1096 = vpop.f32.mrb[0].mxu0
      %v1097 = vpop.f32.mrb[0].mxu0
      %v1098 = vadd.f32 %v279, %v1097
      %v1099 = vpop.f32.mrb[0].mxu0
      %1100 = vmatprep.mubr.bf16.mxu0 0
      %1101 = vmatmul.mubr.bf16.gmra.mrb[0].mxu0 %v680
      %v1102 = vpop.f32.mrb[0].mxu0
      %v1103 = vadd.f32 %v279, %v1102
      %v1104 = vpop.f32.mrb[0].mxu0
      %v1105 = vpop.f32.mrb[0].mxu0
      %v1106 = vadd.f32 %v279, %v1105
      %v1107 = vpop.f32.mrb[0].mxu0
      %1108 = vmatprep.mubr.bf16.mxu0 0
      %1109 = vmatmul.mubr.bf16.gmra.mrb[0].mxu0 %v683
      %v1110 = vpop.f32.mrb[0].mxu0
      %v1111 = vadd.f32 %v279, %v1110
      %v1112 = vpop.f32.mrb[0].mxu0
      %v1113 = vpop.f32.mrb[0].mxu0
      %v1114 = vadd.f32 %v279, %v1113
      %v1115 = vpop.f32.mrb[0].mxu0
      %1116 = vdwg.mxu0
      %vm1117 = vcmp.ge.f32.partialorder %v727, 0.0
      %vm1118 = vcmp.ge.f32.partialorder %v730, 0.0
      %vm1119 = vcmp.ge.f32.partialorder %v735, 0.0
      %vm1120 = vcmp.ge.f32.partialorder %v738, 0.0
      %vm1121 = vcmp.ge.f32.partialorder %v743, 0.0
      %vm1122 = vcmp.ge.f32.partialorder %v746, 0.0
      %vm1123 = vcmp.ge.f32.partialorder %v751, 0.0
      %vm1124 = vcmp.ge.f32.partialorder %v754, 0.0
      %vm1125 = vcmp.ge.f32.partialorder %v759, 0.0
      %vm1126 = vcmp.ge.f32.partialorder %v762, 0.0
      %vm1127 = vcmp.ge.f32.partialorder %v767, 0.0
      %vm1128 = vcmp.ge.f32.partialorder %v770, 0.0
      %vm1129 = vcmp.ge.f32.partialorder %v775, 0.0
      %vm1130 = vcmp.ge.f32.partialorder %v778, 0.0
      %vm1131 = vcmp.ge.f32.partialorder %v783, 0.0
      %vm1132 = vcmp.ge.f32.partialorder %v786, 0.0
      %vm1133 = vcmp.ge.f32.partialorder %v791, 0.0
      %vm1134 = vcmp.ge.f32.partialorder %v794, 0.0
      %vm1135 = vcmp.ge.f32.partialorder %v799, 0.0
      %vm1136 = vcmp.ge.f32.partialorder %v802, 0.0
      %vm1137 = vcmp.ge.f32.partialorder %v807, 0.0
      %vm1138 = vcmp.ge.f32.partialorder %v810, 0.0
      %vm1139 = vcmp.ge.f32.partialorder %v815, 0.0
      %vm1140 = vcmp.ge.f32.partialorder %v818, 0.0
      %vm1141 = vcmp.ge.f32.partialorder %v823, 0.0
      %vm1142 = vcmp.ge.f32.partialorder %v826, 0.0
      %vm1143 = vcmp.ge.f32.partialorder %v831, 0.0
      %vm1144 = vcmp.ge.f32.partialorder %v834, 0.0
      %vm1145 = vcmp.ge.f32.partialorder %v839, 0.0
      %vm1146 = vcmp.ge.f32.partialorder %v842, 0.0
      %vm1147 = vcmp.ge.f32.partialorder %v847, 0.0
      %vm1148 = vcmp.ge.f32.partialorder %v850, 0.0
      %vm1149 = vcmp.ge.f32.partialorder %v855, 0.0
      %vm1150 = vcmp.ge.f32.partialorder %v858, 0.0
      %vm1151 = vcmp.ge.f32.partialorder %v863, 0.0
      %vm1152 = vcmp.ge.f32.partialorder %v866, 0.0
      %vm1153 = vcmp.ge.f32.partialorder %v871, 0.0
      %vm1154 = vcmp.ge.f32.partialorder %v874, 0.0
      %vm1155 = vcmp.ge.f32.partialorder %v879, 0.0
      %vm1156 = vcmp.ge.f32.partialorder %v882, 0.0
      %vm1157 = vcmp.ge.f32.partialorder %v887, 0.0
      %vm1158 = vcmp.ge.f32.partialorder %v890, 0.0
      %vm1159 = vcmp.ge.f32.partialorder %v895, 0.0
      %vm1160 = vcmp.ge.f32.partialorder %v898, 0.0
      %vm1161 = vcmp.ge.f32.partialorder %v903, 0.0
      %vm1162 = vcmp.ge.f32.partialorder %v906, 0.0
      %vm1163 = vcmp.ge.f32.partialorder %v911, 0.0
      %vm1164 = vcmp.ge.f32.partialorder %v914, 0.0
      %vm1165 = vcmp.ge.f32.partialorder %v919, 0.0
      %vm1166 = vcmp.ge.f32.partialorder %v922, 0.0
      %vm1167 = vcmp.ge.f32.partialorder %v927, 0.0
      %vm1168 = vcmp.ge.f32.partialorder %v930, 0.0
      %vm1169 = vcmp.ge.f32.partialorder %v935, 0.0
      %vm1170 = vcmp.ge.f32.partialorder %v938, 0.0
      %vm1171 = vcmp.ge.f32.partialorder %v943, 0.0
      %vm1172 = vcmp.ge.f32.partialorder %v946, 0.0
      %vm1173 = vcmp.ge.f32.partialorder %v951, 0.0
      %vm1174 = vcmp.ge.f32.partialorder %v954, 0.0
      %vm1175 = vcmp.ge.f32.partialorder %v959, 0.0
      %vm1176 = vcmp.ge.f32.partialorder %v962, 0.0
      %vm1177 = vcmp.ge.f32.partialorder %v967, 0.0
      %vm1178 = vcmp.ge.f32.partialorder %v970, 0.0
      %vm1179 = vcmp.ge.f32.partialorder %v975, 0.0
      %vm1180 = vcmp.ge.f32.partialorder %v978, 0.0
      %vm1181 = vcmp.ge.f32.partialorder %v983, 0.0
      %vm1182 = vcmp.ge.f32.partialorder %v986, 0.0
      %vm1183 = vcmp.ge.f32.partialorder %v991, 0.0
      %vm1184 = vcmp.ge.f32.partialorder %v994, 0.0
      %vm1185 = vcmp.ge.f32.partialorder %v999, 0.0
      %vm1186 = vcmp.ge.f32.partialorder %v1002, 0.0
      %vm1187 = vcmp.ge.f32.partialorder %v1007, 0.0
      %vm1188 = vcmp.ge.f32.partialorder %v1010, 0.0
      %vm1189 = vcmp.ge.f32.partialorder %v1015, 0.0
      %vm1190 = vcmp.ge.f32.partialorder %v1018, 0.0
      %vm1191 = vcmp.ge.f32.partialorder %v1023, 0.0
      %vm1192 = vcmp.ge.f32.partialorder %v1026, 0.0
      %vm1193 = vcmp.ge.f32.partialorder %v1031, 0.0
      %vm1194 = vcmp.ge.f32.partialorder %v1034, 0.0
      %vm1195 = vcmp.ge.f32.partialorder %v1039, 0.0
      %vm1196 = vcmp.ge.f32.partialorder %v1042, 0.0
      %vm1197 = vcmp.ge.f32.partialorder %v1047, 0.0
      %vm1198 = vcmp.ge.f32.partialorder %v1050, 0.0
      %vm1199 = vcmp.ge.f32.partialorder %v1055, 0.0
      %vm1200 = vcmp.ge.f32.partialorder %v1058, 0.0
      %vm1201 = vcmp.ge.f32.partialorder %v1063, 0.0
      %vm1202 = vcmp.ge.f32.partialorder %v1066, 0.0
      %vm1203 = vcmp.ge.f32.partialorder %v1071, 0.0
      %vm1204 = vcmp.ge.f32.partialorder %v1074, 0.0
      %vm1205 = vcmp.ge.f32.partialorder %v1079, 0.0
      %vm1206 = vcmp.ge.f32.partialorder %v1082, 0.0
      %vm1207 = vcmp.ge.f32.partialorder %v1087, 0.0
      %vm1208 = vcmp.ge.f32.partialorder %v1090, 0.0
      %vm1209 = vcmp.ge.f32.partialorder %v1095, 0.0
      %vm1210 = vcmp.ge.f32.partialorder %v1098, 0.0
      %vm1211 = vcmp.ge.f32.partialorder %v1103, 0.0
      %vm1212 = vcmp.ge.f32.partialorder %v1106, 0.0
      %vm1213 = vcmp.ge.f32.partialorder %v1111, 0.0
      %vm1214 = vcmp.ge.f32.partialorder %v1114, 0.0
      %v1215 = vmul.f32 %v727, 0.2
      %v1216 = vmul.f32 %v730, 0.2
      %v1217 = vmul.f32 %v735, 0.2
      %v1218 = vmul.f32 %v738, 0.2
      %v1219 = vmul.f32 %v743, 0.2
      %v1220 = vmul.f32 %v746, 0.2
      %v1221 = vmul.f32 %v751, 0.2
      %v1222 = vmul.f32 %v754, 0.2
      %v1223 = vmul.f32 %v759, 0.2
      %v1224 = vmul.f32 %v762, 0.2
      %v1225 = vmul.f32 %v767, 0.2
      %v1226 = vmul.f32 %v770, 0.2
      %v1227 = vmul.f32 %v775, 0.2
      %v1228 = vmul.f32 %v778, 0.2
      %v1229 = vmul.f32 %v783, 0.2
      %v1230 = vmul.f32 %v786, 0.2
      %v1231 = vmul.f32 %v791, 0.2
      %v1232 = vmul.f32 %v794, 0.2
      %v1233 = vmul.f32 %v799, 0.2
      %v1234 = vmul.f32 %v802, 0.2
      %v1235 = vmul.f32 %v807, 0.2
      %v1236 = vmul.f32 %v810, 0.2
      %v1237 = vmul.f32 %v815, 0.2
      %v1238 = vmul.f32 %v818, 0.2
      %v1239 = vmul.f32 %v823, 0.2
      %v1240 = vmul.f32 %v826, 0.2
      %v1241 = vmul.f32 %v831, 0.2
      %v1242 = vmul.f32 %v834, 0.2
      %v1243 = vmul.f32 %v839, 0.2
      %v1244 = vmul.f32 %v842, 0.2
      %v1245 = vmul.f32 %v847, 0.2
      %v1246 = vmul.f32 %v850, 0.2
      %v1247 = vmul.f32 %v855, 0.2
      %v1248 = vmul.f32 %v858, 0.2
      %v1249 = vmul.f32 %v863, 0.2
      %v1250 = vmul.f32 %v866, 0.2
      %v1251 = vmul.f32 %v871, 0.2
      %v1252 = vmul.f32 %v874, 0.2
      %v1253 = vmul.f32 %v879, 0.2
      %v1254 = vmul.f32 %v882, 0.2
      %v1255 = vmul.f32 %v887, 0.2
      %v1256 = vmul.f32 %v890, 0.2
      %v1257 = vmul.f32 %v895, 0.2
      %v1258 = vmul.f32 %v898, 0.2
      %v1259 = vmul.f32 %v903, 0.2
      %v1260 = vmul.f32 %v906, 0.2
      %v1261 = vmul.f32 %v911, 0.2
      %v1262 = vmul.f32 %v914, 0.2
      %v1263 = vmul.f32 %v919, 0.2
      %v1264 = vmul.f32 %v922, 0.2
      %v1265 = vmul.f32 %v927, 0.2
      %v1266 = vmul.f32 %v930, 0.2
      %v1267 = vmul.f32 %v935, 0.2
      %v1268 = vmul.f32 %v938, 0.2
      %v1269 = vmul.f32 %v943, 0.2
      %v1270 = vmul.f32 %v946, 0.2
      %v1271 = vmul.f32 %v951, 0.2
      %v1272 = vmul.f32 %v954, 0.2
      %v1273 = vmul.f32 %v959, 0.2
      %v1274 = vmul.f32 %v962, 0.2
      %v1275 = vmul.f32 %v967, 0.2
      %v1276 = vmul.f32 %v970, 0.2
      %v1277 = vmul.f32 %v975, 0.2
      %v1278 = vmul.f32 %v978, 0.2
      %v1279 = vmul.f32 %v983, 0.2
      %v1280 = vmul.f32 %v986, 0.2
      %v1281 = vmul.f32 %v991, 0.2
      %v1282 = vmul.f32 %v994, 0.2
      %v1283 = vmul.f32 %v999, 0.2
      %v1284 = vmul.f32 %v1002, 0.2
      %v1285 = vmul.f32 %v1007, 0.2
      %v1286 = vmul.f32 %v1010, 0.2
      %v1287 = vmul.f32 %v1015, 0.2
      %v1288 = vmul.f32 %v1018, 0.2
      %v1289 = vmul.f32 %v1023, 0.2
      %v1290 = vmul.f32 %v1026, 0.2
      %v1291 = vmul.f32 %v1031, 0.2
      %v1292 = vmul.f32 %v1034, 0.2
      %v1293 = vmul.f32 %v1039, 0.2
      %v1294 = vmul.f32 %v1042, 0.2
      %v1295 = vmul.f32 %v1047, 0.2
      %v1296 = vmul.f32 %v1050, 0.2
      %v1297 = vmul.f32 %v1055, 0.2
      %v1298 = vmul.f32 %v1058, 0.2
      %v1299 = vmul.f32 %v1063, 0.2
      %v1300 = vmul.f32 %v1066, 0.2
      %v1301 = vmul.f32 %v1071, 0.2
      %v1302 = vmul.f32 %v1074, 0.2
      %v1303 = vmul.f32 %v1079, 0.2
      %v1304 = vmul.f32 %v1082, 0.2
      %v1305 = vmul.f32 %v1087, 0.2
      %v1306 = vmul.f32 %v1090, 0.2
      %v1307 = vmul.f32 %v1095, 0.2
      %v1308 = vmul.f32 %v1098, 0.2
      %v1309 = vmul.f32 %v1103, 0.2
      %v1310 = vmul.f32 %v1106, 0.2
      %v1311 = vmul.f32 %v1111, 0.2
      %v1312 = vmul.f32 %v1114, 0.2
      %v1313 = vsel %vm1117, %v727, %v1215
      %v1314 = vsel %vm1118, %v730, %v1216
      %v1315 = vsel %vm1119, %v735, %v1217
      %v1316 = vsel %vm1120, %v738, %v1218
      %v1317 = vsel %vm1121, %v743, %v1219
      %v1318 = vsel %vm1122, %v746, %v1220
      %v1319 = vsel %vm1123, %v751, %v1221
      %v1320 = vsel %vm1124, %v754, %v1222
      %v1321 = vsel %vm1125, %v759, %v1223
      %v1322 = vsel %vm1126, %v762, %v1224
      %v1323 = vsel %vm1127, %v767, %v1225
      %v1324 = vsel %vm1128, %v770, %v1226
      %v1325 = vsel %vm1129, %v775, %v1227
      %v1326 = vsel %vm1130, %v778, %v1228
      %v1327 = vsel %vm1131, %v783, %v1229
      %v1328 = vsel %vm1132, %v786, %v1230
      %v1329 = vsel %vm1133, %v791, %v1231
      %v1330 = vsel %vm1134, %v794, %v1232
      %v1331 = vsel %vm1135, %v799, %v1233
      %v1332 = vsel %vm1136, %v802, %v1234
      %v1333 = vsel %vm1137, %v807, %v1235
      %v1334 = vsel %vm1138, %v810, %v1236
      %v1335 = vsel %vm1139, %v815, %v1237
      %v1336 = vsel %vm1140, %v818, %v1238
      %v1337 = vsel %vm1141, %v823, %v1239
      %v1338 = vsel %vm1142, %v826, %v1240
      %v1339 = vsel %vm1143, %v831, %v1241
      %v1340 = vsel %vm1144, %v834, %v1242
      %v1341 = vsel %vm1145, %v839, %v1243
      %v1342 = vsel %vm1146, %v842, %v1244
      %v1343 = vsel %vm1147, %v847, %v1245
      %v1344 = vsel %vm1148, %v850, %v1246
      %v1345 = vsel %vm1149, %v855, %v1247
      %v1346 = vsel %vm1150, %v858, %v1248
      %v1347 = vsel %vm1151, %v863, %v1249
      %v1348 = vsel %vm1152, %v866, %v1250
      %v1349 = vsel %vm1153, %v871, %v1251
      %v1350 = vsel %vm1154, %v874, %v1252
      %v1351 = vsel %vm1155, %v879, %v1253
      %v1352 = vsel %vm1156, %v882, %v1254
      %v1353 = vsel %vm1157, %v887, %v1255
      %v1354 = vsel %vm1158, %v890, %v1256
      %v1355 = vsel %vm1159, %v895, %v1257
      %v1356 = vsel %vm1160, %v898, %v1258
      %v1357 = vsel %vm1161, %v903, %v1259
      %v1358 = vsel %vm1162, %v906, %v1260
      %v1359 = vsel %vm1163, %v911, %v1261
      %v1360 = vsel %vm1164, %v914, %v1262
      %v1361 = vsel %vm1165, %v919, %v1263
      %v1362 = vsel %vm1166, %v922, %v1264
      %v1363 = vsel %vm1167, %v927, %v1265
      %v1364 = vsel %vm1168, %v930, %v1266
      %v1365 = vsel %vm1169, %v935, %v1267
      %v1366 = vsel %vm1170, %v938, %v1268
      %v1367 = vsel %vm1171, %v943, %v1269
      %v1368 = vsel %vm1172, %v946, %v1270
      %v1369 = vsel %vm1173, %v951, %v1271
      %v1370 = vsel %vm1174, %v954, %v1272
      %v1371 = vsel %vm1175, %v959, %v1273
      %v1372 = vsel %vm1176, %v962, %v1274
      %v1373 = vsel %vm1177, %v967, %v1275
      %v1374 = vsel %vm1178, %v970, %v1276
      %v1375 = vsel %vm1179, %v975, %v1277
      %v1376 = vsel %vm1180, %v978, %v1278
      %v1377 = vsel %vm1181, %v983, %v1279
      %v1378 = vsel %vm1182, %v986, %v1280
      %v1379 = vsel %vm1183, %v991, %v1281
      %v1380 = vsel %vm1184, %v994, %v1282
      %v1381 = vsel %vm1185, %v999, %v1283
      %v1382 = vsel %vm1186, %v1002, %v1284
      %v1383 = vsel %vm1187, %v1007, %v1285
      %v1384 = vsel %vm1188, %v1010, %v1286
      %v1385 = vsel %vm1189, %v1015, %v1287
      %v1386 = vsel %vm1190, %v1018, %v1288
      %v1387 = vsel %vm1191, %v1023, %v1289
      %v1388 = vsel %vm1192, %v1026, %v1290
      %v1389 = vsel %vm1193, %v1031, %v1291
      %v1390 = vsel %vm1194, %v1034, %v1292
      %v1391 = vsel %vm1195, %v1039, %v1293
      %v1392 = vsel %vm1196, %v1042, %v1294
      %v1393 = vsel %vm1197, %v1047, %v1295
      %v1394 = vsel %vm1198, %v1050, %v1296
      %v1395 = vsel %vm1199, %v1055, %v1297
      %v1396 = vsel %vm1200, %v1058, %v1298
      %v1397 = vsel %vm1201, %v1063, %v1299
      %v1398 = vsel %vm1202, %v1066, %v1300
      %v1399 = vsel %vm1203, %v1071, %v1301
      %v1400 = vsel %vm1204, %v1074, %v1302
      %v1401 = vsel %vm1205, %v1079, %v1303
      %v1402 = vsel %vm1206, %v1082, %v1304
      %v1403 = vsel %vm1207, %v1087, %v1305
      %v1404 = vsel %vm1208, %v1090, %v1306
      %v1405 = vsel %vm1209, %v1095, %v1307
      %v1406 = vsel %vm1210, %v1098, %v1308
      %v1407 = vsel %vm1211, %v1103, %v1309
      %v1408 = vsel %vm1212, %v1106, %v1310
      %v1409 = vsel %vm1213, %v1111, %v1311
      %v1410 = vsel %vm1214, %v1114, %v1312
      %vm1411 = vcmask 261120
      %1412 = vst.msk [vmem:[#allocation2] sm:$0xff] %vm1411, %v1313
      %1413 = vst.msk [vmem:[#allocation2 + $0x8] sm:$0xff] %vm1411, %v1314
      %1414 = vst.msk [vmem:[#allocation2 + $0x10] sm:$0xff] %vm1411, %v1315
      %1415 = vst.msk [vmem:[#allocation2 + $0x18] sm:$0xff] %vm1411, %v1316
      %1416 = vst.msk [vmem:[#allocation2 + $0x20] sm:$0xff] %vm1411, %v1317
      %1417 = vst.msk [vmem:[#allocation2 + $0x28] sm:$0xff] %vm1411, %v1318
      %1418 = vst.msk [vmem:[#allocation2 + $0x30] sm:$0xff] %vm1411, %v1319
      %1419 = vst.msk [vmem:[#allocation2 + $0x38] sm:$0xff] %vm1411, %v1320
      %1420 = vst.msk [vmem:[#allocation2 + $0x40] sm:$0xff] %vm1411, %v1321
      %1421 = vst.msk [vmem:[#allocation2 + $0x48] sm:$0xff] %vm1411, %v1322
      %1422 = vst.msk [vmem:[#allocation2 + $0x50] sm:$0xff] %vm1411, %v1323
      %1423 = vst.msk [vmem:[#allocation2 + $0x58] sm:$0xff] %vm1411, %v1324
      %1424 = vst.msk [vmem:[#allocation2 + $0x60] sm:$0xff] %vm1411, %v1325
      %1425 = vst.msk [vmem:[#allocation2 + $0x68] sm:$0xff] %vm1411, %v1326
      %1426 = vst.msk [vmem:[#allocation2 + $0x70] sm:$0xff] %vm1411, %v1327
      %1427 = vst.msk [vmem:[#allocation2 + $0x78] sm:$0xff] %vm1411, %v1328
      %1428 = vst.msk [vmem:[#allocation2 + $0x80] sm:$0xff] %vm1411, %v1329
      %1429 = vst.msk [vmem:[#allocation2 + $0x88] sm:$0xff] %vm1411, %v1330
      %1430 = vst.msk [vmem:[#allocation2 + $0x90] sm:$0xff] %vm1411, %v1331
      %1431 = vst.msk [vmem:[#allocation2 + $0x98] sm:$0xff] %vm1411, %v1332
      %1432 = vst.msk [vmem:[#allocation2 + $0xa0] sm:$0xff] %vm1411, %v1333
      %1433 = vst.msk [vmem:[#allocation2 + $0xa8] sm:$0xff] %vm1411, %v1334
      %1434 = vst.msk [vmem:[#allocation2 + $0xb0] sm:$0xff] %vm1411, %v1335
      %1435 = vst.msk [vmem:[#allocation2 + $0xb8] sm:$0xff] %vm1411, %v1336
      %1436 = vst.msk [vmem:[#allocation2 + $0xc0] sm:$0xff] %vm1411, %v1337
      %1437 = vst.msk [vmem:[#allocation2 + $0xc8] sm:$0xff] %vm1411, %v1338
      %1438 = vst.msk [vmem:[#allocation2 + $0xd0] sm:$0xff] %vm1411, %v1339
      %1439 = vst.msk [vmem:[#allocation2 + $0xd8] sm:$0xff] %vm1411, %v1340
      %1440 = vst.msk [vmem:[#allocation2 + $0xe0] sm:$0xff] %vm1411, %v1341
      %1441 = vst.msk [vmem:[#allocation2 + $0xe8] sm:$0xff] %vm1411, %v1342
      %1442 = vst.msk [vmem:[#allocation2 + $0xf0] sm:$0xff] %vm1411, %v1343
      %1443 = vst.msk [vmem:[#allocation2 + $0xf8] sm:$0xff] %vm1411, %v1344
      %1444 = vst.msk [vmem:[#allocation2 + $0x100] sm:$0xff] %vm1411, %v1345
      %1445 = vst.msk [vmem:[#allocation2 + $0x108] sm:$0xff] %vm1411, %v1346
      %1446 = vst.msk [vmem:[#allocation2 + $0x110] sm:$0xff] %vm1411, %v1347
      %1447 = vst.msk [vmem:[#allocation2 + $0x118] sm:$0xff] %vm1411, %v1348
      %1448 = vst.msk [vmem:[#allocation2 + $0x120] sm:$0xff] %vm1411, %v1349
      %1449 = vst.msk [vmem:[#allocation2 + $0x128] sm:$0xff] %vm1411, %v1350
      %1450 = vst.msk [vmem:[#allocation2 + $0x130] sm:$0xff] %vm1411, %v1351
      %1451 = vst.msk [vmem:[#allocation2 + $0x138] sm:$0xff] %vm1411, %v1352
      %1452 = vst.msk [vmem:[#allocation2 + $0x140] sm:$0xff] %vm1411, %v1353
      %1453 = vst.msk [vmem:[#allocation2 + $0x148] sm:$0xff] %vm1411, %v1354
      %1454 = vst.msk [vmem:[#allocation2 + $0x150] sm:$0xff] %vm1411, %v1355
      %1455 = vst.msk [vmem:[#allocation2 + $0x158] sm:$0xff] %vm1411, %v1356
      %1456 = vst.msk [vmem:[#allocation2 + $0x160] sm:$0xff] %vm1411, %v1357
      %1457 = vst.msk [vmem:[#allocation2 + $0x168] sm:$0xff] %vm1411, %v1358
      %1458 = vst.msk [vmem:[#allocation2 + $0x170] sm:$0xff] %vm1411, %v1359
      %1459 = vst.msk [vmem:[#allocation2 + $0x178] sm:$0xff] %vm1411, %v1360
      %1460 = vst.msk [vmem:[#allocation2 + $0x180] sm:$0xff] %vm1411, %v1361
      %1461 = vst.msk [vmem:[#allocation2 + $0x188] sm:$0xff] %vm1411, %v1362
      %1462 = vst.msk [vmem:[#allocation2 + $0x190] sm:$0xff] %vm1411, %v1363
      %1463 = vst.msk [vmem:[#allocation2 + $0x198] sm:$0xff] %vm1411, %v1364
      %1464 = vst.msk [vmem:[#allocation2 + $0x1a0] sm:$0xff] %vm1411, %v1365
      %1465 = vst.msk [vmem:[#allocation2 + $0x1a8] sm:$0xff] %vm1411, %v1366
      %1466 = vst.msk [vmem:[#allocation2 + $0x1b0] sm:$0xff] %vm1411, %v1367
      %1467 = vst.msk [vmem:[#allocation2 + $0x1b8] sm:$0xff] %vm1411, %v1368
      %1468 = vst.msk [vmem:[#allocation2 + $0x1c0] sm:$0xff] %vm1411, %v1369
      %1469 = vst.msk [vmem:[#allocation2 + $0x1c8] sm:$0xff] %vm1411, %v1370
      %1470 = vst.msk [vmem:[#allocation2 + $0x1d0] sm:$0xff] %vm1411, %v1371
      %1471 = vst.msk [vmem:[#allocation2 + $0x1d8] sm:$0xff] %vm1411, %v1372
      %1472 = vst.msk [vmem:[#allocation2 + $0x1e0] sm:$0xff] %vm1411, %v1373
      %1473 = vst.msk [vmem:[#allocation2 + $0x1e8] sm:$0xff] %vm1411, %v1374
      %1474 = vst.msk [vmem:[#allocation2 + $0x1f0] sm:$0xff] %vm1411, %v1375
      %1475 = vst.msk [vmem:[#allocation2 + $0x1f8] sm:$0xff] %vm1411, %v1376
      %1476 = vst.msk [vmem:[#allocation2 + $0x200] sm:$0xff] %vm1411, %v1377
      %1477 = vst.msk [vmem:[#allocation2 + $0x208] sm:$0xff] %vm1411, %v1378
      %1478 = vst.msk [vmem:[#allocation2 + $0x210] sm:$0xff] %vm1411, %v1379
      %1479 = vst.msk [vmem:[#allocation2 + $0x218] sm:$0xff] %vm1411, %v1380
      %1480 = vst.msk [vmem:[#allocation2 + $0x220] sm:$0xff] %vm1411, %v1381
      %1481 = vst.msk [vmem:[#allocation2 + $0x228] sm:$0xff] %vm1411, %v1382
      %1482 = vst.msk [vmem:[#allocation2 + $0x230] sm:$0xff] %vm1411, %v1383
      %1483 = vst.msk [vmem:[#allocation2 + $0x238] sm:$0xff] %vm1411, %v1384
      %1484 = vst.msk [vmem:[#allocation2 + $0x240] sm:$0xff] %vm1411, %v1385
      %1485 = vst.msk [vmem:[#allocation2 + $0x248] sm:$0xff] %vm1411, %v1386
      %1486 = vst.msk [vmem:[#allocation2 + $0x250] sm:$0xff] %vm1411, %v1387
      %1487 = vst.msk [vmem:[#allocation2 + $0x258] sm:$0xff] %vm1411, %v1388
      %1488 = vst.msk [vmem:[#allocation2 + $0x260] sm:$0xff] %vm1411, %v1389
      %1489 = vst.msk [vmem:[#allocation2 + $0x268] sm:$0xff] %vm1411, %v1390
      %1490 = vst.msk [vmem:[#allocation2 + $0x270] sm:$0xff] %vm1411, %v1391
      %1491 = vst.msk [vmem:[#allocation2 + $0x278] sm:$0xff] %vm1411, %v1392
      %1492 = vst.msk [vmem:[#allocation2 + $0x280] sm:$0xff] %vm1411, %v1393
      %1493 = vst.msk [vmem:[#allocation2 + $0x288] sm:$0xff] %vm1411, %v1394
      %1494 = vst.msk [vmem:[#allocation2 + $0x290] sm:$0xff] %vm1411, %v1395
      %1495 = vst.msk [vmem:[#allocation2 + $0x298] sm:$0xff] %vm1411, %v1396
      %1496 = vst.msk [vmem:[#allocation2 + $0x2a0] sm:$0xff] %vm1411, %v1397
      %1497 = vst.msk [vmem:[#allocation2 + $0x2a8] sm:$0xff] %vm1411, %v1398
      %1498 = vst.msk [vmem:[#allocation2 + $0x2b0] sm:$0xff] %vm1411, %v1399
      %1499 = vst.msk [vmem:[#allocation2 + $0x2b8] sm:$0xff] %vm1411, %v1400
      %1500 = vst.msk [vmem:[#allocation2 + $0x2c0] sm:$0xff] %vm1411, %v1401
      %1501 = vst.msk [vmem:[#allocation2 + $0x2c8] sm:$0xff] %vm1411, %v1402
      %1502 = vst.msk [vmem:[#allocation2 + $0x2d0] sm:$0xff] %vm1411, %v1403
      %1503 = vst.msk [vmem:[#allocation2 + $0x2d8] sm:$0xff] %vm1411, %v1404
      %1504 = vst.msk [vmem:[#allocation2 + $0x2e0] sm:$0xff] %vm1411, %v1405
      %1505 = vst.msk [vmem:[#allocation2 + $0x2e8] sm:$0xff] %vm1411, %v1406
      %1506 = vst.msk [vmem:[#allocation2 + $0x2f0] sm:$0xff] %vm1411, %v1407
      %1507 = vst.msk [vmem:[#allocation2 + $0x2f8] sm:$0xff] %vm1411, %v1408
      %1508 = vst.msk [vmem:[#allocation2 + $0x300] sm:$0xff] %vm1411, %v1409
      %1509 = vst.msk [vmem:[#allocation2 + $0x308] sm:$0xff] %vm1411, %v1410
      %v1510 = vld [vmem:[#allocation2] sm:$0xff]
      %v1511 = vld [vmem:[#allocation2 + $0x8] sm:$0xff]
      %v1512 = vld [vmem:[#allocation2 + $0x10] sm:$0xff]
      %v1513 = vld [vmem:[#allocation2 + $0x18] sm:$0xff]
      %v1514 = vld [vmem:[#allocation2 + $0x20] sm:$0xff]
      %v1515 = vld [vmem:[#allocation2 + $0x28] sm:$0xff]
      %v1516 = vld [vmem:[#allocation2 + $0x30] sm:$0xff]
      %v1517 = vld [vmem:[#allocation2 + $0x38] sm:$0xff]
      %v1518 = vld [vmem:[#allocation2 + $0x40] sm:$0xff]
      %v1519 = vld [vmem:[#allocation2 + $0x48] sm:$0xff]
      %v1520 = vld [vmem:[#allocation2 + $0x50] sm:$0xff]
      %v1521 = vld [vmem:[#allocation2 + $0x58] sm:$0xff]
      %v1522 = vld [vmem:[#allocation2 + $0x60] sm:$0xff]
      %v1523 = vld [vmem:[#allocation2 + $0x68] sm:$0xff]
      %v1524 = vld [vmem:[#allocation2 + $0x70] sm:$0xff]
      %v1525 = vld [vmem:[#allocation2 + $0x78] sm:$0xff]
      %v1526 = vld [vmem:[#allocation2 + $0x80] sm:$0xff]
      %v1527 = vld [vmem:[#allocation2 + $0x88] sm:$0xff]
      %v1528 = vld [vmem:[#allocation2 + $0x90] sm:$0xff]
      %v1529 = vld [vmem:[#allocation2 + $0x98] sm:$0xff]
      %v1530 = vld [vmem:[#allocation2 + $0xa0] sm:$0xff]
      %v1531 = vld [vmem:[#allocation2 + $0xa8] sm:$0xff]
      %v1532 = vld [vmem:[#allocation2 + $0xb0] sm:$0xff]
      %v1533 = vld [vmem:[#allocation2 + $0xb8] sm:$0xff]
      %v1534 = vld [vmem:[#allocation2 + $0xc0] sm:$0xf]
      %v1535 = vld [vmem:[#allocation2 + $0xc4] sm:$0xff]
      %v1536 = vld [vmem:[#allocation2 + $0xcc] sm:$0xff]
      %v1537 = vld [vmem:[#allocation2 + $0xd4] sm:$0xff]
      %v1538 = vld [vmem:[#allocation2 + $0xdc] sm:$0xff]
      %v1539 = vld [vmem:[#allocation2 + $0xe4] sm:$0xff]
      %v1540 = vld [vmem:[#allocation2 + $0xec] sm:$0xff]
      %v1541 = vld [vmem:[#allocation2 + $0xf4] sm:$0xff]
      %v1542 = vld [vmem:[#allocation2 + $0xfc] sm:$0xff]
      %v1543 = vld [vmem:[#allocation2 + $0x104] sm:$0xff]
      %v1544 = vld [vmem:[#allocation2 + $0x10c] sm:$0xff]
      %v1545 = vld [vmem:[#allocation2 + $0x114] sm:$0xff]
      %v1546 = vld [vmem:[#allocation2 + $0x11c] sm:$0xff]
      %v1547 = vld [vmem:[#allocation2 + $0x124] sm:$0xff]
      %v1548 = vld [vmem:[#allocation2 + $0x12c] sm:$0xff]
      %v1549 = vld [vmem:[#allocation2 + $0x134] sm:$0xff]
      %v1550 = vld [vmem:[#allocation2 + $0x13c] sm:$0xff]
      %v1551 = vld [vmem:[#allocation2 + $0x144] sm:$0xff]
      %v1552 = vld [vmem:[#allocation2 + $0x14c] sm:$0xff]
      %v1553 = vld [vmem:[#allocation2 + $0x154] sm:$0xff]
      %v1554 = vld [vmem:[#allocation2 + $0x15c] sm:$0xff]
      %v1555 = vld [vmem:[#allocation2 + $0x164] sm:$0xff]
      %v1556 = vld [vmem:[#allocation2 + $0x16c] sm:$0xff]
      %v1557 = vld [vmem:[#allocation2 + $0x174] sm:$0xff]
      %v1558 = vld [vmem:[#allocation2 + $0x17c] sm:$0xff]
      %v1559 = vld [vmem:[#allocation2 + $0x184] sm:$0xf]
      %v1560 = vadd.f32 %v1510, %v1535
      %v1561 = vadd.f32 %v1511, %v1536
      %v1562 = vadd.f32 %v1512, %v1537
      %v1563 = vadd.f32 %v1513, %v1538
      %v1564 = vadd.f32 %v1514, %v1539
      %v1565 = vadd.f32 %v1515, %v1540
      %v1566 = vadd.f32 %v1516, %v1541
      %v1567 = vadd.f32 %v1517, %v1542
      %v1568 = vadd.f32 %v1518, %v1543
      %v1569 = vadd.f32 %v1519, %v1544
      %v1570 = vadd.f32 %v1520, %v1545
      %v1571 = vadd.f32 %v1521, %v1546
      %v1572 = vadd.f32 %v1522, %v1547
      %v1573 = vadd.f32 %v1523, %v1548
      %v1574 = vadd.f32 %v1524, %v1549
      %v1575 = vadd.f32 %v1525, %v1550
      %v1576 = vadd.f32 %v1526, %v1551
      %v1577 = vadd.f32 %v1527, %v1552
      %v1578 = vadd.f32 %v1528, %v1553
      %v1579 = vadd.f32 %v1529, %v1554
      %v1580 = vadd.f32 %v1530, %v1555
      %v1581 = vadd.f32 %v1531, %v1556
      %v1582 = vadd.f32 %v1532, %v1557
      %v1583 = vadd.f32 %v1533, %v1558
      %v1584 = vadd.f32 %v1534, %v1559
      %v1585 = vld [vmem:[#allocation2 + $0x188] sm:$0xff]
      %v1586 = vld [vmem:[#allocation2 + $0x190] sm:$0xff]
      %v1587 = vld [vmem:[#allocation2 + $0x198] sm:$0xff]
      %v1588 = vld [vmem:[#allocation2 + $0x1a0] sm:$0xff]
      %v1589 = vld [vmem:[#allocation2 + $0x1a8] sm:$0xff]
      %v1590 = vld [vmem:[#allocation2 + $0x1b0] sm:$0xff]
      %v1591 = vld [vmem:[#allocation2 + $0x1b8] sm:$0xff]
      %v1592 = vld [vmem:[#allocation2 + $0x1c0] sm:$0xff]
      %v1593 = vld [vmem:[#allocation2 + $0x1c8] sm:$0xff]
      %v1594 = vld [vmem:[#allocation2 + $0x1d0] sm:$0xff]
      %v1595 = vld [vmem:[#allocation2 + $0x1d8] sm:$0xff]
      %v1596 = vld [vmem:[#allocation2 + $0x1e0] sm:$0xff]
      %v1597 = vld [vmem:[#allocation2 + $0x1e8] sm:$0xff]
      %v1598 = vld [vmem:[#allocation2 + $0x1f0] sm:$0xff]
      %v1599 = vld [vmem:[#allocation2 + $0x1f8] sm:$0xff]
      %v1600 = vld [vmem:[#allocation2 + $0x200] sm:$0xff]
      %v1601 = vld [vmem:[#allocation2 + $0x208] sm:$0xff]
      %v1602 = vld [vmem:[#allocation2 + $0x210] sm:$0xff]
      %v1603 = vld [vmem:[#allocation2 + $0x218] sm:$0xff]
      %v1604 = vld [vmem:[#allocation2 + $0x220] sm:$0xff]
      %v1605 = vld [vmem:[#allocation2 + $0x228] sm:$0xff]
      %v1606 = vld [vmem:[#allocation2 + $0x230] sm:$0xff]
      %v1607 = vld [vmem:[#allocation2 + $0x238] sm:$0xff]
      %v1608 = vld [vmem:[#allocation2 + $0x240] sm:$0xff]
      %v1609 = vld [vmem:[#allocation2 + $0x248] sm:$0xf]
      %v1610 = vadd.f32 %v1560, %v1585
      %v1611 = vadd.f32 %v1561, %v1586
      %v1612 = vadd.f32 %v1562, %v1587
      %v1613 = vadd.f32 %v1563, %v1588
      %v1614 = vadd.f32 %v1564, %v1589
      %v1615 = vadd.f32 %v1565, %v1590
      %v1616 = vadd.f32 %v1566, %v1591
      %v1617 = vadd.f32 %v1567, %v1592
      %v1618 = vadd.f32 %v1568, %v1593
      %v1619 = vadd.f32 %v1569, %v1594
      %v1620 = vadd.f32 %v1570, %v1595
      %v1621 = vadd.f32 %v1571, %v1596
      %v1622 = vadd.f32 %v1572, %v1597
      %v1623 = vadd.f32 %v1573, %v1598
      %v1624 = vadd.f32 %v1574, %v1599
      %v1625 = vadd.f32 %v1575, %v1600
      %v1626 = vadd.f32 %v1576, %v1601
      %v1627 = vadd.f32 %v1577, %v1602
      %v1628 = vadd.f32 %v1578, %v1603
      %v1629 = vadd.f32 %v1579, %v1604
      %v1630 = vadd.f32 %v1580, %v1605
      %v1631 = vadd.f32 %v1581, %v1606
      %v1632 = vadd.f32 %v1582, %v1607
      %v1633 = vadd.f32 %v1583, %v1608
      %v1634 = vadd.f32 %v1584, %v1609
      %v1635 = vld [vmem:[#allocation2 + $0x24c] sm:$0xff]
      %v1636 = vld [vmem:[#allocation2 + $0x254] sm:$0xff]
      %v1637 = vld [vmem:[#allocation2 + $0x25c] sm:$0xff]
      %v1638 = vld [vmem:[#allocation2 + $0x264] sm:$0xff]
      %v1639 = vld [vmem:[#allocation2 + $0x26c] sm:$0xff]
      %v1640 = vld [vmem:[#allocation2 + $0x274] sm:$0xff]
      %v1641 = vld [vmem:[#allocation2 + $0x27c] sm:$0xff]
      %v1642 = vld [vmem:[#allocation2 + $0x284] sm:$0xff]
      %v1643 = vld [vmem:[#allocation2 + $0x28c] sm:$0xff]
      %v1644 = vld [vmem:[#allocation2 + $0x294] sm:$0xff]
      %v1645 = vld [vmem:[#allocation2 + $0x29c] sm:$0xff]
      %v1646 = vld [vmem:[#allocation2 + $0x2a4] sm:$0xff]
      %v1647 = vld [vmem:[#allocation2 + $0x2ac] sm:$0xff]
      %v1648 = vld [vmem:[#allocation2 + $0x2b4] sm:$0xff]
      %v1649 = vld [vmem:[#allocation2 + $0x2bc] sm:$0xff]
      %v1650 = vld [vmem:[#allocation2 + $0x2c4] sm:$0xff]
      %v1651 = vld [vmem:[#allocation2 + $0x2cc] sm:$0xff]
      %v1652 = vld [vmem:[#allocation2 + $0x2d4] sm:$0xff]
      %v1653 = vld [vmem:[#allocation2 + $0x2dc] sm:$0xff]
      %v1654 = vld [vmem:[#allocation2 + $0x2e4] sm:$0xff]
      %v1655 = vld [vmem:[#allocation2 + $0x2ec] sm:$0xff]
      %v1656 = vld [vmem:[#allocation2 + $0x2f4] sm:$0xff]
      %v1657 = vld [vmem:[#allocation2 + $0x2fc] sm:$0xff]
      %v1658 = vld [vmem:[#allocation2 + $0x304] sm:$0xff]
      %v1659 = vld [vmem:[#allocation2 + $0x30c] sm:$0xf]
      %v1660 = vadd.f32 %v1610, %v1635
      %v1661 = vadd.f32 %v1611, %v1636
      %v1662 = vadd.f32 %v1612, %v1637
      %v1663 = vadd.f32 %v1613, %v1638
      %v1664 = vadd.f32 %v1614, %v1639
      %v1665 = vadd.f32 %v1615, %v1640
      %v1666 = vadd.f32 %v1616, %v1641
      %v1667 = vadd.f32 %v1617, %v1642
      %v1668 = vadd.f32 %v1618, %v1643
      %v1669 = vadd.f32 %v1619, %v1644
      %v1670 = vadd.f32 %v1620, %v1645
      %v1671 = vadd.f32 %v1621, %v1646
      %v1672 = vadd.f32 %v1622, %v1647
      %v1673 = vadd.f32 %v1623, %v1648
      %v1674 = vadd.f32 %v1624, %v1649
      %v1675 = vadd.f32 %v1625, %v1650
      %v1676 = vadd.f32 %v1626, %v1651
      %v1677 = vadd.f32 %v1627, %v1652
      %v1678 = vadd.f32 %v1628, %v1653
      %v1679 = vadd.f32 %v1629, %v1654
      %v1680 = vadd.f32 %v1630, %v1655
      %v1681 = vadd.f32 %v1631, %v1656
      %v1682 = vadd.f32 %v1632, %v1657
      %v1683 = vadd.f32 %v1633, %v1658
      %v1684 = vadd.f32 %v1634, %v1659
      %v1685 = vmul.f32 %v1660, 0.25
      %v1686 = vmul.f32 %v1661, 0.25
      %v1687 = vmul.f32 %v1662, 0.25
      %v1688 = vmul.f32 %v1663, 0.25
      %v1689 = vmul.f32 %v1664, 0.25
      %v1690 = vmul.f32 %v1665, 0.25
      %v1691 = vmul.f32 %v1666, 0.25
      %v1692 = vmul.f32 %v1667, 0.25
      %v1693 = vmul.f32 %v1668, 0.25
      %v1694 = vmul.f32 %v1669, 0.25
      %v1695 = vmul.f32 %v1670, 0.25
      %v1696 = vmul.f32 %v1671, 0.25
      %v1697 = vmul.f32 %v1672, 0.25
      %v1698 = vmul.f32 %v1673, 0.25
      %v1699 = vmul.f32 %v1674, 0.25
      %v1700 = vmul.f32 %v1675, 0.25
      %v1701 = vmul.f32 %v1676, 0.25
      %v1702 = vmul.f32 %v1677, 0.25
      %v1703 = vmul.f32 %v1678, 0.25
      %v1704 = vmul.f32 %v1679, 0.25
      %v1705 = vmul.f32 %v1680, 0.25
      %v1706 = vmul.f32 %v1681, 0.25
      %v1707 = vmul.f32 %v1682, 0.25
      %v1708 = vmul.f32 %v1683, 0.25
      %v1709 = vmul.f32 %v1684, 0.25
      %v1710 = vpack.c.bf16 %v1686, %v1685
      %v1711 = vpack.c.bf16 %v1688, %v1687
      %v1712 = vpack.c.bf16 %v1690, %v1689
      %v1713 = vpack.c.bf16 %v1692, %v1691
      %v1714 = vpack.c.bf16 %v1694, %v1693
      %v1715 = vpack.c.bf16 %v1696, %v1695
      %v1716 = vpack.c.bf16 %v1698, %v1697
      %v1717 = vpack.c.bf16 %v1700, %v1699
      %v1718 = vpack.c.bf16 %v1702, %v1701
      %v1719 = vpack.c.bf16 %v1704, %v1703
      %v1720 = vpack.c.bf16 %v1706, %v1705
      %v1721 = vpack.c.bf16 %v1708, %v1707
      %v1722 = vpack.c.bf16 %v1709, %v1709
      %v1736 = vunpack.c.l.b16 %v1710
      %v1737 = vunpack.c.h.b16 %v1710
      %v1738 = vunpack.c.l.b16 %v1711
      %v1739 = vunpack.c.h.b16 %v1711
      %v1740 = vunpack.c.l.b16 %v1712
      %v1741 = vunpack.c.h.b16 %v1712
      %v1742 = vunpack.c.l.b16 %v1713
      %v1743 = vunpack.c.h.b16 %v1713
      %v1744 = vunpack.c.l.b16 %v1714
      %v1745 = vunpack.c.h.b16 %v1714
      %v1746 = vunpack.c.l.b16 %v1715
      %v1747 = vunpack.c.h.b16 %v1715
      %v1748 = vunpack.c.l.b16 %v1716
      %v1749 = vunpack.c.h.b16 %v1716
      %v1750 = vunpack.c.l.b16 %v1717
      %v1751 = vunpack.c.h.b16 %v1717
      %v1752 = vunpack.c.l.b16 %v1718
      %v1753 = vunpack.c.h.b16 %v1718
      %v1754 = vunpack.c.l.b16 %v1719
      %v1755 = vunpack.c.h.b16 %v1719
      %v1756 = vunpack.c.l.b16 %v1720
      %v1757 = vunpack.c.h.b16 %v1720
      %v1758 = vunpack.c.l.b16 %v1721
      %v1759 = vunpack.c.h.b16 %v1721
      %v1760 = vunpack.c.l.b16 %v1722
      %v1761 = vpack.c.b16 %v1736, %v1736
      %v1762 = vpack.c.b16 %v1737, %v1737
      %v1763 = vpack.c.b16 %v1738, %v1738
      %v1764 = vpack.c.b16 %v1739, %v1739
      %v1765 = vpack.c.b16 %v1740, %v1740
      %v1766 = vpack.c.b16 %v1741, %v1741
      %v1767 = vpack.c.b16 %v1742, %v1742
      %v1768 = vpack.c.b16 %v1743, %v1743
      %v1769 = vpack.c.b16 %v1744, %v1744
      %v1770 = vpack.c.b16 %v1745, %v1745
      %v1771 = vpack.c.b16 %v1746, %v1746
      %v1772 = vpack.c.b16 %v1747, %v1747
      %v1773 = vpack.c.b16 %v1748, %v1748
      %v1774 = vpack.c.b16 %v1749, %v1749
      %v1775 = vpack.c.b16 %v1750, %v1750
      %v1776 = vpack.c.b16 %v1751, %v1751
      %v1777 = vpack.c.b16 %v1752, %v1752
      %v1778 = vpack.c.b16 %v1753, %v1753
      %v1779 = vpack.c.b16 %v1754, %v1754
      %v1780 = vpack.c.b16 %v1755, %v1755
      %v1781 = vpack.c.b16 %v1756, %v1756
      %v1782 = vpack.c.b16 %v1757, %v1757
      %v1783 = vpack.c.b16 %v1758, %v1758
      %v1784 = vpack.c.b16 %v1759, %v1759
      %v1785 = vpack.c.b16 %v1760, %v1760
      %vm1811 = vcmask 257024
      %1812 = vst.msk [vmem:[%s170] sm:$0xf] %vm1811, %v1761
      %1813 = vst.msk [vmem:[%s170 + $0x4] sm:$0xf] %vm1811, %v1762
      %1814 = vst.msk [vmem:[%s170 + $0x8] sm:$0xf] %vm1811, %v1763
      %1815 = vst.msk [vmem:[%s170 + $0xc] sm:$0xf] %vm1811, %v1764
      %1816 = vst.msk [vmem:[%s170 + $0x10] sm:$0xf] %vm1811, %v1765
      %1817 = vst.msk [vmem:[%s170 + $0x14] sm:$0xf] %vm1811, %v1766
      %1818 = vst.msk [vmem:[%s170 + $0x18] sm:$0xf] %vm1811, %v1767
      %1819 = vst.msk [vmem:[%s170 + $0x1c] sm:$0xf] %vm1811, %v1768
      %1820 = vst.msk [vmem:[%s170 + $0x20] sm:$0xf] %vm1811, %v1769
      %1821 = vst.msk [vmem:[%s170 + $0x24] sm:$0xf] %vm1811, %v1770
      %1822 = vst.msk [vmem:[%s170 + $0x28] sm:$0xf] %vm1811, %v1771
      %1823 = vst.msk [vmem:[%s170 + $0x2c] sm:$0xf] %vm1811, %v1772
      %1824 = vst.msk [vmem:[%s170 + $0x30] sm:$0xf] %vm1811, %v1773
      %1825 = vst.msk [vmem:[%s170 + $0x34] sm:$0xf] %vm1811, %v1774
      %1826 = vst.msk [vmem:[%s170 + $0x38] sm:$0xf] %vm1811, %v1775
      %1827 = vst.msk [vmem:[%s170 + $0x3c] sm:$0xf] %vm1811, %v1776
      %1828 = vst.msk [vmem:[%s170 + $0x40] sm:$0xf] %vm1811, %v1777
      %1829 = vst.msk [vmem:[%s170 + $0x44] sm:$0xf] %vm1811, %v1778
      %1830 = vst.msk [vmem:[%s170 + $0x48] sm:$0xf] %vm1811, %v1779
      %1831 = vst.msk [vmem:[%s170 + $0x4c] sm:$0xf] %vm1811, %v1780
      %1832 = vst.msk [vmem:[%s170 + $0x50] sm:$0xf] %vm1811, %v1781
      %1833 = vst.msk [vmem:[%s170 + $0x54] sm:$0xf] %vm1811, %v1782
      %1834 = vst.msk [vmem:[%s170 + $0x58] sm:$0xf] %vm1811, %v1783
      %1835 = vst.msk [vmem:[%s170 + $0x5c] sm:$0xf] %vm1811, %v1784
      %vm1836 = vcmask 254976
      %1837 = vst.msk [vmem:[%s170 + $0x60] sm:$0x3] %vm1836, %v1785
      %p1838 = scmp.lt.s32.totalorder %s14, 1
      %s1839 = scalar_select %p1838, %s14, 1
      %s1840 = smul.addr %s1839, 25
      %s1841 = smul.addr %s1840, 4
      %s1842 = scalar_lea.vmem %s3, %s1841
      // Predicated region
      $region33: #{discrimination_net_forward.3} parent=31 // pred_check
        %p1843 = pneg %p100
      $region34: #{discrimination_net_forward.3} parent=31 // pred_check_branch
        %1845 = sbr.rel (%p1843) target = $region36
      $region35: #{discrimination_net_forward.3} parent=31 // pred_region
        _
      $region36: #{discrimination_net_forward.3} parent=31 // pred_fallthru
        _
    $region32: #{discrimination_net_forward.3} parent=5 // pred_fallthru
      _
    %p1846 = scmp.le.s32.totalorder 2, %s9
    // Predicated region
    $region37: #{discrimination_net_forward.3} parent=5 // pred_check
      %p1847 = pneg %p1846
    $region38: #{discrimination_net_forward.3} parent=5 // pred_check_branch
      %1849 = sbr.rel (%p1847) target = $region40
    $region39: #{discrimination_net_forward.3} parent=5 // pred_region
      %s1850 = ssub.s32 %s9, 2
      // Predicated region
      $region41: #{discrimination_net_forward.3} parent=39 // pred_check
        %p1851 = pneg %p106
      $region42: #{discrimination_net_forward.3} parent=39 // pred_check_branch
        %1853 = sbr.rel (%p1851) target = $region44
      $region43: #{discrimination_net_forward.3} parent=39 // pred_region
        %p1854 = scmp.lt.s32.totalorder %s15, 1
        %s1855 = scalar_select %p1854, %s15, 1
        %s1856 = smul.addr %s1855, 25
        %s1857 = smul.addr %s1856, 4
        %s1858 = scalar_lea.vmem %s3, %s1857
      $region44: #{discrimination_net_forward.3} parent=39 // pred_fallthru
        _
    $region40: #{discrimination_net_forward.3} parent=5 // pred_fallthru
      _
  $region6: #{discrimination_net_forward.3} parent=0 // loop_footer
    %s13 = sadd.s32 1, %s9
  $region7: #{discrimination_net_forward.3} parent=0 // loop_footer_branch
    %8 = sbr.rel target = $region3
  $region8: #{discrimination_net_forward.3} parent=0 // loop_exit
    _

// kernel: discrimination_net_forward.4
$region0: #{discrimination_net_forward.4}
  #allocation0 [shape = 'u32[]', space=smem, size = 0x4, offset = 0x4, fixed_abs, tag = 'smem constant byte address 0x4 - core index']
  #allocation1 [shape = 'u32[144,128]{1,0:T(1,128)}', space=vmem, size = 0x12000, scoped, tag = 'internal scratch']
  #allocation2 [shape = 'f32[196,64]{1,0:T(8,128)}', space=vmem, size = 0x19000, scoped, tag = 'scratch operand']
  %s0 = inlined_call_operand.vmem [shape: bf16[2,196,800], index: 0, kind: input, shape index: {}]
  %s1 = inlined_call_operand.vmem [shape: bf16[800,64], index: 1, kind: input, shape index: {}]
  %s2 = inlined_call_operand.vmem [shape: f32[1,64], index: 2, kind: input, shape index: {}]
  %s3 = inlined_call_operand.vmem [shape: bf16[2,49,64], index: 3, kind: output, shape index: {}]
  %s4 = sld [smem:[#allocation0]]
  $region45: #{discrimination_net_forward.4} parent=0
    _
  %s6 = ssub.s32 1, %s4
  %s7 = scalar_select 0, %s6, %s4
  loop: start=0, step=1, limit=4
  $region2: #{discrimination_net_forward.4} parent=0 // loop_pre_header
    _
  $region3: #{discrimination_net_forward.4} parent=0 // loop_header
    %s9 = sphi 0, %s13
    %p10 = scmp.ge.s32.totalorder %s9, 4
    %s19 = sphi 0, %s21
    %s22 = sphi 0, %s19
    %s23 = sphi 0, %s22
    %s39 = sphi 0, %s23
    %s43 = sphi 0, %s43
    %s45 = sphi 0, %s43
    %s46 = sphi 0, %s45
    %s60 = sphi 0, %s46
    %s64 = sphi 0, %s64
    %s66 = sphi 0, %s64
    %s67 = sphi 0, %s66
    %s81 = sphi 0, %s67
    %s87 = sphi 0, %s89
    %s90 = sphi 0, %s87
    %s91 = sphi 0, %s90
    %s107 = sphi 0, %s91
  $region4: #{discrimination_net_forward.4} parent=0 // loop_header_branch
    %12 = sbr.rel (%p10) target = $region8
  $region5: #{discrimination_net_forward.4} parent=0 // loop_body
    %s14 = ssub.s32 %s9, 1
    %s15 = ssub.s32 %s9, 2
    %s16 = sadd.s32 %s9, 1
    %s17 = ssub.s32 %s9, %s16
    %p18 = scmp.eq.s32.totalorder %s17, 0
    %s20 = sadd.s32 %s19, 1
    %s21 = scalar_select %p18, %s19, %s20
    %p24 = pneg %p18
    %p25 = scmp.eq.s32.totalorder %s9, 1
    %p26 = por %p24, %p25
    %p27 = scmp.ne.s32.totalorder %s19, %s22
    %p28 = scmp.eq.s32.totalorder %s9, 0
    %p29 = por %p27, %p28
    %p30 = scmp.ne.s32.totalorder %s19, %s22
    %p31 = scmp.eq.s32.totalorder %s14, 1
    %p32 = por %p30, %p31
    %p33 = scmp.ne.s32.totalorder %s22, %s23
    %p34 = scmp.eq.s32.totalorder %s14, 0
    %p35 = por %p33, %p34
    %p36 = scmp.ne.s32.totalorder %s22, %s23
    %p37 = scmp.eq.s32.totalorder %s15, 1
    %p38 = por %p36, %p37
    %p40 = scmp.ne.s32.totalorder %s23, %s39
    %p41 = scmp.eq.s32.totalorder %s15, 0
    %p42 = por %p40, %p41
    %s44 = sadd.s32 %s43, 1
    %p47 = scmp.eq.s32.totalorder %s9, 1
    %p48 = scmp.ne.s32.totalorder %s43, %s45
    %p49 = scmp.eq.s32.totalorder %s9, 0
    %p50 = por %p48, %p49
    %p51 = scmp.ne.s32.totalorder %s43, %s45
    %p52 = scmp.eq.s32.totalorder %s14, 1
    %p53 = por %p51, %p52
    %p54 = scmp.ne.s32.totalorder %s45, %s46
    %p55 = scmp.eq.s32.totalorder %s14, 0
    %p56 = por %p54, %p55
    %p57 = scmp.ne.s32.totalorder %s45, %s46
    %p58 = scmp.eq.s32.totalorder %s15, 1
    %p59 = por %p57, %p58
    %p61 = scmp.ne.s32.totalorder %s46, %s60
    %p62 = scmp.eq.s32.totalorder %s15, 0
    %p63 = por %p61, %p62
    %s65 = sadd.s32 %s64, 1
    %p68 = scmp.eq.s32.totalorder %s9, 1
    %p69 = scmp.ne.s32.totalorder %s64, %s66
    %p70 = scmp.eq.s32.totalorder %s9, 0
    %p71 = por %p69, %p70
    %p72 = scmp.ne.s32.totalorder %s64, %s66
    %p73 = scmp.eq.s32.totalorder %s14, 1
    %p74 = por %p72, %p73
    %p75 = scmp.ne.s32.totalorder %s66, %s67
    %p76 = scmp.eq.s32.totalorder %s14, 0
    %p77 = por %p75, %p76
    %p78 = scmp.ne.s32.totalorder %s66, %s67
    %p79 = scmp.eq.s32.totalorder %s15, 1
    %p80 = por %p78, %p79
    %p82 = scmp.ne.s32.totalorder %s67, %s81
    %p83 = scmp.eq.s32.totalorder %s15, 0
    %p84 = por %p82, %p83
    %s85 = ssub.s32 %s9, %s16
    %p86 = scmp.eq.s32.totalorder %s85, 0
    %s88 = sadd.s32 %s87, 1
    %s89 = scalar_select %p86, %s87, %s88
    %p92 = pneg %p86
    %p93 = scmp.eq.s32.totalorder %s9, 1
    %p94 = por %p92, %p93
    %p95 = scmp.ne.s32.totalorder %s87, %s90
    %p96 = scmp.eq.s32.totalorder %s9, 0
    %p97 = por %p95, %p96
    %p98 = scmp.ne.s32.totalorder %s87, %s90
    %p99 = scmp.eq.s32.totalorder %s14, 1
    %p100 = por %p98, %p99
    %p101 = scmp.ne.s32.totalorder %s90, %s91
    %p102 = scmp.eq.s32.totalorder %s14, 0
    %p103 = por %p101, %p102
    %p104 = scmp.ne.s32.totalorder %s90, %s91
    %p105 = scmp.eq.s32.totalorder %s15, 1
    %p106 = por %p104, %p105
    %p108 = scmp.ne.s32.totalorder %s91, %s107
    %p109 = scmp.eq.s32.totalorder %s15, 0
    %p110 = por %p108, %p109
    %p111 = scmp.le.s32.totalorder 1, %s9
    %p112 = scmp.lt.s32.totalorder %s9, 3
    %p113 = pnand %p111, %p112
    %p114 = pneg %p113
    // Predicated region
    $region9: #{discrimination_net_forward.4} parent=5 // pred_check
      _
    $region10: #{discrimination_net_forward.4} parent=5 // pred_check_branch
      %116 = sbr.rel (%p113) target = $region12
    $region11: #{discrimination_net_forward.4} parent=5 // pred_region
      %s117 = ssub.s32 %s9, 1
      // Predicated region
      $region13: #{discrimination_net_forward.4} parent=11 // pred_check
        %p118 = pneg %p56
      $region14: #{discrimination_net_forward.4} parent=11 // pred_check_branch
        %120 = sbr.rel (%p118) target = $region16
      $region15: #{discrimination_net_forward.4} parent=11 // pred_region
        _
      $region16: #{discrimination_net_forward.4} parent=11 // pred_fallthru
        _
      // Predicated region
      $region17: #{discrimination_net_forward.4} parent=11 // pred_check
        %p121 = pneg %p77
      $region18: #{discrimination_net_forward.4} parent=11 // pred_check_branch
        %123 = sbr.rel (%p121) target = $region20
      $region19: #{discrimination_net_forward.4} parent=11 // pred_region
        _
      $region20: #{discrimination_net_forward.4} parent=11 // pred_fallthru
        _
    $region12: #{discrimination_net_forward.4} parent=5 // pred_fallthru
      _
    %p124 = scmp.lt.s32.totalorder %s9, 2
    // Predicated region
    $region21: #{discrimination_net_forward.4} parent=5 // pred_check
      %p125 = pneg %p124
    $region22: #{discrimination_net_forward.4} parent=5 // pred_check_branch
      %127 = sbr.rel (%p125) target = $region24
    $region23: #{discrimination_net_forward.4} parent=5 // pred_region
      // Predicated region
      $region25: #{discrimination_net_forward.4} parent=23 // pred_check
        %p128 = pneg %p29
      $region26: #{discrimination_net_forward.4} parent=23 // pred_check_branch
        %130 = sbr.rel (%p128) target = $region28
      $region27: #{discrimination_net_forward.4} parent=23 // pred_region
        %p131 = scmp.lt.s32.totalorder %s9, 1
        %s132 = scalar_select %p131, %s9, 1
        %s133 = smul.addr %s132, 175
        %s134 = smul.addr %s133, 4
        %s135 = scalar_lea.vmem %s0, %s134
      $region28: #{discrimination_net_forward.4} parent=23 // pred_fallthru
        _
    $region24: #{discrimination_net_forward.4} parent=5 // pred_fallthru
      _
    %p136 = scmp.le.s32.totalorder 1, %s9
    %p137 = scmp.lt.s32.totalorder %s9, 3
    %p138 = pnand %p136, %p137
    %p139 = pneg %p138
    // Predicated region
    $region29: #{discrimination_net_forward.4} parent=5 // pred_check
      _
    $region30: #{discrimination_net_forward.4} parent=5 // pred_check_branch
      %141 = sbr.rel (%p138) target = $region32
    $region31: #{discrimination_net_forward.4} parent=5 // pred_region
      %s142 = ssub.s32 %s9, 1
      %p143 = scmp.lt.s32.totalorder %s14, 1
      %s144 = scalar_select %p143, %s14, 1
      %s145 = smul.addr %s144, 175
      %s146 = smul.addr %s145, 4
      %s147 = scalar_lea.vmem %s0, %s146
      %p148 = pneg %p35
      %p149 = pneg %p32
      %p150 = pneg %p56
      %p151 = pneg %p53
      %p152 = pneg %p77
      %p153 = pneg %p74
      %p154 = pneg %p103
      %p155 = pneg %p100
      %p156 = scmp.lt.s32.totalorder %s14, 1
      %s157 = scalar_select %p156, %s14, 1
      %s158 = smul.addr %s157, 7
      %s159 = smul.addr %s158, 4
      %s160 = scalar_lea.vmem %s3, %s159
      %p161 = scmp.lt.s32.totalorder %s14, 1
      %s162 = scalar_select %p161, %s14, 1
      %s163 = smul.addr %s162, 175
      %s164 = smul.addr %s163, 4
      %s165 = scalar_lea.vmem %s0, %s164
      %p166 = scmp.lt.s32.totalorder %s14, 1
      %s167 = scalar_select %p166, %s14, 1
      %s168 = smul.addr %s167, 7
      %s169 = smul.addr %s168, 4
      %s170 = scalar_lea.vmem %s3, %s169
      %v172 = vld [vmem:[%s165] sm:$0xff]
      %v173 = vld [vmem:[%s165 + $0x8] sm:$0xff]
      %v174 = vld [vmem:[%s165 + $0x10] sm:$0xff]
      %v175 = vld [vmem:[%s165 + $0x18] sm:$0xf]
      %v176 = vld [vmem:[%s165 + $0x1c] sm:$0xff]
      %v177 = vld [vmem:[%s165 + $0x24] sm:$0xff]
      %v178 = vld [vmem:[%s165 + $0x2c] sm:$0xff]
      %v179 = vld [vmem:[%s165 + $0x34] sm:$0xf]
      %v180 = vld [vmem:[%s165 + $0x38] sm:$0xff]
      %v181 = vld [vmem:[%s165 + $0x40] sm:$0xff]
      %v182 = vld [vmem:[%s165 + $0x48] sm:$0xff]
      %v183 = vld [vmem:[%s165 + $0x50] sm:$0xf]
      %v184 = vld [vmem:[%s165 + $0x54] sm:$0xff]
      %v185 = vld [vmem:[%s165 + $0x5c] sm:$0xff]
      %v186 = vld [vmem:[%s165 + $0x64] sm:$0xff]
      %v187 = vld [vmem:[%s165 + $0x6c] sm:$0xf]
      %v188 = vld [vmem:[%s165 + $0x70] sm:$0xff]
      %v189 = vld [vmem:[%s165 + $0x78] sm:$0xff]
      %v190 = vld [vmem:[%s165 + $0x80] sm:$0xff]
      %v191 = vld [vmem:[%s165 + $0x88] sm:$0xf]
      %v192 = vld [vmem:[%s165 + $0x8c] sm:$0xff]
      %v193 = vld [vmem:[%s165 + $0x94] sm:$0xff]
      %v194 = vld [vmem:[%s165 + $0x9c] sm:$0xff]
      %v195 = vld [vmem:[%s165 + $0xa4] sm:$0xf]
      %v196 = vld [vmem:[%s165 + $0xa8] sm:$0xff]
      %v197 = vld [vmem:[%s165 + $0xb0] sm:$0xff]
      %v198 = vld [vmem:[%s165 + $0xb8] sm:$0xff]
      %v199 = vld [vmem:[%s165 + $0xc0] sm:$0xf]
      %v200 = vld [vmem:[%s165 + $0xc4] sm:$0xff]
      %v201 = vld [vmem:[%s165 + $0xcc] sm:$0xff]
      %v202 = vld [vmem:[%s165 + $0xd4] sm:$0xff]
      %v203 = vld [vmem:[%s165 + $0xdc] sm:$0xf]
      %v204 = vld [vmem:[%s165 + $0xe0] sm:$0xff]
      %v205 = vld [vmem:[%s165 + $0xe8] sm:$0xff]
      %v206 = vld [vmem:[%s165 + $0xf0] sm:$0xff]
      %v207 = vld [vmem:[%s165 + $0xf8] sm:$0xf]
      %v208 = vld [vmem:[%s165 + $0xfc] sm:$0xff]
      %v209 = vld [vmem:[%s165 + $0x104] sm:$0xff]
      %v210 = vld [vmem:[%s165 + $0x10c] sm:$0xff]
      %v211 = vld [vmem:[%s165 + $0x114] sm:$0xf]
      %v212 = vld [vmem:[%s165 + $0x118] sm:$0xff]
      %v213 = vld [vmem:[%s165 + $0x120] sm:$0xff]
      %v214 = vld [vmem:[%s165 + $0x128] sm:$0xff]
      %v215 = vld [vmem:[%s165 + $0x130] sm:$0xf]
      %v216 = vld [vmem:[%s165 + $0x134] sm:$0xff]
      %v217 = vld [vmem:[%s165 + $0x13c] sm:$0xff]
      %v218 = vld [vmem:[%s165 + $0x144] sm:$0xff]
      %v219 = vld [vmem:[%s165 + $0x14c] sm:$0xf]
      %v220 = vld [vmem:[%s165 + $0x150] sm:$0xff]
      %v221 = vld [vmem:[%s165 + $0x158] sm:$0xff]
      %v222 = vld [vmem:[%s165 + $0x160] sm:$0xff]
      %v223 = vld [vmem:[%s165 + $0x168] sm:$0xf]
      %v224 = vld [vmem:[%s165 + $0x16c] sm:$0xff]
      %v225 = vld [vmem:[%s165 + $0x174] sm:$0xff]
      %v226 = vld [vmem:[%s165 + $0x17c] sm:$0xff]
      %v227 = vld [vmem:[%s165 + $0x184] sm:$0xf]
      %v228 = vld [vmem:[%s165 + $0x188] sm:$0xff]
      %v229 = vld [vmem:[%s165 + $0x190] sm:$0xff]
      %v230 = vld [vmem:[%s165 + $0x198] sm:$0xff]
      %v231 = vld [vmem:[%s165 + $0x1a0] sm:$0xf]
      %v232 = vld [vmem:[%s165 + $0x1a4] sm:$0xff]
      %v233 = vld [vmem:[%s165 + $0x1ac] sm:$0xff]
      %v234 = vld [vmem:[%s165 + $0x1b4] sm:$0xff]
      %v235 = vld [vmem:[%s165 + $0x1bc] sm:$0xf]
      %v236 = vld [vmem:[%s165 + $0x1c0] sm:$0xff]
      %v237 = vld [vmem:[%s165 + $0x1c8] sm:$0xff]
      %v238 = vld [vmem:[%s165 + $0x1d0] sm:$0xff]
      %v239 = vld [vmem:[%s165 + $0x1d8] sm:$0xf]
      %v240 = vld [vmem:[%s165 + $0x1dc] sm:$0xff]
      %v241 = vld [vmem:[%s165 + $0x1e4] sm:$0xff]
      %v242 = vld [vmem:[%s165 + $0x1ec] sm:$0xff]
      %v243 = vld [vmem:[%s165 + $0x1f4] sm:$0xf]
      %v244 = vld [vmem:[%s165 + $0x1f8] sm:$0xff]
      %v245 = vld [vmem:[%s165 + $0x200] sm:$0xff]
      %v246 = vld [vmem:[%s165 + $0x208] sm:$0xff]
      %v247 = vld [vmem:[%s165 + $0x210] sm:$0xf]
      %v248 = vld [vmem:[%s165 + $0x214] sm:$0xff]
      %v249 = vld [vmem:[%s165 + $0x21c] sm:$0xff]
      %v250 = vld [vmem:[%s165 + $0x224] sm:$0xff]
      %v251 = vld [vmem:[%s165 + $0x22c] sm:$0xf]
      %v252 = vld [vmem:[%s165 + $0x230] sm:$0xff]
      %v253 = vld [vmem:[%s165 + $0x238] sm:$0xff]
      %v254 = vld [vmem:[%s165 + $0x240] sm:$0xff]
      %v255 = vld [vmem:[%s165 + $0x248] sm:$0xf]
      %v256 = vld [vmem:[%s165 + $0x24c] sm:$0xff]
      %v257 = vld [vmem:[%s165 + $0x254] sm:$0xff]
      %v258 = vld [vmem:[%s165 + $0x25c] sm:$0xff]
      %v259 = vld [vmem:[%s165 + $0x264] sm:$0xf]
      %v260 = vld [vmem:[%s165 + $0x268] sm:$0xff]
      %v261 = vld [vmem:[%s165 + $0x270] sm:$0xff]
      %v262 = vld [vmem:[%s165 + $0x278] sm:$0xff]
      %v263 = vld [vmem:[%s165 + $0x280] sm:$0xf]
      %v264 = vld [vmem:[%s165 + $0x284] sm:$0xff]
      %v265 = vld [vmem:[%s165 + $0x28c] sm:$0xff]
      %v266 = vld [vmem:[%s165 + $0x294] sm:$0xff]
      %v267 = vld [vmem:[%s165 + $0x29c] sm:$0xf]
      %v268 = vld [vmem:[%s165 + $0x2a0] sm:$0x33]
      %v269 = vld [vmem:[%s165 + $0x2a8] sm:$0x33]
      %v270 = vld [vmem:[%s165 + $0x2b0] sm:$0x33]
      %v271 = vld [vmem:[%s165 + $0x2b8] sm:$0x3]
      %v272 = vld [vmem:[%s1] sm:$0xf]
      %v273 = vld [vmem:[%s1 + $0x4] sm:$0xf]
      %v274 = vld [vmem:[%s1 + $0x8] sm:$0xf]
      %v275 = vld [vmem:[%s1 + $0xc] sm:$0xf]
      %v276 = vld [vmem:[%s1 + $0x10] sm:$0xf]
      %v277 = vld [vmem:[%s1 + $0x14] sm:$0xf]
      %v278 = vld [vmem:[%s1 + $0x18] sm:$0xf]
      %v279 = vld [vmem:[%s1 + $0x1c] sm:$0xf]
      %v280 = vld [vmem:[%s1 + $0x20] sm:$0xf]
      %v281 = vld [vmem:[%s1 + $0x24] sm:$0xf]
      %v282 = vld [vmem:[%s1 + $0x28] sm:$0xf]
      %v283 = vld [vmem:[%s1 + $0x2c] sm:$0xf]
      %v284 = vld [vmem:[%s1 + $0x30] sm:$0xf]
      %v285 = vld [vmem:[%s1 + $0x34] sm:$0xf]
      %v286 = vld [vmem:[%s1 + $0x38] sm:$0xf]
      %v287 = vld [vmem:[%s1 + $0x3c] sm:$0xf]
      %v288 = vld [vmem:[%s1 + $0x40] sm:$0xf]
      %v289 = vld [vmem:[%s1 + $0x44] sm:$0xf]
      %v290 = vld [vmem:[%s1 + $0x48] sm:$0xf]
      %v291 = vld [vmem:[%s1 + $0x4c] sm:$0xf]
      %v292 = vld [vmem:[%s1 + $0x50] sm:$0xf]
      %v293 = vld [vmem:[%s1 + $0x54] sm:$0xf]
      %v294 = vld [vmem:[%s1 + $0x58] sm:$0xf]
      %v295 = vld [vmem:[%s1 + $0x5c] sm:$0xf]
      %v296 = vld [vmem:[%s1 + $0x60] sm:$0xf]
      %v297 = vld [vmem:[%s1 + $0x64] sm:$0xf]
      %v298 = vld [vmem:[%s1 + $0x68] sm:$0xf]
      %v299 = vld [vmem:[%s1 + $0x6c] sm:$0xf]
      %v300 = vld [vmem:[%s1 + $0x70] sm:$0xf]
      %v301 = vld [vmem:[%s1 + $0x74] sm:$0xf]
      %v302 = vld [vmem:[%s1 + $0x78] sm:$0xf]
      %v303 = vld [vmem:[%s1 + $0x7c] sm:$0xf]
      %v304 = vld [vmem:[%s1 + $0x80] sm:$0xf]
      %v305 = vld [vmem:[%s1 + $0x84] sm:$0xf]
      %v306 = vld [vmem:[%s1 + $0x88] sm:$0xf]
      %v307 = vld [vmem:[%s1 + $0x8c] sm:$0xf]
      %v308 = vld [vmem:[%s1 + $0x90] sm:$0xf]
      %v309 = vld [vmem:[%s1 + $0x94] sm:$0xf]
      %v310 = vld [vmem:[%s1 + $0x98] sm:$0xf]
      %v311 = vld [vmem:[%s1 + $0x9c] sm:$0xf]
      %v312 = vld [vmem:[%s1 + $0xa0] sm:$0xf]
      %v313 = vld [vmem:[%s1 + $0xa4] sm:$0xf]
      %v314 = vld [vmem:[%s1 + $0xa8] sm:$0xf]
      %v315 = vld [vmem:[%s1 + $0xac] sm:$0xf]
      %v316 = vld [vmem:[%s1 + $0xb0] sm:$0xf]
      %v317 = vld [vmem:[%s1 + $0xb4] sm:$0xf]
      %v318 = vld [vmem:[%s1 + $0xb8] sm:$0xf]
      %v319 = vld [vmem:[%s1 + $0xbc] sm:$0xf]
      %v320 = vld [vmem:[%s1 + $0xc0] sm:$0xf]
      %v321 = vld [vmem:[%s1 + $0xc4] sm:$0xf]
      %v322 = vld [vmem:[%s1 + $0xc8] sm:$0xf]
      %v323 = vld [vmem:[%s1 + $0xcc] sm:$0xf]
      %v324 = vld [vmem:[%s1 + $0xd0] sm:$0xf]
      %v325 = vld [vmem:[%s1 + $0xd4] sm:$0xf]
      %v326 = vld [vmem:[%s1 + $0xd8] sm:$0xf]
      %v327 = vld [vmem:[%s1 + $0xdc] sm:$0xf]
      %v328 = vld [vmem:[%s1 + $0xe0] sm:$0xf]
      %v329 = vld [vmem:[%s1 + $0xe4] sm:$0xf]
      %v330 = vld [vmem:[%s1 + $0xe8] sm:$0xf]
      %v331 = vld [vmem:[%s1 + $0xec] sm:$0xf]
      %v332 = vld [vmem:[%s1 + $0xf0] sm:$0xf]
      %v333 = vld [vmem:[%s1 + $0xf4] sm:$0xf]
      %v334 = vld [vmem:[%s1 + $0xf8] sm:$0xf]
      %v335 = vld [vmem:[%s1 + $0xfc] sm:$0xf]
      %v336 = vld [vmem:[%s1 + $0x100] sm:$0xf]
      %v337 = vld [vmem:[%s1 + $0x104] sm:$0xf]
      %v338 = vld [vmem:[%s1 + $0x108] sm:$0xf]
      %v339 = vld [vmem:[%s1 + $0x10c] sm:$0xf]
      %v340 = vld [vmem:[%s1 + $0x110] sm:$0xf]
      %v341 = vld [vmem:[%s1 + $0x114] sm:$0xf]
      %v342 = vld [vmem:[%s1 + $0x118] sm:$0xf]
      %v343 = vld [vmem:[%s1 + $0x11c] sm:$0xf]
      %v344 = vld [vmem:[%s1 + $0x120] sm:$0xf]
      %v345 = vld [vmem:[%s1 + $0x124] sm:$0xf]
      %v346 = vld [vmem:[%s1 + $0x128] sm:$0xf]
      %v347 = vld [vmem:[%s1 + $0x12c] sm:$0xf]
      %v348 = vld [vmem:[%s1 + $0x130] sm:$0xf]
      %v349 = vld [vmem:[%s1 + $0x134] sm:$0xf]
      %v350 = vld [vmem:[%s1 + $0x138] sm:$0xf]
      %v351 = vld [vmem:[%s1 + $0x13c] sm:$0xf]
      %v352 = vld [vmem:[%s1 + $0x140] sm:$0xf]
      %v353 = vld [vmem:[%s1 + $0x144] sm:$0xf]
      %v354 = vld [vmem:[%s1 + $0x148] sm:$0xf]
      %v355 = vld [vmem:[%s1 + $0x14c] sm:$0xf]
      %v356 = vld [vmem:[%s1 + $0x150] sm:$0xf]
      %v357 = vld [vmem:[%s1 + $0x154] sm:$0xf]
      %v358 = vld [vmem:[%s1 + $0x158] sm:$0xf]
      %v359 = vld [vmem:[%s1 + $0x15c] sm:$0xf]
      %v360 = vld [vmem:[%s1 + $0x160] sm:$0xf]
      %v361 = vld [vmem:[%s1 + $0x164] sm:$0xf]
      %v362 = vld [vmem:[%s1 + $0x168] sm:$0xf]
      %v363 = vld [vmem:[%s1 + $0x16c] sm:$0xf]
      %v364 = vld [vmem:[%s1 + $0x170] sm:$0xf]
      %v365 = vld [vmem:[%s1 + $0x174] sm:$0xf]
      %v366 = vld [vmem:[%s1 + $0x178] sm:$0xf]
      %v367 = vld [vmem:[%s1 + $0x17c] sm:$0xf]
      %v368 = vld [vmem:[%s1 + $0x180] sm:$0xf]
      %v369 = vld [vmem:[%s1 + $0x184] sm:$0xf]
      %v370 = vld [vmem:[%s1 + $0x188] sm:$0xf]
      %v371 = vld [vmem:[%s1 + $0x18c] sm:$0xf]
      %v372 = vld [vmem:[%s2] sm:$0x1]
      %v374 = vlaneseq
      %v375 = vshrl.u32 %v374, 7
      %v376 = vsub.s32 0, %v375
      %v377 = vrot.slane %v372, %v376
      %v479 = vunpack.c.l.b16 %v172
      %v480 = vunpack.c.h.b16 %v172
      %v481 = vunpack.c.l.b16 %v173
      %v482 = vunpack.c.h.b16 %v173
      %v483 = vunpack.c.l.b16 %v174
      %v484 = vunpack.c.h.b16 %v174
      %v485 = vunpack.c.l.b16 %v175
      %v486 = vunpack.c.l.b16 %v176
      %v487 = vunpack.c.h.b16 %v176
      %v488 = vunpack.c.l.b16 %v177
      %v489 = vunpack.c.h.b16 %v177
      %v490 = vunpack.c.l.b16 %v178
      %v491 = vunpack.c.h.b16 %v178
      %v492 = vunpack.c.l.b16 %v179
      %v493 = vunpack.c.l.b16 %v180
      %v494 = vunpack.c.h.b16 %v180
      %v495 = vunpack.c.l.b16 %v181
      %v496 = vunpack.c.h.b16 %v181
      %v497 = vunpack.c.l.b16 %v182
      %v498 = vunpack.c.h.b16 %v182
      %v499 = vunpack.c.l.b16 %v183
      %v500 = vunpack.c.l.b16 %v184
      %v501 = vunpack.c.h.b16 %v184
      %v502 = vunpack.c.l.b16 %v185
      %v503 = vunpack.c.h.b16 %v185
      %v504 = vunpack.c.l.b16 %v186
      %v505 = vunpack.c.h.b16 %v186
      %v506 = vunpack.c.l.b16 %v187
      %v507 = vunpack.c.l.b16 %v188
      %v508 = vunpack.c.h.b16 %v188
      %v509 = vunpack.c.l.b16 %v189
      %v510 = vunpack.c.h.b16 %v189
      %v511 = vunpack.c.l.b16 %v190
      %v512 = vunpack.c.h.b16 %v190
      %v513 = vunpack.c.l.b16 %v191
      %v514 = vunpack.c.l.b16 %v192
      %v515 = vunpack.c.h.b16 %v192
      %v516 = vunpack.c.l.b16 %v193
      %v517 = vunpack.c.h.b16 %v193
      %v518 = vunpack.c.l.b16 %v194
      %v519 = vunpack.c.h.b16 %v194
      %v520 = vunpack.c.l.b16 %v195
      %v521 = vunpack.c.l.b16 %v196
      %v522 = vunpack.c.h.b16 %v196
      %v523 = vunpack.c.l.b16 %v197
      %v524 = vunpack.c.h.b16 %v197
      %v525 = vunpack.c.l.b16 %v198
      %v526 = vunpack.c.h.b16 %v198
      %v527 = vunpack.c.l.b16 %v199
      %v528 = vunpack.c.l.b16 %v200
      %v529 = vunpack.c.h.b16 %v200
      %v530 = vunpack.c.l.b16 %v201
      %v531 = vunpack.c.h.b16 %v201
      %v532 = vunpack.c.l.b16 %v202
      %v533 = vunpack.c.h.b16 %v202
      %v534 = vunpack.c.l.b16 %v203
      %v535 = vunpack.c.l.b16 %v204
      %v536 = vunpack.c.h.b16 %v204
      %v537 = vunpack.c.l.b16 %v205
      %v538 = vunpack.c.h.b16 %v205
      %v539 = vunpack.c.l.b16 %v206
      %v540 = vunpack.c.h.b16 %v206
      %v541 = vunpack.c.l.b16 %v207
      %v542 = vunpack.c.l.b16 %v208
      %v543 = vunpack.c.h.b16 %v208
      %v544 = vunpack.c.l.b16 %v209
      %v545 = vunpack.c.h.b16 %v209
      %v546 = vunpack.c.l.b16 %v210
      %v547 = vunpack.c.h.b16 %v210
      %v548 = vunpack.c.l.b16 %v211
      %v549 = vunpack.c.l.b16 %v212
      %v550 = vunpack.c.h.b16 %v212
      %v551 = vunpack.c.l.b16 %v213
      %v552 = vunpack.c.h.b16 %v213
      %v553 = vunpack.c.l.b16 %v214
      %v554 = vunpack.c.h.b16 %v214
      %v555 = vunpack.c.l.b16 %v215
      %v556 = vunpack.c.l.b16 %v216
      %v557 = vunpack.c.h.b16 %v216
      %v558 = vunpack.c.l.b16 %v217
      %v559 = vunpack.c.h.b16 %v217
      %v560 = vunpack.c.l.b16 %v218
      %v561 = vunpack.c.h.b16 %v218
      %v562 = vunpack.c.l.b16 %v219
      %v563 = vunpack.c.l.b16 %v220
      %v564 = vunpack.c.h.b16 %v220
      %v565 = vunpack.c.l.b16 %v221
      %v566 = vunpack.c.h.b16 %v221
      %v567 = vunpack.c.l.b16 %v222
      %v568 = vunpack.c.h.b16 %v222
      %v569 = vunpack.c.l.b16 %v223
      %v570 = vunpack.c.l.b16 %v224
      %v571 = vunpack.c.h.b16 %v224
      %v572 = vunpack.c.l.b16 %v225
      %v573 = vunpack.c.h.b16 %v225
      %v574 = vunpack.c.l.b16 %v226
      %v575 = vunpack.c.h.b16 %v226
      %v576 = vunpack.c.l.b16 %v227
      %v577 = vunpack.c.l.b16 %v228
      %v578 = vunpack.c.h.b16 %v228
      %v579 = vunpack.c.l.b16 %v229
      %v580 = vunpack.c.h.b16 %v229
      %v581 = vunpack.c.l.b16 %v230
      %v582 = vunpack.c.h.b16 %v230
      %v583 = vunpack.c.l.b16 %v231
      %v584 = vunpack.c.l.b16 %v232
      %v585 = vunpack.c.h.b16 %v232
      %v586 = vunpack.c.l.b16 %v233
      %v587 = vunpack.c.h.b16 %v233
      %v588 = vunpack.c.l.b16 %v234
      %v589 = vunpack.c.h.b16 %v234
      %v590 = vunpack.c.l.b16 %v235
      %v591 = vunpack.c.l.b16 %v236
      %v592 = vunpack.c.h.b16 %v236
      %v593 = vunpack.c.l.b16 %v237
      %v594 = vunpack.c.h.b16 %v237
      %v595 = vunpack.c.l.b16 %v238
      %v596 = vunpack.c.h.b16 %v238
      %v597 = vunpack.c.l.b16 %v239
      %v598 = vunpack.c.l.b16 %v240
      %v599 = vunpack.c.h.b16 %v240
      %v600 = vunpack.c.l.b16 %v241
      %v601 = vunpack.c.h.b16 %v241
      %v602 = vunpack.c.l.b16 %v242
      %v603 = vunpack.c.h.b16 %v242
      %v604 = vunpack.c.l.b16 %v243
      %v605 = vunpack.c.l.b16 %v244
      %v606 = vunpack.c.h.b16 %v244
      %v607 = vunpack.c.l.b16 %v245
      %v608 = vunpack.c.h.b16 %v245
      %v609 = vunpack.c.l.b16 %v246
      %v610 = vunpack.c.h.b16 %v246
      %v611 = vunpack.c.l.b16 %v247
      %v612 = vunpack.c.l.b16 %v248
      %v613 = vunpack.c.h.b16 %v248
      %v614 = vunpack.c.l.b16 %v249
      %v615 = vunpack.c.h.b16 %v249
      %v616 = vunpack.c.l.b16 %v250
      %v617 = vunpack.c.h.b16 %v250
      %v618 = vunpack.c.l.b16 %v251
      %v619 = vunpack.c.l.b16 %v252
      %v620 = vunpack.c.h.b16 %v252
      %v621 = vunpack.c.l.b16 %v253
      %v622 = vunpack.c.h.b16 %v253
      %v623 = vunpack.c.l.b16 %v254
      %v624 = vunpack.c.h.b16 %v254
      %v625 = vunpack.c.l.b16 %v255
      %v626 = vunpack.c.l.b16 %v256
      %v627 = vunpack.c.h.b16 %v256
      %v628 = vunpack.c.l.b16 %v257
      %v629 = vunpack.c.h.b16 %v257
      %v630 = vunpack.c.l.b16 %v258
      %v631 = vunpack.c.h.b16 %v258
      %v632 = vunpack.c.l.b16 %v259
      %v633 = vunpack.c.l.b16 %v260
      %v634 = vunpack.c.h.b16 %v260
      %v635 = vunpack.c.l.b16 %v261
      %v636 = vunpack.c.h.b16 %v261
      %v637 = vunpack.c.l.b16 %v262
      %v638 = vunpack.c.h.b16 %v262
      %v639 = vunpack.c.l.b16 %v263
      %v640 = vunpack.c.l.b16 %v264
      %v641 = vunpack.c.h.b16 %v264
      %v642 = vunpack.c.l.b16 %v265
      %v643 = vunpack.c.h.b16 %v265
      %v644 = vunpack.c.l.b16 %v266
      %v645 = vunpack.c.h.b16 %v266
      %v646 = vunpack.c.l.b16 %v267
      %v647 = vunpack.c.l.b16 %v268
      %v648 = vunpack.c.h.b16 %v268
      %v649 = vunpack.c.l.b16 %v269
      %v650 = vunpack.c.h.b16 %v269
      %v651 = vunpack.c.l.b16 %v270
      %v652 = vunpack.c.h.b16 %v270
      %v653 = vunpack.c.l.b16 %v271
      %v654 = vpack.c.b16 %v486, %v479
      %v655 = vpack.c.b16 %v487, %v480
      %v656 = vpack.c.b16 %v488, %v481
      %v657 = vpack.c.b16 %v489, %v482
      %v658 = vpack.c.b16 %v490, %v483
      %v659 = vpack.c.b16 %v491, %v484
      %v660 = vpack.c.b16 %v492, %v485
      %v661 = vpack.c.b16 %v500, %v493
      %v662 = vpack.c.b16 %v501, %v494
      %v663 = vpack.c.b16 %v502, %v495
      %v664 = vpack.c.b16 %v503, %v496
      %v665 = vpack.c.b16 %v504, %v497
      %v666 = vpack.c.b16 %v505, %v498
      %v667 = vpack.c.b16 %v506, %v499
      %v668 = vpack.c.b16 %v514, %v507
      %v669 = vpack.c.b16 %v515, %v508
      %v670 = vpack.c.b16 %v516, %v509
      %v671 = vpack.c.b16 %v517, %v510
      %v672 = vpack.c.b16 %v518, %v511
      %v673 = vpack.c.b16 %v519, %v512
      %v674 = vpack.c.b16 %v520, %v513
      %v675 = vpack.c.b16 %v528, %v521
      %v676 = vpack.c.b16 %v529, %v522
      %v677 = vpack.c.b16 %v530, %v523
      %v678 = vpack.c.b16 %v531, %v524
      %v679 = vpack.c.b16 %v532, %v525
      %v680 = vpack.c.b16 %v533, %v526
      %v681 = vpack.c.b16 %v534, %v527
      %v682 = vpack.c.b16 %v542, %v535
      %v683 = vpack.c.b16 %v543, %v536
      %v684 = vpack.c.b16 %v544, %v537
      %v685 = vpack.c.b16 %v545, %v538
      %v686 = vpack.c.b16 %v546, %v539
      %v687 = vpack.c.b16 %v547, %v540
      %v688 = vpack.c.b16 %v548, %v541
      %v689 = vpack.c.b16 %v556, %v549
      %v690 = vpack.c.b16 %v557, %v550
      %v691 = vpack.c.b16 %v558, %v551
      %v692 = vpack.c.b16 %v559, %v552
      %v693 = vpack.c.b16 %v560, %v553
      %v694 = vpack.c.b16 %v561, %v554
      %v695 = vpack.c.b16 %v562, %v555
      %v696 = vpack.c.b16 %v570, %v563
      %v697 = vpack.c.b16 %v571, %v564
      %v698 = vpack.c.b16 %v572, %v565
      %v699 = vpack.c.b16 %v573, %v566
      %v700 = vpack.c.b16 %v574, %v567
      %v701 = vpack.c.b16 %v575, %v568
      %v702 = vpack.c.b16 %v576, %v569
      %v703 = vpack.c.b16 %v584, %v577
      %v704 = vpack.c.b16 %v585, %v578
      %v705 = vpack.c.b16 %v586, %v579
      %v706 = vpack.c.b16 %v587, %v580
      %v707 = vpack.c.b16 %v588, %v581
      %v708 = vpack.c.b16 %v589, %v582
      %v709 = vpack.c.b16 %v590, %v583
      %v710 = vpack.c.b16 %v598, %v591
      %v711 = vpack.c.b16 %v599, %v592
      %v712 = vpack.c.b16 %v600, %v593
      %v713 = vpack.c.b16 %v601, %v594
      %v714 = vpack.c.b16 %v602, %v595
      %v715 = vpack.c.b16 %v603, %v596
      %v716 = vpack.c.b16 %v604, %v597
      %v717 = vpack.c.b16 %v612, %v605
      %v718 = vpack.c.b16 %v613, %v606
      %v719 = vpack.c.b16 %v614, %v607
      %v720 = vpack.c.b16 %v615, %v608
      %v721 = vpack.c.b16 %v616, %v609
      %v722 = vpack.c.b16 %v617, %v610
      %v723 = vpack.c.b16 %v618, %v611
      %v724 = vpack.c.b16 %v626, %v619
      %v725 = vpack.c.b16 %v627, %v620
      %v726 = vpack.c.b16 %v628, %v621
      %v727 = vpack.c.b16 %v629, %v622
      %v728 = vpack.c.b16 %v630, %v623
      %v729 = vpack.c.b16 %v631, %v624
      %v730 = vpack.c.b16 %v632, %v625
      %v731 = vpack.c.b16 %v640, %v633
      %v732 = vpack.c.b16 %v641, %v634
      %v733 = vpack.c.b16 %v642, %v635
      %v734 = vpack.c.b16 %v643, %v636
      %v735 = vpack.c.b16 %v644, %v637
      %v736 = vpack.c.b16 %v645, %v638
      %v737 = vpack.c.b16 %v646, %v639
      %v738 = vpack.c.b16 %v647, %v647
      %v739 = vpack.c.b16 %v648, %v648
      %v740 = vpack.c.b16 %v649, %v649
      %v741 = vpack.c.b16 %v650, %v650
      %v742 = vpack.c.b16 %v651, %v651
      %v743 = vpack.c.b16 %v652, %v652
      %v744 = vpack.c.b16 %v653, %v653
      %v923 = vunpack.c.l.b16 %v272
      %v924 = vunpack.c.l.b16 %v273
      %v925 = vunpack.c.l.b16 %v274
      %v926 = vunpack.c.l.b16 %v275
      %v927 = vunpack.c.l.b16 %v276
      %v928 = vunpack.c.l.b16 %v277
      %v929 = vunpack.c.l.b16 %v278
      %v930 = vunpack.c.l.b16 %v279
      %v931 = vunpack.c.l.b16 %v280
      %v932 = vunpack.c.l.b16 %v281
      %v933 = vunpack.c.l.b16 %v282
      %v934 = vunpack.c.l.b16 %v283
      %v935 = vunpack.c.l.b16 %v284
      %v936 = vunpack.c.l.b16 %v285
      %v937 = vunpack.c.l.b16 %v286
      %v938 = vunpack.c.l.b16 %v287
      %v939 = vunpack.c.l.b16 %v288
      %v940 = vunpack.c.l.b16 %v289
      %v941 = vunpack.c.l.b16 %v290
      %v942 = vunpack.c.l.b16 %v291
      %v943 = vunpack.c.l.b16 %v292
      %v944 = vunpack.c.l.b16 %v293
      %v945 = vunpack.c.l.b16 %v294
      %v946 = vunpack.c.l.b16 %v295
      %v947 = vunpack.c.l.b16 %v296
      %v948 = vunpack.c.l.b16 %v297
      %v949 = vunpack.c.l.b16 %v298
      %v950 = vunpack.c.l.b16 %v299
      %v951 = vunpack.c.l.b16 %v300
      %v952 = vunpack.c.l.b16 %v301
      %v953 = vunpack.c.l.b16 %v302
      %v954 = vunpack.c.l.b16 %v303
      %v955 = vunpack.c.l.b16 %v304
      %v956 = vunpack.c.l.b16 %v305
      %v957 = vunpack.c.l.b16 %v306
      %v958 = vunpack.c.l.b16 %v307
      %v959 = vunpack.c.l.b16 %v308
      %v960 = vunpack.c.l.b16 %v309
      %v961 = vunpack.c.l.b16 %v310
      %v962 = vunpack.c.l.b16 %v311
      %v963 = vunpack.c.l.b16 %v312
      %v964 = vunpack.c.l.b16 %v313
      %v965 = vunpack.c.l.b16 %v314
      %v966 = vunpack.c.l.b16 %v315
      %v967 = vunpack.c.l.b16 %v316
      %v968 = vunpack.c.l.b16 %v317
      %v969 = vunpack.c.l.b16 %v318
      %v970 = vunpack.c.l.b16 %v319
      %v971 = vunpack.c.l.b16 %v320
      %v972 = vunpack.c.l.b16 %v321
      %v973 = vunpack.c.l.b16 %v322
      %v974 = vunpack.c.l.b16 %v323
      %v975 = vunpack.c.l.b16 %v324
      %v976 = vunpack.c.l.b16 %v325
      %v977 = vunpack.c.l.b16 %v326
      %v978 = vunpack.c.l.b16 %v327
      %v979 = vunpack.c.l.b16 %v328
      %v980 = vunpack.c.l.b16 %v329
      %v981 = vunpack.c.l.b16 %v330
      %v982 = vunpack.c.l.b16 %v331
      %v983 = vunpack.c.l.b16 %v332
      %v984 = vunpack.c.l.b16 %v333
      %v985 = vunpack.c.l.b16 %v334
      %v986 = vunpack.c.l.b16 %v335
      %v987 = vunpack.c.l.b16 %v336
      %v988 = vunpack.c.l.b16 %v337
      %v989 = vunpack.c.l.b16 %v338
      %v990 = vunpack.c.l.b16 %v339
      %v991 = vunpack.c.l.b16 %v340
      %v992 = vunpack.c.l.b16 %v341
      %v993 = vunpack.c.l.b16 %v342
      %v994 = vunpack.c.l.b16 %v343
      %v995 = vunpack.c.l.b16 %v344
      %v996 = vunpack.c.l.b16 %v345
      %v997 = vunpack.c.l.b16 %v346
      %v998 = vunpack.c.l.b16 %v347
      %v999 = vunpack.c.l.b16 %v348
      %v1000 = vunpack.c.l.b16 %v349
      %v1001 = vunpack.c.l.b16 %v350
      %v1002 = vunpack.c.l.b16 %v351
      %v1003 = vunpack.c.l.b16 %v352
      %v1004 = vunpack.c.l.b16 %v353
      %v1005 = vunpack.c.l.b16 %v354
      %v1006 = vunpack.c.l.b16 %v355
      %v1007 = vunpack.c.l.b16 %v356
      %v1008 = vunpack.c.l.b16 %v357
      %v1009 = vunpack.c.l.b16 %v358
      %v1010 = vunpack.c.l.b16 %v359
      %v1011 = vunpack.c.l.b16 %v360
      %v1012 = vunpack.c.l.b16 %v361
      %v1013 = vunpack.c.l.b16 %v362
      %v1014 = vunpack.c.l.b16 %v363
      %v1015 = vunpack.c.l.b16 %v364
      %v1016 = vunpack.c.l.b16 %v365
      %v1017 = vunpack.c.l.b16 %v366
      %v1018 = vunpack.c.l.b16 %v367
      %v1019 = vunpack.c.l.b16 %v368
      %v1020 = vunpack.c.l.b16 %v369
      %v1021 = vunpack.c.l.b16 %v370
      %v1022 = vunpack.c.l.b16 %v371
      %v1023 = vpack.c.b16 %v924, %v923
      %v1024 = vpack.c.b16 %v926, %v925
      %v1025 = vpack.c.b16 %v928, %v927
      %v1026 = vpack.c.b16 %v930, %v929
      %v1027 = vpack.c.b16 %v932, %v931
      %v1028 = vpack.c.b16 %v934, %v933
      %v1029 = vpack.c.b16 %v936, %v935
      %v1030 = vpack.c.b16 %v938, %v937
      %v1031 = vpack.c.b16 %v940, %v939
      %v1032 = vpack.c.b16 %v942, %v941
      %v1033 = vpack.c.b16 %v944, %v943
      %v1034 = vpack.c.b16 %v946, %v945
      %v1035 = vpack.c.b16 %v948, %v947
      %v1036 = vpack.c.b16 %v950, %v949
      %v1037 = vpack.c.b16 %v952, %v951
      %v1038 = vpack.c.b16 %v954, %v953
      %v1039 = vpack.c.b16 %v956, %v955
      %v1040 = vpack.c.b16 %v958, %v957
      %v1041 = vpack.c.b16 %v960, %v959
      %v1042 = vpack.c.b16 %v962, %v961
      %v1043 = vpack.c.b16 %v964, %v963
      %v1044 = vpack.c.b16 %v966, %v965
      %v1045 = vpack.c.b16 %v968, %v967
      %v1046 = vpack.c.b16 %v970, %v969
      %v1047 = vpack.c.b16 %v972, %v971
      %v1048 = vpack.c.b16 %v974, %v973
      %v1049 = vpack.c.b16 %v976, %v975
      %v1050 = vpack.c.b16 %v978, %v977
      %v1051 = vpack.c.b16 %v980, %v979
      %v1052 = vpack.c.b16 %v982, %v981
      %v1053 = vpack.c.b16 %v984, %v983
      %v1054 = vpack.c.b16 %v986, %v985
      %v1055 = vpack.c.b16 %v988, %v987
      %v1056 = vpack.c.b16 %v990, %v989
      %v1057 = vpack.c.b16 %v992, %v991
      %v1058 = vpack.c.b16 %v994, %v993
      %v1059 = vpack.c.b16 %v996, %v995
      %v1060 = vpack.c.b16 %v998, %v997
      %v1061 = vpack.c.b16 %v1000, %v999
      %v1062 = vpack.c.b16 %v1002, %v1001
      %v1063 = vpack.c.b16 %v1004, %v1003
      %v1064 = vpack.c.b16 %v1006, %v1005
      %v1065 = vpack.c.b16 %v1008, %v1007
      %v1066 = vpack.c.b16 %v1010, %v1009
      %v1067 = vpack.c.b16 %v1012, %v1011
      %v1068 = vpack.c.b16 %v1014, %v1013
      %v1069 = vpack.c.b16 %v1016, %v1015
      %v1070 = vpack.c.b16 %v1018, %v1017
      %v1071 = vpack.c.b16 %v1020, %v1019
      %v1072 = vpack.c.b16 %v1022, %v1021
      %vm1123 = vcmask 261120
      %v1125 = vsel %vm1123, %v660, 0
      %v1128 = vsel %vm1123, %v667, 0
      %v1131 = vsel %vm1123, %v674, 0
      %v1134 = vsel %vm1123, %v681, 0
      %v1137 = vsel %vm1123, %v688, 0
      %v1140 = vsel %vm1123, %v695, 0
      %v1143 = vsel %vm1123, %v702, 0
      %v1146 = vsel %vm1123, %v709, 0
      %v1149 = vsel %vm1123, %v716, 0
      %v1152 = vsel %vm1123, %v723, 0
      %v1155 = vsel %vm1123, %v730, 0
      %v1158 = vsel %vm1123, %v737, 0
      %v1161 = vsel %vm1123, %v744, 0
      %1163 = vmatprep.subr.bf16.mxu0 0
      %1164 = vmatpush1.bf16.msra.mxu0 %v1023
      %1165 = vmatprep.subr.bf16.mxu0 0
      %1166 = vmatpush1.bf16.msra.mxu0 %v1024
      %1167 = vmatprep.subr.bf16.mxu0 0
      %1168 = vmatpush1.bf16.msra.mxu0 %v1025
      %1169 = vmatprep.subr.bf16.mxu0 0
      %1170 = vmatpush1.bf16.msra.mxu0 %v1026
      %1171 = vmatprep.subr.bf16.mxu0 0
      %1172 = vmatpush1.bf16.msra.mxu0 %v1027
      %1173 = vmatprep.subr.bf16.mxu0 0
      %1174 = vmatpush1.bf16.msra.mxu0 %v1028
      %1175 = vmatprep.subr.bf16.mxu0 0
      %1176 = vmatpush1.bf16.msra.mxu0 %v1029
      %1177 = vmatprep.subr.bf16.mxu0 0
      %1178 = vmatpush1.bf16.msra.mxu0 %v1030
      %1179 = vmatprep.subr.bf16.mxu0 0
      %1180 = vmatpush1.bf16.msra.mxu0 %v1031
      %1181 = vmatprep.subr.bf16.mxu0 0
      %1182 = vmatpush1.bf16.msra.mxu0 %v1032
      %1183 = vmatprep.subr.bf16.mxu0 0
      %1184 = vmatpush1.bf16.msra.mxu0 %v1033
      %1185 = vmatprep.subr.bf16.mxu0 0
      %1186 = vmatpush1.bf16.msra.mxu0 %v1034
      %1187 = vmatprep.subr.bf16.mxu0 0
      %1188 = vmatpush1.bf16.msra.mxu0 %v1035
      %1189 = vmatprep.subr.bf16.mxu0 0
      %1190 = vmatpush1.bf16.msra.mxu0 %v1036
      %1191 = vmatprep.subr.bf16.mxu0 0
      %1192 = vmatpush1.bf16.msra.mxu0 %v1037
      %1193 = vmatprep.subr.bf16.mxu0 0
      %1194 = vmatpush1.bf16.msra.mxu0 %v1038
      %1195 = vmatprep.mubr.bf16.mxu0 %v655
      %1196 = vmatmul.mubr.bf16.gmra.mrb[0].mxu0 %v654
      %v1197 = vpop.f32.mrb[0].mxu0
      %v1198 = vadd.f32 %v377, %v1197
      %v1199 = vpop.f32.mrb[0].mxu0
      %v1200 = vpop.f32.mrb[0].mxu0
      %v1201 = vadd.f32 %v377, %v1200
      %v1202 = vpop.f32.mrb[0].mxu0
      %1203 = vmatprep.mubr.bf16.mxu0 %v662
      %1204 = vmatmul.mubr.bf16.gmra.mrb[0].mxu0 %v661
      %v1205 = vpop.f32.mrb[0].mxu0
      %v1206 = vadd.f32 %v377, %v1205
      %v1207 = vpop.f32.mrb[0].mxu0
      %v1208 = vpop.f32.mrb[0].mxu0
      %v1209 = vadd.f32 %v377, %v1208
      %v1210 = vpop.f32.mrb[0].mxu0
      %1211 = vmatprep.mubr.bf16.mxu0 %v669
      %1212 = vmatmul.mubr.bf16.gmra.mrb[0].mxu0 %v668
      %v1213 = vpop.f32.mrb[0].mxu0
      %v1214 = vadd.f32 %v377, %v1213
      %v1215 = vpop.f32.mrb[0].mxu0
      %v1216 = vpop.f32.mrb[0].mxu0
      %v1217 = vadd.f32 %v377, %v1216
      %v1218 = vpop.f32.mrb[0].mxu0
      %1219 = vmatprep.mubr.bf16.mxu0 %v676
      %1220 = vmatmul.mubr.bf16.gmra.mrb[0].mxu0 %v675
      %v1221 = vpop.f32.mrb[0].mxu0
      %v1222 = vadd.f32 %v377, %v1221
      %v1223 = vpop.f32.mrb[0].mxu0
      %v1224 = vpop.f32.mrb[0].mxu0
      %v1225 = vadd.f32 %v377, %v1224
      %v1226 = vpop.f32.mrb[0].mxu0
      %1227 = vmatprep.mubr.bf16.mxu0 %v683
      %1228 = vmatmul.mubr.bf16.gmra.mrb[0].mxu0 %v682
      %v1229 = vpop.f32.mrb[0].mxu0
      %v1230 = vadd.f32 %v377, %v1229
      %v1231 = vpop.f32.mrb[0].mxu0
      %v1232 = vpop.f32.mrb[0].mxu0
      %v1233 = vadd.f32 %v377, %v1232
      %v1234 = vpop.f32.mrb[0].mxu0
      %1235 = vmatprep.mubr.bf16.mxu0 %v690
      %1236 = vmatmul.mubr.bf16.gmra.mrb[0].mxu0 %v689
      %v1237 = vpop.f32.mrb[0].mxu0
      %v1238 = vadd.f32 %v377, %v1237
      %v1239 = vpop.f32.mrb[0].mxu0
      %v1240 = vpop.f32.mrb[0].mxu0
      %v1241 = vadd.f32 %v377, %v1240
      %v1242 = vpop.f32.mrb[0].mxu0
      %1243 = vmatprep.mubr.bf16.mxu0 %v697
      %1244 = vmatmul.mubr.bf16.gmra.mrb[0].mxu0 %v696
      %v1245 = vpop.f32.mrb[0].mxu0
      %v1246 = vadd.f32 %v377, %v1245
      %v1247 = vpop.f32.mrb[0].mxu0
      %v1248 = vpop.f32.mrb[0].mxu0
      %v1249 = vadd.f32 %v377, %v1248
      %v1250 = vpop.f32.mrb[0].mxu0
      %1251 = vmatprep.mubr.bf16.mxu0 %v704
      %1252 = vmatmul.mubr.bf16.gmra.mrb[0].mxu0 %v703
      %v1253 = vpop.f32.mrb[0].mxu0
      %v1254 = vadd.f32 %v377, %v1253
      %v1255 = vpop.f32.mrb[0].mxu0
      %v1256 = vpop.f32.mrb[0].mxu0
      %v1257 = vadd.f32 %v377, %v1256
      %v1258 = vpop.f32.mrb[0].mxu0
      %1259 = vmatprep.mubr.bf16.mxu0 %v711
      %1260 = vmatmul.mubr.bf16.gmra.mrb[0].mxu0 %v710
      %v1261 = vpop.f32.mrb[0].mxu0
      %v1262 = vadd.f32 %v377, %v1261
      %v1263 = vpop.f32.mrb[0].mxu0
      %v1264 = vpop.f32.mrb[0].mxu0
      %v1265 = vadd.f32 %v377, %v1264
      %v1266 = vpop.f32.mrb[0].mxu0
      %1267 = vmatprep.mubr.bf16.mxu0 %v718
      %1268 = vmatmul.mubr.bf16.gmra.mrb[0].mxu0 %v717
      %v1269 = vpop.f32.mrb[0].mxu0
      %v1270 = vadd.f32 %v377, %v1269
      %v1271 = vpop.f32.mrb[0].mxu0
      %v1272 = vpop.f32.mrb[0].mxu0
      %v1273 = vadd.f32 %v377, %v1272
      %v1274 = vpop.f32.mrb[0].mxu0
      %1275 = vmatprep.mubr.bf16.mxu0 %v725
      %1276 = vmatmul.mubr.bf16.gmra.mrb[0].mxu0 %v724
      %v1277 = vpop.f32.mrb[0].mxu0
      %v1278 = vadd.f32 %v377, %v1277
      %v1279 = vpop.f32.mrb[0].mxu0
      %v1280 = vpop.f32.mrb[0].mxu0
      %v1281 = vadd.f32 %v377, %v1280
      %v1282 = vpop.f32.mrb[0].mxu0
      %1283 = vmatprep.mubr.bf16.mxu0 %v732
      %1284 = vmatmul.mubr.bf16.gmra.mrb[0].mxu0 %v731
      %v1285 = vpop.f32.mrb[0].mxu0
      %v1286 = vadd.f32 %v377, %v1285
      %v1287 = vpop.f32.mrb[0].mxu0
      %v1288 = vpop.f32.mrb[0].mxu0
      %v1289 = vadd.f32 %v377, %v1288
      %v1290 = vpop.f32.mrb[0].mxu0
      %1291 = vmatprep.mubr.bf16.mxu0 %v739
      %1292 = vmatmul.mubr.bf16.gmra.mrb[0].mxu0 %v738
      %v1293 = vpop.f32.mrb[0].mxu0
      %v1294 = vadd.f32 %v377, %v1293
      %v1295 = vpop.f32.mrb[0].mxu0
      %v1296 = vpop.f32.mrb[0].mxu0
      %v1297 = vpop.f32.mrb[0].mxu0
      %1298 = vdwg.mxu0
      %1299 = vmatprep.subr.bf16.mxu0 0
      %1300 = vmatpush1.bf16.msra.mxu0 %v1039
      %1301 = vmatprep.subr.bf16.mxu0 0
      %1302 = vmatpush1.bf16.msra.mxu0 %v1040
      %1303 = vmatprep.subr.bf16.mxu0 0
      %1304 = vmatpush1.bf16.msra.mxu0 %v1041
      %1305 = vmatprep.subr.bf16.mxu0 0
      %1306 = vmatpush1.bf16.msra.mxu0 %v1042
      %1307 = vmatprep.subr.bf16.mxu0 0
      %1308 = vmatpush1.bf16.msra.mxu0 %v1043
      %1309 = vmatprep.subr.bf16.mxu0 0
      %1310 = vmatpush1.bf16.msra.mxu0 %v1044
      %1311 = vmatprep.subr.bf16.mxu0 0
      %1312 = vmatpush1.bf16.msra.mxu0 %v1045
      %1313 = vmatprep.subr.bf16.mxu0 0
      %1314 = vmatpush1.bf16.msra.mxu0 %v1046
      %1315 = vmatprep.subr.bf16.mxu0 0
      %1316 = vmatpush1.bf16.msra.mxu0 %v1047
      %1317 = vmatprep.subr.bf16.mxu0 0
      %1318 = vmatpush1.bf16.msra.mxu0 %v1048
      %1319 = vmatprep.subr.bf16.mxu0 0
      %1320 = vmatpush1.bf16.msra.mxu0 %v1049
      %1321 = vmatprep.subr.bf16.mxu0 0
      %1322 = vmatpush1.bf16.msra.mxu0 %v1050
      %1323 = vmatprep.subr.bf16.mxu0 0
      %1324 = vmatpush1.bf16.msra.mxu0 %v1051
      %1325 = vmatprep.subr.bf16.mxu0 0
      %1326 = vmatpush1.bf16.msra.mxu0 %v1052
      %1327 = vmatprep.subr.bf16.mxu0 0
      %1328 = vmatpush1.bf16.msra.mxu0 %v1053
      %1329 = vmatprep.subr.bf16.mxu0 0
      %1330 = vmatpush1.bf16.msra.mxu0 %v1054
      %1331 = vmatprep.mubr.bf16.mxu0 %v657
      %1332 = vmatmul.mubr.bf16.gmra.mrb[0].mxu0 %v656
      %v1333 = vpop.f32.mrb[0].mxu0
      %v1334 = vadd.f32 %v1198, %v1333
      %v1335 = vpop.f32.mrb[0].mxu0
      %v1336 = vpop.f32.mrb[0].mxu0
      %v1337 = vadd.f32 %v1201, %v1336
      %v1338 = vpop.f32.mrb[0].mxu0
      %1339 = vmatprep.mubr.bf16.mxu0 %v664
      %1340 = vmatmul.mubr.bf16.gmra.mrb[0].mxu0 %v663
      %v1341 = vpop.f32.mrb[0].mxu0
      %v1342 = vadd.f32 %v1206, %v1341
      %v1343 = vpop.f32.mrb[0].mxu0
      %v1344 = vpop.f32.mrb[0].mxu0
      %v1345 = vadd.f32 %v1209, %v1344
      %v1346 = vpop.f32.mrb[0].mxu0
      %1347 = vmatprep.mubr.bf16.mxu0 %v671
      %1348 = vmatmul.mubr.bf16.gmra.mrb[0].mxu0 %v670
      %v1349 = vpop.f32.mrb[0].mxu0
      %v1350 = vadd.f32 %v1214, %v1349
      %v1351 = vpop.f32.mrb[0].mxu0
      %v1352 = vpop.f32.mrb[0].mxu0
      %v1353 = vadd.f32 %v1217, %v1352
      %v1354 = vpop.f32.mrb[0].mxu0
      %1355 = vmatprep.mubr.bf16.mxu0 %v678
      %1356 = vmatmul.mubr.bf16.gmra.mrb[0].mxu0 %v677
      %v1357 = vpop.f32.mrb[0].mxu0
      %v1358 = vadd.f32 %v1222, %v1357
      %v1359 = vpop.f32.mrb[0].mxu0
      %v1360 = vpop.f32.mrb[0].mxu0
      %v1361 = vadd.f32 %v1225, %v1360
      %v1362 = vpop.f32.mrb[0].mxu0
      %1363 = vmatprep.mubr.bf16.mxu0 %v685
      %1364 = vmatmul.mubr.bf16.gmra.mrb[0].mxu0 %v684
      %v1365 = vpop.f32.mrb[0].mxu0
      %v1366 = vadd.f32 %v1230, %v1365
      %v1367 = vpop.f32.mrb[0].mxu0
      %v1368 = vpop.f32.mrb[0].mxu0
      %v1369 = vadd.f32 %v1233, %v1368
      %v1370 = vpop.f32.mrb[0].mxu0
      %1371 = vmatprep.mubr.bf16.mxu0 %v692
      %1372 = vmatmul.mubr.bf16.gmra.mrb[0].mxu0 %v691
      %v1373 = vpop.f32.mrb[0].mxu0
      %v1374 = vadd.f32 %v1238, %v1373
      %v1375 = vpop.f32.mrb[0].mxu0
      %v1376 = vpop.f32.mrb[0].mxu0
      %v1377 = vadd.f32 %v1241, %v1376
      %v1378 = vpop.f32.mrb[0].mxu0
      %1379 = vmatprep.mubr.bf16.mxu0 %v699
      %1380 = vmatmul.mubr.bf16.gmra.mrb[0].mxu0 %v698
      %v1381 = vpop.f32.mrb[0].mxu0
      %v1382 = vadd.f32 %v1246, %v1381
      %v1383 = vpop.f32.mrb[0].mxu0
      %v1384 = vpop.f32.mrb[0].mxu0
      %v1385 = vadd.f32 %v1249, %v1384
      %v1386 = vpop.f32.mrb[0].mxu0
      %1387 = vmatprep.mubr.bf16.mxu0 %v706
      %1388 = vmatmul.mubr.bf16.gmra.mrb[0].mxu0 %v705
      %v1389 = vpop.f32.mrb[0].mxu0
      %v1390 = vadd.f32 %v1254, %v1389
      %v1391 = vpop.f32.mrb[0].mxu0
      %v1392 = vpop.f32.mrb[0].mxu0
      %v1393 = vadd.f32 %v1257, %v1392
      %v1394 = vpop.f32.mrb[0].mxu0
      %1395 = vmatprep.mubr.bf16.mxu0 %v713
      %1396 = vmatmul.mubr.bf16.gmra.mrb[0].mxu0 %v712
      %v1397 = vpop.f32.mrb[0].mxu0
      %v1398 = vadd.f32 %v1262, %v1397
      %v1399 = vpop.f32.mrb[0].mxu0
      %v1400 = vpop.f32.mrb[0].mxu0
      %v1401 = vadd.f32 %v1265, %v1400
      %v1402 = vpop.f32.mrb[0].mxu0
      %1403 = vmatprep.mubr.bf16.mxu0 %v720
      %1404 = vmatmul.mubr.bf16.gmra.mrb[0].mxu0 %v719
      %v1405 = vpop.f32.mrb[0].mxu0
      %v1406 = vadd.f32 %v1270, %v1405
      %v1407 = vpop.f32.mrb[0].mxu0
      %v1408 = vpop.f32.mrb[0].mxu0
      %v1409 = vadd.f32 %v1273, %v1408
      %v1410 = vpop.f32.mrb[0].mxu0
      %1411 = vmatprep.mubr.bf16.mxu0 %v727
      %1412 = vmatmul.mubr.bf16.gmra.mrb[0].mxu0 %v726
      %v1413 = vpop.f32.mrb[0].mxu0
      %v1414 = vadd.f32 %v1278, %v1413
      %v1415 = vpop.f32.mrb[0].mxu0
      %v1416 = vpop.f32.mrb[0].mxu0
      %v1417 = vadd.f32 %v1281, %v1416
      %v1418 = vpop.f32.mrb[0].mxu0
      %1419 = vmatprep.mubr.bf16.mxu0 %v734
      %1420 = vmatmul.mubr.bf16.gmra.mrb[0].mxu0 %v733
      %v1421 = vpop.f32.mrb[0].mxu0
      %v1422 = vadd.f32 %v1286, %v1421
      %v1423 = vpop.f32.mrb[0].mxu0
      %v1424 = vpop.f32.mrb[0].mxu0
      %v1425 = vadd.f32 %v1289, %v1424
      %v1426 = vpop.f32.mrb[0].mxu0
      %1427 = vmatprep.mubr.bf16.mxu0 %v741
      %1428 = vmatmul.mubr.bf16.gmra.mrb[0].mxu0 %v740
      %v1429 = vpop.f32.mrb[0].mxu0
      %v1430 = vadd.f32 %v1294, %v1429
      %v1431 = vpop.f32.mrb[0].mxu0
      %v1432 = vpop.f32.mrb[0].mxu0
      %v1433 = vpop.f32.mrb[0].mxu0
      %1434 = vdwg.mxu0
      %1435 = vmatprep.subr.bf16.mxu0 0
      %1436 = vmatpush1.bf16.msra.mxu0 %v1055
      %1437 = vmatprep.subr.bf16.mxu0 0
      %1438 = vmatpush1.bf16.msra.mxu0 %v1056
      %1439 = vmatprep.subr.bf16.mxu0 0
      %1440 = vmatpush1.bf16.msra.mxu0 %v1057
      %1441 = vmatprep.subr.bf16.mxu0 0
      %1442 = vmatpush1.bf16.msra.mxu0 %v1058
      %1443 = vmatprep.subr.bf16.mxu0 0
      %1444 = vmatpush1.bf16.msra.mxu0 %v1059
      %1445 = vmatprep.subr.bf16.mxu0 0
      %1446 = vmatpush1.bf16.msra.mxu0 %v1060
      %1447 = vmatprep.subr.bf16.mxu0 0
      %1448 = vmatpush1.bf16.msra.mxu0 %v1061
      %1449 = vmatprep.subr.bf16.mxu0 0
      %1450 = vmatpush1.bf16.msra.mxu0 %v1062
      %1451 = vmatprep.subr.bf16.mxu0 0
      %1452 = vmatpush1.bf16.msra.mxu0 %v1063
      %1453 = vmatprep.subr.bf16.mxu0 0
      %1454 = vmatpush1.bf16.msra.mxu0 %v1064
      %1455 = vmatprep.subr.bf16.mxu0 0
      %1456 = vmatpush1.bf16.msra.mxu0 %v1065
      %1457 = vmatprep.subr.bf16.mxu0 0
      %1458 = vmatpush1.bf16.msra.mxu0 %v1066
      %1459 = vmatprep.subr.bf16.mxu0 0
      %1460 = vmatpush1.bf16.msra.mxu0 %v1067
      %1461 = vmatprep.subr.bf16.mxu0 0
      %1462 = vmatpush1.bf16.msra.mxu0 %v1068
      %1463 = vmatprep.subr.bf16.mxu0 0
      %1464 = vmatpush1.bf16.msra.mxu0 %v1069
      %1465 = vmatprep.subr.bf16.mxu0 0
      %1466 = vmatpush1.bf16.msra.mxu0 %v1070
      %1467 = vmatprep.mubr.bf16.mxu0 %v659
      %1468 = vmatmul.mubr.bf16.gmra.mrb[0].mxu0 %v658
      %v1469 = vpop.f32.mrb[0].mxu0
      %v1470 = vadd.f32 %v1334, %v1469
      %v1471 = vpop.f32.mrb[0].mxu0
      %v1472 = vpop.f32.mrb[0].mxu0
      %v1473 = vadd.f32 %v1337, %v1472
      %v1474 = vpop.f32.mrb[0].mxu0
      %1475 = vmatprep.mubr.bf16.mxu0 %v666
      %1476 = vmatmul.mubr.bf16.gmra.mrb[0].mxu0 %v665
      %v1477 = vpop.f32.mrb[0].mxu0
      %v1478 = vadd.f32 %v1342, %v1477
      %v1479 = vpop.f32.mrb[0].mxu0
      %v1480 = vpop.f32.mrb[0].mxu0
      %v1481 = vadd.f32 %v1345, %v1480
      %v1482 = vpop.f32.mrb[0].mxu0
      %1483 = vmatprep.mubr.bf16.mxu0 %v673
      %1484 = vmatmul.mubr.bf16.gmra.mrb[0].mxu0 %v672
      %v1485 = vpop.f32.mrb[0].mxu0
      %v1486 = vadd.f32 %v1350, %v1485
      %v1487 = vpop.f32.mrb[0].mxu0
      %v1488 = vpop.f32.mrb[0].mxu0
      %v1489 = vadd.f32 %v1353, %v1488
      %v1490 = vpop.f32.mrb[0].mxu0
      %1491 = vmatprep.mubr.bf16.mxu0 %v680
      %1492 = vmatmul.mubr.bf16.gmra.mrb[0].mxu0 %v679
      %v1493 = vpop.f32.mrb[0].mxu0
      %v1494 = vadd.f32 %v1358, %v1493
      %v1495 = vpop.f32.mrb[0].mxu0
      %v1496 = vpop.f32.mrb[0].mxu0
      %v1497 = vadd.f32 %v1361, %v1496
      %v1498 = vpop.f32.mrb[0].mxu0
      %1499 = vmatprep.mubr.bf16.mxu0 %v687
      %1500 = vmatmul.mubr.bf16.gmra.mrb[0].mxu0 %v686
      %v1501 = vpop.f32.mrb[0].mxu0
      %v1502 = vadd.f32 %v1366, %v1501
      %v1503 = vpop.f32.mrb[0].mxu0
      %v1504 = vpop.f32.mrb[0].mxu0
      %v1505 = vadd.f32 %v1369, %v1504
      %v1506 = vpop.f32.mrb[0].mxu0
      %1507 = vmatprep.mubr.bf16.mxu0 %v694
      %1508 = vmatmul.mubr.bf16.gmra.mrb[0].mxu0 %v693
      %v1509 = vpop.f32.mrb[0].mxu0
      %v1510 = vadd.f32 %v1374, %v1509
      %v1511 = vpop.f32.mrb[0].mxu0
      %v1512 = vpop.f32.mrb[0].mxu0
      %v1513 = vadd.f32 %v1377, %v1512
      %v1514 = vpop.f32.mrb[0].mxu0
      %1515 = vmatprep.mubr.bf16.mxu0 %v701
      %1516 = vmatmul.mubr.bf16.gmra.mrb[0].mxu0 %v700
      %v1517 = vpop.f32.mrb[0].mxu0
      %v1518 = vadd.f32 %v1382, %v1517
      %v1519 = vpop.f32.mrb[0].mxu0
      %v1520 = vpop.f32.mrb[0].mxu0
      %v1521 = vadd.f32 %v1385, %v1520
      %v1522 = vpop.f32.mrb[0].mxu0
      %1523 = vmatprep.mubr.bf16.mxu0 %v708
      %1524 = vmatmul.mubr.bf16.gmra.mrb[0].mxu0 %v707
      %v1525 = vpop.f32.mrb[0].mxu0
      %v1526 = vadd.f32 %v1390, %v1525
      %v1527 = vpop.f32.mrb[0].mxu0
      %v1528 = vpop.f32.mrb[0].mxu0
      %v1529 = vadd.f32 %v1393, %v1528
      %v1530 = vpop.f32.mrb[0].mxu0
      %1531 = vmatprep.mubr.bf16.mxu0 %v715
      %1532 = vmatmul.mubr.bf16.gmra.mrb[0].mxu0 %v714
      %v1533 = vpop.f32.mrb[0].mxu0
      %v1534 = vadd.f32 %v1398, %v1533
      %v1535 = vpop.f32.mrb[0].mxu0
      %v1536 = vpop.f32.mrb[0].mxu0
      %v1537 = vadd.f32 %v1401, %v1536
      %v1538 = vpop.f32.mrb[0].mxu0
      %1539 = vmatprep.mubr.bf16.mxu0 %v722
      %1540 = vmatmul.mubr.bf16.gmra.mrb[0].mxu0 %v721
      %v1541 = vpop.f32.mrb[0].mxu0
      %v1542 = vadd.f32 %v1406, %v1541
      %v1543 = vpop.f32.mrb[0].mxu0
      %v1544 = vpop.f32.mrb[0].mxu0
      %v1545 = vadd.f32 %v1409, %v1544
      %v1546 = vpop.f32.mrb[0].mxu0
      %1547 = vmatprep.mubr.bf16.mxu0 %v729
      %1548 = vmatmul.mubr.bf16.gmra.mrb[0].mxu0 %v728
      %v1549 = vpop.f32.mrb[0].mxu0
      %v1550 = vadd.f32 %v1414, %v1549
      %v1551 = vpop.f32.mrb[0].mxu0
      %v1552 = vpop.f32.mrb[0].mxu0
      %v1553 = vadd.f32 %v1417, %v1552
      %v1554 = vpop.f32.mrb[0].mxu0
      %1555 = vmatprep.mubr.bf16.mxu0 %v736
      %1556 = vmatmul.mubr.bf16.gmra.mrb[0].mxu0 %v735
      %v1557 = vpop.f32.mrb[0].mxu0
      %v1558 = vadd.f32 %v1422, %v1557
      %v1559 = vpop.f32.mrb[0].mxu0
      %v1560 = vpop.f32.mrb[0].mxu0
      %v1561 = vadd.f32 %v1425, %v1560
      %v1562 = vpop.f32.mrb[0].mxu0
      %1563 = vmatprep.mubr.bf16.mxu0 %v743
      %1564 = vmatmul.mubr.bf16.gmra.mrb[0].mxu0 %v742
      %v1565 = vpop.f32.mrb[0].mxu0
      %v1566 = vadd.f32 %v1430, %v1565
      %v1567 = vpop.f32.mrb[0].mxu0
      %v1568 = vpop.f32.mrb[0].mxu0
      %v1569 = vpop.f32.mrb[0].mxu0
      %1570 = vdwg.mxu0
      %1571 = vmatprep.subr.bf16.mxu0 0
      %1572 = vmatpush1.bf16.msra.mxu0 %v1071
      %1573 = vmatprep.subr.bf16.mxu0 0
      %1574 = vmatpush1.bf16.msra.mxu0 %v1072
      %1575 = vmatprep.subr.bf16.mxu0 0
      %1576 = vmatpush1.bf16.msra.mxu0 0
      %1577 = vmatprep.subr.bf16.mxu0 0
      %1578 = vmatpush1.bf16.msra.mxu0 0
      %1579 = vmatprep.subr.bf16.mxu0 0
      %1580 = vmatpush1.bf16.msra.mxu0 0
      %1581 = vmatprep.subr.bf16.mxu0 0
      %1582 = vmatpush1.bf16.msra.mxu0 0
      %1583 = vmatprep.subr.bf16.mxu0 0
      %1584 = vmatpush1.bf16.msra.mxu0 0
      %1585 = vmatprep.subr.bf16.mxu0 0
      %1586 = vmatpush1.bf16.msra.mxu0 0
      %1587 = vmatprep.subr.bf16.mxu0 0
      %1588 = vmatpush1.bf16.msra.mxu0 0
      %1589 = vmatprep.subr.bf16.mxu0 0
      %1590 = vmatpush1.bf16.msra.mxu0 0
      %1591 = vmatprep.subr.bf16.mxu0 0
      %1592 = vmatpush1.bf16.msra.mxu0 0
      %1593 = vmatprep.subr.bf16.mxu0 0
      %1594 = vmatpush1.bf16.msra.mxu0 0
      %1595 = vmatprep.subr.bf16.mxu0 0
      %1596 = vmatpush1.bf16.msra.mxu0 0
      %1597 = vmatprep.subr.bf16.mxu0 0
      %1598 = vmatpush1.bf16.msra.mxu0 0
      %1599 = vmatprep.subr.bf16.mxu0 0
      %1600 = vmatpush1.bf16.msra.mxu0 0
      %1601 = vmatprep.subr.bf16.mxu0 0
      %1602 = vmatpush1.bf16.msra.mxu0 0
      %1603 = vmatprep.mubr.bf16.mxu0 0
      %1604 = vmatmul.mubr.bf16.gmra.mrb[0].mxu0 %v1125
      %v1605 = vpop.f32.mrb[0].mxu0
      %v1606 = vadd.f32 %v1470, %v1605
      %v1607 = vpop.f32.mrb[0].mxu0
      %v1608 = vpop.f32.mrb[0].mxu0
      %v1609 = vadd.f32 %v1473, %v1608
      %v1610 = vpop.f32.mrb[0].mxu0
      %1611 = vmatprep.mubr.bf16.mxu0 0
      %1612 = vmatmul.mubr.bf16.gmra.mrb[0].mxu0 %v1128
      %v1613 = vpop.f32.mrb[0].mxu0
      %v1614 = vadd.f32 %v1478, %v1613
      %v1615 = vpop.f32.mrb[0].mxu0
      %v1616 = vpop.f32.mrb[0].mxu0
      %v1617 = vadd.f32 %v1481, %v1616
      %v1618 = vpop.f32.mrb[0].mxu0
      %1619 = vmatprep.mubr.bf16.mxu0 0
      %1620 = vmatmul.mubr.bf16.gmra.mrb[0].mxu0 %v1131
      %v1621 = vpop.f32.mrb[0].mxu0
      %v1622 = vadd.f32 %v1486, %v1621
      %v1623 = vpop.f32.mrb[0].mxu0
      %v1624 = vpop.f32.mrb[0].mxu0
      %v1625 = vadd.f32 %v1489, %v1624
      %v1626 = vpop.f32.mrb[0].mxu0
      %1627 = vmatprep.mubr.bf16.mxu0 0
      %1628 = vmatmul.mubr.bf16.gmra.mrb[0].mxu0 %v1134
      %v1629 = vpop.f32.mrb[0].mxu0
      %v1630 = vadd.f32 %v1494, %v1629
      %v1631 = vpop.f32.mrb[0].mxu0
      %v1632 = vpop.f32.mrb[0].mxu0
      %v1633 = vadd.f32 %v1497, %v1632
      %v1634 = vpop.f32.mrb[0].mxu0
      %1635 = vmatprep.mubr.bf16.mxu0 0
      %1636 = vmatmul.mubr.bf16.gmra.mrb[0].mxu0 %v1137
      %v1637 = vpop.f32.mrb[0].mxu0
      %v1638 = vadd.f32 %v1502, %v1637
      %v1639 = vpop.f32.mrb[0].mxu0
      %v1640 = vpop.f32.mrb[0].mxu0
      %v1641 = vadd.f32 %v1505, %v1640
      %v1642 = vpop.f32.mrb[0].mxu0
      %1643 = vmatprep.mubr.bf16.mxu0 0
      %1644 = vmatmul.mubr.bf16.gmra.mrb[0].mxu0 %v1140
      %v1645 = vpop.f32.mrb[0].mxu0
      %v1646 = vadd.f32 %v1510, %v1645
      %v1647 = vpop.f32.mrb[0].mxu0
      %v1648 = vpop.f32.mrb[0].mxu0
      %v1649 = vadd.f32 %v1513, %v1648
      %v1650 = vpop.f32.mrb[0].mxu0
      %1651 = vmatprep.mubr.bf16.mxu0 0
      %1652 = vmatmul.mubr.bf16.gmra.mrb[0].mxu0 %v1143
      %v1653 = vpop.f32.mrb[0].mxu0
      %v1654 = vadd.f32 %v1518, %v1653
      %v1655 = vpop.f32.mrb[0].mxu0
      %v1656 = vpop.f32.mrb[0].mxu0
      %v1657 = vadd.f32 %v1521, %v1656
      %v1658 = vpop.f32.mrb[0].mxu0
      %1659 = vmatprep.mubr.bf16.mxu0 0
      %1660 = vmatmul.mubr.bf16.gmra.mrb[0].mxu0 %v1146
      %v1661 = vpop.f32.mrb[0].mxu0
      %v1662 = vadd.f32 %v1526, %v1661
      %v1663 = vpop.f32.mrb[0].mxu0
      %v1664 = vpop.f32.mrb[0].mxu0
      %v1665 = vadd.f32 %v1529, %v1664
      %v1666 = vpop.f32.mrb[0].mxu0
      %1667 = vmatprep.mubr.bf16.mxu0 0
      %1668 = vmatmul.mubr.bf16.gmra.mrb[0].mxu0 %v1149
      %v1669 = vpop.f32.mrb[0].mxu0
      %v1670 = vadd.f32 %v1534, %v1669
      %v1671 = vpop.f32.mrb[0].mxu0
      %v1672 = vpop.f32.mrb[0].mxu0
      %v1673 = vadd.f32 %v1537, %v1672
      %v1674 = vpop.f32.mrb[0].mxu0
      %1675 = vmatprep.mubr.bf16.mxu0 0
      %1676 = vmatmul.mubr.bf16.gmra.mrb[0].mxu0 %v1152
      %v1677 = vpop.f32.mrb[0].mxu0
      %v1678 = vadd.f32 %v1542, %v1677
      %v1679 = vpop.f32.mrb[0].mxu0
      %v1680 = vpop.f32.mrb[0].mxu0
      %v1681 = vadd.f32 %v1545, %v1680
      %v1682 = vpop.f32.mrb[0].mxu0
      %1683 = vmatprep.mubr.bf16.mxu0 0
      %1684 = vmatmul.mubr.bf16.gmra.mrb[0].mxu0 %v1155
      %v1685 = vpop.f32.mrb[0].mxu0
      %v1686 = vadd.f32 %v1550, %v1685
      %v1687 = vpop.f32.mrb[0].mxu0
      %v1688 = vpop.f32.mrb[0].mxu0
      %v1689 = vadd.f32 %v1553, %v1688
      %v1690 = vpop.f32.mrb[0].mxu0
      %1691 = vmatprep.mubr.bf16.mxu0 0
      %1692 = vmatmul.mubr.bf16.gmra.mrb[0].mxu0 %v1158
      %v1693 = vpop.f32.mrb[0].mxu0
      %v1694 = vadd.f32 %v1558, %v1693
      %v1695 = vpop.f32.mrb[0].mxu0
      %v1696 = vpop.f32.mrb[0].mxu0
      %v1697 = vadd.f32 %v1561, %v1696
      %v1698 = vpop.f32.mrb[0].mxu0
      %1699 = vmatprep.mubr.bf16.mxu0 0
      %1700 = vmatmul.mubr.bf16.gmra.mrb[0].mxu0 %v1161
      %v1701 = vpop.f32.mrb[0].mxu0
      %v1702 = vadd.f32 %v1566, %v1701
      %v1703 = vpop.f32.mrb[0].mxu0
      %v1704 = vpop.f32.mrb[0].mxu0
      %v1705 = vpop.f32.mrb[0].mxu0
      %1706 = vdwg.mxu0
      %vm1707 = vcmp.ge.f32.partialorder %v1606, 0.0
      %vm1708 = vcmp.ge.f32.partialorder %v1609, 0.0
      %vm1709 = vcmp.ge.f32.partialorder %v1614, 0.0
      %vm1710 = vcmp.ge.f32.partialorder %v1617, 0.0
      %vm1711 = vcmp.ge.f32.partialorder %v1622, 0.0
      %vm1712 = vcmp.ge.f32.partialorder %v1625, 0.0
      %vm1713 = vcmp.ge.f32.partialorder %v1630, 0.0
      %vm1714 = vcmp.ge.f32.partialorder %v1633, 0.0
      %vm1715 = vcmp.ge.f32.partialorder %v1638, 0.0
      %vm1716 = vcmp.ge.f32.partialorder %v1641, 0.0
      %vm1717 = vcmp.ge.f32.partialorder %v1646, 0.0
      %vm1718 = vcmp.ge.f32.partialorder %v1649, 0.0
      %vm1719 = vcmp.ge.f32.partialorder %v1654, 0.0
      %vm1720 = vcmp.ge.f32.partialorder %v1657, 0.0
      %vm1721 = vcmp.ge.f32.partialorder %v1662, 0.0
      %vm1722 = vcmp.ge.f32.partialorder %v1665, 0.0
      %vm1723 = vcmp.ge.f32.partialorder %v1670, 0.0
      %vm1724 = vcmp.ge.f32.partialorder %v1673, 0.0
      %vm1725 = vcmp.ge.f32.partialorder %v1678, 0.0
      %vm1726 = vcmp.ge.f32.partialorder %v1681, 0.0
      %vm1727 = vcmp.ge.f32.partialorder %v1686, 0.0
      %vm1728 = vcmp.ge.f32.partialorder %v1689, 0.0
      %vm1729 = vcmp.ge.f32.partialorder %v1694, 0.0
      %vm1730 = vcmp.ge.f32.partialorder %v1697, 0.0
      %vm1731 = vcmp.ge.f32.partialorder %v1702, 0.0
      %v1732 = vmul.f32 %v1606, 0.2
      %v1733 = vmul.f32 %v1609, 0.2
      %v1734 = vmul.f32 %v1614, 0.2
      %v1735 = vmul.f32 %v1617, 0.2
      %v1736 = vmul.f32 %v1622, 0.2
      %v1737 = vmul.f32 %v1625, 0.2
      %v1738 = vmul.f32 %v1630, 0.2
      %v1739 = vmul.f32 %v1633, 0.2
      %v1740 = vmul.f32 %v1638, 0.2
      %v1741 = vmul.f32 %v1641, 0.2
      %v1742 = vmul.f32 %v1646, 0.2
      %v1743 = vmul.f32 %v1649, 0.2
      %v1744 = vmul.f32 %v1654, 0.2
      %v1745 = vmul.f32 %v1657, 0.2
      %v1746 = vmul.f32 %v1662, 0.2
      %v1747 = vmul.f32 %v1665, 0.2
      %v1748 = vmul.f32 %v1670, 0.2
      %v1749 = vmul.f32 %v1673, 0.2
      %v1750 = vmul.f32 %v1678, 0.2
      %v1751 = vmul.f32 %v1681, 0.2
      %v1752 = vmul.f32 %v1686, 0.2
      %v1753 = vmul.f32 %v1689, 0.2
      %v1754 = vmul.f32 %v1694, 0.2
      %v1755 = vmul.f32 %v1697, 0.2
      %v1756 = vmul.f32 %v1702, 0.2
      %v1757 = vsel %vm1707, %v1606, %v1732
      %v1758 = vsel %vm1708, %v1609, %v1733
      %v1759 = vsel %vm1709, %v1614, %v1734
      %v1760 = vsel %vm1710, %v1617, %v1735
      %v1761 = vsel %vm1711, %v1622, %v1736
      %v1762 = vsel %vm1712, %v1625, %v1737
      %v1763 = vsel %vm1713, %v1630, %v1738
      %v1764 = vsel %vm1714, %v1633, %v1739
      %v1765 = vsel %vm1715, %v1638, %v1740
      %v1766 = vsel %vm1716, %v1641, %v1741
      %v1767 = vsel %vm1717, %v1646, %v1742
      %v1768 = vsel %vm1718, %v1649, %v1743
      %v1769 = vsel %vm1719, %v1654, %v1744
      %v1770 = vsel %vm1720, %v1657, %v1745
      %v1771 = vsel %vm1721, %v1662, %v1746
      %v1772 = vsel %vm1722, %v1665, %v1747
      %v1773 = vsel %vm1723, %v1670, %v1748
      %v1774 = vsel %vm1724, %v1673, %v1749
      %v1775 = vsel %vm1725, %v1678, %v1750
      %v1776 = vsel %vm1726, %v1681, %v1751
      %v1777 = vsel %vm1727, %v1686, %v1752
      %v1778 = vsel %vm1728, %v1689, %v1753
      %v1779 = vsel %vm1729, %v1694, %v1754
      %v1780 = vsel %vm1730, %v1697, %v1755
      %v1781 = vsel %vm1731, %v1702, %v1756
      %vm1782 = vcmask 523264
      %1783 = vst.msk [vmem:[#allocation2] sm:$0xff] %vm1782, %v1757
      %1784 = vst.msk [vmem:[#allocation2 + $0x8] sm:$0xff] %vm1782, %v1758
      %1785 = vst.msk [vmem:[#allocation2 + $0x10] sm:$0xff] %vm1782, %v1759
      %1786 = vst.msk [vmem:[#allocation2 + $0x18] sm:$0xff] %vm1782, %v1760
      %1787 = vst.msk [vmem:[#allocation2 + $0x20] sm:$0xff] %vm1782, %v1761
      %1788 = vst.msk [vmem:[#allocation2 + $0x28] sm:$0xff] %vm1782, %v1762
      %1789 = vst.msk [vmem:[#allocation2 + $0x30] sm:$0xff] %vm1782, %v1763
      %1790 = vst.msk [vmem:[#allocation2 + $0x38] sm:$0xff] %vm1782, %v1764
      %1791 = vst.msk [vmem:[#allocation2 + $0x40] sm:$0xff] %vm1782, %v1765
      %1792 = vst.msk [vmem:[#allocation2 + $0x48] sm:$0xff] %vm1782, %v1766
      %1793 = vst.msk [vmem:[#allocation2 + $0x50] sm:$0xff] %vm1782, %v1767
      %1794 = vst.msk [vmem:[#allocation2 + $0x58] sm:$0xff] %vm1782, %v1768
      %1795 = vst.msk [vmem:[#allocation2 + $0x60] sm:$0xff] %vm1782, %v1769
      %1796 = vst.msk [vmem:[#allocation2 + $0x68] sm:$0xff] %vm1782, %v1770
      %1797 = vst.msk [vmem:[#allocation2 + $0x70] sm:$0xff] %vm1782, %v1771
      %1798 = vst.msk [vmem:[#allocation2 + $0x78] sm:$0xff] %vm1782, %v1772
      %1799 = vst.msk [vmem:[#allocation2 + $0x80] sm:$0xff] %vm1782, %v1773
      %1800 = vst.msk [vmem:[#allocation2 + $0x88] sm:$0xff] %vm1782, %v1774
      %1801 = vst.msk [vmem:[#allocation2 + $0x90] sm:$0xff] %vm1782, %v1775
      %1802 = vst.msk [vmem:[#allocation2 + $0x98] sm:$0xff] %vm1782, %v1776
      %1803 = vst.msk [vmem:[#allocation2 + $0xa0] sm:$0xff] %vm1782, %v1777
      %1804 = vst.msk [vmem:[#allocation2 + $0xa8] sm:$0xff] %vm1782, %v1778
      %1805 = vst.msk [vmem:[#allocation2 + $0xb0] sm:$0xff] %vm1782, %v1779
      %1806 = vst.msk [vmem:[#allocation2 + $0xb8] sm:$0xff] %vm1782, %v1780
      %vm1807 = vcmask 519168
      %1808 = vst.msk [vmem:[#allocation2 + $0xc0] sm:$0xf] %vm1807, %v1781
      %v1809 = vld [vmem:[#allocation2] sm:$0xff]
      %v1810 = vld [vmem:[#allocation2 + $0x8] sm:$0xff]
      %v1811 = vld [vmem:[#allocation2 + $0x10] sm:$0xff]
      %v1812 = vld [vmem:[#allocation2 + $0x18] sm:$0xff]
      %v1813 = vld [vmem:[#allocation2 + $0x20] sm:$0xff]
      %v1814 = vld [vmem:[#allocation2 + $0x28] sm:$0xff]
      %v1815 = vld [vmem:[#allocation2 + $0x30] sm:$0x1]
      %v1816 = vld [vmem:[#allocation2 + $0x31] sm:$0xff]
      %v1817 = vld [vmem:[#allocation2 + $0x39] sm:$0xff]
      %v1818 = vld [vmem:[#allocation2 + $0x41] sm:$0xff]
      %v1819 = vld [vmem:[#allocation2 + $0x49] sm:$0xff]
      %v1820 = vld [vmem:[#allocation2 + $0x51] sm:$0xff]
      %v1821 = vld [vmem:[#allocation2 + $0x59] sm:$0xff]
      %v1822 = vld [vmem:[#allocation2 + $0x61] sm:$0x1]
      %v1823 = vadd.f32 %v1809, %v1816
      %v1824 = vadd.f32 %v1810, %v1817
      %v1825 = vadd.f32 %v1811, %v1818
      %v1826 = vadd.f32 %v1812, %v1819
      %v1827 = vadd.f32 %v1813, %v1820
      %v1828 = vadd.f32 %v1814, %v1821
      %v1829 = vadd.f32 %v1815, %v1822
      %v1830 = vld [vmem:[#allocation2 + $0x62] sm:$0xff]
      %v1831 = vld [vmem:[#allocation2 + $0x6a] sm:$0xff]
      %v1832 = vld [vmem:[#allocation2 + $0x72] sm:$0xff]
      %v1833 = vld [vmem:[#allocation2 + $0x7a] sm:$0xff]
      %v1834 = vld [vmem:[#allocation2 + $0x82] sm:$0xff]
      %v1835 = vld [vmem:[#allocation2 + $0x8a] sm:$0xff]
      %v1836 = vld [vmem:[#allocation2 + $0x92] sm:$0x1]
      %v1837 = vadd.f32 %v1823, %v1830
      %v1838 = vadd.f32 %v1824, %v1831
      %v1839 = vadd.f32 %v1825, %v1832
      %v1840 = vadd.f32 %v1826, %v1833
      %v1841 = vadd.f32 %v1827, %v1834
      %v1842 = vadd.f32 %v1828, %v1835
      %v1843 = vadd.f32 %v1829, %v1836
      %v1844 = vld [vmem:[#allocation2 + $0x93] sm:$0xff]
      %v1845 = vld [vmem:[#allocation2 + $0x9b] sm:$0xff]
      %v1846 = vld [vmem:[#allocation2 + $0xa3] sm:$0xff]
      %v1847 = vld [vmem:[#allocation2 + $0xab] sm:$0xff]
      %v1848 = vld [vmem:[#allocation2 + $0xb3] sm:$0xff]
      %v1849 = vld [vmem:[#allocation2 + $0xbb] sm:$0xff]
      %v1850 = vld [vmem:[#allocation2 + $0xc3] sm:$0x1]
      %v1851 = vadd.f32 %v1837, %v1844
      %v1852 = vadd.f32 %v1838, %v1845
      %v1853 = vadd.f32 %v1839, %v1846
      %v1854 = vadd.f32 %v1840, %v1847
      %v1855 = vadd.f32 %v1841, %v1848
      %v1856 = vadd.f32 %v1842, %v1849
      %v1857 = vadd.f32 %v1843, %v1850
      %v1858 = vmul.f32 %v1851, 0.25
      %v1859 = vmul.f32 %v1852, 0.25
      %v1860 = vmul.f32 %v1853, 0.25
      %v1861 = vmul.f32 %v1854, 0.25
      %v1862 = vmul.f32 %v1855, 0.25
      %v1863 = vmul.f32 %v1856, 0.25
      %v1864 = vmul.f32 %v1857, 0.25
      %v1865 = vpack.c.bf16 %v1859, %v1858
      %v1866 = vpack.c.bf16 %v1861, %v1860
      %v1867 = vpack.c.bf16 %v1863, %v1862
      %v1868 = vpack.c.bf16 %v1864, %v1864
      %v1873 = vunpack.c.l.b16 %v1865
      %v1874 = vunpack.c.h.b16 %v1865
      %v1875 = vunpack.c.l.b16 %v1866
      %v1876 = vunpack.c.h.b16 %v1866
      %v1877 = vunpack.c.l.b16 %v1867
      %v1878 = vunpack.c.h.b16 %v1867
      %v1879 = vunpack.c.l.b16 %v1868
      %v1880 = vpack.c.b16 %v1873, %v1873
      %v1881 = vpack.c.b16 %v1874, %v1874
      %v1882 = vpack.c.b16 %v1875, %v1875
      %v1883 = vpack.c.b16 %v1876, %v1876
      %v1884 = vpack.c.b16 %v1877, %v1877
      %v1885 = vpack.c.b16 %v1878, %v1878
      %v1886 = vpack.c.b16 %v1879, %v1879
      %1894 = vst.msk [vmem:[%s170] sm:$0xf] %vm1807, %v1880
      %1895 = vst.msk [vmem:[%s170 + $0x4] sm:$0xf] %vm1807, %v1881
      %1896 = vst.msk [vmem:[%s170 + $0x8] sm:$0xf] %vm1807, %v1882
      %1897 = vst.msk [vmem:[%s170 + $0xc] sm:$0xf] %vm1807, %v1883
      %1898 = vst.msk [vmem:[%s170 + $0x10] sm:$0xf] %vm1807, %v1884
      %1899 = vst.msk [vmem:[%s170 + $0x14] sm:$0xf] %vm1807, %v1885
      %vm1900 = vcmask 516096
      %vm1901 = vsmask.f32 256
      %vm1902 = vmand %vm1900, %vm1901
      %v1903 = vld [vmem:[%s170 + $0x18] sm:$0x1]
      %v1904 = vsel %vm1902, %v1886, %v1903
      %1905 = vst [vmem:[%s170 + $0x18] sm:$0x1] %v1904
      %p1906 = scmp.lt.s32.totalorder %s14, 1
      %s1907 = scalar_select %p1906, %s14, 1
      %s1908 = smul.addr %s1907, 7
      %s1909 = smul.addr %s1908, 4
      %s1910 = scalar_lea.vmem %s3, %s1909
      // Predicated region
      $region33: #{discrimination_net_forward.4} parent=31 // pred_check
        %p1911 = pneg %p100
      $region34: #{discrimination_net_forward.4} parent=31 // pred_check_branch
        %1913 = sbr.rel (%p1911) target = $region36
      $region35: #{discrimination_net_forward.4} parent=31 // pred_region
        _
      $region36: #{discrimination_net_forward.4} parent=31 // pred_fallthru
        _
    $region32: #{discrimination_net_forward.4} parent=5 // pred_fallthru
      _
    %p1914 = scmp.le.s32.totalorder 2, %s9
    // Predicated region
    $region37: #{discrimination_net_forward.4} parent=5 // pred_check
      %p1915 = pneg %p1914
    $region38: #{discrimination_net_forward.4} parent=5 // pred_check_branch
      %1917 = sbr.rel (%p1915) target = $region40
    $region39: #{discrimination_net_forward.4} parent=5 // pred_region
      %s1918 = ssub.s32 %s9, 2
      // Predicated region
      $region41: #{discrimination_net_forward.4} parent=39 // pred_check
        %p1919 = pneg %p106
      $region42: #{discrimination_net_forward.4} parent=39 // pred_check_branch
        %1921 = sbr.rel (%p1919) target = $region44
      $region43: #{discrimination_net_forward.4} parent=39 // pred_region
        %p1922 = scmp.lt.s32.totalorder %s15, 1
        %s1923 = scalar_select %p1922, %s15, 1
        %s1924 = smul.addr %s1923, 7
        %s1925 = smul.addr %s1924, 4
        %s1926 = scalar_lea.vmem %s3, %s1925
      $region44: #{discrimination_net_forward.4} parent=39 // pred_fallthru
        _
    $region40: #{discrimination_net_forward.4} parent=5 // pred_fallthru
      _
  $region6: #{discrimination_net_forward.4} parent=0 // loop_footer
    %s13 = sadd.s32 1, %s9
  $region7: #{discrimination_net_forward.4} parent=0 // loop_footer_branch
    %8 = sbr.rel target = $region3
  $region8: #{discrimination_net_forward.4} parent=0 // loop_exit
    _

// kernel: discrimination_net_forward.5
$region0: #{discrimination_net_forward.5}
  #allocation0 [shape = 'u32[]', space=smem, size = 0x4, offset = 0x4, fixed_abs, tag = 'smem constant byte address 0x4 - core index']
  #allocation1 [shape = 'u32[144,128]{1,0:T(1,128)}', space=vmem, size = 0x12000, scoped, tag = 'internal scratch']
  #allocation2 [shape = 'f32[2,1024]{1,0:T(2,128)}', space=vmem, size = 0x2000, scoped, tag = 'scratch operand']
  #allocation3 [shape = 'f32[1,1]{1,0:T(1,128)S(1)}', space=vmem, size = 0x200, scoped, tag = 'scoped memory for discrimination_net_forward.5']
  %s0 = inlined_call_operand.vmem [shape: bf16[2,3200], index: 0, kind: input, shape index: {}]
  %s1 = inlined_call_operand.vmem [shape: bf16[3200,1024], index: 1, kind: input, shape index: {}]
  %s2 = inlined_call_operand.vmem [shape: f32[1,1024], index: 2, kind: input, shape index: {}]
  %s3 = inlined_call_operand.vmem [shape: bf16[1024,1], index: 3, kind: input, shape index: {}]
  %s4 = inlined_call_operand.<no memory space> [shape: f32[1,1], index: 4, kind: input, shape index: {}]
  %s5 = inlined_call_operand.vmem [shape: f32[2,1], index: 5, kind: output, shape index: {}]
  %s6 = sld [smem:[#allocation0]]
  $region61: #{discrimination_net_forward.5} parent=0
    _
  %s8 = ssub.s32 1, %s6
  %s9 = scalar_select 0, %s8, %s6
  %v10 = vstv %s4
  %11 = vst [vmem:[#allocation3] sm:$0x1] %v10
  loop: start=0, step=1, limit=7
  $region2: #{discrimination_net_forward.5} parent=0 // loop_pre_header
    _
  $region3: #{discrimination_net_forward.5} parent=0 // loop_header
    %s13 = sphi 0, %s17
    %p14 = scmp.ge.s32.totalorder %s13, 7
    %s20 = sphi 0, %s32
    %s21 = sphi 0, %s28
    %s22 = sphi 0, %s20
    %s23 = sphi 0, %s21
    %s24 = sphi 0, %s22
    %s25 = sphi 0, %s23
    %s37 = sphi 0, %s39
    %s40 = sphi 0, %s37
    %s41 = sphi 0, %s40
    %s57 = sphi 0, %s41
    %s63 = sphi 0, %s65
    %s66 = sphi 0, %s63
    %s67 = sphi 0, %s66
    %s83 = sphi 0, %s67
    %s87 = sphi 0, %s87
    %s89 = sphi 0, %s87
    %s90 = sphi 0, %s89
    %s104 = sphi 0, %s90
    %s108 = sphi 0, %s108
    %s110 = sphi 0, %s108
    %s111 = sphi 0, %s110
    %s125 = sphi 0, %s111
    %s129 = sphi 0, %s129
    %s131 = sphi 0, %s129
    %s132 = sphi 0, %s131
    %s146 = sphi 0, %s132
    %s152 = sphi 0, %s154
    %s155 = sphi 0, %s152
    %s156 = sphi 0, %s155
    %s172 = sphi 0, %s156
  $region4: #{discrimination_net_forward.5} parent=0 // loop_header_branch
    %16 = sbr.rel (%p14) target = $region8
  $region5: #{discrimination_net_forward.5} parent=0 // loop_body
    %s18 = ssub.s32 %s13, 1
    %s19 = ssub.s32 %s13, 2
    %s26 = sadd.s32 1, %s21
    %p27 = scmp.ge.s32.totalorder %s26, 5
    %s28 = scalar_select %p27, 0, %s26
    %s29 = sadd.s32 1, %s20
    %s30 = scalar_select %p27, %s29, %s20
    %p31 = scmp.ge.s32.totalorder %s30, 1
    %s32 = scalar_select %p31, 0, %s30
    %s33 = ssub.s32 %s20, %s32
    %s34 = ssub.s32 %s21, %s28
    %s35 = sor.u32 %s33, %s34
    %p36 = scmp.eq.s32.totalorder %s35, 0
    %s38 = sadd.s32 %s37, 1
    %s39 = scalar_select %p36, %s37, %s38
    %p42 = pneg %p36
    %p43 = scmp.eq.s32.totalorder %s13, 4
    %p44 = por %p42, %p43
    %p45 = scmp.ne.s32.totalorder %s37, %s40
    %p46 = scmp.eq.s32.totalorder %s13, 0
    %p47 = por %p45, %p46
    %p48 = scmp.ne.s32.totalorder %s37, %s40
    %p49 = scmp.eq.s32.totalorder %s18, 4
    %p50 = por %p48, %p49
    %p51 = scmp.ne.s32.totalorder %s40, %s41
    %p52 = scmp.eq.s32.totalorder %s18, 0
    %p53 = por %p51, %p52
    %p54 = scmp.ne.s32.totalorder %s40, %s41
    %p55 = scmp.eq.s32.totalorder %s19, 4
    %p56 = por %p54, %p55
    %p58 = scmp.ne.s32.totalorder %s41, %s57
    %p59 = scmp.eq.s32.totalorder %s19, 0
    %p60 = por %p58, %p59
    %s61 = ssub.s32 %s21, %s28
    %p62 = scmp.eq.s32.totalorder %s61, 0
    %s64 = sadd.s32 %s63, 1
    %s65 = scalar_select %p62, %s63, %s64
    %p68 = pneg %p62
    %p69 = scmp.eq.s32.totalorder %s13, 4
    %p70 = por %p68, %p69
    %p71 = scmp.ne.s32.totalorder %s63, %s66
    %p72 = scmp.eq.s32.totalorder %s13, 0
    %p73 = por %p71, %p72
    %p74 = scmp.ne.s32.totalorder %s63, %s66
    %p75 = scmp.eq.s32.totalorder %s18, 4
    %p76 = por %p74, %p75
    %p77 = scmp.ne.s32.totalorder %s66, %s67
    %p78 = scmp.eq.s32.totalorder %s18, 0
    %p79 = por %p77, %p78
    %p80 = scmp.ne.s32.totalorder %s66, %s67
    %p81 = scmp.eq.s32.totalorder %s19, 4
    %p82 = por %p80, %p81
    %p84 = scmp.ne.s32.totalorder %s67, %s83
    %p85 = scmp.eq.s32.totalorder %s19, 0
    %p86 = por %p84, %p85
    %s88 = sadd.s32 %s87, 1
    %p91 = scmp.eq.s32.totalorder %s13, 4
    %p92 = scmp.ne.s32.totalorder %s87, %s89
    %p93 = scmp.eq.s32.totalorder %s13, 0
    %p94 = por %p92, %p93
    %p95 = scmp.ne.s32.totalorder %s87, %s89
    %p96 = scmp.eq.s32.totalorder %s18, 4
    %p97 = por %p95, %p96
    %p98 = scmp.ne.s32.totalorder %s89, %s90
    %p99 = scmp.eq.s32.totalorder %s18, 0
    %p100 = por %p98, %p99
    %p101 = scmp.ne.s32.totalorder %s89, %s90
    %p102 = scmp.eq.s32.totalorder %s19, 4
    %p103 = por %p101, %p102
    %p105 = scmp.ne.s32.totalorder %s90, %s104
    %p106 = scmp.eq.s32.totalorder %s19, 0
    %p107 = por %p105, %p106
    %s109 = sadd.s32 %s108, 1
    %p112 = scmp.eq.s32.totalorder %s13, 4
    %p113 = scmp.ne.s32.totalorder %s108, %s110
    %p114 = scmp.eq.s32.totalorder %s13, 0
    %p115 = por %p113, %p114
    %p116 = scmp.ne.s32.totalorder %s108, %s110
    %p117 = scmp.eq.s32.totalorder %s18, 4
    %p118 = por %p116, %p117
    %p119 = scmp.ne.s32.totalorder %s110, %s111
    %p120 = scmp.eq.s32.totalorder %s18, 0
    %p121 = por %p119, %p120
    %p122 = scmp.ne.s32.totalorder %s110, %s111
    %p123 = scmp.eq.s32.totalorder %s19, 4
    %p124 = por %p122, %p123
    %p126 = scmp.ne.s32.totalorder %s111, %s125
    %p127 = scmp.eq.s32.totalorder %s19, 0
    %p128 = por %p126, %p127
    %s130 = sadd.s32 %s129, 1
    %p133 = scmp.eq.s32.totalorder %s13, 4
    %p134 = scmp.ne.s32.totalorder %s129, %s131
    %p135 = scmp.eq.s32.totalorder %s13, 0
    %p136 = por %p134, %p135
    %p137 = scmp.ne.s32.totalorder %s129, %s131
    %p138 = scmp.eq.s32.totalorder %s18, 4
    %p139 = por %p137, %p138
    %p140 = scmp.ne.s32.totalorder %s131, %s132
    %p141 = scmp.eq.s32.totalorder %s18, 0
    %p142 = por %p140, %p141
    %p143 = scmp.ne.s32.totalorder %s131, %s132
    %p144 = scmp.eq.s32.totalorder %s19, 4
    %p145 = por %p143, %p144
    %p147 = scmp.ne.s32.totalorder %s132, %s146
    %p148 = scmp.eq.s32.totalorder %s19, 0
    %p149 = por %p147, %p148
    %s150 = ssub.s32 %s20, %s32
    %p151 = scmp.eq.s32.totalorder %s150, 0
    %s153 = sadd.s32 %s152, 1
    %s154 = scalar_select %p151, %s152, %s153
    %p157 = pneg %p151
    %p158 = scmp.eq.s32.totalorder %s13, 4
    %p159 = por %p157, %p158
    %p160 = scmp.ne.s32.totalorder %s152, %s155
    %p161 = scmp.eq.s32.totalorder %s13, 0
    %p162 = por %p160, %p161
    %p163 = scmp.ne.s32.totalorder %s152, %s155
    %p164 = scmp.eq.s32.totalorder %s18, 4
    %p165 = por %p163, %p164
    %p166 = scmp.ne.s32.totalorder %s155, %s156
    %p167 = scmp.eq.s32.totalorder %s18, 0
    %p168 = por %p166, %p167
    %p169 = scmp.ne.s32.totalorder %s155, %s156
    %p170 = scmp.eq.s32.totalorder %s19, 4
    %p171 = por %p169, %p170
    %p173 = scmp.ne.s32.totalorder %s156, %s172
    %p174 = scmp.eq.s32.totalorder %s19, 0
    %p175 = por %p173, %p174
    %p176 = scmp.le.s32.totalorder 1, %s13
    %p177 = scmp.lt.s32.totalorder %s13, 6
    %p178 = pnand %p176, %p177
    %p179 = pneg %p178
    // Predicated region
    $region9: #{discrimination_net_forward.5} parent=5 // pred_check
      _
    $region10: #{discrimination_net_forward.5} parent=5 // pred_check_branch
      %181 = sbr.rel (%p178) target = $region12
    $region11: #{discrimination_net_forward.5} parent=5 // pred_region
      %s182 = ssub.s32 %s13, 1
      // Predicated region
      $region13: #{discrimination_net_forward.5} parent=11 // pred_check
        %p183 = pneg %p100
      $region14: #{discrimination_net_forward.5} parent=11 // pred_check_branch
        %185 = sbr.rel (%p183) target = $region16
      $region15: #{discrimination_net_forward.5} parent=11 // pred_region
        _
      $region16: #{discrimination_net_forward.5} parent=11 // pred_fallthru
        _
      // Predicated region
      $region17: #{discrimination_net_forward.5} parent=11 // pred_check
        %p186 = pneg %p121
      $region18: #{discrimination_net_forward.5} parent=11 // pred_check_branch
        %188 = sbr.rel (%p186) target = $region20
      $region19: #{discrimination_net_forward.5} parent=11 // pred_region
        _
      $region20: #{discrimination_net_forward.5} parent=11 // pred_fallthru
        _
      // Predicated region
      $region21: #{discrimination_net_forward.5} parent=11 // pred_check
        %p189 = pneg %p142
      $region22: #{discrimination_net_forward.5} parent=11 // pred_check_branch
        %191 = sbr.rel (%p189) target = $region24
      $region23: #{discrimination_net_forward.5} parent=11 // pred_region
        _
      $region24: #{discrimination_net_forward.5} parent=11 // pred_fallthru
        _
    $region12: #{discrimination_net_forward.5} parent=5 // pred_fallthru
      _
    %p192 = scmp.lt.s32.totalorder %s13, 5
    // Predicated region
    $region25: #{discrimination_net_forward.5} parent=5 // pred_check
      %p193 = pneg %p192
    $region26: #{discrimination_net_forward.5} parent=5 // pred_check_branch
      %195 = sbr.rel (%p193) target = $region28
    $region27: #{discrimination_net_forward.5} parent=5 // pred_region
      // Predicated region
      $region29: #{discrimination_net_forward.5} parent=27 // pred_check
        %p196 = pneg %p47
      $region30: #{discrimination_net_forward.5} parent=27 // pred_check_branch
        %198 = sbr.rel (%p196) target = $region32
      $region31: #{discrimination_net_forward.5} parent=27 // pred_region
        %s199 = smul.u32 5, %s21
        %p200 = scmp.lt.s32.totalorder %s20, 0
        %s201 = scalar_select %p200, %s20, 0
        %p202 = scmp.lt.s32.totalorder %s199, 24
        %s203 = scalar_select %p202, %s199, 24
        %s204 = smul.addr %s201, 25
        %s205 = sadd.s32 %s203, %s204
        %s206 = scalar_lea.vmem %s0, %s205
        %s207 = smul.u32 5, %s21
      $region32: #{discrimination_net_forward.5} parent=27 // pred_fallthru
        _
      // Predicated region
      $region33: #{discrimination_net_forward.5} parent=27 // pred_check
        %p208 = pneg %p73
      $region34: #{discrimination_net_forward.5} parent=27 // pred_check_branch
        %210 = sbr.rel (%p208) target = $region36
      $region35: #{discrimination_net_forward.5} parent=27 // pred_region
        %s211 = smul.u32 80, %s21
        %p212 = scmp.lt.s32.totalorder %s211, 399
        %s213 = scalar_select %p212, %s211, 399
        %s214 = smul.addr %s213, 8
        %s215 = smul.addr %s214, 4
        %s216 = scalar_lea.vmem %s1, %s215
        %s217 = smul.u32 80, %s21
      $region36: #{discrimination_net_forward.5} parent=27 // pred_fallthru
        _
    $region28: #{discrimination_net_forward.5} parent=5 // pred_fallthru
      _
    %p218 = scmp.le.s32.totalorder 1, %s13
    %p219 = scmp.lt.s32.totalorder %s13, 6
    %p220 = pnand %p218, %p219
    %p221 = pneg %p220
    // Predicated region
    $region37: #{discrimination_net_forward.5} parent=5 // pred_check
      _
    $region38: #{discrimination_net_forward.5} parent=5 // pred_check_branch
      %223 = sbr.rel (%p220) target = $region40
    $region39: #{discrimination_net_forward.5} parent=5 // pred_region
      %s224 = ssub.s32 %s13, 1
      %s225 = smul.u32 5, %s23
      %p226 = scmp.lt.s32.totalorder %s22, 0
      %s227 = scalar_select %p226, %s22, 0
      %p228 = scmp.lt.s32.totalorder %s225, 24
      %s229 = scalar_select %p228, %s225, 24
      %s230 = smul.addr %s227, 25
      %s231 = sadd.s32 %s229, %s230
      %s232 = scalar_lea.vmem %s0, %s231
      %p233 = pneg %p53
      %p234 = pneg %p50
      %s235 = smul.u32 80, %s23
      %p236 = scmp.lt.s32.totalorder %s235, 399
      %s237 = scalar_select %p236, %s235, 399
      %s238 = smul.addr %s237, 8
      %s239 = smul.addr %s238, 4
      %s240 = scalar_lea.vmem %s1, %s239
      %p241 = pneg %p79
      %p242 = pneg %p76
      %p243 = pneg %p100
      %p244 = pneg %p97
      %p245 = pneg %p121
      %p246 = pneg %p118
      %p247 = pneg %p142
      %p248 = pneg %p139
      %p249 = pneg %p168
      %p250 = pneg %p165
      %p251 = scmp.lt.s32.totalorder %s22, 0
      %s252 = scalar_select %p251, %s22, 0
      %s253 = smul.addr %s252, 2
      %s254 = scalar_lea.vmem %s5, %s253
      %s255 = smul.u32 5, %s23
      %p256 = scmp.lt.s32.totalorder %s22, 0
      %s257 = scalar_select %p256, %s22, 0
      %p258 = scmp.lt.s32.totalorder %s255, 24
      %s259 = scalar_select %p258, %s255, 24
      %s260 = smul.addr %s257, 25
      %s261 = sadd.s32 %s259, %s260
      %s262 = scalar_lea.vmem %s0, %s261
      %s263 = smul.u32 5, %s23
      %s264 = smul.u32 80, %s23
      %p265 = scmp.lt.s32.totalorder %s264, 399
      %s266 = scalar_select %p265, %s264, 399
      %s267 = smul.addr %s266, 8
      %s268 = smul.addr %s267, 4
      %s269 = scalar_lea.vmem %s1, %s268
      %s270 = smul.u32 80, %s23
      %p271 = scmp.lt.s32.totalorder %s22, 0
      %s272 = scalar_select %p271, %s22, 0
      %s273 = smul.addr %s272, 2
      %s274 = scalar_lea.vmem %s5, %s273
      %p276 = scmp.eq.s32.totalorder %s23, 0
      // Predicated region
      $region41: #{discrimination_net_forward.5} parent=39 // pred_check
        %p277 = pneg %p276
      $region42: #{discrimination_net_forward.5} parent=39 // pred_check_branch
        %279 = sbr.rel (%p277) target = $region44
      $region43: #{discrimination_net_forward.5} parent=39 // pred_region
        %280 = vst [vmem:[#allocation2] sm:$0xff] 0.0
        %281 = vst [vmem:[#allocation2 + $0x8] sm:$0xff] 0.0
      $region44: #{discrimination_net_forward.5} parent=39 // pred_fallthru
        _
      %v282 = vld [vmem:[#allocation2] sm:$0xff]
      %v283 = vld [vmem:[#allocation2 + $0x8] sm:$0xff]
      %v284 = vld [vmem:[%s262] sm:$0x1f]
      %v285 = vld [vmem:[%s269] sm:$0xff]
      %v286 = vld [vmem:[%s269 + $0x8] sm:$0xff]
      %v287 = vld [vmem:[%s269 + $0x10] sm:$0xff]
      %v288 = vld [vmem:[%s269 + $0x18] sm:$0xff]
      %v289 = vld [vmem:[%s269 + $0x20] sm:$0xff]
      %v290 = vld [vmem:[%s269 + $0x28] sm:$0xff]
      %v291 = vld [vmem:[%s269 + $0x30] sm:$0xff]
      %v292 = vld [vmem:[%s269 + $0x38] sm:$0xff]
      %v293 = vld [vmem:[%s269 + $0x40] sm:$0xff]
      %v294 = vld [vmem:[%s269 + $0x48] sm:$0xff]
      %v295 = vld [vmem:[%s269 + $0x50] sm:$0xff]
      %v296 = vld [vmem:[%s269 + $0x58] sm:$0xff]
      %v297 = vld [vmem:[%s269 + $0x60] sm:$0xff]
      %v298 = vld [vmem:[%s269 + $0x68] sm:$0xff]
      %v299 = vld [vmem:[%s269 + $0x70] sm:$0xff]
      %v300 = vld [vmem:[%s269 + $0x78] sm:$0xff]
      %v301 = vld [vmem:[%s269 + $0x80] sm:$0xff]
      %v302 = vld [vmem:[%s269 + $0x88] sm:$0xff]
      %v303 = vld [vmem:[%s269 + $0x90] sm:$0xff]
      %v304 = vld [vmem:[%s269 + $0x98] sm:$0xff]
      %v305 = vld [vmem:[%s269 + $0xa0] sm:$0xff]
      %v306 = vld [vmem:[%s269 + $0xa8] sm:$0xff]
      %v307 = vld [vmem:[%s269 + $0xb0] sm:$0xff]
      %v308 = vld [vmem:[%s269 + $0xb8] sm:$0xff]
      %v309 = vld [vmem:[%s269 + $0xc0] sm:$0xff]
      %v310 = vld [vmem:[%s269 + $0xc8] sm:$0xff]
      %v311 = vld [vmem:[%s269 + $0xd0] sm:$0xff]
      %v312 = vld [vmem:[%s269 + $0xd8] sm:$0xff]
      %v313 = vld [vmem:[%s269 + $0xe0] sm:$0xff]
      %v314 = vld [vmem:[%s269 + $0xe8] sm:$0xff]
      %v315 = vld [vmem:[%s269 + $0xf0] sm:$0xff]
      %v316 = vld [vmem:[%s269 + $0xf8] sm:$0xff]
      %v317 = vld [vmem:[%s269 + $0x100] sm:$0xff]
      %v318 = vld [vmem:[%s269 + $0x108] sm:$0xff]
      %v319 = vld [vmem:[%s269 + $0x110] sm:$0xff]
      %v320 = vld [vmem:[%s269 + $0x118] sm:$0xff]
      %v321 = vld [vmem:[%s269 + $0x120] sm:$0xff]
      %v322 = vld [vmem:[%s269 + $0x128] sm:$0xff]
      %v323 = vld [vmem:[%s269 + $0x130] sm:$0xff]
      %v324 = vld [vmem:[%s269 + $0x138] sm:$0xff]
      %v325 = vld [vmem:[%s269 + $0x140] sm:$0xff]
      %v326 = vld [vmem:[%s269 + $0x148] sm:$0xff]
      %v327 = vld [vmem:[%s269 + $0x150] sm:$0xff]
      %v328 = vld [vmem:[%s269 + $0x158] sm:$0xff]
      %v329 = vld [vmem:[%s269 + $0x160] sm:$0xff]
      %v330 = vld [vmem:[%s269 + $0x168] sm:$0xff]
      %v331 = vld [vmem:[%s269 + $0x170] sm:$0xff]
      %v332 = vld [vmem:[%s269 + $0x178] sm:$0xff]
      %v333 = vld [vmem:[%s269 + $0x180] sm:$0xff]
      %v334 = vld [vmem:[%s269 + $0x188] sm:$0xff]
      %v335 = vld [vmem:[%s269 + $0x190] sm:$0xff]
      %v336 = vld [vmem:[%s269 + $0x198] sm:$0xff]
      %v337 = vld [vmem:[%s269 + $0x1a0] sm:$0xff]
      %v338 = vld [vmem:[%s269 + $0x1a8] sm:$0xff]
      %v339 = vld [vmem:[%s269 + $0x1b0] sm:$0xff]
      %v340 = vld [vmem:[%s269 + $0x1b8] sm:$0xff]
      %v341 = vld [vmem:[%s269 + $0x1c0] sm:$0xff]
      %v342 = vld [vmem:[%s269 + $0x1c8] sm:$0xff]
      %v343 = vld [vmem:[%s269 + $0x1d0] sm:$0xff]
      %v344 = vld [vmem:[%s269 + $0x1d8] sm:$0xff]
      %v345 = vld [vmem:[%s269 + $0x1e0] sm:$0xff]
      %v346 = vld [vmem:[%s269 + $0x1e8] sm:$0xff]
      %v347 = vld [vmem:[%s269 + $0x1f0] sm:$0xff]
      %v348 = vld [vmem:[%s269 + $0x1f8] sm:$0xff]
      %v349 = vld [vmem:[%s269 + $0x200] sm:$0xff]
      %v350 = vld [vmem:[%s269 + $0x208] sm:$0xff]
      %v351 = vld [vmem:[%s269 + $0x210] sm:$0xff]
      %v352 = vld [vmem:[%s269 + $0x218] sm:$0xff]
      %v353 = vld [vmem:[%s269 + $0x220] sm:$0xff]
      %v354 = vld [vmem:[%s269 + $0x228] sm:$0xff]
      %v355 = vld [vmem:[%s269 + $0x230] sm:$0xff]
      %v356 = vld [vmem:[%s269 + $0x238] sm:$0xff]
      %v357 = vld [vmem:[%s269 + $0x240] sm:$0xff]
      %v358 = vld [vmem:[%s269 + $0x248] sm:$0xff]
      %v359 = vld [vmem:[%s269 + $0x250] sm:$0xff]
      %v360 = vld [vmem:[%s269 + $0x258] sm:$0xff]
      %v361 = vld [vmem:[%s269 + $0x260] sm:$0xff]
      %v362 = vld [vmem:[%s269 + $0x268] sm:$0xff]
      %v363 = vld [vmem:[%s269 + $0x270] sm:$0xff]
      %v364 = vld [vmem:[%s269 + $0x278] sm:$0xff]
      %v365 = vld [vmem:[%s269 + $0x280] sm:$0xff]
      %v366 = vld [vmem:[%s269 + $0x288] sm:$0xff]
      %v367 = vld [vmem:[%s269 + $0x290] sm:$0xff]
      %v368 = vld [vmem:[%s269 + $0x298] sm:$0xff]
      %v369 = vld [vmem:[%s269 + $0x2a0] sm:$0xff]
      %v370 = vld [vmem:[%s269 + $0x2a8] sm:$0xff]
      %v371 = vld [vmem:[%s269 + $0x2b0] sm:$0xff]
      %v372 = vld [vmem:[%s269 + $0x2b8] sm:$0xff]
      %v373 = vld [vmem:[%s269 + $0x2c0] sm:$0xff]
      %v374 = vld [vmem:[%s269 + $0x2c8] sm:$0xff]
      %v375 = vld [vmem:[%s269 + $0x2d0] sm:$0xff]
      %v376 = vld [vmem:[%s269 + $0x2d8] sm:$0xff]
      %v377 = vld [vmem:[%s269 + $0x2e0] sm:$0xff]
      %v378 = vld [vmem:[%s269 + $0x2e8] sm:$0xff]
      %v379 = vld [vmem:[%s269 + $0x2f0] sm:$0xff]
      %v380 = vld [vmem:[%s269 + $0x2f8] sm:$0xff]
      %v381 = vld [vmem:[%s269 + $0x300] sm:$0xff]
      %v382 = vld [vmem:[%s269 + $0x308] sm:$0xff]
      %v383 = vld [vmem:[%s269 + $0x310] sm:$0xff]
      %v384 = vld [vmem:[%s269 + $0x318] sm:$0xff]
      %v385 = vld [vmem:[%s269 + $0x320] sm:$0xff]
      %v386 = vld [vmem:[%s269 + $0x328] sm:$0xff]
      %v387 = vld [vmem:[%s269 + $0x330] sm:$0xff]
      %v388 = vld [vmem:[%s269 + $0x338] sm:$0xff]
      %v389 = vld [vmem:[%s269 + $0x340] sm:$0xff]
      %v390 = vld [vmem:[%s269 + $0x348] sm:$0xff]
      %v391 = vld [vmem:[%s269 + $0x350] sm:$0xff]
      %v392 = vld [vmem:[%s269 + $0x358] sm:$0xff]
      %v393 = vld [vmem:[%s269 + $0x360] sm:$0xff]
      %v394 = vld [vmem:[%s269 + $0x368] sm:$0xff]
      %v395 = vld [vmem:[%s269 + $0x370] sm:$0xff]
      %v396 = vld [vmem:[%s269 + $0x378] sm:$0xff]
      %v397 = vld [vmem:[%s269 + $0x380] sm:$0xff]
      %v398 = vld [vmem:[%s269 + $0x388] sm:$0xff]
      %v399 = vld [vmem:[%s269 + $0x390] sm:$0xff]
      %v400 = vld [vmem:[%s269 + $0x398] sm:$0xff]
      %v401 = vld [vmem:[%s269 + $0x3a0] sm:$0xff]
      %v402 = vld [vmem:[%s269 + $0x3a8] sm:$0xff]
      %v403 = vld [vmem:[%s269 + $0x3b0] sm:$0xff]
      %v404 = vld [vmem:[%s269 + $0x3b8] sm:$0xff]
      %v405 = vld [vmem:[%s269 + $0x3c0] sm:$0xff]
      %v406 = vld [vmem:[%s269 + $0x3c8] sm:$0xff]
      %v407 = vld [vmem:[%s269 + $0x3d0] sm:$0xff]
      %v408 = vld [vmem:[%s269 + $0x3d8] sm:$0xff]
      %v409 = vld [vmem:[%s269 + $0x3e0] sm:$0xff]
      %v410 = vld [vmem:[%s269 + $0x3e8] sm:$0xff]
      %v411 = vld [vmem:[%s269 + $0x3f0] sm:$0xff]
      %v412 = vld [vmem:[%s269 + $0x3f8] sm:$0xff]
      %v413 = vld [vmem:[%s269 + $0x400] sm:$0xff]
      %v414 = vld [vmem:[%s269 + $0x408] sm:$0xff]
      %v415 = vld [vmem:[%s269 + $0x410] sm:$0xff]
      %v416 = vld [vmem:[%s269 + $0x418] sm:$0xff]
      %v417 = vld [vmem:[%s269 + $0x420] sm:$0xff]
      %v418 = vld [vmem:[%s269 + $0x428] sm:$0xff]
      %v419 = vld [vmem:[%s269 + $0x430] sm:$0xff]
      %v420 = vld [vmem:[%s269 + $0x438] sm:$0xff]
      %v421 = vld [vmem:[%s269 + $0x440] sm:$0xff]
      %v422 = vld [vmem:[%s269 + $0x448] sm:$0xff]
      %v423 = vld [vmem:[%s269 + $0x450] sm:$0xff]
      %v424 = vld [vmem:[%s269 + $0x458] sm:$0xff]
      %v425 = vld [vmem:[%s269 + $0x460] sm:$0xff]
      %v426 = vld [vmem:[%s269 + $0x468] sm:$0xff]
      %v427 = vld [vmem:[%s269 + $0x470] sm:$0xff]
      %v428 = vld [vmem:[%s269 + $0x478] sm:$0xff]
      %v429 = vld [vmem:[%s269 + $0x480] sm:$0xff]
      %v430 = vld [vmem:[%s269 + $0x488] sm:$0xff]
      %v431 = vld [vmem:[%s269 + $0x490] sm:$0xff]
      %v432 = vld [vmem:[%s269 + $0x498] sm:$0xff]
      %v433 = vld [vmem:[%s269 + $0x4a0] sm:$0xff]
      %v434 = vld [vmem:[%s269 + $0x4a8] sm:$0xff]
      %v435 = vld [vmem:[%s269 + $0x4b0] sm:$0xff]
      %v436 = vld [vmem:[%s269 + $0x4b8] sm:$0xff]
      %v437 = vld [vmem:[%s269 + $0x4c0] sm:$0xff]
      %v438 = vld [vmem:[%s269 + $0x4c8] sm:$0xff]
      %v439 = vld [vmem:[%s269 + $0x4d0] sm:$0xff]
      %v440 = vld [vmem:[%s269 + $0x4d8] sm:$0xff]
      %v441 = vld [vmem:[%s269 + $0x4e0] sm:$0xff]
      %v442 = vld [vmem:[%s269 + $0x4e8] sm:$0xff]
      %v443 = vld [vmem:[%s269 + $0x4f0] sm:$0xff]
      %v444 = vld [vmem:[%s269 + $0x4f8] sm:$0xff]
      %v445 = vld [vmem:[%s269 + $0x500] sm:$0xff]
      %v446 = vld [vmem:[%s269 + $0x508] sm:$0xff]
      %v447 = vld [vmem:[%s269 + $0x510] sm:$0xff]
      %v448 = vld [vmem:[%s269 + $0x518] sm:$0xff]
      %v449 = vld [vmem:[%s269 + $0x520] sm:$0xff]
      %v450 = vld [vmem:[%s269 + $0x528] sm:$0xff]
      %v451 = vld [vmem:[%s269 + $0x530] sm:$0xff]
      %v452 = vld [vmem:[%s269 + $0x538] sm:$0xff]
      %v453 = vld [vmem:[%s269 + $0x540] sm:$0xff]
      %v454 = vld [vmem:[%s269 + $0x548] sm:$0xff]
      %v455 = vld [vmem:[%s269 + $0x550] sm:$0xff]
      %v456 = vld [vmem:[%s269 + $0x558] sm:$0xff]
      %v457 = vld [vmem:[%s269 + $0x560] sm:$0xff]
      %v458 = vld [vmem:[%s269 + $0x568] sm:$0xff]
      %v459 = vld [vmem:[%s269 + $0x570] sm:$0xff]
      %v460 = vld [vmem:[%s269 + $0x578] sm:$0xff]
      %v461 = vld [vmem:[%s269 + $0x580] sm:$0xff]
      %v462 = vld [vmem:[%s269 + $0x588] sm:$0xff]
      %v463 = vld [vmem:[%s269 + $0x590] sm:$0xff]
      %v464 = vld [vmem:[%s269 + $0x598] sm:$0xff]
      %v465 = vld [vmem:[%s269 + $0x5a0] sm:$0xff]
      %v466 = vld [vmem:[%s269 + $0x5a8] sm:$0xff]
      %v467 = vld [vmem:[%s269 + $0x5b0] sm:$0xff]
      %v468 = vld [vmem:[%s269 + $0x5b8] sm:$0xff]
      %v469 = vld [vmem:[%s269 + $0x5c0] sm:$0xff]
      %v470 = vld [vmem:[%s269 + $0x5c8] sm:$0xff]
      %v471 = vld [vmem:[%s269 + $0x5d0] sm:$0xff]
      %v472 = vld [vmem:[%s269 + $0x5d8] sm:$0xff]
      %v473 = vld [vmem:[%s269 + $0x5e0] sm:$0xff]
      %v474 = vld [vmem:[%s269 + $0x5e8] sm:$0xff]
      %v475 = vld [vmem:[%s269 + $0x5f0] sm:$0xff]
      %v476 = vld [vmem:[%s269 + $0x5f8] sm:$0xff]
      %v477 = vld [vmem:[%s269 + $0x600] sm:$0xff]
      %v478 = vld [vmem:[%s269 + $0x608] sm:$0xff]
      %v479 = vld [vmem:[%s269 + $0x610] sm:$0xff]
      %v480 = vld [vmem:[%s269 + $0x618] sm:$0xff]
      %v481 = vld [vmem:[%s269 + $0x620] sm:$0xff]
      %v482 = vld [vmem:[%s269 + $0x628] sm:$0xff]
      %v483 = vld [vmem:[%s269 + $0x630] sm:$0xff]
      %v484 = vld [vmem:[%s269 + $0x638] sm:$0xff]
      %v485 = vld [vmem:[%s269 + $0x640] sm:$0xff]
      %v486 = vld [vmem:[%s269 + $0x648] sm:$0xff]
      %v487 = vld [vmem:[%s269 + $0x650] sm:$0xff]
      %v488 = vld [vmem:[%s269 + $0x658] sm:$0xff]
      %v489 = vld [vmem:[%s269 + $0x660] sm:$0xff]
      %v490 = vld [vmem:[%s269 + $0x668] sm:$0xff]
      %v491 = vld [vmem:[%s269 + $0x670] sm:$0xff]
      %v492 = vld [vmem:[%s269 + $0x678] sm:$0xff]
      %v493 = vld [vmem:[%s269 + $0x680] sm:$0xff]
      %v494 = vld [vmem:[%s269 + $0x688] sm:$0xff]
      %v495 = vld [vmem:[%s269 + $0x690] sm:$0xff]
      %v496 = vld [vmem:[%s269 + $0x698] sm:$0xff]
      %v497 = vld [vmem:[%s269 + $0x6a0] sm:$0xff]
      %v498 = vld [vmem:[%s269 + $0x6a8] sm:$0xff]
      %v499 = vld [vmem:[%s269 + $0x6b0] sm:$0xff]
      %v500 = vld [vmem:[%s269 + $0x6b8] sm:$0xff]
      %v501 = vld [vmem:[%s269 + $0x6c0] sm:$0xff]
      %v502 = vld [vmem:[%s269 + $0x6c8] sm:$0xff]
      %v503 = vld [vmem:[%s269 + $0x6d0] sm:$0xff]
      %v504 = vld [vmem:[%s269 + $0x6d8] sm:$0xff]
      %v505 = vld [vmem:[%s269 + $0x6e0] sm:$0xff]
      %v506 = vld [vmem:[%s269 + $0x6e8] sm:$0xff]
      %v507 = vld [vmem:[%s269 + $0x6f0] sm:$0xff]
      %v508 = vld [vmem:[%s269 + $0x6f8] sm:$0xff]
      %v509 = vld [vmem:[%s269 + $0x700] sm:$0xff]
      %v510 = vld [vmem:[%s269 + $0x708] sm:$0xff]
      %v511 = vld [vmem:[%s269 + $0x710] sm:$0xff]
      %v512 = vld [vmem:[%s269 + $0x718] sm:$0xff]
      %v513 = vld [vmem:[%s269 + $0x720] sm:$0xff]
      %v514 = vld [vmem:[%s269 + $0x728] sm:$0xff]
      %v515 = vld [vmem:[%s269 + $0x730] sm:$0xff]
      %v516 = vld [vmem:[%s269 + $0x738] sm:$0xff]
      %v517 = vld [vmem:[%s269 + $0x740] sm:$0xff]
      %v518 = vld [vmem:[%s269 + $0x748] sm:$0xff]
      %v519 = vld [vmem:[%s269 + $0x750] sm:$0xff]
      %v520 = vld [vmem:[%s269 + $0x758] sm:$0xff]
      %v521 = vld [vmem:[%s269 + $0x760] sm:$0xff]
      %v522 = vld [vmem:[%s269 + $0x768] sm:$0xff]
      %v523 = vld [vmem:[%s269 + $0x770] sm:$0xff]
      %v524 = vld [vmem:[%s269 + $0x778] sm:$0xff]
      %v525 = vld [vmem:[%s269 + $0x780] sm:$0xff]
      %v526 = vld [vmem:[%s269 + $0x788] sm:$0xff]
      %v527 = vld [vmem:[%s269 + $0x790] sm:$0xff]
      %v528 = vld [vmem:[%s269 + $0x798] sm:$0xff]
      %v529 = vld [vmem:[%s269 + $0x7a0] sm:$0xff]
      %v530 = vld [vmem:[%s269 + $0x7a8] sm:$0xff]
      %v531 = vld [vmem:[%s269 + $0x7b0] sm:$0xff]
      %v532 = vld [vmem:[%s269 + $0x7b8] sm:$0xff]
      %v533 = vld [vmem:[%s269 + $0x7c0] sm:$0xff]
      %v534 = vld [vmem:[%s269 + $0x7c8] sm:$0xff]
      %v535 = vld [vmem:[%s269 + $0x7d0] sm:$0xff]
      %v536 = vld [vmem:[%s269 + $0x7d8] sm:$0xff]
      %v537 = vld [vmem:[%s269 + $0x7e0] sm:$0xff]
      %v538 = vld [vmem:[%s269 + $0x7e8] sm:$0xff]
      %v539 = vld [vmem:[%s269 + $0x7f0] sm:$0xff]
      %v540 = vld [vmem:[%s269 + $0x7f8] sm:$0xff]
      %v541 = vld [vmem:[%s269 + $0x800] sm:$0xff]
      %v542 = vld [vmem:[%s269 + $0x808] sm:$0xff]
      %v543 = vld [vmem:[%s269 + $0x810] sm:$0xff]
      %v544 = vld [vmem:[%s269 + $0x818] sm:$0xff]
      %v545 = vld [vmem:[%s269 + $0x820] sm:$0xff]
      %v546 = vld [vmem:[%s269 + $0x828] sm:$0xff]
      %v547 = vld [vmem:[%s269 + $0x830] sm:$0xff]
      %v548 = vld [vmem:[%s269 + $0x838] sm:$0xff]
      %v549 = vld [vmem:[%s269 + $0x840] sm:$0xff]
      %v550 = vld [vmem:[%s269 + $0x848] sm:$0xff]
      %v551 = vld [vmem:[%s269 + $0x850] sm:$0xff]
      %v552 = vld [vmem:[%s269 + $0x858] sm:$0xff]
      %v553 = vld [vmem:[%s269 + $0x860] sm:$0xff]
      %v554 = vld [vmem:[%s269 + $0x868] sm:$0xff]
      %v555 = vld [vmem:[%s269 + $0x870] sm:$0xff]
      %v556 = vld [vmem:[%s269 + $0x878] sm:$0xff]
      %v557 = vld [vmem:[%s269 + $0x880] sm:$0xff]
      %v558 = vld [vmem:[%s269 + $0x888] sm:$0xff]
      %v559 = vld [vmem:[%s269 + $0x890] sm:$0xff]
      %v560 = vld [vmem:[%s269 + $0x898] sm:$0xff]
      %v561 = vld [vmem:[%s269 + $0x8a0] sm:$0xff]
      %v562 = vld [vmem:[%s269 + $0x8a8] sm:$0xff]
      %v563 = vld [vmem:[%s269 + $0x8b0] sm:$0xff]
      %v564 = vld [vmem:[%s269 + $0x8b8] sm:$0xff]
      %v565 = vld [vmem:[%s269 + $0x8c0] sm:$0xff]
      %v566 = vld [vmem:[%s269 + $0x8c8] sm:$0xff]
      %v567 = vld [vmem:[%s269 + $0x8d0] sm:$0xff]
      %v568 = vld [vmem:[%s269 + $0x8d8] sm:$0xff]
      %v569 = vld [vmem:[%s269 + $0x8e0] sm:$0xff]
      %v570 = vld [vmem:[%s269 + $0x8e8] sm:$0xff]
      %v571 = vld [vmem:[%s269 + $0x8f0] sm:$0xff]
      %v572 = vld [vmem:[%s269 + $0x8f8] sm:$0xff]
      %v573 = vld [vmem:[%s269 + $0x900] sm:$0xff]
      %v574 = vld [vmem:[%s269 + $0x908] sm:$0xff]
      %v575 = vld [vmem:[%s269 + $0x910] sm:$0xff]
      %v576 = vld [vmem:[%s269 + $0x918] sm:$0xff]
      %v577 = vld [vmem:[%s269 + $0x920] sm:$0xff]
      %v578 = vld [vmem:[%s269 + $0x928] sm:$0xff]
      %v579 = vld [vmem:[%s269 + $0x930] sm:$0xff]
      %v580 = vld [vmem:[%s269 + $0x938] sm:$0xff]
      %v581 = vld [vmem:[%s269 + $0x940] sm:$0xff]
      %v582 = vld [vmem:[%s269 + $0x948] sm:$0xff]
      %v583 = vld [vmem:[%s269 + $0x950] sm:$0xff]
      %v584 = vld [vmem:[%s269 + $0x958] sm:$0xff]
      %v585 = vld [vmem:[%s269 + $0x960] sm:$0xff]
      %v586 = vld [vmem:[%s269 + $0x968] sm:$0xff]
      %v587 = vld [vmem:[%s269 + $0x970] sm:$0xff]
      %v588 = vld [vmem:[%s269 + $0x978] sm:$0xff]
      %v589 = vld [vmem:[%s269 + $0x980] sm:$0xff]
      %v590 = vld [vmem:[%s269 + $0x988] sm:$0xff]
      %v591 = vld [vmem:[%s269 + $0x990] sm:$0xff]
      %v592 = vld [vmem:[%s269 + $0x998] sm:$0xff]
      %v593 = vld [vmem:[%s269 + $0x9a0] sm:$0xff]
      %v594 = vld [vmem:[%s269 + $0x9a8] sm:$0xff]
      %v595 = vld [vmem:[%s269 + $0x9b0] sm:$0xff]
      %v596 = vld [vmem:[%s269 + $0x9b8] sm:$0xff]
      %v597 = vld [vmem:[%s269 + $0x9c0] sm:$0xff]
      %v598 = vld [vmem:[%s269 + $0x9c8] sm:$0xff]
      %v599 = vld [vmem:[%s269 + $0x9d0] sm:$0xff]
      %v600 = vld [vmem:[%s269 + $0x9d8] sm:$0xff]
      %v601 = vld [vmem:[%s269 + $0x9e0] sm:$0xff]
      %v602 = vld [vmem:[%s269 + $0x9e8] sm:$0xff]
      %v603 = vld [vmem:[%s269 + $0x9f0] sm:$0xff]
      %v604 = vld [vmem:[%s269 + $0x9f8] sm:$0xff]
      %v606 = vcombine.high %v284, %v284
      %v608 = vunpack.c.l.s4 1966171168
      %v609 = vunpack.c.0.s8 %v608
      %v610 = vlaneseq
      %v611 = vshrl.u32 %v610, 7
      %v612 = vsub.s32 %v609, %v611
      %v613 = vrot.slane %v284, %v612
      %v615 = vunpack.c.l.s4 1966171168
      %v616 = vunpack.c.0.s8 %v615
      %v617 = vlaneseq
      %v618 = vshrl.u32 %v617, 7
      %v619 = vsub.s32 %v616, %v618
      %v620 = vrot.slane %v606, %v619
      %v621 = vcombine.high %v613, %v613
      %v623 = vunpack.c.l.s4 1966171168
      %v624 = vunpack.c.0.s8 %v623
      %v625 = vlaneseq
      %v626 = vshrl.u32 %v625, 7
      %v627 = vsub.s32 %v624, %v626
      %v628 = vrot.slane %v613, %v627
      %v630 = vunpack.c.l.s4 1966171168
      %v631 = vunpack.c.0.s8 %v630
      %v632 = vlaneseq
      %v633 = vshrl.u32 %v632, 7
      %v634 = vsub.s32 %v631, %v633
      %v635 = vrot.slane %v620, %v634
      %v637 = vunpack.c.l.s4 1966171168
      %v638 = vunpack.c.0.s8 %v637
      %v639 = vlaneseq
      %v640 = vshrl.u32 %v639, 7
      %v641 = vsub.s32 %v638, %v640
      %v642 = vrot.slane %v621, %v641
      %v643 = vcombine.high %v628, %v628
      %v644 = vcombine.high %v642, %v642
      %v970 = vunpack.c.l.b16 %v285
      %v971 = vunpack.c.h.b16 %v285
      %v972 = vunpack.c.l.b16 %v286
      %v973 = vunpack.c.h.b16 %v286
      %v974 = vunpack.c.l.b16 %v287
      %v975 = vunpack.c.h.b16 %v287
      %v976 = vunpack.c.l.b16 %v288
      %v977 = vunpack.c.h.b16 %v288
      %v978 = vunpack.c.l.b16 %v289
      %v979 = vunpack.c.h.b16 %v289
      %v980 = vunpack.c.l.b16 %v290
      %v981 = vunpack.c.h.b16 %v290
      %v982 = vunpack.c.l.b16 %v291
      %v983 = vunpack.c.h.b16 %v291
      %v984 = vunpack.c.l.b16 %v292
      %v985 = vunpack.c.h.b16 %v292
      %v986 = vunpack.c.l.b16 %v293
      %v987 = vunpack.c.h.b16 %v293
      %v988 = vunpack.c.l.b16 %v294
      %v989 = vunpack.c.h.b16 %v294
      %v990 = vunpack.c.l.b16 %v295
      %v991 = vunpack.c.h.b16 %v295
      %v992 = vunpack.c.l.b16 %v296
      %v993 = vunpack.c.h.b16 %v296
      %v994 = vunpack.c.l.b16 %v297
      %v995 = vunpack.c.h.b16 %v297
      %v996 = vunpack.c.l.b16 %v298
      %v997 = vunpack.c.h.b16 %v298
      %v998 = vunpack.c.l.b16 %v299
      %v999 = vunpack.c.h.b16 %v299
      %v1000 = vunpack.c.l.b16 %v300
      %v1001 = vunpack.c.h.b16 %v300
      %v1002 = vunpack.c.l.b16 %v301
      %v1003 = vunpack.c.h.b16 %v301
      %v1004 = vunpack.c.l.b16 %v302
      %v1005 = vunpack.c.h.b16 %v302
      %v1006 = vunpack.c.l.b16 %v303
      %v1007 = vunpack.c.h.b16 %v303
      %v1008 = vunpack.c.l.b16 %v304
      %v1009 = vunpack.c.h.b16 %v304
      %v1010 = vunpack.c.l.b16 %v305
      %v1011 = vunpack.c.h.b16 %v305
      %v1012 = vunpack.c.l.b16 %v306
      %v1013 = vunpack.c.h.b16 %v306
      %v1014 = vunpack.c.l.b16 %v307
      %v1015 = vunpack.c.h.b16 %v307
      %v1016 = vunpack.c.l.b16 %v308
      %v1017 = vunpack.c.h.b16 %v308
      %v1018 = vunpack.c.l.b16 %v309
      %v1019 = vunpack.c.h.b16 %v309
      %v1020 = vunpack.c.l.b16 %v310
      %v1021 = vunpack.c.h.b16 %v310
      %v1022 = vunpack.c.l.b16 %v311
      %v1023 = vunpack.c.h.b16 %v311
      %v1024 = vunpack.c.l.b16 %v312
      %v1025 = vunpack.c.h.b16 %v312
      %v1026 = vunpack.c.l.b16 %v313
      %v1027 = vunpack.c.h.b16 %v313
      %v1028 = vunpack.c.l.b16 %v314
      %v1029 = vunpack.c.h.b16 %v314
      %v1030 = vunpack.c.l.b16 %v315
      %v1031 = vunpack.c.h.b16 %v315
      %v1032 = vunpack.c.l.b16 %v316
      %v1033 = vunpack.c.h.b16 %v316
      %v1034 = vunpack.c.l.b16 %v317
      %v1035 = vunpack.c.h.b16 %v317
      %v1036 = vunpack.c.l.b16 %v318
      %v1037 = vunpack.c.h.b16 %v318
      %v1038 = vunpack.c.l.b16 %v319
      %v1039 = vunpack.c.h.b16 %v319
      %v1040 = vunpack.c.l.b16 %v320
      %v1041 = vunpack.c.h.b16 %v320
      %v1042 = vunpack.c.l.b16 %v321
      %v1043 = vunpack.c.h.b16 %v321
      %v1044 = vunpack.c.l.b16 %v322
      %v1045 = vunpack.c.h.b16 %v322
      %v1046 = vunpack.c.l.b16 %v323
      %v1047 = vunpack.c.h.b16 %v323
      %v1048 = vunpack.c.l.b16 %v324
      %v1049 = vunpack.c.h.b16 %v324
      %v1050 = vunpack.c.l.b16 %v325
      %v1051 = vunpack.c.h.b16 %v325
      %v1052 = vunpack.c.l.b16 %v326
      %v1053 = vunpack.c.h.b16 %v326
      %v1054 = vunpack.c.l.b16 %v327
      %v1055 = vunpack.c.h.b16 %v327
      %v1056 = vunpack.c.l.b16 %v328
      %v1057 = vunpack.c.h.b16 %v328
      %v1058 = vunpack.c.l.b16 %v329
      %v1059 = vunpack.c.h.b16 %v329
      %v1060 = vunpack.c.l.b16 %v330
      %v1061 = vunpack.c.h.b16 %v330
      %v1062 = vunpack.c.l.b16 %v331
      %v1063 = vunpack.c.h.b16 %v331
      %v1064 = vunpack.c.l.b16 %v332
      %v1065 = vunpack.c.h.b16 %v332
      %v1066 = vunpack.c.l.b16 %v333
      %v1067 = vunpack.c.h.b16 %v333
      %v1068 = vunpack.c.l.b16 %v334
      %v1069 = vunpack.c.h.b16 %v334
      %v1070 = vunpack.c.l.b16 %v335
      %v1071 = vunpack.c.h.b16 %v335
      %v1072 = vunpack.c.l.b16 %v336
      %v1073 = vunpack.c.h.b16 %v336
      %v1074 = vunpack.c.l.b16 %v337
      %v1075 = vunpack.c.h.b16 %v337
      %v1076 = vunpack.c.l.b16 %v338
      %v1077 = vunpack.c.h.b16 %v338
      %v1078 = vunpack.c.l.b16 %v339
      %v1079 = vunpack.c.h.b16 %v339
      %v1080 = vunpack.c.l.b16 %v340
      %v1081 = vunpack.c.h.b16 %v340
      %v1082 = vunpack.c.l.b16 %v341
      %v1083 = vunpack.c.h.b16 %v341
      %v1084 = vunpack.c.l.b16 %v342
      %v1085 = vunpack.c.h.b16 %v342
      %v1086 = vunpack.c.l.b16 %v343
      %v1087 = vunpack.c.h.b16 %v343
      %v1088 = vunpack.c.l.b16 %v344
      %v1089 = vunpack.c.h.b16 %v344
      %v1090 = vunpack.c.l.b16 %v345
      %v1091 = vunpack.c.h.b16 %v345
      %v1092 = vunpack.c.l.b16 %v346
      %v1093 = vunpack.c.h.b16 %v346
      %v1094 = vunpack.c.l.b16 %v347
      %v1095 = vunpack.c.h.b16 %v347
      %v1096 = vunpack.c.l.b16 %v348
      %v1097 = vunpack.c.h.b16 %v348
      %v1098 = vunpack.c.l.b16 %v349
      %v1099 = vunpack.c.h.b16 %v349
      %v1100 = vunpack.c.l.b16 %v350
      %v1101 = vunpack.c.h.b16 %v350
      %v1102 = vunpack.c.l.b16 %v351
      %v1103 = vunpack.c.h.b16 %v351
      %v1104 = vunpack.c.l.b16 %v352
      %v1105 = vunpack.c.h.b16 %v352
      %v1106 = vunpack.c.l.b16 %v353
      %v1107 = vunpack.c.h.b16 %v353
      %v1108 = vunpack.c.l.b16 %v354
      %v1109 = vunpack.c.h.b16 %v354
      %v1110 = vunpack.c.l.b16 %v355
      %v1111 = vunpack.c.h.b16 %v355
      %v1112 = vunpack.c.l.b16 %v356
      %v1113 = vunpack.c.h.b16 %v356
      %v1114 = vunpack.c.l.b16 %v357
      %v1115 = vunpack.c.h.b16 %v357
      %v1116 = vunpack.c.l.b16 %v358
      %v1117 = vunpack.c.h.b16 %v358
      %v1118 = vunpack.c.l.b16 %v359
      %v1119 = vunpack.c.h.b16 %v359
      %v1120 = vunpack.c.l.b16 %v360
      %v1121 = vunpack.c.h.b16 %v360
      %v1122 = vunpack.c.l.b16 %v361
      %v1123 = vunpack.c.h.b16 %v361
      %v1124 = vunpack.c.l.b16 %v362
      %v1125 = vunpack.c.h.b16 %v362
      %v1126 = vunpack.c.l.b16 %v363
      %v1127 = vunpack.c.h.b16 %v363
      %v1128 = vunpack.c.l.b16 %v364
      %v1129 = vunpack.c.h.b16 %v364
      %v1130 = vunpack.c.l.b16 %v365
      %v1131 = vunpack.c.h.b16 %v365
      %v1132 = vunpack.c.l.b16 %v366
      %v1133 = vunpack.c.h.b16 %v366
      %v1134 = vunpack.c.l.b16 %v367
      %v1135 = vunpack.c.h.b16 %v367
      %v1136 = vunpack.c.l.b16 %v368
      %v1137 = vunpack.c.h.b16 %v368
      %v1138 = vunpack.c.l.b16 %v369
      %v1139 = vunpack.c.h.b16 %v369
      %v1140 = vunpack.c.l.b16 %v370
      %v1141 = vunpack.c.h.b16 %v370
      %v1142 = vunpack.c.l.b16 %v371
      %v1143 = vunpack.c.h.b16 %v371
      %v1144 = vunpack.c.l.b16 %v372
      %v1145 = vunpack.c.h.b16 %v372
      %v1146 = vunpack.c.l.b16 %v373
      %v1147 = vunpack.c.h.b16 %v373
      %v1148 = vunpack.c.l.b16 %v374
      %v1149 = vunpack.c.h.b16 %v374
      %v1150 = vunpack.c.l.b16 %v375
      %v1151 = vunpack.c.h.b16 %v375
      %v1152 = vunpack.c.l.b16 %v376
      %v1153 = vunpack.c.h.b16 %v376
      %v1154 = vunpack.c.l.b16 %v377
      %v1155 = vunpack.c.h.b16 %v377
      %v1156 = vunpack.c.l.b16 %v378
      %v1157 = vunpack.c.h.b16 %v378
      %v1158 = vunpack.c.l.b16 %v379
      %v1159 = vunpack.c.h.b16 %v379
      %v1160 = vunpack.c.l.b16 %v380
      %v1161 = vunpack.c.h.b16 %v380
      %v1162 = vunpack.c.l.b16 %v381
      %v1163 = vunpack.c.h.b16 %v381
      %v1164 = vunpack.c.l.b16 %v382
      %v1165 = vunpack.c.h.b16 %v382
      %v1166 = vunpack.c.l.b16 %v383
      %v1167 = vunpack.c.h.b16 %v383
      %v1168 = vunpack.c.l.b16 %v384
      %v1169 = vunpack.c.h.b16 %v384
      %v1170 = vunpack.c.l.b16 %v385
      %v1171 = vunpack.c.h.b16 %v385
      %v1172 = vunpack.c.l.b16 %v386
      %v1173 = vunpack.c.h.b16 %v386
      %v1174 = vunpack.c.l.b16 %v387
      %v1175 = vunpack.c.h.b16 %v387
      %v1176 = vunpack.c.l.b16 %v388
      %v1177 = vunpack.c.h.b16 %v388
      %v1178 = vunpack.c.l.b16 %v389
      %v1179 = vunpack.c.h.b16 %v389
      %v1180 = vunpack.c.l.b16 %v390
      %v1181 = vunpack.c.h.b16 %v390
      %v1182 = vunpack.c.l.b16 %v391
      %v1183 = vunpack.c.h.b16 %v391
      %v1184 = vunpack.c.l.b16 %v392
      %v1185 = vunpack.c.h.b16 %v392
      %v1186 = vunpack.c.l.b16 %v393
      %v1187 = vunpack.c.h.b16 %v393
      %v1188 = vunpack.c.l.b16 %v394
      %v1189 = vunpack.c.h.b16 %v394
      %v1190 = vunpack.c.l.b16 %v395
      %v1191 = vunpack.c.h.b16 %v395
      %v1192 = vunpack.c.l.b16 %v396
      %v1193 = vunpack.c.h.b16 %v396
      %v1194 = vunpack.c.l.b16 %v397
      %v1195 = vunpack.c.h.b16 %v397
      %v1196 = vunpack.c.l.b16 %v398
      %v1197 = vunpack.c.h.b16 %v398
      %v1198 = vunpack.c.l.b16 %v399
      %v1199 = vunpack.c.h.b16 %v399
      %v1200 = vunpack.c.l.b16 %v400
      %v1201 = vunpack.c.h.b16 %v400
      %v1202 = vunpack.c.l.b16 %v401
      %v1203 = vunpack.c.h.b16 %v401
      %v1204 = vunpack.c.l.b16 %v402
      %v1205 = vunpack.c.h.b16 %v402
      %v1206 = vunpack.c.l.b16 %v403
      %v1207 = vunpack.c.h.b16 %v403
      %v1208 = vunpack.c.l.b16 %v404
      %v1209 = vunpack.c.h.b16 %v404
      %v1210 = vunpack.c.l.b16 %v405
      %v1211 = vunpack.c.h.b16 %v405
      %v1212 = vunpack.c.l.b16 %v406
      %v1213 = vunpack.c.h.b16 %v406
      %v1214 = vunpack.c.l.b16 %v407
      %v1215 = vunpack.c.h.b16 %v407
      %v1216 = vunpack.c.l.b16 %v408
      %v1217 = vunpack.c.h.b16 %v408
      %v1218 = vunpack.c.l.b16 %v409
      %v1219 = vunpack.c.h.b16 %v409
      %v1220 = vunpack.c.l.b16 %v410
      %v1221 = vunpack.c.h.b16 %v410
      %v1222 = vunpack.c.l.b16 %v411
      %v1223 = vunpack.c.h.b16 %v411
      %v1224 = vunpack.c.l.b16 %v412
      %v1225 = vunpack.c.h.b16 %v412
      %v1226 = vunpack.c.l.b16 %v413
      %v1227 = vunpack.c.h.b16 %v413
      %v1228 = vunpack.c.l.b16 %v414
      %v1229 = vunpack.c.h.b16 %v414
      %v1230 = vunpack.c.l.b16 %v415
      %v1231 = vunpack.c.h.b16 %v415
      %v1232 = vunpack.c.l.b16 %v416
      %v1233 = vunpack.c.h.b16 %v416
      %v1234 = vunpack.c.l.b16 %v417
      %v1235 = vunpack.c.h.b16 %v417
      %v1236 = vunpack.c.l.b16 %v418
      %v1237 = vunpack.c.h.b16 %v418
      %v1238 = vunpack.c.l.b16 %v419
      %v1239 = vunpack.c.h.b16 %v419
      %v1240 = vunpack.c.l.b16 %v420
      %v1241 = vunpack.c.h.b16 %v420
      %v1242 = vunpack.c.l.b16 %v421
      %v1243 = vunpack.c.h.b16 %v421
      %v1244 = vunpack.c.l.b16 %v422
      %v1245 = vunpack.c.h.b16 %v422
      %v1246 = vunpack.c.l.b16 %v423
      %v1247 = vunpack.c.h.b16 %v423
      %v1248 = vunpack.c.l.b16 %v424
      %v1249 = vunpack.c.h.b16 %v424
      %v1250 = vunpack.c.l.b16 %v425
      %v1251 = vunpack.c.h.b16 %v425
      %v1252 = vunpack.c.l.b16 %v426
      %v1253 = vunpack.c.h.b16 %v426
      %v1254 = vunpack.c.l.b16 %v427
      %v1255 = vunpack.c.h.b16 %v427
      %v1256 = vunpack.c.l.b16 %v428
      %v1257 = vunpack.c.h.b16 %v428
      %v1258 = vunpack.c.l.b16 %v429
      %v1259 = vunpack.c.h.b16 %v429
      %v1260 = vunpack.c.l.b16 %v430
      %v1261 = vunpack.c.h.b16 %v430
      %v1262 = vunpack.c.l.b16 %v431
      %v1263 = vunpack.c.h.b16 %v431
      %v1264 = vunpack.c.l.b16 %v432
      %v1265 = vunpack.c.h.b16 %v432
      %v1266 = vunpack.c.l.b16 %v433
      %v1267 = vunpack.c.h.b16 %v433
      %v1268 = vunpack.c.l.b16 %v434
      %v1269 = vunpack.c.h.b16 %v434
      %v1270 = vunpack.c.l.b16 %v435
      %v1271 = vunpack.c.h.b16 %v435
      %v1272 = vunpack.c.l.b16 %v436
      %v1273 = vunpack.c.h.b16 %v436
      %v1274 = vunpack.c.l.b16 %v437
      %v1275 = vunpack.c.h.b16 %v437
      %v1276 = vunpack.c.l.b16 %v438
      %v1277 = vunpack.c.h.b16 %v438
      %v1278 = vunpack.c.l.b16 %v439
      %v1279 = vunpack.c.h.b16 %v439
      %v1280 = vunpack.c.l.b16 %v440
      %v1281 = vunpack.c.h.b16 %v440
      %v1282 = vunpack.c.l.b16 %v441
      %v1283 = vunpack.c.h.b16 %v441
      %v1284 = vunpack.c.l.b16 %v442
      %v1285 = vunpack.c.h.b16 %v442
      %v1286 = vunpack.c.l.b16 %v443
      %v1287 = vunpack.c.h.b16 %v443
      %v1288 = vunpack.c.l.b16 %v444
      %v1289 = vunpack.c.h.b16 %v444
      %v1290 = vunpack.c.l.b16 %v445
      %v1291 = vunpack.c.h.b16 %v445
      %v1292 = vunpack.c.l.b16 %v446
      %v1293 = vunpack.c.h.b16 %v446
      %v1294 = vunpack.c.l.b16 %v447
      %v1295 = vunpack.c.h.b16 %v447
      %v1296 = vunpack.c.l.b16 %v448
      %v1297 = vunpack.c.h.b16 %v448
      %v1298 = vunpack.c.l.b16 %v449
      %v1299 = vunpack.c.h.b16 %v449
      %v1300 = vunpack.c.l.b16 %v450
      %v1301 = vunpack.c.h.b16 %v450
      %v1302 = vunpack.c.l.b16 %v451
      %v1303 = vunpack.c.h.b16 %v451
      %v1304 = vunpack.c.l.b16 %v452
      %v1305 = vunpack.c.h.b16 %v452
      %v1306 = vunpack.c.l.b16 %v453
      %v1307 = vunpack.c.h.b16 %v453
      %v1308 = vunpack.c.l.b16 %v454
      %v1309 = vunpack.c.h.b16 %v454
      %v1310 = vunpack.c.l.b16 %v455
      %v1311 = vunpack.c.h.b16 %v455
      %v1312 = vunpack.c.l.b16 %v456
      %v1313 = vunpack.c.h.b16 %v456
      %v1314 = vunpack.c.l.b16 %v457
      %v1315 = vunpack.c.h.b16 %v457
      %v1316 = vunpack.c.l.b16 %v458
      %v1317 = vunpack.c.h.b16 %v458
      %v1318 = vunpack.c.l.b16 %v459
      %v1319 = vunpack.c.h.b16 %v459
      %v1320 = vunpack.c.l.b16 %v460
      %v1321 = vunpack.c.h.b16 %v460
      %v1322 = vunpack.c.l.b16 %v461
      %v1323 = vunpack.c.h.b16 %v461
      %v1324 = vunpack.c.l.b16 %v462
      %v1325 = vunpack.c.h.b16 %v462
      %v1326 = vunpack.c.l.b16 %v463
      %v1327 = vunpack.c.h.b16 %v463
      %v1328 = vunpack.c.l.b16 %v464
      %v1329 = vunpack.c.h.b16 %v464
      %v1330 = vunpack.c.l.b16 %v465
      %v1331 = vunpack.c.h.b16 %v465
      %v1332 = vunpack.c.l.b16 %v466
      %v1333 = vunpack.c.h.b16 %v466
      %v1334 = vunpack.c.l.b16 %v467
      %v1335 = vunpack.c.h.b16 %v467
      %v1336 = vunpack.c.l.b16 %v468
      %v1337 = vunpack.c.h.b16 %v468
      %v1338 = vunpack.c.l.b16 %v469
      %v1339 = vunpack.c.h.b16 %v469
      %v1340 = vunpack.c.l.b16 %v470
      %v1341 = vunpack.c.h.b16 %v470
      %v1342 = vunpack.c.l.b16 %v471
      %v1343 = vunpack.c.h.b16 %v471
      %v1344 = vunpack.c.l.b16 %v472
      %v1345 = vunpack.c.h.b16 %v472
      %v1346 = vunpack.c.l.b16 %v473
      %v1347 = vunpack.c.h.b16 %v473
      %v1348 = vunpack.c.l.b16 %v474
      %v1349 = vunpack.c.h.b16 %v474
      %v1350 = vunpack.c.l.b16 %v475
      %v1351 = vunpack.c.h.b16 %v475
      %v1352 = vunpack.c.l.b16 %v476
      %v1353 = vunpack.c.h.b16 %v476
      %v1354 = vunpack.c.l.b16 %v477
      %v1355 = vunpack.c.h.b16 %v477
      %v1356 = vunpack.c.l.b16 %v478
      %v1357 = vunpack.c.h.b16 %v478
      %v1358 = vunpack.c.l.b16 %v479
      %v1359 = vunpack.c.h.b16 %v479
      %v1360 = vunpack.c.l.b16 %v480
      %v1361 = vunpack.c.h.b16 %v480
      %v1362 = vunpack.c.l.b16 %v481
      %v1363 = vunpack.c.h.b16 %v481
      %v1364 = vunpack.c.l.b16 %v482
      %v1365 = vunpack.c.h.b16 %v482
      %v1366 = vunpack.c.l.b16 %v483
      %v1367 = vunpack.c.h.b16 %v483
      %v1368 = vunpack.c.l.b16 %v484
      %v1369 = vunpack.c.h.b16 %v484
      %v1370 = vunpack.c.l.b16 %v485
      %v1371 = vunpack.c.h.b16 %v485
      %v1372 = vunpack.c.l.b16 %v486
      %v1373 = vunpack.c.h.b16 %v486
      %v1374 = vunpack.c.l.b16 %v487
      %v1375 = vunpack.c.h.b16 %v487
      %v1376 = vunpack.c.l.b16 %v488
      %v1377 = vunpack.c.h.b16 %v488
      %v1378 = vunpack.c.l.b16 %v489
      %v1379 = vunpack.c.h.b16 %v489
      %v1380 = vunpack.c.l.b16 %v490
      %v1381 = vunpack.c.h.b16 %v490
      %v1382 = vunpack.c.l.b16 %v491
      %v1383 = vunpack.c.h.b16 %v491
      %v1384 = vunpack.c.l.b16 %v492
      %v1385 = vunpack.c.h.b16 %v492
      %v1386 = vunpack.c.l.b16 %v493
      %v1387 = vunpack.c.h.b16 %v493
      %v1388 = vunpack.c.l.b16 %v494
      %v1389 = vunpack.c.h.b16 %v494
      %v1390 = vunpack.c.l.b16 %v495
      %v1391 = vunpack.c.h.b16 %v495
      %v1392 = vunpack.c.l.b16 %v496
      %v1393 = vunpack.c.h.b16 %v496
      %v1394 = vunpack.c.l.b16 %v497
      %v1395 = vunpack.c.h.b16 %v497
      %v1396 = vunpack.c.l.b16 %v498
      %v1397 = vunpack.c.h.b16 %v498
      %v1398 = vunpack.c.l.b16 %v499
      %v1399 = vunpack.c.h.b16 %v499
      %v1400 = vunpack.c.l.b16 %v500
      %v1401 = vunpack.c.h.b16 %v500
      %v1402 = vunpack.c.l.b16 %v501
      %v1403 = vunpack.c.h.b16 %v501
      %v1404 = vunpack.c.l.b16 %v502
      %v1405 = vunpack.c.h.b16 %v502
      %v1406 = vunpack.c.l.b16 %v503
      %v1407 = vunpack.c.h.b16 %v503
      %v1408 = vunpack.c.l.b16 %v504
      %v1409 = vunpack.c.h.b16 %v504
      %v1410 = vunpack.c.l.b16 %v505
      %v1411 = vunpack.c.h.b16 %v505
      %v1412 = vunpack.c.l.b16 %v506
      %v1413 = vunpack.c.h.b16 %v506
      %v1414 = vunpack.c.l.b16 %v507
      %v1415 = vunpack.c.h.b16 %v507
      %v1416 = vunpack.c.l.b16 %v508
      %v1417 = vunpack.c.h.b16 %v508
      %v1418 = vunpack.c.l.b16 %v509
      %v1419 = vunpack.c.h.b16 %v509
      %v1420 = vunpack.c.l.b16 %v510
      %v1421 = vunpack.c.h.b16 %v510
      %v1422 = vunpack.c.l.b16 %v511
      %v1423 = vunpack.c.h.b16 %v511
      %v1424 = vunpack.c.l.b16 %v512
      %v1425 = vunpack.c.h.b16 %v512
      %v1426 = vunpack.c.l.b16 %v513
      %v1427 = vunpack.c.h.b16 %v513
      %v1428 = vunpack.c.l.b16 %v514
      %v1429 = vunpack.c.h.b16 %v514
      %v1430 = vunpack.c.l.b16 %v515
      %v1431 = vunpack.c.h.b16 %v515
      %v1432 = vunpack.c.l.b16 %v516
      %v1433 = vunpack.c.h.b16 %v516
      %v1434 = vunpack.c.l.b16 %v517
      %v1435 = vunpack.c.h.b16 %v517
      %v1436 = vunpack.c.l.b16 %v518
      %v1437 = vunpack.c.h.b16 %v518
      %v1438 = vunpack.c.l.b16 %v519
      %v1439 = vunpack.c.h.b16 %v519
      %v1440 = vunpack.c.l.b16 %v520
      %v1441 = vunpack.c.h.b16 %v520
      %v1442 = vunpack.c.l.b16 %v521
      %v1443 = vunpack.c.h.b16 %v521
      %v1444 = vunpack.c.l.b16 %v522
      %v1445 = vunpack.c.h.b16 %v522
      %v1446 = vunpack.c.l.b16 %v523
      %v1447 = vunpack.c.h.b16 %v523
      %v1448 = vunpack.c.l.b16 %v524
      %v1449 = vunpack.c.h.b16 %v524
      %v1450 = vunpack.c.l.b16 %v525
      %v1451 = vunpack.c.h.b16 %v525
      %v1452 = vunpack.c.l.b16 %v526
      %v1453 = vunpack.c.h.b16 %v526
      %v1454 = vunpack.c.l.b16 %v527
      %v1455 = vunpack.c.h.b16 %v527
      %v1456 = vunpack.c.l.b16 %v528
      %v1457 = vunpack.c.h.b16 %v528
      %v1458 = vunpack.c.l.b16 %v529
      %v1459 = vunpack.c.h.b16 %v529
      %v1460 = vunpack.c.l.b16 %v530
      %v1461 = vunpack.c.h.b16 %v530
      %v1462 = vunpack.c.l.b16 %v531
      %v1463 = vunpack.c.h.b16 %v531
      %v1464 = vunpack.c.l.b16 %v532
      %v1465 = vunpack.c.h.b16 %v532
      %v1466 = vunpack.c.l.b16 %v533
      %v1467 = vunpack.c.h.b16 %v533
      %v1468 = vunpack.c.l.b16 %v534
      %v1469 = vunpack.c.h.b16 %v534
      %v1470 = vunpack.c.l.b16 %v535
      %v1471 = vunpack.c.h.b16 %v535
      %v1472 = vunpack.c.l.b16 %v536
      %v1473 = vunpack.c.h.b16 %v536
      %v1474 = vunpack.c.l.b16 %v537
      %v1475 = vunpack.c.h.b16 %v537
      %v1476 = vunpack.c.l.b16 %v538
      %v1477 = vunpack.c.h.b16 %v538
      %v1478 = vunpack.c.l.b16 %v539
      %v1479 = vunpack.c.h.b16 %v539
      %v1480 = vunpack.c.l.b16 %v540
      %v1481 = vunpack.c.h.b16 %v540
      %v1482 = vunpack.c.l.b16 %v541
      %v1483 = vunpack.c.h.b16 %v541
      %v1484 = vunpack.c.l.b16 %v542
      %v1485 = vunpack.c.h.b16 %v542
      %v1486 = vunpack.c.l.b16 %v543
      %v1487 = vunpack.c.h.b16 %v543
      %v1488 = vunpack.c.l.b16 %v544
      %v1489 = vunpack.c.h.b16 %v544
      %v1490 = vunpack.c.l.b16 %v545
      %v1491 = vunpack.c.h.b16 %v545
      %v1492 = vunpack.c.l.b16 %v546
      %v1493 = vunpack.c.h.b16 %v546
      %v1494 = vunpack.c.l.b16 %v547
      %v1495 = vunpack.c.h.b16 %v547
      %v1496 = vunpack.c.l.b16 %v548
      %v1497 = vunpack.c.h.b16 %v548
      %v1498 = vunpack.c.l.b16 %v549
      %v1499 = vunpack.c.h.b16 %v549
      %v1500 = vunpack.c.l.b16 %v550
      %v1501 = vunpack.c.h.b16 %v550
      %v1502 = vunpack.c.l.b16 %v551
      %v1503 = vunpack.c.h.b16 %v551
      %v1504 = vunpack.c.l.b16 %v552
      %v1505 = vunpack.c.h.b16 %v552
      %v1506 = vunpack.c.l.b16 %v553
      %v1507 = vunpack.c.h.b16 %v553
      %v1508 = vunpack.c.l.b16 %v554
      %v1509 = vunpack.c.h.b16 %v554
      %v1510 = vunpack.c.l.b16 %v555
      %v1511 = vunpack.c.h.b16 %v555
      %v1512 = vunpack.c.l.b16 %v556
      %v1513 = vunpack.c.h.b16 %v556
      %v1514 = vunpack.c.l.b16 %v557
      %v1515 = vunpack.c.h.b16 %v557
      %v1516 = vunpack.c.l.b16 %v558
      %v1517 = vunpack.c.h.b16 %v558
      %v1518 = vunpack.c.l.b16 %v559
      %v1519 = vunpack.c.h.b16 %v559
      %v1520 = vunpack.c.l.b16 %v560
      %v1521 = vunpack.c.h.b16 %v560
      %v1522 = vunpack.c.l.b16 %v561
      %v1523 = vunpack.c.h.b16 %v561
      %v1524 = vunpack.c.l.b16 %v562
      %v1525 = vunpack.c.h.b16 %v562
      %v1526 = vunpack.c.l.b16 %v563
      %v1527 = vunpack.c.h.b16 %v563
      %v1528 = vunpack.c.l.b16 %v564
      %v1529 = vunpack.c.h.b16 %v564
      %v1530 = vunpack.c.l.b16 %v565
      %v1531 = vunpack.c.h.b16 %v565
      %v1532 = vunpack.c.l.b16 %v566
      %v1533 = vunpack.c.h.b16 %v566
      %v1534 = vunpack.c.l.b16 %v567
      %v1535 = vunpack.c.h.b16 %v567
      %v1536 = vunpack.c.l.b16 %v568
      %v1537 = vunpack.c.h.b16 %v568
      %v1538 = vunpack.c.l.b16 %v569
      %v1539 = vunpack.c.h.b16 %v569
      %v1540 = vunpack.c.l.b16 %v570
      %v1541 = vunpack.c.h.b16 %v570
      %v1542 = vunpack.c.l.b16 %v571
      %v1543 = vunpack.c.h.b16 %v571
      %v1544 = vunpack.c.l.b16 %v572
      %v1545 = vunpack.c.h.b16 %v572
      %v1546 = vunpack.c.l.b16 %v573
      %v1547 = vunpack.c.h.b16 %v573
      %v1548 = vunpack.c.l.b16 %v574
      %v1549 = vunpack.c.h.b16 %v574
      %v1550 = vunpack.c.l.b16 %v575
      %v1551 = vunpack.c.h.b16 %v575
      %v1552 = vunpack.c.l.b16 %v576
      %v1553 = vunpack.c.h.b16 %v576
      %v1554 = vunpack.c.l.b16 %v577
      %v1555 = vunpack.c.h.b16 %v577
      %v1556 = vunpack.c.l.b16 %v578
      %v1557 = vunpack.c.h.b16 %v578
      %v1558 = vunpack.c.l.b16 %v579
      %v1559 = vunpack.c.h.b16 %v579
      %v1560 = vunpack.c.l.b16 %v580
      %v1561 = vunpack.c.h.b16 %v580
      %v1562 = vunpack.c.l.b16 %v581
      %v1563 = vunpack.c.h.b16 %v581
      %v1564 = vunpack.c.l.b16 %v582
      %v1565 = vunpack.c.h.b16 %v582
      %v1566 = vunpack.c.l.b16 %v583
      %v1567 = vunpack.c.h.b16 %v583
      %v1568 = vunpack.c.l.b16 %v584
      %v1569 = vunpack.c.h.b16 %v584
      %v1570 = vunpack.c.l.b16 %v585
      %v1571 = vunpack.c.h.b16 %v585
      %v1572 = vunpack.c.l.b16 %v586
      %v1573 = vunpack.c.h.b16 %v586
      %v1574 = vunpack.c.l.b16 %v587
      %v1575 = vunpack.c.h.b16 %v587
      %v1576 = vunpack.c.l.b16 %v588
      %v1577 = vunpack.c.h.b16 %v588
      %v1578 = vunpack.c.l.b16 %v589
      %v1579 = vunpack.c.h.b16 %v589
      %v1580 = vunpack.c.l.b16 %v590
      %v1581 = vunpack.c.h.b16 %v590
      %v1582 = vunpack.c.l.b16 %v591
      %v1583 = vunpack.c.h.b16 %v591
      %v1584 = vunpack.c.l.b16 %v592
      %v1585 = vunpack.c.h.b16 %v592
      %v1586 = vunpack.c.l.b16 %v593
      %v1587 = vunpack.c.h.b16 %v593
      %v1588 = vunpack.c.l.b16 %v594
      %v1589 = vunpack.c.h.b16 %v594
      %v1590 = vunpack.c.l.b16 %v595
      %v1591 = vunpack.c.h.b16 %v595
      %v1592 = vunpack.c.l.b16 %v596
      %v1593 = vunpack.c.h.b16 %v596
      %v1594 = vunpack.c.l.b16 %v597
      %v1595 = vunpack.c.h.b16 %v597
      %v1596 = vunpack.c.l.b16 %v598
      %v1597 = vunpack.c.h.b16 %v598
      %v1598 = vunpack.c.l.b16 %v599
      %v1599 = vunpack.c.h.b16 %v599
      %v1600 = vunpack.c.l.b16 %v600
      %v1601 = vunpack.c.h.b16 %v600
      %v1602 = vunpack.c.l.b16 %v601
      %v1603 = vunpack.c.h.b16 %v601
      %v1604 = vunpack.c.l.b16 %v602
      %v1605 = vunpack.c.h.b16 %v602
      %v1606 = vunpack.c.l.b16 %v603
      %v1607 = vunpack.c.h.b16 %v603
      %v1608 = vunpack.c.l.b16 %v604
      %v1609 = vunpack.c.h.b16 %v604
      %v1610 = vpack.c.b16 %v978, %v970
      %v1611 = vpack.c.b16 %v979, %v971
      %v1612 = vpack.c.b16 %v980, %v972
      %v1613 = vpack.c.b16 %v981, %v973
      %v1614 = vpack.c.b16 %v982, %v974
      %v1615 = vpack.c.b16 %v983, %v975
      %v1616 = vpack.c.b16 %v984, %v976
      %v1617 = vpack.c.b16 %v985, %v977
      %v1618 = vpack.c.b16 %v994, %v986
      %v1619 = vpack.c.b16 %v995, %v987
      %v1620 = vpack.c.b16 %v996, %v988
      %v1621 = vpack.c.b16 %v997, %v989
      %v1622 = vpack.c.b16 %v998, %v990
      %v1623 = vpack.c.b16 %v999, %v991
      %v1624 = vpack.c.b16 %v1000, %v992
      %v1625 = vpack.c.b16 %v1001, %v993
      %v1626 = vpack.c.b16 %v1010, %v1002
      %v1627 = vpack.c.b16 %v1011, %v1003
      %v1628 = vpack.c.b16 %v1012, %v1004
      %v1629 = vpack.c.b16 %v1013, %v1005
      %v1630 = vpack.c.b16 %v1014, %v1006
      %v1631 = vpack.c.b16 %v1015, %v1007
      %v1632 = vpack.c.b16 %v1016, %v1008
      %v1633 = vpack.c.b16 %v1017, %v1009
      %v1634 = vpack.c.b16 %v1026, %v1018
      %v1635 = vpack.c.b16 %v1027, %v1019
      %v1636 = vpack.c.b16 %v1028, %v1020
      %v1637 = vpack.c.b16 %v1029, %v1021
      %v1638 = vpack.c.b16 %v1030, %v1022
      %v1639 = vpack.c.b16 %v1031, %v1023
      %v1640 = vpack.c.b16 %v1032, %v1024
      %v1641 = vpack.c.b16 %v1033, %v1025
      %v1642 = vpack.c.b16 %v1042, %v1034
      %v1643 = vpack.c.b16 %v1043, %v1035
      %v1644 = vpack.c.b16 %v1044, %v1036
      %v1645 = vpack.c.b16 %v1045, %v1037
      %v1646 = vpack.c.b16 %v1046, %v1038
      %v1647 = vpack.c.b16 %v1047, %v1039
      %v1648 = vpack.c.b16 %v1048, %v1040
      %v1649 = vpack.c.b16 %v1049, %v1041
      %v1650 = vpack.c.b16 %v1058, %v1050
      %v1651 = vpack.c.b16 %v1059, %v1051
      %v1652 = vpack.c.b16 %v1060, %v1052
      %v1653 = vpack.c.b16 %v1061, %v1053
      %v1654 = vpack.c.b16 %v1062, %v1054
      %v1655 = vpack.c.b16 %v1063, %v1055
      %v1656 = vpack.c.b16 %v1064, %v1056
      %v1657 = vpack.c.b16 %v1065, %v1057
      %v1658 = vpack.c.b16 %v1074, %v1066
      %v1659 = vpack.c.b16 %v1075, %v1067
      %v1660 = vpack.c.b16 %v1076, %v1068
      %v1661 = vpack.c.b16 %v1077, %v1069
      %v1662 = vpack.c.b16 %v1078, %v1070
      %v1663 = vpack.c.b16 %v1079, %v1071
      %v1664 = vpack.c.b16 %v1080, %v1072
      %v1665 = vpack.c.b16 %v1081, %v1073
      %v1666 = vpack.c.b16 %v1090, %v1082
      %v1667 = vpack.c.b16 %v1091, %v1083
      %v1668 = vpack.c.b16 %v1092, %v1084
      %v1669 = vpack.c.b16 %v1093, %v1085
      %v1670 = vpack.c.b16 %v1094, %v1086
      %v1671 = vpack.c.b16 %v1095, %v1087
      %v1672 = vpack.c.b16 %v1096, %v1088
      %v1673 = vpack.c.b16 %v1097, %v1089
      %v1674 = vpack.c.b16 %v1106, %v1098
      %v1675 = vpack.c.b16 %v1107, %v1099
      %v1676 = vpack.c.b16 %v1108, %v1100
      %v1677 = vpack.c.b16 %v1109, %v1101
      %v1678 = vpack.c.b16 %v1110, %v1102
      %v1679 = vpack.c.b16 %v1111, %v1103
      %v1680 = vpack.c.b16 %v1112, %v1104
      %v1681 = vpack.c.b16 %v1113, %v1105
      %v1682 = vpack.c.b16 %v1122, %v1114
      %v1683 = vpack.c.b16 %v1123, %v1115
      %v1684 = vpack.c.b16 %v1124, %v1116
      %v1685 = vpack.c.b16 %v1125, %v1117
      %v1686 = vpack.c.b16 %v1126, %v1118
      %v1687 = vpack.c.b16 %v1127, %v1119
      %v1688 = vpack.c.b16 %v1128, %v1120
      %v1689 = vpack.c.b16 %v1129, %v1121
      %v1690 = vpack.c.b16 %v1138, %v1130
      %v1691 = vpack.c.b16 %v1139, %v1131
      %v1692 = vpack.c.b16 %v1140, %v1132
      %v1693 = vpack.c.b16 %v1141, %v1133
      %v1694 = vpack.c.b16 %v1142, %v1134
      %v1695 = vpack.c.b16 %v1143, %v1135
      %v1696 = vpack.c.b16 %v1144, %v1136
      %v1697 = vpack.c.b16 %v1145, %v1137
      %v1698 = vpack.c.b16 %v1154, %v1146
      %v1699 = vpack.c.b16 %v1155, %v1147
      %v1700 = vpack.c.b16 %v1156, %v1148
      %v1701 = vpack.c.b16 %v1157, %v1149
      %v1702 = vpack.c.b16 %v1158, %v1150
      %v1703 = vpack.c.b16 %v1159, %v1151
      %v1704 = vpack.c.b16 %v1160, %v1152
      %v1705 = vpack.c.b16 %v1161, %v1153
      %v1706 = vpack.c.b16 %v1170, %v1162
      %v1707 = vpack.c.b16 %v1171, %v1163
      %v1708 = vpack.c.b16 %v1172, %v1164
      %v1709 = vpack.c.b16 %v1173, %v1165
      %v1710 = vpack.c.b16 %v1174, %v1166
      %v1711 = vpack.c.b16 %v1175, %v1167
      %v1712 = vpack.c.b16 %v1176, %v1168
      %v1713 = vpack.c.b16 %v1177, %v1169
      %v1714 = vpack.c.b16 %v1186, %v1178
      %v1715 = vpack.c.b16 %v1187, %v1179
      %v1716 = vpack.c.b16 %v1188, %v1180
      %v1717 = vpack.c.b16 %v1189, %v1181
      %v1718 = vpack.c.b16 %v1190, %v1182
      %v1719 = vpack.c.b16 %v1191, %v1183
      %v1720 = vpack.c.b16 %v1192, %v1184
      %v1721 = vpack.c.b16 %v1193, %v1185
      %v1722 = vpack.c.b16 %v1202, %v1194
      %v1723 = vpack.c.b16 %v1203, %v1195
      %v1724 = vpack.c.b16 %v1204, %v1196
      %v1725 = vpack.c.b16 %v1205, %v1197
      %v1726 = vpack.c.b16 %v1206, %v1198
      %v1727 = vpack.c.b16 %v1207, %v1199
      %v1728 = vpack.c.b16 %v1208, %v1200
      %v1729 = vpack.c.b16 %v1209, %v1201
      %v1730 = vpack.c.b16 %v1218, %v1210
      %v1731 = vpack.c.b16 %v1219, %v1211
      %v1732 = vpack.c.b16 %v1220, %v1212
      %v1733 = vpack.c.b16 %v1221, %v1213
      %v1734 = vpack.c.b16 %v1222, %v1214
      %v1735 = vpack.c.b16 %v1223, %v1215
      %v1736 = vpack.c.b16 %v1224, %v1216
      %v1737 = vpack.c.b16 %v1225, %v1217
      %v1738 = vpack.c.b16 %v1234, %v1226
      %v1739 = vpack.c.b16 %v1235, %v1227
      %v1740 = vpack.c.b16 %v1236, %v1228
      %v1741 = vpack.c.b16 %v1237, %v1229
      %v1742 = vpack.c.b16 %v1238, %v1230
      %v1743 = vpack.c.b16 %v1239, %v1231
      %v1744 = vpack.c.b16 %v1240, %v1232
      %v1745 = vpack.c.b16 %v1241, %v1233
      %v1746 = vpack.c.b16 %v1250, %v1242
      %v1747 = vpack.c.b16 %v1251, %v1243
      %v1748 = vpack.c.b16 %v1252, %v1244
      %v1749 = vpack.c.b16 %v1253, %v1245
      %v1750 = vpack.c.b16 %v1254, %v1246
      %v1751 = vpack.c.b16 %v1255, %v1247
      %v1752 = vpack.c.b16 %v1256, %v1248
      %v1753 = vpack.c.b16 %v1257, %v1249
      %v1754 = vpack.c.b16 %v1266, %v1258
      %v1755 = vpack.c.b16 %v1267, %v1259
      %v1756 = vpack.c.b16 %v1268, %v1260
      %v1757 = vpack.c.b16 %v1269, %v1261
      %v1758 = vpack.c.b16 %v1270, %v1262
      %v1759 = vpack.c.b16 %v1271, %v1263
      %v1760 = vpack.c.b16 %v1272, %v1264
      %v1761 = vpack.c.b16 %v1273, %v1265
      %v1762 = vpack.c.b16 %v1282, %v1274
      %v1763 = vpack.c.b16 %v1283, %v1275
      %v1764 = vpack.c.b16 %v1284, %v1276
      %v1765 = vpack.c.b16 %v1285, %v1277
      %v1766 = vpack.c.b16 %v1286, %v1278
      %v1767 = vpack.c.b16 %v1287, %v1279
      %v1768 = vpack.c.b16 %v1288, %v1280
      %v1769 = vpack.c.b16 %v1289, %v1281
      %v1770 = vpack.c.b16 %v1298, %v1290
      %v1771 = vpack.c.b16 %v1299, %v1291
      %v1772 = vpack.c.b16 %v1300, %v1292
      %v1773 = vpack.c.b16 %v1301, %v1293
      %v1774 = vpack.c.b16 %v1302, %v1294
      %v1775 = vpack.c.b16 %v1303, %v1295
      %v1776 = vpack.c.b16 %v1304, %v1296
      %v1777 = vpack.c.b16 %v1305, %v1297
      %v1778 = vpack.c.b16 %v1314, %v1306
      %v1779 = vpack.c.b16 %v1315, %v1307
      %v1780 = vpack.c.b16 %v1316, %v1308
      %v1781 = vpack.c.b16 %v1317, %v1309
      %v1782 = vpack.c.b16 %v1318, %v1310
      %v1783 = vpack.c.b16 %v1319, %v1311
      %v1784 = vpack.c.b16 %v1320, %v1312
      %v1785 = vpack.c.b16 %v1321, %v1313
      %v1786 = vpack.c.b16 %v1330, %v1322
      %v1787 = vpack.c.b16 %v1331, %v1323
      %v1788 = vpack.c.b16 %v1332, %v1324
      %v1789 = vpack.c.b16 %v1333, %v1325
      %v1790 = vpack.c.b16 %v1334, %v1326
      %v1791 = vpack.c.b16 %v1335, %v1327
      %v1792 = vpack.c.b16 %v1336, %v1328
      %v1793 = vpack.c.b16 %v1337, %v1329
      %v1794 = vpack.c.b16 %v1346, %v1338
      %v1795 = vpack.c.b16 %v1347, %v1339
      %v1796 = vpack.c.b16 %v1348, %v1340
      %v1797 = vpack.c.b16 %v1349, %v1341
      %v1798 = vpack.c.b16 %v1350, %v1342
      %v1799 = vpack.c.b16 %v1351, %v1343
      %v1800 = vpack.c.b16 %v1352, %v1344
      %v1801 = vpack.c.b16 %v1353, %v1345
      %v1802 = vpack.c.b16 %v1362, %v1354
      %v1803 = vpack.c.b16 %v1363, %v1355
      %v1804 = vpack.c.b16 %v1364, %v1356
      %v1805 = vpack.c.b16 %v1365, %v1357
      %v1806 = vpack.c.b16 %v1366, %v1358
      %v1807 = vpack.c.b16 %v1367, %v1359
      %v1808 = vpack.c.b16 %v1368, %v1360
      %v1809 = vpack.c.b16 %v1369, %v1361
      %v1810 = vpack.c.b16 %v1378, %v1370
      %v1811 = vpack.c.b16 %v1379, %v1371
      %v1812 = vpack.c.b16 %v1380, %v1372
      %v1813 = vpack.c.b16 %v1381, %v1373
      %v1814 = vpack.c.b16 %v1382, %v1374
      %v1815 = vpack.c.b16 %v1383, %v1375
      %v1816 = vpack.c.b16 %v1384, %v1376
      %v1817 = vpack.c.b16 %v1385, %v1377
      %v1818 = vpack.c.b16 %v1394, %v1386
      %v1819 = vpack.c.b16 %v1395, %v1387
      %v1820 = vpack.c.b16 %v1396, %v1388
      %v1821 = vpack.c.b16 %v1397, %v1389
      %v1822 = vpack.c.b16 %v1398, %v1390
      %v1823 = vpack.c.b16 %v1399, %v1391
      %v1824 = vpack.c.b16 %v1400, %v1392
      %v1825 = vpack.c.b16 %v1401, %v1393
      %v1826 = vpack.c.b16 %v1410, %v1402
      %v1827 = vpack.c.b16 %v1411, %v1403
      %v1828 = vpack.c.b16 %v1412, %v1404
      %v1829 = vpack.c.b16 %v1413, %v1405
      %v1830 = vpack.c.b16 %v1414, %v1406
      %v1831 = vpack.c.b16 %v1415, %v1407
      %v1832 = vpack.c.b16 %v1416, %v1408
      %v1833 = vpack.c.b16 %v1417, %v1409
      %v1834 = vpack.c.b16 %v1426, %v1418
      %v1835 = vpack.c.b16 %v1427, %v1419
      %v1836 = vpack.c.b16 %v1428, %v1420
      %v1837 = vpack.c.b16 %v1429, %v1421
      %v1838 = vpack.c.b16 %v1430, %v1422
      %v1839 = vpack.c.b16 %v1431, %v1423
      %v1840 = vpack.c.b16 %v1432, %v1424
      %v1841 = vpack.c.b16 %v1433, %v1425
      %v1842 = vpack.c.b16 %v1442, %v1434
      %v1843 = vpack.c.b16 %v1443, %v1435
      %v1844 = vpack.c.b16 %v1444, %v1436
      %v1845 = vpack.c.b16 %v1445, %v1437
      %v1846 = vpack.c.b16 %v1446, %v1438
      %v1847 = vpack.c.b16 %v1447, %v1439
      %v1848 = vpack.c.b16 %v1448, %v1440
      %v1849 = vpack.c.b16 %v1449, %v1441
      %v1850 = vpack.c.b16 %v1458, %v1450
      %v1851 = vpack.c.b16 %v1459, %v1451
      %v1852 = vpack.c.b16 %v1460, %v1452
      %v1853 = vpack.c.b16 %v1461, %v1453
      %v1854 = vpack.c.b16 %v1462, %v1454
      %v1855 = vpack.c.b16 %v1463, %v1455
      %v1856 = vpack.c.b16 %v1464, %v1456
      %v1857 = vpack.c.b16 %v1465, %v1457
      %v1858 = vpack.c.b16 %v1474, %v1466
      %v1859 = vpack.c.b16 %v1475, %v1467
      %v1860 = vpack.c.b16 %v1476, %v1468
      %v1861 = vpack.c.b16 %v1477, %v1469
      %v1862 = vpack.c.b16 %v1478, %v1470
      %v1863 = vpack.c.b16 %v1479, %v1471
      %v1864 = vpack.c.b16 %v1480, %v1472
      %v1865 = vpack.c.b16 %v1481, %v1473
      %v1866 = vpack.c.b16 %v1490, %v1482
      %v1867 = vpack.c.b16 %v1491, %v1483
      %v1868 = vpack.c.b16 %v1492, %v1484
      %v1869 = vpack.c.b16 %v1493, %v1485
      %v1870 = vpack.c.b16 %v1494, %v1486
      %v1871 = vpack.c.b16 %v1495, %v1487
      %v1872 = vpack.c.b16 %v1496, %v1488
      %v1873 = vpack.c.b16 %v1497, %v1489
      %v1874 = vpack.c.b16 %v1506, %v1498
      %v1875 = vpack.c.b16 %v1507, %v1499
      %v1876 = vpack.c.b16 %v1508, %v1500
      %v1877 = vpack.c.b16 %v1509, %v1501
      %v1878 = vpack.c.b16 %v1510, %v1502
      %v1879 = vpack.c.b16 %v1511, %v1503
      %v1880 = vpack.c.b16 %v1512, %v1504
      %v1881 = vpack.c.b16 %v1513, %v1505
      %v1882 = vpack.c.b16 %v1522, %v1514
      %v1883 = vpack.c.b16 %v1523, %v1515
      %v1884 = vpack.c.b16 %v1524, %v1516
      %v1885 = vpack.c.b16 %v1525, %v1517
      %v1886 = vpack.c.b16 %v1526, %v1518
      %v1887 = vpack.c.b16 %v1527, %v1519
      %v1888 = vpack.c.b16 %v1528, %v1520
      %v1889 = vpack.c.b16 %v1529, %v1521
      %v1890 = vpack.c.b16 %v1538, %v1530
      %v1891 = vpack.c.b16 %v1539, %v1531
      %v1892 = vpack.c.b16 %v1540, %v1532
      %v1893 = vpack.c.b16 %v1541, %v1533
      %v1894 = vpack.c.b16 %v1542, %v1534
      %v1895 = vpack.c.b16 %v1543, %v1535
      %v1896 = vpack.c.b16 %v1544, %v1536
      %v1897 = vpack.c.b16 %v1545, %v1537
      %v1898 = vpack.c.b16 %v1554, %v1546
      %v1899 = vpack.c.b16 %v1555, %v1547
      %v1900 = vpack.c.b16 %v1556, %v1548
      %v1901 = vpack.c.b16 %v1557, %v1549
      %v1902 = vpack.c.b16 %v1558, %v1550
      %v1903 = vpack.c.b16 %v1559, %v1551
      %v1904 = vpack.c.b16 %v1560, %v1552
      %v1905 = vpack.c.b16 %v1561, %v1553
      %v1906 = vpack.c.b16 %v1570, %v1562
      %v1907 = vpack.c.b16 %v1571, %v1563
      %v1908 = vpack.c.b16 %v1572, %v1564
      %v1909 = vpack.c.b16 %v1573, %v1565
      %v1910 = vpack.c.b16 %v1574, %v1566
      %v1911 = vpack.c.b16 %v1575, %v1567
      %v1912 = vpack.c.b16 %v1576, %v1568
      %v1913 = vpack.c.b16 %v1577, %v1569
      %v1914 = vpack.c.b16 %v1586, %v1578
      %v1915 = vpack.c.b16 %v1587, %v1579
      %v1916 = vpack.c.b16 %v1588, %v1580
      %v1917 = vpack.c.b16 %v1589, %v1581
      %v1918 = vpack.c.b16 %v1590, %v1582
      %v1919 = vpack.c.b16 %v1591, %v1583
      %v1920 = vpack.c.b16 %v1592, %v1584
      %v1921 = vpack.c.b16 %v1593, %v1585
      %v1922 = vpack.c.b16 %v1602, %v1594
      %v1923 = vpack.c.b16 %v1603, %v1595
      %v1924 = vpack.c.b16 %v1604, %v1596
      %v1925 = vpack.c.b16 %v1605, %v1597
      %v1926 = vpack.c.b16 %v1606, %v1598
      %v1927 = vpack.c.b16 %v1607, %v1599
      %v1928 = vpack.c.b16 %v1608, %v1600
      %v1929 = vpack.c.b16 %v1609, %v1601
      %2250 = vmatprep.subr.bf16.mxu0 %v1611
      %2251 = vmatpush1.bf16.msra.mxu0 %v1610
      %2252 = vmatprep.subr.bf16.mxu0 %v1619
      %2253 = vmatpush1.bf16.msra.mxu0 %v1618
      %2254 = vmatprep.subr.bf16.mxu0 %v1627
      %2255 = vmatpush1.bf16.msra.mxu0 %v1626
      %2256 = vmatprep.subr.bf16.mxu0 %v1635
      %2257 = vmatpush1.bf16.msra.mxu0 %v1634
      %2258 = vmatprep.subr.bf16.mxu0 %v1643
      %2259 = vmatpush1.bf16.msra.mxu0 %v1642
      %2260 = vmatprep.subr.bf16.mxu0 %v1651
      %2261 = vmatpush1.bf16.msra.mxu0 %v1650
      %2262 = vmatprep.subr.bf16.mxu0 %v1659
      %2263 = vmatpush1.bf16.msra.mxu0 %v1658
      %2264 = vmatprep.subr.bf16.mxu0 %v1667
      %2265 = vmatpush1.bf16.msra.mxu0 %v1666
      %2266 = vmatprep.subr.bf16.mxu0 %v1675
      %2267 = vmatpush1.bf16.msra.mxu0 %v1674
      %2268 = vmatprep.subr.bf16.mxu0 %v1683
      %2269 = vmatpush1.bf16.msra.mxu0 %v1682
      %2270 = vmatprep.subr.bf16.mxu0 %v1691
      %2271 = vmatpush1.bf16.msra.mxu0 %v1690
      %2272 = vmatprep.subr.bf16.mxu0 %v1699
      %2273 = vmatpush1.bf16.msra.mxu0 %v1698
      %2274 = vmatprep.subr.bf16.mxu0 %v1707
      %2275 = vmatpush1.bf16.msra.mxu0 %v1706
      %2276 = vmatprep.subr.bf16.mxu0 %v1715
      %2277 = vmatpush1.bf16.msra.mxu0 %v1714
      %2278 = vmatprep.subr.bf16.mxu0 %v1723
      %2279 = vmatpush1.bf16.msra.mxu0 %v1722
      %2280 = vmatprep.subr.bf16.mxu0 %v1731
      %2281 = vmatpush1.bf16.msra.mxu0 %v1730
      %2282 = vmatprep.mubr.bf16.mxu0 %v642
      %2283 = vmatmul.mubr.bf16.gmra.mrb[0].mxu0 %v628
      %v2284 = vpop.f32.mrb[0].mxu0
      %v2285 = vadd.f32 0.0, %v2284
      %v2286 = vpop.f32.mrb[0].mxu0
      %v2287 = vadd.f32 0.0, %v2286
      %v2288 = vpop.f32.mrb[0].mxu0
      %v2289 = vpop.f32.mrb[0].mxu0
      %2290 = vdwg.mxu0
      %2291 = vmatprep.subr.bf16.mxu0 %v1739
      %2292 = vmatpush1.bf16.msra.mxu0 %v1738
      %2293 = vmatprep.subr.bf16.mxu0 %v1747
      %2294 = vmatpush1.bf16.msra.mxu0 %v1746
      %2295 = vmatprep.subr.bf16.mxu0 %v1755
      %2296 = vmatpush1.bf16.msra.mxu0 %v1754
      %2297 = vmatprep.subr.bf16.mxu0 %v1763
      %2298 = vmatpush1.bf16.msra.mxu0 %v1762
      %2299 = vmatprep.subr.bf16.mxu0 %v1771
      %2300 = vmatpush1.bf16.msra.mxu0 %v1770
      %2301 = vmatprep.subr.bf16.mxu0 %v1779
      %2302 = vmatpush1.bf16.msra.mxu0 %v1778
      %2303 = vmatprep.subr.bf16.mxu0 %v1787
      %2304 = vmatpush1.bf16.msra.mxu0 %v1786
      %2305 = vmatprep.subr.bf16.mxu0 %v1795
      %2306 = vmatpush1.bf16.msra.mxu0 %v1794
      %2307 = vmatprep.subr.bf16.mxu0 %v1803
      %2308 = vmatpush1.bf16.msra.mxu0 %v1802
      %2309 = vmatprep.subr.bf16.mxu0 %v1811
      %2310 = vmatpush1.bf16.msra.mxu0 %v1810
      %2311 = vmatprep.subr.bf16.mxu0 %v1819
      %2312 = vmatpush1.bf16.msra.mxu0 %v1818
      %2313 = vmatprep.subr.bf16.mxu0 %v1827
      %2314 = vmatpush1.bf16.msra.mxu0 %v1826
      %2315 = vmatprep.subr.bf16.mxu0 %v1835
      %2316 = vmatpush1.bf16.msra.mxu0 %v1834
      %2317 = vmatprep.subr.bf16.mxu0 %v1843
      %2318 = vmatpush1.bf16.msra.mxu0 %v1842
      %2319 = vmatprep.subr.bf16.mxu0 %v1851
      %2320 = vmatpush1.bf16.msra.mxu0 %v1850
      %2321 = vmatprep.subr.bf16.mxu0 %v1859
      %2322 = vmatpush1.bf16.msra.mxu0 %v1858
      %2323 = vmatprep.mubr.bf16.mxu0 %v644
      %2324 = vmatmul.mubr.bf16.gmra.mrb[0].mxu0 %v643
      %v2325 = vpop.f32.mrb[0].mxu0
      %v2326 = vadd.f32 %v2285, %v2325
      %v2327 = vpop.f32.mrb[0].mxu0
      %v2328 = vadd.f32 %v2287, %v2327
      %v2329 = vpop.f32.mrb[0].mxu0
      %v2330 = vpop.f32.mrb[0].mxu0
      %2331 = vdwg.mxu0
      %2332 = vmatprep.subr.bf16.mxu0 %v1867
      %2333 = vmatpush1.bf16.msra.mxu0 %v1866
      %2334 = vmatprep.subr.bf16.mxu0 %v1875
      %2335 = vmatpush1.bf16.msra.mxu0 %v1874
      %2336 = vmatprep.subr.bf16.mxu0 %v1883
      %2337 = vmatpush1.bf16.msra.mxu0 %v1882
      %2338 = vmatprep.subr.bf16.mxu0 %v1891
      %2339 = vmatpush1.bf16.msra.mxu0 %v1890
      %2340 = vmatprep.subr.bf16.mxu0 %v1899
      %2341 = vmatpush1.bf16.msra.mxu0 %v1898
      %2342 = vmatprep.subr.bf16.mxu0 %v1907
      %2343 = vmatpush1.bf16.msra.mxu0 %v1906
      %2344 = vmatprep.subr.bf16.mxu0 %v1915
      %2345 = vmatpush1.bf16.msra.mxu0 %v1914
      %2346 = vmatprep.subr.bf16.mxu0 %v1923
      %2347 = vmatpush1.bf16.msra.mxu0 %v1922
      %2348 = vmatprep.subr.bf16.mxu0 0
      %2349 = vmatpush1.bf16.msra.mxu0 0
      %2350 = vmatprep.subr.bf16.mxu0 0
      %2351 = vmatpush1.bf16.msra.mxu0 0
      %2352 = vmatprep.subr.bf16.mxu0 0
      %2353 = vmatpush1.bf16.msra.mxu0 0
      %2354 = vmatprep.subr.bf16.mxu0 0
      %2355 = vmatpush1.bf16.msra.mxu0 0
      %2356 = vmatprep.subr.bf16.mxu0 0
      %2357 = vmatpush1.bf16.msra.mxu0 0
      %2358 = vmatprep.subr.bf16.mxu0 0
      %2359 = vmatpush1.bf16.msra.mxu0 0
      %2360 = vmatprep.subr.bf16.mxu0 0
      %2361 = vmatpush1.bf16.msra.mxu0 0
      %2362 = vmatprep.subr.bf16.mxu0 0
      %2363 = vmatpush1.bf16.msra.mxu0 0
      %2364 = vmatprep.mubr.bf16.mxu0 0
      %2365 = vmatmul.mubr.bf16.gmra.mrb[0].mxu0 %v635
      %v2366 = vpop.f32.mrb[0].mxu0
      %v2367 = vadd.f32 %v2326, %v2366
      %v2368 = vpop.f32.mrb[0].mxu0
      %v2369 = vadd.f32 %v2328, %v2368
      %v2370 = vpop.f32.mrb[0].mxu0
      %v2371 = vpop.f32.mrb[0].mxu0
      %2372 = vdwg.mxu0
      %2373 = vmatprep.subr.bf16.mxu0 %v1613
      %2374 = vmatpush1.bf16.msra.mxu0 %v1612
      %2375 = vmatprep.subr.bf16.mxu0 %v1621
      %2376 = vmatpush1.bf16.msra.mxu0 %v1620
      %2377 = vmatprep.subr.bf16.mxu0 %v1629
      %2378 = vmatpush1.bf16.msra.mxu0 %v1628
      %2379 = vmatprep.subr.bf16.mxu0 %v1637
      %2380 = vmatpush1.bf16.msra.mxu0 %v1636
      %2381 = vmatprep.subr.bf16.mxu0 %v1645
      %2382 = vmatpush1.bf16.msra.mxu0 %v1644
      %2383 = vmatprep.subr.bf16.mxu0 %v1653
      %2384 = vmatpush1.bf16.msra.mxu0 %v1652
      %2385 = vmatprep.subr.bf16.mxu0 %v1661
      %2386 = vmatpush1.bf16.msra.mxu0 %v1660
      %2387 = vmatprep.subr.bf16.mxu0 %v1669
      %2388 = vmatpush1.bf16.msra.mxu0 %v1668
      %2389 = vmatprep.subr.bf16.mxu0 %v1677
      %2390 = vmatpush1.bf16.msra.mxu0 %v1676
      %2391 = vmatprep.subr.bf16.mxu0 %v1685
      %2392 = vmatpush1.bf16.msra.mxu0 %v1684
      %2393 = vmatprep.subr.bf16.mxu0 %v1693
      %2394 = vmatpush1.bf16.msra.mxu0 %v1692
      %2395 = vmatprep.subr.bf16.mxu0 %v1701
      %2396 = vmatpush1.bf16.msra.mxu0 %v1700
      %2397 = vmatprep.subr.bf16.mxu0 %v1709
      %2398 = vmatpush1.bf16.msra.mxu0 %v1708
      %2399 = vmatprep.subr.bf16.mxu0 %v1717
      %2400 = vmatpush1.bf16.msra.mxu0 %v1716
      %2401 = vmatprep.subr.bf16.mxu0 %v1725
      %2402 = vmatpush1.bf16.msra.mxu0 %v1724
      %2403 = vmatprep.subr.bf16.mxu0 %v1733
      %2404 = vmatpush1.bf16.msra.mxu0 %v1732
      %2405 = vmatprep.mubr.bf16.mxu0 %v642
      %2406 = vmatmul.mubr.bf16.gmra.mrb[0].mxu0 %v628
      %v2407 = vpop.f32.mrb[0].mxu0
      %v2408 = vadd.f32 0.0, %v2407
      %v2409 = vpop.f32.mrb[0].mxu0
      %v2410 = vadd.f32 0.0, %v2409
      %v2411 = vpop.f32.mrb[0].mxu0
      %v2412 = vpop.f32.mrb[0].mxu0
      %2413 = vdwg.mxu0
      %2414 = vmatprep.subr.bf16.mxu0 %v1741
      %2415 = vmatpush1.bf16.msra.mxu0 %v1740
      %2416 = vmatprep.subr.bf16.mxu0 %v1749
      %2417 = vmatpush1.bf16.msra.mxu0 %v1748
      %2418 = vmatprep.subr.bf16.mxu0 %v1757
      %2419 = vmatpush1.bf16.msra.mxu0 %v1756
      %2420 = vmatprep.subr.bf16.mxu0 %v1765
      %2421 = vmatpush1.bf16.msra.mxu0 %v1764
      %2422 = vmatprep.subr.bf16.mxu0 %v1773
      %2423 = vmatpush1.bf16.msra.mxu0 %v1772
      %2424 = vmatprep.subr.bf16.mxu0 %v1781
      %2425 = vmatpush1.bf16.msra.mxu0 %v1780
      %2426 = vmatprep.subr.bf16.mxu0 %v1789
      %2427 = vmatpush1.bf16.msra.mxu0 %v1788
      %2428 = vmatprep.subr.bf16.mxu0 %v1797
      %2429 = vmatpush1.bf16.msra.mxu0 %v1796
      %2430 = vmatprep.subr.bf16.mxu0 %v1805
      %2431 = vmatpush1.bf16.msra.mxu0 %v1804
      %2432 = vmatprep.subr.bf16.mxu0 %v1813
      %2433 = vmatpush1.bf16.msra.mxu0 %v1812
      %2434 = vmatprep.subr.bf16.mxu0 %v1821
      %2435 = vmatpush1.bf16.msra.mxu0 %v1820
      %2436 = vmatprep.subr.bf16.mxu0 %v1829
      %2437 = vmatpush1.bf16.msra.mxu0 %v1828
      %2438 = vmatprep.subr.bf16.mxu0 %v1837
      %2439 = vmatpush1.bf16.msra.mxu0 %v1836
      %2440 = vmatprep.subr.bf16.mxu0 %v1845
      %2441 = vmatpush1.bf16.msra.mxu0 %v1844
      %2442 = vmatprep.subr.bf16.mxu0 %v1853
      %2443 = vmatpush1.bf16.msra.mxu0 %v1852
      %2444 = vmatprep.subr.bf16.mxu0 %v1861
      %2445 = vmatpush1.bf16.msra.mxu0 %v1860
      %2446 = vmatprep.mubr.bf16.mxu0 %v644
      %2447 = vmatmul.mubr.bf16.gmra.mrb[0].mxu0 %v643
      %v2448 = vpop.f32.mrb[0].mxu0
      %v2449 = vadd.f32 %v2408, %v2448
      %v2450 = vpop.f32.mrb[0].mxu0
      %v2451 = vadd.f32 %v2410, %v2450
      %v2452 = vpop.f32.mrb[0].mxu0
      %v2453 = vpop.f32.mrb[0].mxu0
      %2454 = vdwg.mxu0
      %2455 = vmatprep.subr.bf16.mxu0 %v1869
      %2456 = vmatpush1.bf16.msra.mxu0 %v1868
      %2457 = vmatprep.subr.bf16.mxu0 %v1877
      %2458 = vmatpush1.bf16.msra.mxu0 %v1876
      %2459 = vmatprep.subr.bf16.mxu0 %v1885
      %2460 = vmatpush1.bf16.msra.mxu0 %v1884
      %2461 = vmatprep.subr.bf16.mxu0 %v1893
      %2462 = vmatpush1.bf16.msra.mxu0 %v1892
      %2463 = vmatprep.subr.bf16.mxu0 %v1901
      %2464 = vmatpush1.bf16.msra.mxu0 %v1900
      %2465 = vmatprep.subr.bf16.mxu0 %v1909
      %2466 = vmatpush1.bf16.msra.mxu0 %v1908
      %2467 = vmatprep.subr.bf16.mxu0 %v1917
      %2468 = vmatpush1.bf16.msra.mxu0 %v1916
      %2469 = vmatprep.subr.bf16.mxu0 %v1925
      %2470 = vmatpush1.bf16.msra.mxu0 %v1924
      %2471 = vmatprep.subr.bf16.mxu0 0
      %2472 = vmatpush1.bf16.msra.mxu0 0
      %2473 = vmatprep.subr.bf16.mxu0 0
      %2474 = vmatpush1.bf16.msra.mxu0 0
      %2475 = vmatprep.subr.bf16.mxu0 0
      %2476 = vmatpush1.bf16.msra.mxu0 0
      %2477 = vmatprep.subr.bf16.mxu0 0
      %2478 = vmatpush1.bf16.msra.mxu0 0
      %2479 = vmatprep.subr.bf16.mxu0 0
      %2480 = vmatpush1.bf16.msra.mxu0 0
      %2481 = vmatprep.subr.bf16.mxu0 0
      %2482 = vmatpush1.bf16.msra.mxu0 0
      %2483 = vmatprep.subr.bf16.mxu0 0
      %2484 = vmatpush1.bf16.msra.mxu0 0
      %2485 = vmatprep.subr.bf16.mxu0 0
      %2486 = vmatpush1.bf16.msra.mxu0 0
      %2487 = vmatprep.mubr.bf16.mxu0 0
      %2488 = vmatmul.mubr.bf16.gmra.mrb[0].mxu0 %v635
      %v2489 = vpop.f32.mrb[0].mxu0
      %v2490 = vadd.f32 %v2449, %v2489
      %v2491 = vpop.f32.mrb[0].mxu0
      %v2492 = vadd.f32 %v2451, %v2491
      %v2493 = vpop.f32.mrb[0].mxu0
      %v2494 = vpop.f32.mrb[0].mxu0
      %2495 = vdwg.mxu0
      %2496 = vmatprep.subr.bf16.mxu0 %v1615
      %2497 = vmatpush1.bf16.msra.mxu0 %v1614
      %2498 = vmatprep.subr.bf16.mxu0 %v1623
      %2499 = vmatpush1.bf16.msra.mxu0 %v1622
      %2500 = vmatprep.subr.bf16.mxu0 %v1631
      %2501 = vmatpush1.bf16.msra.mxu0 %v1630
      %2502 = vmatprep.subr.bf16.mxu0 %v1639
      %2503 = vmatpush1.bf16.msra.mxu0 %v1638
      %2504 = vmatprep.subr.bf16.mxu0 %v1647
      %2505 = vmatpush1.bf16.msra.mxu0 %v1646
      %2506 = vmatprep.subr.bf16.mxu0 %v1655
      %2507 = vmatpush1.bf16.msra.mxu0 %v1654
      %2508 = vmatprep.subr.bf16.mxu0 %v1663
      %2509 = vmatpush1.bf16.msra.mxu0 %v1662
      %2510 = vmatprep.subr.bf16.mxu0 %v1671
      %2511 = vmatpush1.bf16.msra.mxu0 %v1670
      %2512 = vmatprep.subr.bf16.mxu0 %v1679
      %2513 = vmatpush1.bf16.msra.mxu0 %v1678
      %2514 = vmatprep.subr.bf16.mxu0 %v1687
      %2515 = vmatpush1.bf16.msra.mxu0 %v1686
      %2516 = vmatprep.subr.bf16.mxu0 %v1695
      %2517 = vmatpush1.bf16.msra.mxu0 %v1694
      %2518 = vmatprep.subr.bf16.mxu0 %v1703
      %2519 = vmatpush1.bf16.msra.mxu0 %v1702
      %2520 = vmatprep.subr.bf16.mxu0 %v1711
      %2521 = vmatpush1.bf16.msra.mxu0 %v1710
      %2522 = vmatprep.subr.bf16.mxu0 %v1719
      %2523 = vmatpush1.bf16.msra.mxu0 %v1718
      %2524 = vmatprep.subr.bf16.mxu0 %v1727
      %2525 = vmatpush1.bf16.msra.mxu0 %v1726
      %2526 = vmatprep.subr.bf16.mxu0 %v1735
      %2527 = vmatpush1.bf16.msra.mxu0 %v1734
      %2528 = vmatprep.mubr.bf16.mxu0 %v642
      %2529 = vmatmul.mubr.bf16.gmra.mrb[0].mxu0 %v628
      %v2530 = vpop.f32.mrb[0].mxu0
      %v2531 = vadd.f32 0.0, %v2530
      %v2532 = vpop.f32.mrb[0].mxu0
      %v2533 = vadd.f32 0.0, %v2532
      %v2534 = vpop.f32.mrb[0].mxu0
      %v2535 = vpop.f32.mrb[0].mxu0
      %2536 = vdwg.mxu0
      %2537 = vmatprep.subr.bf16.mxu0 %v1743
      %2538 = vmatpush1.bf16.msra.mxu0 %v1742
      %2539 = vmatprep.subr.bf16.mxu0 %v1751
      %2540 = vmatpush1.bf16.msra.mxu0 %v1750
      %2541 = vmatprep.subr.bf16.mxu0 %v1759
      %2542 = vmatpush1.bf16.msra.mxu0 %v1758
      %2543 = vmatprep.subr.bf16.mxu0 %v1767
      %2544 = vmatpush1.bf16.msra.mxu0 %v1766
      %2545 = vmatprep.subr.bf16.mxu0 %v1775
      %2546 = vmatpush1.bf16.msra.mxu0 %v1774
      %2547 = vmatprep.subr.bf16.mxu0 %v1783
      %2548 = vmatpush1.bf16.msra.mxu0 %v1782
      %2549 = vmatprep.subr.bf16.mxu0 %v1791
      %2550 = vmatpush1.bf16.msra.mxu0 %v1790
      %2551 = vmatprep.subr.bf16.mxu0 %v1799
      %2552 = vmatpush1.bf16.msra.mxu0 %v1798
      %2553 = vmatprep.subr.bf16.mxu0 %v1807
      %2554 = vmatpush1.bf16.msra.mxu0 %v1806
      %2555 = vmatprep.subr.bf16.mxu0 %v1815
      %2556 = vmatpush1.bf16.msra.mxu0 %v1814
      %2557 = vmatprep.subr.bf16.mxu0 %v1823
      %2558 = vmatpush1.bf16.msra.mxu0 %v1822
      %2559 = vmatprep.subr.bf16.mxu0 %v1831
      %2560 = vmatpush1.bf16.msra.mxu0 %v1830
      %2561 = vmatprep.subr.bf16.mxu0 %v1839
      %2562 = vmatpush1.bf16.msra.mxu0 %v1838
      %2563 = vmatprep.subr.bf16.mxu0 %v1847
      %2564 = vmatpush1.bf16.msra.mxu0 %v1846
      %2565 = vmatprep.subr.bf16.mxu0 %v1855
      %2566 = vmatpush1.bf16.msra.mxu0 %v1854
      %2567 = vmatprep.subr.bf16.mxu0 %v1863
      %2568 = vmatpush1.bf16.msra.mxu0 %v1862
      %2569 = vmatprep.mubr.bf16.mxu0 %v644
      %2570 = vmatmul.mubr.bf16.gmra.mrb[0].mxu0 %v643
      %v2571 = vpop.f32.mrb[0].mxu0
      %v2572 = vadd.f32 %v2531, %v2571
      %v2573 = vpop.f32.mrb[0].mxu0
      %v2574 = vadd.f32 %v2533, %v2573
      %v2575 = vpop.f32.mrb[0].mxu0
      %v2576 = vpop.f32.mrb[0].mxu0
      %2577 = vdwg.mxu0
      %2578 = vmatprep.subr.bf16.mxu0 %v1871
      %2579 = vmatpush1.bf16.msra.mxu0 %v1870
      %2580 = vmatprep.subr.bf16.mxu0 %v1879
      %2581 = vmatpush1.bf16.msra.mxu0 %v1878
      %2582 = vmatprep.subr.bf16.mxu0 %v1887
      %2583 = vmatpush1.bf16.msra.mxu0 %v1886
      %2584 = vmatprep.subr.bf16.mxu0 %v1895
      %2585 = vmatpush1.bf16.msra.mxu0 %v1894
      %2586 = vmatprep.subr.bf16.mxu0 %v1903
      %2587 = vmatpush1.bf16.msra.mxu0 %v1902
      %2588 = vmatprep.subr.bf16.mxu0 %v1911
      %2589 = vmatpush1.bf16.msra.mxu0 %v1910
      %2590 = vmatprep.subr.bf16.mxu0 %v1919
      %2591 = vmatpush1.bf16.msra.mxu0 %v1918
      %2592 = vmatprep.subr.bf16.mxu0 %v1927
      %2593 = vmatpush1.bf16.msra.mxu0 %v1926
      %2594 = vmatprep.subr.bf16.mxu0 0
      %2595 = vmatpush1.bf16.msra.mxu0 0
      %2596 = vmatprep.subr.bf16.mxu0 0
      %2597 = vmatpush1.bf16.msra.mxu0 0
      %2598 = vmatprep.subr.bf16.mxu0 0
      %2599 = vmatpush1.bf16.msra.mxu0 0
      %2600 = vmatprep.subr.bf16.mxu0 0
      %2601 = vmatpush1.bf16.msra.mxu0 0
      %2602 = vmatprep.subr.bf16.mxu0 0
      %2603 = vmatpush1.bf16.msra.mxu0 0
      %2604 = vmatprep.subr.bf16.mxu0 0
      %2605 = vmatpush1.bf16.msra.mxu0 0
      %2606 = vmatprep.subr.bf16.mxu0 0
      %2607 = vmatpush1.bf16.msra.mxu0 0
      %2608 = vmatprep.subr.bf16.mxu0 0
      %2609 = vmatpush1.bf16.msra.mxu0 0
      %2610 = vmatprep.mubr.bf16.mxu0 0
      %2611 = vmatmul.mubr.bf16.gmra.mrb[0].mxu0 %v635
      %v2612 = vpop.f32.mrb[0].mxu0
      %v2613 = vadd.f32 %v2572, %v2612
      %v2614 = vpop.f32.mrb[0].mxu0
      %v2615 = vadd.f32 %v2574, %v2614
      %v2616 = vpop.f32.mrb[0].mxu0
      %v2617 = vpop.f32.mrb[0].mxu0
      %2618 = vdwg.mxu0
      %2619 = vmatprep.subr.bf16.mxu0 %v1617
      %2620 = vmatpush1.bf16.msra.mxu0 %v1616
      %2621 = vmatprep.subr.bf16.mxu0 %v1625
      %2622 = vmatpush1.bf16.msra.mxu0 %v1624
      %2623 = vmatprep.subr.bf16.mxu0 %v1633
      %2624 = vmatpush1.bf16.msra.mxu0 %v1632
      %2625 = vmatprep.subr.bf16.mxu0 %v1641
      %2626 = vmatpush1.bf16.msra.mxu0 %v1640
      %2627 = vmatprep.subr.bf16.mxu0 %v1649
      %2628 = vmatpush1.bf16.msra.mxu0 %v1648
      %2629 = vmatprep.subr.bf16.mxu0 %v1657
      %2630 = vmatpush1.bf16.msra.mxu0 %v1656
      %2631 = vmatprep.subr.bf16.mxu0 %v1665
      %2632 = vmatpush1.bf16.msra.mxu0 %v1664
      %2633 = vmatprep.subr.bf16.mxu0 %v1673
      %2634 = vmatpush1.bf16.msra.mxu0 %v1672
      %2635 = vmatprep.subr.bf16.mxu0 %v1681
      %2636 = vmatpush1.bf16.msra.mxu0 %v1680
      %2637 = vmatprep.subr.bf16.mxu0 %v1689
      %2638 = vmatpush1.bf16.msra.mxu0 %v1688
      %2639 = vmatprep.subr.bf16.mxu0 %v1697
      %2640 = vmatpush1.bf16.msra.mxu0 %v1696
      %2641 = vmatprep.subr.bf16.mxu0 %v1705
      %2642 = vmatpush1.bf16.msra.mxu0 %v1704
      %2643 = vmatprep.subr.bf16.mxu0 %v1713
      %2644 = vmatpush1.bf16.msra.mxu0 %v1712
      %2645 = vmatprep.subr.bf16.mxu0 %v1721
      %2646 = vmatpush1.bf16.msra.mxu0 %v1720
      %2647 = vmatprep.subr.bf16.mxu0 %v1729
      %2648 = vmatpush1.bf16.msra.mxu0 %v1728
      %2649 = vmatprep.subr.bf16.mxu0 %v1737
      %2650 = vmatpush1.bf16.msra.mxu0 %v1736
      %2651 = vmatprep.mubr.bf16.mxu0 %v642
      %2652 = vmatmul.mubr.bf16.gmra.mrb[0].mxu0 %v628
      %v2653 = vpop.f32.mrb[0].mxu0
      %v2654 = vadd.f32 0.0, %v2653
      %v2655 = vpop.f32.mrb[0].mxu0
      %v2656 = vadd.f32 0.0, %v2655
      %v2657 = vpop.f32.mrb[0].mxu0
      %v2658 = vpop.f32.mrb[0].mxu0
      %2659 = vdwg.mxu0
      %2660 = vmatprep.subr.bf16.mxu0 %v1745
      %2661 = vmatpush1.bf16.msra.mxu0 %v1744
      %2662 = vmatprep.subr.bf16.mxu0 %v1753
      %2663 = vmatpush1.bf16.msra.mxu0 %v1752
      %2664 = vmatprep.subr.bf16.mxu0 %v1761
      %2665 = vmatpush1.bf16.msra.mxu0 %v1760
      %2666 = vmatprep.subr.bf16.mxu0 %v1769
      %2667 = vmatpush1.bf16.msra.mxu0 %v1768
      %2668 = vmatprep.subr.bf16.mxu0 %v1777
      %2669 = vmatpush1.bf16.msra.mxu0 %v1776
      %2670 = vmatprep.subr.bf16.mxu0 %v1785
      %2671 = vmatpush1.bf16.msra.mxu0 %v1784
      %2672 = vmatprep.subr.bf16.mxu0 %v1793
      %2673 = vmatpush1.bf16.msra.mxu0 %v1792
      %2674 = vmatprep.subr.bf16.mxu0 %v1801
      %2675 = vmatpush1.bf16.msra.mxu0 %v1800
      %2676 = vmatprep.subr.bf16.mxu0 %v1809
      %2677 = vmatpush1.bf16.msra.mxu0 %v1808
      %2678 = vmatprep.subr.bf16.mxu0 %v1817
      %2679 = vmatpush1.bf16.msra.mxu0 %v1816
      %2680 = vmatprep.subr.bf16.mxu0 %v1825
      %2681 = vmatpush1.bf16.msra.mxu0 %v1824
      %2682 = vmatprep.subr.bf16.mxu0 %v1833
      %2683 = vmatpush1.bf16.msra.mxu0 %v1832
      %2684 = vmatprep.subr.bf16.mxu0 %v1841
      %2685 = vmatpush1.bf16.msra.mxu0 %v1840
      %2686 = vmatprep.subr.bf16.mxu0 %v1849
      %2687 = vmatpush1.bf16.msra.mxu0 %v1848
      %2688 = vmatprep.subr.bf16.mxu0 %v1857
      %2689 = vmatpush1.bf16.msra.mxu0 %v1856
      %2690 = vmatprep.subr.bf16.mxu0 %v1865
      %2691 = vmatpush1.bf16.msra.mxu0 %v1864
      %2692 = vmatprep.mubr.bf16.mxu0 %v644
      %2693 = vmatmul.mubr.bf16.gmra.mrb[0].mxu0 %v643
      %v2694 = vpop.f32.mrb[0].mxu0
      %v2695 = vadd.f32 %v2654, %v2694
      %v2696 = vpop.f32.mrb[0].mxu0
      %v2697 = vadd.f32 %v2656, %v2696
      %v2698 = vpop.f32.mrb[0].mxu0
      %v2699 = vpop.f32.mrb[0].mxu0
      %2700 = vdwg.mxu0
      %2701 = vmatprep.subr.bf16.mxu0 %v1873
      %2702 = vmatpush1.bf16.msra.mxu0 %v1872
      %2703 = vmatprep.subr.bf16.mxu0 %v1881
      %2704 = vmatpush1.bf16.msra.mxu0 %v1880
      %2705 = vmatprep.subr.bf16.mxu0 %v1889
      %2706 = vmatpush1.bf16.msra.mxu0 %v1888
      %2707 = vmatprep.subr.bf16.mxu0 %v1897
      %2708 = vmatpush1.bf16.msra.mxu0 %v1896
      %2709 = vmatprep.subr.bf16.mxu0 %v1905
      %2710 = vmatpush1.bf16.msra.mxu0 %v1904
      %2711 = vmatprep.subr.bf16.mxu0 %v1913
      %2712 = vmatpush1.bf16.msra.mxu0 %v1912
      %2713 = vmatprep.subr.bf16.mxu0 %v1921
      %2714 = vmatpush1.bf16.msra.mxu0 %v1920
      %2715 = vmatprep.subr.bf16.mxu0 %v1929
      %2716 = vmatpush1.bf16.msra.mxu0 %v1928
      %2717 = vmatprep.subr.bf16.mxu0 0
      %2718 = vmatpush1.bf16.msra.mxu0 0
      %2719 = vmatprep.subr.bf16.mxu0 0
      %2720 = vmatpush1.bf16.msra.mxu0 0
      %2721 = vmatprep.subr.bf16.mxu0 0
      %2722 = vmatpush1.bf16.msra.mxu0 0
      %2723 = vmatprep.subr.bf16.mxu0 0
      %2724 = vmatpush1.bf16.msra.mxu0 0
      %2725 = vmatprep.subr.bf16.mxu0 0
      %2726 = vmatpush1.bf16.msra.mxu0 0
      %2727 = vmatprep.subr.bf16.mxu0 0
      %2728 = vmatpush1.bf16.msra.mxu0 0
      %2729 = vmatprep.subr.bf16.mxu0 0
      %2730 = vmatpush1.bf16.msra.mxu0 0
      %2731 = vmatprep.subr.bf16.mxu0 0
      %2732 = vmatpush1.bf16.msra.mxu0 0
      %2733 = vmatprep.mubr.bf16.mxu0 0
      %2734 = vmatmul.mubr.bf16.gmra.mrb[0].mxu0 %v635
      %v2735 = vpop.f32.mrb[0].mxu0
      %v2736 = vadd.f32 %v2695, %v2735
      %v2737 = vpop.f32.mrb[0].mxu0
      %v2738 = vadd.f32 %v2697, %v2737
      %v2739 = vpop.f32.mrb[0].mxu0
      %v2740 = vpop.f32.mrb[0].mxu0
      %2741 = vdwg.mxu0
      %v2750 = vcombine.low %v2367, %v2369
      %v2751 = vcombine.low %v2490, %v2492
      %v2753 = vunpack.c.l.s4 1983009808
      %v2754 = vunpack.c.0.s8 %v2753
      %v2755 = vlaneseq
      %v2756 = vshrl.u32 %v2755, 7
      %v2757 = vsub.s32 %v2754, %v2756
      %v2758 = vrot.slane %v2750, %v2757
      %v2760 = vunpack.c.l.s4 1983009808
      %v2761 = vunpack.c.0.s8 %v2760
      %v2762 = vlaneseq
      %v2763 = vshrl.u32 %v2762, 7
      %v2764 = vsub.s32 %v2761, %v2763
      %v2765 = vrot.slane %v2751, %v2764
      %v2766 = vcombine.low %v2758, %v2765
      %v2767 = vcombine.low %v2613, %v2615
      %v2768 = vcombine.low %v2736, %v2738
      %v2770 = vunpack.c.l.s4 1983009808
      %v2771 = vunpack.c.0.s8 %v2770
      %v2772 = vlaneseq
      %v2773 = vshrl.u32 %v2772, 7
      %v2774 = vsub.s32 %v2771, %v2773
      %v2775 = vrot.slane %v2767, %v2774
      %v2777 = vunpack.c.l.s4 1983009808
      %v2778 = vunpack.c.0.s8 %v2777
      %v2779 = vlaneseq
      %v2780 = vshrl.u32 %v2779, 7
      %v2781 = vsub.s32 %v2778, %v2780
      %v2782 = vrot.slane %v2768, %v2781
      %v2783 = vcombine.low %v2775, %v2782
      %v2786 = vadd.f32 %v282, %v2766
      %v2787 = vadd.f32 %v283, %v2783
      %2788 = vst [vmem:[#allocation2] sm:$0xff] %v2786
      %2789 = vst [vmem:[#allocation2 + $0x8] sm:$0xff] %v2787
      %p2790 = scmp.eq.s32.totalorder %s23, 4
      // Predicated region
      $region45: #{discrimination_net_forward.5} parent=39 // pred_check
        %p2791 = pneg %p2790
      $region46: #{discrimination_net_forward.5} parent=39 // pred_check_branch
        %2793 = sbr.rel (%p2791) target = $region48
      $region47: #{discrimination_net_forward.5} parent=39 // pred_region
        %v2794 = vld [vmem:[#allocation2] sm:$0xff]
        %v2795 = vld [vmem:[#allocation2 + $0x8] sm:$0xff]
        %v2796 = vld [vmem:[%s2] sm:$0xff]
        %v2798 = vlaneseq
        %v2799 = vshrl.u32 %v2798, 7
        %v2800 = vsub.s32 0, %v2799
        %v2801 = vrot.slane %v2796, %v2800
        %v2802 = vlaneseq
        %v2803 = vshrl.u32 %v2802, 7
        %v2804 = vsub.s32 1, %v2803
        %v2805 = vrot.slane %v2796, %v2804
        %v2806 = vlaneseq
        %v2807 = vshrl.u32 %v2806, 7
        %v2808 = vsub.s32 2, %v2807
        %v2809 = vrot.slane %v2796, %v2808
        %v2810 = vlaneseq
        %v2811 = vshrl.u32 %v2810, 7
        %v2812 = vsub.s32 3, %v2811
        %v2813 = vrot.slane %v2796, %v2812
        %v2814 = vlaneseq
        %v2815 = vshrl.u32 %v2814, 7
        %v2816 = vsub.s32 4, %v2815
        %v2817 = vrot.slane %v2796, %v2816
        %v2818 = vlaneseq
        %v2819 = vshrl.u32 %v2818, 7
        %v2820 = vsub.s32 5, %v2819
        %v2821 = vrot.slane %v2796, %v2820
        %v2822 = vlaneseq
        %v2823 = vshrl.u32 %v2822, 7
        %v2824 = vsub.s32 6, %v2823
        %v2825 = vrot.slane %v2796, %v2824
        %v2826 = vlaneseq
        %v2827 = vshrl.u32 %v2826, 7
        %v2828 = vsub.s32 7, %v2827
        %v2829 = vrot.slane %v2796, %v2828
        %v2830 = vcombine.low %v2801, %v2805
        %v2831 = vcombine.low %v2809, %v2813
        %v2833 = vunpack.c.l.s4 1983009808
        %v2834 = vunpack.c.0.s8 %v2833
        %v2835 = vlaneseq
        %v2836 = vshrl.u32 %v2835, 7
        %v2837 = vsub.s32 %v2834, %v2836
        %v2838 = vrot.slane %v2830, %v2837
        %v2840 = vunpack.c.l.s4 1983009808
        %v2841 = vunpack.c.0.s8 %v2840
        %v2842 = vlaneseq
        %v2843 = vshrl.u32 %v2842, 7
        %v2844 = vsub.s32 %v2841, %v2843
        %v2845 = vrot.slane %v2831, %v2844
        %v2846 = vcombine.low %v2838, %v2845
        %v2847 = vcombine.low %v2817, %v2821
        %v2848 = vcombine.low %v2825, %v2829
        %v2850 = vunpack.c.l.s4 1983009808
        %v2851 = vunpack.c.0.s8 %v2850
        %v2852 = vlaneseq
        %v2853 = vshrl.u32 %v2852, 7
        %v2854 = vsub.s32 %v2851, %v2853
        %v2855 = vrot.slane %v2847, %v2854
        %v2857 = vunpack.c.l.s4 1983009808
        %v2858 = vunpack.c.0.s8 %v2857
        %v2859 = vlaneseq
        %v2860 = vshrl.u32 %v2859, 7
        %v2861 = vsub.s32 %v2858, %v2860
        %v2862 = vrot.slane %v2848, %v2861
        %v2863 = vcombine.low %v2855, %v2862
        %v2866 = vadd.f32 %v2794, %v2846
        %v2867 = vadd.f32 %v2795, %v2863
        %vm2868 = vcmp.ge.f32.partialorder %v2866, 0.0
        %vm2869 = vcmp.ge.f32.partialorder %v2867, 0.0
        %v2870 = vmul.f32 %v2866, 0.2
        %v2871 = vmul.f32 %v2867, 0.2
        %v2872 = vsel %vm2868, %v2866, %v2870
        %v2873 = vsel %vm2869, %v2867, %v2871
        %v2876 = vcombine.high %v2872, %v2872
        %v2878 = vunpack.c.l.s4 1983009808
        %v2879 = vunpack.c.0.s8 %v2878
        %v2880 = vlaneseq
        %v2881 = vshrl.u32 %v2880, 7
        %v2882 = vsub.s32 %v2879, %v2881
        %v2883 = vrot.slane %v2872, %v2882
        %v2885 = vunpack.c.l.s4 1983009808
        %v2886 = vunpack.c.0.s8 %v2885
        %v2887 = vlaneseq
        %v2888 = vshrl.u32 %v2887, 7
        %v2889 = vsub.s32 %v2886, %v2888
        %v2890 = vrot.slane %v2876, %v2889
        %v2891 = vcombine.high %v2883, %v2883
        %v2892 = vcombine.high %v2890, %v2890
        %v2893 = vcombine.high %v2873, %v2873
        %v2895 = vunpack.c.l.s4 1983009808
        %v2896 = vunpack.c.0.s8 %v2895
        %v2897 = vlaneseq
        %v2898 = vshrl.u32 %v2897, 7
        %v2899 = vsub.s32 %v2896, %v2898
        %v2900 = vrot.slane %v2873, %v2899
        %v2902 = vunpack.c.l.s4 1983009808
        %v2903 = vunpack.c.0.s8 %v2902
        %v2904 = vlaneseq
        %v2905 = vshrl.u32 %v2904, 7
        %v2906 = vsub.s32 %v2903, %v2905
        %v2907 = vrot.slane %v2893, %v2906
        %v2908 = vcombine.high %v2900, %v2900
        %v2909 = vcombine.high %v2907, %v2907
        %v2918 = vpack.c.bf16 %v2883, %v2883
        %v2919 = vpack.c.bf16 %v2891, %v2891
        %v2920 = vpack.c.bf16 %v2890, %v2890
        %v2921 = vpack.c.bf16 %v2892, %v2892
        %v2922 = vpack.c.bf16 %v2900, %v2900
        %v2923 = vpack.c.bf16 %v2908, %v2908
        %v2924 = vpack.c.bf16 %v2907, %v2907
        %v2925 = vpack.c.bf16 %v2909, %v2909
        %v2926 = vld [vmem:[%s3] sm:$0xf]
        %v2927 = vld [vmem:[%s3 + $0x4] sm:$0xf]
        %v2928 = vld [vmem:[%s3 + $0x8] sm:$0xf]
        %v2929 = vld [vmem:[%s3 + $0xc] sm:$0xf]
        %v2930 = vld [vmem:[%s3 + $0x10] sm:$0xf]
        %v2931 = vld [vmem:[%s3 + $0x14] sm:$0xf]
        %v2932 = vld [vmem:[%s3 + $0x18] sm:$0xf]
        %v2933 = vld [vmem:[%s3 + $0x1c] sm:$0xf]
        %v2934 = vld [vmem:[%s3 + $0x20] sm:$0xf]
        %v2935 = vld [vmem:[%s3 + $0x24] sm:$0xf]
        %v2936 = vld [vmem:[%s3 + $0x28] sm:$0xf]
        %v2937 = vld [vmem:[%s3 + $0x2c] sm:$0xf]
        %v2938 = vld [vmem:[%s3 + $0x30] sm:$0xf]
        %v2939 = vld [vmem:[%s3 + $0x34] sm:$0xf]
        %v2940 = vld [vmem:[%s3 + $0x38] sm:$0xf]
        %v2941 = vld [vmem:[%s3 + $0x3c] sm:$0xf]
        %v2942 = vld [vmem:[%s3 + $0x40] sm:$0xf]
        %v2943 = vld [vmem:[%s3 + $0x44] sm:$0xf]
        %v2944 = vld [vmem:[%s3 + $0x48] sm:$0xf]
        %v2945 = vld [vmem:[%s3 + $0x4c] sm:$0xf]
        %v2946 = vld [vmem:[%s3 + $0x50] sm:$0xf]
        %v2947 = vld [vmem:[%s3 + $0x54] sm:$0xf]
        %v2948 = vld [vmem:[%s3 + $0x58] sm:$0xf]
        %v2949 = vld [vmem:[%s3 + $0x5c] sm:$0xf]
        %v2950 = vld [vmem:[%s3 + $0x60] sm:$0xf]
        %v2951 = vld [vmem:[%s3 + $0x64] sm:$0xf]
        %v2952 = vld [vmem:[%s3 + $0x68] sm:$0xf]
        %v2953 = vld [vmem:[%s3 + $0x6c] sm:$0xf]
        %v2954 = vld [vmem:[%s3 + $0x70] sm:$0xf]
        %v2955 = vld [vmem:[%s3 + $0x74] sm:$0xf]
        %v2956 = vld [vmem:[%s3 + $0x78] sm:$0xf]
        %v2957 = vld [vmem:[%s3 + $0x7c] sm:$0xf]
        %v2958 = vld [vmem:[%s3 + $0x80] sm:$0xf]
        %v2959 = vld [vmem:[%s3 + $0x84] sm:$0xf]
        %v2960 = vld [vmem:[%s3 + $0x88] sm:$0xf]
        %v2961 = vld [vmem:[%s3 + $0x8c] sm:$0xf]
        %v2962 = vld [vmem:[%s3 + $0x90] sm:$0xf]
        %v2963 = vld [vmem:[%s3 + $0x94] sm:$0xf]
        %v2964 = vld [vmem:[%s3 + $0x98] sm:$0xf]
        %v2965 = vld [vmem:[%s3 + $0x9c] sm:$0xf]
        %v2966 = vld [vmem:[%s3 + $0xa0] sm:$0xf]
        %v2967 = vld [vmem:[%s3 + $0xa4] sm:$0xf]
        %v2968 = vld [vmem:[%s3 + $0xa8] sm:$0xf]
        %v2969 = vld [vmem:[%s3 + $0xac] sm:$0xf]
        %v2970 = vld [vmem:[%s3 + $0xb0] sm:$0xf]
        %v2971 = vld [vmem:[%s3 + $0xb4] sm:$0xf]
        %v2972 = vld [vmem:[%s3 + $0xb8] sm:$0xf]
        %v2973 = vld [vmem:[%s3 + $0xbc] sm:$0xf]
        %v2974 = vld [vmem:[%s3 + $0xc0] sm:$0xf]
        %v2975 = vld [vmem:[%s3 + $0xc4] sm:$0xf]
        %v2976 = vld [vmem:[%s3 + $0xc8] sm:$0xf]
        %v2977 = vld [vmem:[%s3 + $0xcc] sm:$0xf]
        %v2978 = vld [vmem:[%s3 + $0xd0] sm:$0xf]
        %v2979 = vld [vmem:[%s3 + $0xd4] sm:$0xf]
        %v2980 = vld [vmem:[%s3 + $0xd8] sm:$0xf]
        %v2981 = vld [vmem:[%s3 + $0xdc] sm:$0xf]
        %v2982 = vld [vmem:[%s3 + $0xe0] sm:$0xf]
        %v2983 = vld [vmem:[%s3 + $0xe4] sm:$0xf]
        %v2984 = vld [vmem:[%s3 + $0xe8] sm:$0xf]
        %v2985 = vld [vmem:[%s3 + $0xec] sm:$0xf]
        %v2986 = vld [vmem:[%s3 + $0xf0] sm:$0xf]
        %v2987 = vld [vmem:[%s3 + $0xf4] sm:$0xf]
        %v2988 = vld [vmem:[%s3 + $0xf8] sm:$0xf]
        %v2989 = vld [vmem:[%s3 + $0xfc] sm:$0xf]
        %v2990 = vld [vmem:[%s3 + $0x100] sm:$0xf]
        %v2991 = vld [vmem:[%s3 + $0x104] sm:$0xf]
        %v2992 = vld [vmem:[%s3 + $0x108] sm:$0xf]
        %v2993 = vld [vmem:[%s3 + $0x10c] sm:$0xf]
        %v2994 = vld [vmem:[%s3 + $0x110] sm:$0xf]
        %v2995 = vld [vmem:[%s3 + $0x114] sm:$0xf]
        %v2996 = vld [vmem:[%s3 + $0x118] sm:$0xf]
        %v2997 = vld [vmem:[%s3 + $0x11c] sm:$0xf]
        %v2998 = vld [vmem:[%s3 + $0x120] sm:$0xf]
        %v2999 = vld [vmem:[%s3 + $0x124] sm:$0xf]
        %v3000 = vld [vmem:[%s3 + $0x128] sm:$0xf]
        %v3001 = vld [vmem:[%s3 + $0x12c] sm:$0xf]
        %v3002 = vld [vmem:[%s3 + $0x130] sm:$0xf]
        %v3003 = vld [vmem:[%s3 + $0x134] sm:$0xf]
        %v3004 = vld [vmem:[%s3 + $0x138] sm:$0xf]
        %v3005 = vld [vmem:[%s3 + $0x13c] sm:$0xf]
        %v3006 = vld [vmem:[%s3 + $0x140] sm:$0xf]
        %v3007 = vld [vmem:[%s3 + $0x144] sm:$0xf]
        %v3008 = vld [vmem:[%s3 + $0x148] sm:$0xf]
        %v3009 = vld [vmem:[%s3 + $0x14c] sm:$0xf]
        %v3010 = vld [vmem:[%s3 + $0x150] sm:$0xf]
        %v3011 = vld [vmem:[%s3 + $0x154] sm:$0xf]
        %v3012 = vld [vmem:[%s3 + $0x158] sm:$0xf]
        %v3013 = vld [vmem:[%s3 + $0x15c] sm:$0xf]
        %v3014 = vld [vmem:[%s3 + $0x160] sm:$0xf]
        %v3015 = vld [vmem:[%s3 + $0x164] sm:$0xf]
        %v3016 = vld [vmem:[%s3 + $0x168] sm:$0xf]
        %v3017 = vld [vmem:[%s3 + $0x16c] sm:$0xf]
        %v3018 = vld [vmem:[%s3 + $0x170] sm:$0xf]
        %v3019 = vld [vmem:[%s3 + $0x174] sm:$0xf]
        %v3020 = vld [vmem:[%s3 + $0x178] sm:$0xf]
        %v3021 = vld [vmem:[%s3 + $0x17c] sm:$0xf]
        %v3022 = vld [vmem:[%s3 + $0x180] sm:$0xf]
        %v3023 = vld [vmem:[%s3 + $0x184] sm:$0xf]
        %v3024 = vld [vmem:[%s3 + $0x188] sm:$0xf]
        %v3025 = vld [vmem:[%s3 + $0x18c] sm:$0xf]
        %v3026 = vld [vmem:[%s3 + $0x190] sm:$0xf]
        %v3027 = vld [vmem:[%s3 + $0x194] sm:$0xf]
        %v3028 = vld [vmem:[%s3 + $0x198] sm:$0xf]
        %v3029 = vld [vmem:[%s3 + $0x19c] sm:$0xf]
        %v3030 = vld [vmem:[%s3 + $0x1a0] sm:$0xf]
        %v3031 = vld [vmem:[%s3 + $0x1a4] sm:$0xf]
        %v3032 = vld [vmem:[%s3 + $0x1a8] sm:$0xf]
        %v3033 = vld [vmem:[%s3 + $0x1ac] sm:$0xf]
        %v3034 = vld [vmem:[%s3 + $0x1b0] sm:$0xf]
        %v3035 = vld [vmem:[%s3 + $0x1b4] sm:$0xf]
        %v3036 = vld [vmem:[%s3 + $0x1b8] sm:$0xf]
        %v3037 = vld [vmem:[%s3 + $0x1bc] sm:$0xf]
        %v3038 = vld [vmem:[%s3 + $0x1c0] sm:$0xf]
        %v3039 = vld [vmem:[%s3 + $0x1c4] sm:$0xf]
        %v3040 = vld [vmem:[%s3 + $0x1c8] sm:$0xf]
        %v3041 = vld [vmem:[%s3 + $0x1cc] sm:$0xf]
        %v3042 = vld [vmem:[%s3 + $0x1d0] sm:$0xf]
        %v3043 = vld [vmem:[%s3 + $0x1d4] sm:$0xf]
        %v3044 = vld [vmem:[%s3 + $0x1d8] sm:$0xf]
        %v3045 = vld [vmem:[%s3 + $0x1dc] sm:$0xf]
        %v3046 = vld [vmem:[%s3 + $0x1e0] sm:$0xf]
        %v3047 = vld [vmem:[%s3 + $0x1e4] sm:$0xf]
        %v3048 = vld [vmem:[%s3 + $0x1e8] sm:$0xf]
        %v3049 = vld [vmem:[%s3 + $0x1ec] sm:$0xf]
        %v3050 = vld [vmem:[%s3 + $0x1f0] sm:$0xf]
        %v3051 = vld [vmem:[%s3 + $0x1f4] sm:$0xf]
        %v3052 = vld [vmem:[%s3 + $0x1f8] sm:$0xf]
        %v3053 = vld [vmem:[%s3 + $0x1fc] sm:$0xf]
        %v3054 = vld [vmem:[#allocation3] sm:$0x1]
        %v3056 = vlaneseq
        %v3057 = vshrl.u32 %v3056, 7
        %v3058 = vsub.s32 0, %v3057
        %v3059 = vrot.slane %v3054, %v3058
        %v3189 = vunpack.c.l.b16 %v2926
        %v3190 = vunpack.c.l.b16 %v2927
        %v3191 = vunpack.c.l.b16 %v2928
        %v3192 = vunpack.c.l.b16 %v2929
        %v3193 = vunpack.c.l.b16 %v2930
        %v3194 = vunpack.c.l.b16 %v2931
        %v3195 = vunpack.c.l.b16 %v2932
        %v3196 = vunpack.c.l.b16 %v2933
        %v3197 = vunpack.c.l.b16 %v2934
        %v3198 = vunpack.c.l.b16 %v2935
        %v3199 = vunpack.c.l.b16 %v2936
        %v3200 = vunpack.c.l.b16 %v2937
        %v3201 = vunpack.c.l.b16 %v2938
        %v3202 = vunpack.c.l.b16 %v2939
        %v3203 = vunpack.c.l.b16 %v2940
        %v3204 = vunpack.c.l.b16 %v2941
        %v3205 = vunpack.c.l.b16 %v2942
        %v3206 = vunpack.c.l.b16 %v2943
        %v3207 = vunpack.c.l.b16 %v2944
        %v3208 = vunpack.c.l.b16 %v2945
        %v3209 = vunpack.c.l.b16 %v2946
        %v3210 = vunpack.c.l.b16 %v2947
        %v3211 = vunpack.c.l.b16 %v2948
        %v3212 = vunpack.c.l.b16 %v2949
        %v3213 = vunpack.c.l.b16 %v2950
        %v3214 = vunpack.c.l.b16 %v2951
        %v3215 = vunpack.c.l.b16 %v2952
        %v3216 = vunpack.c.l.b16 %v2953
        %v3217 = vunpack.c.l.b16 %v2954
        %v3218 = vunpack.c.l.b16 %v2955
        %v3219 = vunpack.c.l.b16 %v2956
        %v3220 = vunpack.c.l.b16 %v2957
        %v3221 = vunpack.c.l.b16 %v2958
        %v3222 = vunpack.c.l.b16 %v2959
        %v3223 = vunpack.c.l.b16 %v2960
        %v3224 = vunpack.c.l.b16 %v2961
        %v3225 = vunpack.c.l.b16 %v2962
        %v3226 = vunpack.c.l.b16 %v2963
        %v3227 = vunpack.c.l.b16 %v2964
        %v3228 = vunpack.c.l.b16 %v2965
        %v3229 = vunpack.c.l.b16 %v2966
        %v3230 = vunpack.c.l.b16 %v2967
        %v3231 = vunpack.c.l.b16 %v2968
        %v3232 = vunpack.c.l.b16 %v2969
        %v3233 = vunpack.c.l.b16 %v2970
        %v3234 = vunpack.c.l.b16 %v2971
        %v3235 = vunpack.c.l.b16 %v2972
        %v3236 = vunpack.c.l.b16 %v2973
        %v3237 = vunpack.c.l.b16 %v2974
        %v3238 = vunpack.c.l.b16 %v2975
        %v3239 = vunpack.c.l.b16 %v2976
        %v3240 = vunpack.c.l.b16 %v2977
        %v3241 = vunpack.c.l.b16 %v2978
        %v3242 = vunpack.c.l.b16 %v2979
        %v3243 = vunpack.c.l.b16 %v2980
        %v3244 = vunpack.c.l.b16 %v2981
        %v3245 = vunpack.c.l.b16 %v2982
        %v3246 = vunpack.c.l.b16 %v2983
        %v3247 = vunpack.c.l.b16 %v2984
        %v3248 = vunpack.c.l.b16 %v2985
        %v3249 = vunpack.c.l.b16 %v2986
        %v3250 = vunpack.c.l.b16 %v2987
        %v3251 = vunpack.c.l.b16 %v2988
        %v3252 = vunpack.c.l.b16 %v2989
        %v3253 = vunpack.c.l.b16 %v2990
        %v3254 = vunpack.c.l.b16 %v2991
        %v3255 = vunpack.c.l.b16 %v2992
        %v3256 = vunpack.c.l.b16 %v2993
        %v3257 = vunpack.c.l.b16 %v2994
        %v3258 = vunpack.c.l.b16 %v2995
        %v3259 = vunpack.c.l.b16 %v2996
        %v3260 = vunpack.c.l.b16 %v2997
        %v3261 = vunpack.c.l.b16 %v2998
        %v3262 = vunpack.c.l.b16 %v2999
        %v3263 = vunpack.c.l.b16 %v3000
        %v3264 = vunpack.c.l.b16 %v3001
        %v3265 = vunpack.c.l.b16 %v3002
        %v3266 = vunpack.c.l.b16 %v3003
        %v3267 = vunpack.c.l.b16 %v3004
        %v3268 = vunpack.c.l.b16 %v3005
        %v3269 = vunpack.c.l.b16 %v3006
        %v3270 = vunpack.c.l.b16 %v3007
        %v3271 = vunpack.c.l.b16 %v3008
        %v3272 = vunpack.c.l.b16 %v3009
        %v3273 = vunpack.c.l.b16 %v3010
        %v3274 = vunpack.c.l.b16 %v3011
        %v3275 = vunpack.c.l.b16 %v3012
        %v3276 = vunpack.c.l.b16 %v3013
        %v3277 = vunpack.c.l.b16 %v3014
        %v3278 = vunpack.c.l.b16 %v3015
        %v3279 = vunpack.c.l.b16 %v3016
        %v3280 = vunpack.c.l.b16 %v3017
        %v3281 = vunpack.c.l.b16 %v3018
        %v3282 = vunpack.c.l.b16 %v3019
        %v3283 = vunpack.c.l.b16 %v3020
        %v3284 = vunpack.c.l.b16 %v3021
        %v3285 = vunpack.c.l.b16 %v3022
        %v3286 = vunpack.c.l.b16 %v3023
        %v3287 = vunpack.c.l.b16 %v3024
        %v3288 = vunpack.c.l.b16 %v3025
        %v3289 = vunpack.c.l.b16 %v3026
        %v3290 = vunpack.c.l.b16 %v3027
        %v3291 = vunpack.c.l.b16 %v3028
        %v3292 = vunpack.c.l.b16 %v3029
        %v3293 = vunpack.c.l.b16 %v3030
        %v3294 = vunpack.c.l.b16 %v3031
        %v3295 = vunpack.c.l.b16 %v3032
        %v3296 = vunpack.c.l.b16 %v3033
        %v3297 = vunpack.c.l.b16 %v3034
        %v3298 = vunpack.c.l.b16 %v3035
        %v3299 = vunpack.c.l.b16 %v3036
        %v3300 = vunpack.c.l.b16 %v3037
        %v3301 = vunpack.c.l.b16 %v3038
        %v3302 = vunpack.c.l.b16 %v3039
        %v3303 = vunpack.c.l.b16 %v3040
        %v3304 = vunpack.c.l.b16 %v3041
        %v3305 = vunpack.c.l.b16 %v3042
        %v3306 = vunpack.c.l.b16 %v3043
        %v3307 = vunpack.c.l.b16 %v3044
        %v3308 = vunpack.c.l.b16 %v3045
        %v3309 = vunpack.c.l.b16 %v3046
        %v3310 = vunpack.c.l.b16 %v3047
        %v3311 = vunpack.c.l.b16 %v3048
        %v3312 = vunpack.c.l.b16 %v3049
        %v3313 = vunpack.c.l.b16 %v3050
        %v3314 = vunpack.c.l.b16 %v3051
        %v3315 = vunpack.c.l.b16 %v3052
        %v3316 = vunpack.c.l.b16 %v3053
        %v3317 = vpack.c.b16 %v3190, %v3189
        %v3318 = vpack.c.b16 %v3192, %v3191
        %v3319 = vpack.c.b16 %v3194, %v3193
        %v3320 = vpack.c.b16 %v3196, %v3195
        %v3321 = vpack.c.b16 %v3198, %v3197
        %v3322 = vpack.c.b16 %v3200, %v3199
        %v3323 = vpack.c.b16 %v3202, %v3201
        %v3324 = vpack.c.b16 %v3204, %v3203
        %v3325 = vpack.c.b16 %v3206, %v3205
        %v3326 = vpack.c.b16 %v3208, %v3207
        %v3327 = vpack.c.b16 %v3210, %v3209
        %v3328 = vpack.c.b16 %v3212, %v3211
        %v3329 = vpack.c.b16 %v3214, %v3213
        %v3330 = vpack.c.b16 %v3216, %v3215
        %v3331 = vpack.c.b16 %v3218, %v3217
        %v3332 = vpack.c.b16 %v3220, %v3219
        %v3333 = vpack.c.b16 %v3222, %v3221
        %v3334 = vpack.c.b16 %v3224, %v3223
        %v3335 = vpack.c.b16 %v3226, %v3225
        %v3336 = vpack.c.b16 %v3228, %v3227
        %v3337 = vpack.c.b16 %v3230, %v3229
        %v3338 = vpack.c.b16 %v3232, %v3231
        %v3339 = vpack.c.b16 %v3234, %v3233
        %v3340 = vpack.c.b16 %v3236, %v3235
        %v3341 = vpack.c.b16 %v3238, %v3237
        %v3342 = vpack.c.b16 %v3240, %v3239
        %v3343 = vpack.c.b16 %v3242, %v3241
        %v3344 = vpack.c.b16 %v3244, %v3243
        %v3345 = vpack.c.b16 %v3246, %v3245
        %v3346 = vpack.c.b16 %v3248, %v3247
        %v3347 = vpack.c.b16 %v3250, %v3249
        %v3348 = vpack.c.b16 %v3252, %v3251
        %v3349 = vpack.c.b16 %v3254, %v3253
        %v3350 = vpack.c.b16 %v3256, %v3255
        %v3351 = vpack.c.b16 %v3258, %v3257
        %v3352 = vpack.c.b16 %v3260, %v3259
        %v3353 = vpack.c.b16 %v3262, %v3261
        %v3354 = vpack.c.b16 %v3264, %v3263
        %v3355 = vpack.c.b16 %v3266, %v3265
        %v3356 = vpack.c.b16 %v3268, %v3267
        %v3357 = vpack.c.b16 %v3270, %v3269
        %v3358 = vpack.c.b16 %v3272, %v3271
        %v3359 = vpack.c.b16 %v3274, %v3273
        %v3360 = vpack.c.b16 %v3276, %v3275
        %v3361 = vpack.c.b16 %v3278, %v3277
        %v3362 = vpack.c.b16 %v3280, %v3279
        %v3363 = vpack.c.b16 %v3282, %v3281
        %v3364 = vpack.c.b16 %v3284, %v3283
        %v3365 = vpack.c.b16 %v3286, %v3285
        %v3366 = vpack.c.b16 %v3288, %v3287
        %v3367 = vpack.c.b16 %v3290, %v3289
        %v3368 = vpack.c.b16 %v3292, %v3291
        %v3369 = vpack.c.b16 %v3294, %v3293
        %v3370 = vpack.c.b16 %v3296, %v3295
        %v3371 = vpack.c.b16 %v3298, %v3297
        %v3372 = vpack.c.b16 %v3300, %v3299
        %v3373 = vpack.c.b16 %v3302, %v3301
        %v3374 = vpack.c.b16 %v3304, %v3303
        %v3375 = vpack.c.b16 %v3306, %v3305
        %v3376 = vpack.c.b16 %v3308, %v3307
        %v3377 = vpack.c.b16 %v3310, %v3309
        %v3378 = vpack.c.b16 %v3312, %v3311
        %v3379 = vpack.c.b16 %v3314, %v3313
        %v3380 = vpack.c.b16 %v3316, %v3315
        %3445 = vmatprep.subr.bf16.mxu0 0
        %3446 = vmatpush1.bf16.msra.mxu0 %v3317
        %3447 = vmatprep.subr.bf16.mxu0 0
        %3448 = vmatpush1.bf16.msra.mxu0 %v3318
        %3449 = vmatprep.subr.bf16.mxu0 0
        %3450 = vmatpush1.bf16.msra.mxu0 %v3319
        %3451 = vmatprep.subr.bf16.mxu0 0
        %3452 = vmatpush1.bf16.msra.mxu0 %v3320
        %3453 = vmatprep.subr.bf16.mxu0 0
        %3454 = vmatpush1.bf16.msra.mxu0 %v3321
        %3455 = vmatprep.subr.bf16.mxu0 0
        %3456 = vmatpush1.bf16.msra.mxu0 %v3322
        %3457 = vmatprep.subr.bf16.mxu0 0
        %3458 = vmatpush1.bf16.msra.mxu0 %v3323
        %3459 = vmatprep.subr.bf16.mxu0 0
        %3460 = vmatpush1.bf16.msra.mxu0 %v3324
        %3461 = vmatprep.subr.bf16.mxu0 0
        %3462 = vmatpush1.bf16.msra.mxu0 %v3325
        %3463 = vmatprep.subr.bf16.mxu0 0
        %3464 = vmatpush1.bf16.msra.mxu0 %v3326
        %3465 = vmatprep.subr.bf16.mxu0 0
        %3466 = vmatpush1.bf16.msra.mxu0 %v3327
        %3467 = vmatprep.subr.bf16.mxu0 0
        %3468 = vmatpush1.bf16.msra.mxu0 %v3328
        %3469 = vmatprep.subr.bf16.mxu0 0
        %3470 = vmatpush1.bf16.msra.mxu0 %v3329
        %3471 = vmatprep.subr.bf16.mxu0 0
        %3472 = vmatpush1.bf16.msra.mxu0 %v3330
        %3473 = vmatprep.subr.bf16.mxu0 0
        %3474 = vmatpush1.bf16.msra.mxu0 %v3331
        %3475 = vmatprep.subr.bf16.mxu0 0
        %3476 = vmatpush1.bf16.msra.mxu0 %v3332
        %3477 = vmatprep.mubr.bf16.mxu0 %v2919
        %3478 = vmatmul.mubr.bf16.gmra.mrb[0].mxu0 %v2918
        %v3479 = vpop.f32.mrb[0].mxu0
        %v3480 = vadd.f32 %v3059, %v3479
        %v3481 = vpop.f32.mrb[0].mxu0
        %v3482 = vpop.f32.mrb[0].mxu0
        %v3483 = vpop.f32.mrb[0].mxu0
        %3484 = vdwg.mxu0
        %3485 = vmatprep.subr.bf16.mxu0 0
        %3486 = vmatpush1.bf16.msra.mxu0 %v3333
        %3487 = vmatprep.subr.bf16.mxu0 0
        %3488 = vmatpush1.bf16.msra.mxu0 %v3334
        %3489 = vmatprep.subr.bf16.mxu0 0
        %3490 = vmatpush1.bf16.msra.mxu0 %v3335
        %3491 = vmatprep.subr.bf16.mxu0 0
        %3492 = vmatpush1.bf16.msra.mxu0 %v3336
        %3493 = vmatprep.subr.bf16.mxu0 0
        %3494 = vmatpush1.bf16.msra.mxu0 %v3337
        %3495 = vmatprep.subr.bf16.mxu0 0
        %3496 = vmatpush1.bf16.msra.mxu0 %v3338
        %3497 = vmatprep.subr.bf16.mxu0 0
        %3498 = vmatpush1.bf16.msra.mxu0 %v3339
        %3499 = vmatprep.subr.bf16.mxu0 0
        %3500 = vmatpush1.bf16.msra.mxu0 %v3340
        %3501 = vmatprep.subr.bf16.mxu0 0
        %3502 = vmatpush1.bf16.msra.mxu0 %v3341
        %3503 = vmatprep.subr.bf16.mxu0 0
        %3504 = vmatpush1.bf16.msra.mxu0 %v3342
        %3505 = vmatprep.subr.bf16.mxu0 0
        %3506 = vmatpush1.bf16.msra.mxu0 %v3343
        %3507 = vmatprep.subr.bf16.mxu0 0
        %3508 = vmatpush1.bf16.msra.mxu0 %v3344
        %3509 = vmatprep.subr.bf16.mxu0 0
        %3510 = vmatpush1.bf16.msra.mxu0 %v3345
        %3511 = vmatprep.subr.bf16.mxu0 0
        %3512 = vmatpush1.bf16.msra.mxu0 %v3346
        %3513 = vmatprep.subr.bf16.mxu0 0
        %3514 = vmatpush1.bf16.msra.mxu0 %v3347
        %3515 = vmatprep.subr.bf16.mxu0 0
        %3516 = vmatpush1.bf16.msra.mxu0 %v3348
        %3517 = vmatprep.mubr.bf16.mxu0 %v2921
        %3518 = vmatmul.mubr.bf16.gmra.mrb[0].mxu0 %v2920
        %v3519 = vpop.f32.mrb[0].mxu0
        %v3520 = vadd.f32 %v3480, %v3519
        %v3521 = vpop.f32.mrb[0].mxu0
        %v3522 = vpop.f32.mrb[0].mxu0
        %v3523 = vpop.f32.mrb[0].mxu0
        %3524 = vdwg.mxu0
        %3525 = vmatprep.subr.bf16.mxu0 0
        %3526 = vmatpush1.bf16.msra.mxu0 %v3349
        %3527 = vmatprep.subr.bf16.mxu0 0
        %3528 = vmatpush1.bf16.msra.mxu0 %v3350
        %3529 = vmatprep.subr.bf16.mxu0 0
        %3530 = vmatpush1.bf16.msra.mxu0 %v3351
        %3531 = vmatprep.subr.bf16.mxu0 0
        %3532 = vmatpush1.bf16.msra.mxu0 %v3352
        %3533 = vmatprep.subr.bf16.mxu0 0
        %3534 = vmatpush1.bf16.msra.mxu0 %v3353
        %3535 = vmatprep.subr.bf16.mxu0 0
        %3536 = vmatpush1.bf16.msra.mxu0 %v3354
        %3537 = vmatprep.subr.bf16.mxu0 0
        %3538 = vmatpush1.bf16.msra.mxu0 %v3355
        %3539 = vmatprep.subr.bf16.mxu0 0
        %3540 = vmatpush1.bf16.msra.mxu0 %v3356
        %3541 = vmatprep.subr.bf16.mxu0 0
        %3542 = vmatpush1.bf16.msra.mxu0 %v3357
        %3543 = vmatprep.subr.bf16.mxu0 0
        %3544 = vmatpush1.bf16.msra.mxu0 %v3358
        %3545 = vmatprep.subr.bf16.mxu0 0
        %3546 = vmatpush1.bf16.msra.mxu0 %v3359
        %3547 = vmatprep.subr.bf16.mxu0 0
        %3548 = vmatpush1.bf16.msra.mxu0 %v3360
        %3549 = vmatprep.subr.bf16.mxu0 0
        %3550 = vmatpush1.bf16.msra.mxu0 %v3361
        %3551 = vmatprep.subr.bf16.mxu0 0
        %3552 = vmatpush1.bf16.msra.mxu0 %v3362
        %3553 = vmatprep.subr.bf16.mxu0 0
        %3554 = vmatpush1.bf16.msra.mxu0 %v3363
        %3555 = vmatprep.subr.bf16.mxu0 0
        %3556 = vmatpush1.bf16.msra.mxu0 %v3364
        %3557 = vmatprep.mubr.bf16.mxu0 %v2923
        %3558 = vmatmul.mubr.bf16.gmra.mrb[0].mxu0 %v2922
        %v3559 = vpop.f32.mrb[0].mxu0
        %v3560 = vadd.f32 %v3520, %v3559
        %v3561 = vpop.f32.mrb[0].mxu0
        %v3562 = vpop.f32.mrb[0].mxu0
        %v3563 = vpop.f32.mrb[0].mxu0
        %3564 = vdwg.mxu0
        %3565 = vmatprep.subr.bf16.mxu0 0
        %3566 = vmatpush1.bf16.msra.mxu0 %v3365
        %3567 = vmatprep.subr.bf16.mxu0 0
        %3568 = vmatpush1.bf16.msra.mxu0 %v3366
        %3569 = vmatprep.subr.bf16.mxu0 0
        %3570 = vmatpush1.bf16.msra.mxu0 %v3367
        %3571 = vmatprep.subr.bf16.mxu0 0
        %3572 = vmatpush1.bf16.msra.mxu0 %v3368
        %3573 = vmatprep.subr.bf16.mxu0 0
        %3574 = vmatpush1.bf16.msra.mxu0 %v3369
        %3575 = vmatprep.subr.bf16.mxu0 0
        %3576 = vmatpush1.bf16.msra.mxu0 %v3370
        %3577 = vmatprep.subr.bf16.mxu0 0
        %3578 = vmatpush1.bf16.msra.mxu0 %v3371
        %3579 = vmatprep.subr.bf16.mxu0 0
        %3580 = vmatpush1.bf16.msra.mxu0 %v3372
        %3581 = vmatprep.subr.bf16.mxu0 0
        %3582 = vmatpush1.bf16.msra.mxu0 %v3373
        %3583 = vmatprep.subr.bf16.mxu0 0
        %3584 = vmatpush1.bf16.msra.mxu0 %v3374
        %3585 = vmatprep.subr.bf16.mxu0 0
        %3586 = vmatpush1.bf16.msra.mxu0 %v3375
        %3587 = vmatprep.subr.bf16.mxu0 0
        %3588 = vmatpush1.bf16.msra.mxu0 %v3376
        %3589 = vmatprep.subr.bf16.mxu0 0
        %3590 = vmatpush1.bf16.msra.mxu0 %v3377
        %3591 = vmatprep.subr.bf16.mxu0 0
        %3592 = vmatpush1.bf16.msra.mxu0 %v3378
        %3593 = vmatprep.subr.bf16.mxu0 0
        %3594 = vmatpush1.bf16.msra.mxu0 %v3379
        %3595 = vmatprep.subr.bf16.mxu0 0
        %3596 = vmatpush1.bf16.msra.mxu0 %v3380
        %3597 = vmatprep.mubr.bf16.mxu0 %v2925
        %3598 = vmatmul.mubr.bf16.gmra.mrb[0].mxu0 %v2924
        %v3599 = vpop.f32.mrb[0].mxu0
        %v3600 = vadd.f32 %v3560, %v3599
        %v3601 = vpop.f32.mrb[0].mxu0
        %v3602 = vpop.f32.mrb[0].mxu0
        %v3603 = vpop.f32.mrb[0].mxu0
        %3604 = vdwg.mxu0
        %v3605 = vand.u32 2147483647, %v3600
        %v3606 = vsub.f32 0.0, %v3605
        %v3607 = vmul.f32 %v3606, 1.442695
        %v3608 = vpow.pop %v3607
        %vm3609 = vcmp.ge.f32.partialorder %v3600, 0.0
        %v3610 = vadd.f32 %v3608, 1.0
        %v3611 = vrcp.pop %v3610
        %v3612 = vmul.f32 1.0, %v3611
        %v3613 = vmul.f32 %v3608, %v3611
        %v3614 = vsel %vm3609, %v3612, %v3613
        %vm3615 = vcmask 1024
        %3616 = vst.msk [vmem:[%s274] sm:$0x3] %vm3615, %v3614
      $region48: #{discrimination_net_forward.5} parent=39 // pred_fallthru
        _
      %p3617 = scmp.lt.s32.totalorder %s22, 0
      %s3618 = scalar_select %p3617, %s22, 0
      %s3619 = smul.addr %s3618, 2
      %s3620 = scalar_lea.vmem %s5, %s3619
      // Predicated region
      $region49: #{discrimination_net_forward.5} parent=39 // pred_check
        %p3621 = pneg %p165
      $region50: #{discrimination_net_forward.5} parent=39 // pred_check_branch
        %3623 = sbr.rel (%p3621) target = $region52
      $region51: #{discrimination_net_forward.5} parent=39 // pred_region
        _
      $region52: #{discrimination_net_forward.5} parent=39 // pred_fallthru
        _
      // Predicated region
      $region53: #{discrimination_net_forward.5} parent=39 // pred_check
        %p3624 = pneg %p165
      $region54: #{discrimination_net_forward.5} parent=39 // pred_check_branch
        %3626 = sbr.rel (%p3624) target = $region56
      $region55: #{discrimination_net_forward.5} parent=39 // pred_region
        %p3627 = scmp.lt.s32.totalorder %s22, 0
        %s3628 = scalar_select %p3627, %s22, 0
        %s3629 = smul.addr %s3628, 2
        %s3630 = scalar_lea.vmem %s5, %s3629
      $region56: #{discrimination_net_forward.5} parent=39 // pred_fallthru
        _
    $region40: #{discrimination_net_forward.5} parent=5 // pred_fallthru
      _
    %p3631 = scmp.le.s32.totalorder 2, %s13
    // Predicated region
    $region57: #{discrimination_net_forward.5} parent=5 // pred_check
      %p3632 = pneg %p3631
    $region58: #{discrimination_net_forward.5} parent=5 // pred_check_branch
      %3634 = sbr.rel (%p3632) target = $region60
    $region59: #{discrimination_net_forward.5} parent=5 // pred_region
      %s3635 = ssub.s32 %s13, 2
    $region60: #{discrimination_net_forward.5} parent=5 // pred_fallthru
      _
  $region6: #{discrimination_net_forward.5} parent=0 // loop_footer
    %s17 = sadd.s32 1, %s13
  $region7: #{discrimination_net_forward.5} parent=0 // loop_footer_branch
    %12 = sbr.rel target = $region3
  $region8: #{discrimination_net_forward.5} parent=0 // loop_exit
    _

</llo_original>
